<compile_context>
chip_gen: v6e
topology: v6e:2x2x1
jax: 0.10.0
libtpu: 0.0.40
codegen_flags: <defaults>
</compile_context>

<pallas_src>
import functools
import math

import jax
import jax.numpy as jnp
from jax.experimental import pallas as pl
from jax.experimental.pallas import tpu as pltpu

# ----------------------------- model sizes ---------------------------------
D_MODEL = 32
N_HEAD = 4
D_HEAD = D_MODEL // N_HEAD
D_FF = 64
SEQ = 8          # src sequence length
TOK = 8          # word_tokens length
BATCH = 2
NUM_LAYERS = 2
EPS = 1e-5


# ----------------------------- kernel helpers ------------------------------
def _layernorm(x, gamma, beta):
    mu = jnp.mean(x, axis=-1, keepdims=True)
    var = jnp.mean((x - mu) ** 2, axis=-1, keepdims=True)
    return (x - mu) * jax.lax.rsqrt(var + EPS) * gamma + beta


def _mha_accum(q_src, kv_src, q_off, k_off, v_off, w_out_ref, out_bias, mask,
               batch, seq_q, seq_kv, num_heads, d_head):
    """Multi-head attention with per-head accumulation through the output
    projection (no lane-axis concatenate).  The 1/sqrt(d_head) scale is
    already folded into the q projection weights; the output-projection bias
    seeds the accumulator."""
    d_model = num_heads * d_head
    q3 = q_src.reshape(batch, seq_q, q_src.shape[-1])
    kv3 = kv_src.reshape(batch, seq_kv, kv_src.shape[-1])
    acc = jnp.broadcast_to(out_bias, (batch * seq_q, d_model)).astype(jnp.float32)
    for h in range(num_heads):
        lo = h * d_head
        qh = q3[:, :, q_off + lo: q_off + lo + d_head]
        kh = kv3[:, :, k_off + lo: k_off + lo + d_head]
        vh = kv3[:, :, v_off + lo: v_off + lo + d_head]
        s = jnp.einsum("bqd,bkd->bqk", qh, kh,
                       preferred_element_type=jnp.float32)
        if mask is not None:
            s = s + mask[None, :, :]
        s = s - jnp.max(s, axis=-1, keepdims=True)
        p = jnp.exp(s)
        p = p * pl.reciprocal(jnp.sum(p, axis=-1, keepdims=True), approx=True)
        pv = jnp.einsum("bqk,bkd->bqd", p, vh,
                        preferred_element_type=jnp.float32)
        # fold the head output straight through its slice of W_out
        acc = acc + jnp.dot(pv.reshape(batch * seq_q, d_head),
                            w_out_ref[lo:lo + d_head, :],
                            preferred_element_type=jnp.float32)
    return acc


# ----------------------------- Pallas kernel --------------------------------
def _refined_transformer_body(x_ref, word_ref, mask_ref,
                              w_qkv_ref, b_qkv_ref, w_os_ref, b_os_ref,
                              w_qc_ref, b_qc_ref, w_kvc_ref, b_kvc_ref,
                              w_oc_ref, b_oc_ref,
                              w1_ref, b1_ref, w2_ref, b2_ref, ln_ref,
                              out_ref, *, num_layers, num_heads, d_head,
                              batch, seq_q, seq_kv):
    d_model = num_heads * d_head
    x = x_ref[...].astype(jnp.float32)          # (B*S, D) resident slab
    wtok = word_ref[...].astype(jnp.float32)    # (B*T, D)
    mask = mask_ref[...].astype(jnp.float32) if mask_ref is not None else None

    # Cross-attention KV projections for ALL layers in one lane-dense matmul:
    # word_tokens is layer-invariant, so (B*T, D) @ (D, L*2D) hoists L matmuls
    # out of the layer loop.
    kvc_all = jnp.dot(wtok, w_kvc_ref[...],
                      preferred_element_type=jnp.float32) + b_kvc_ref[...]

    for l in range(num_layers):                 # static unroll over layers
        # ---- self-attention: fused QKV projection on the full slab ----
        qkv = jnp.dot(x, w_qkv_ref[l],
                      preferred_element_type=jnp.float32) + b_qkv_ref[l]
        attn = _mha_accum(qkv, qkv, 0, d_model, 2 * d_model, w_os_ref.at[l],
                          b_os_ref[l], mask,
                          batch, seq_q, seq_q, num_heads, d_head)
        x = _layernorm(x + attn, ln_ref[l, 0], ln_ref[l, 1])

        # ---- cross-attention to word tokens (pre-hoisted KV projection) ----
        qc = jnp.dot(x, w_qc_ref[l],
                     preferred_element_type=jnp.float32) + b_qc_ref[l]
        kvc = kvc_all[:, l * 2 * d_model:(l + 1) * 2 * d_model]
        cattn = _mha_accum(qc, kvc, 0, 0, d_model, w_oc_ref.at[l],
                           b_oc_ref[l], None,
                           batch, seq_q, seq_kv, num_heads, d_head)
        x = _layernorm(x + cattn, ln_ref[l, 2], ln_ref[l, 3])

        # ---- feed-forward ----
        h = jnp.maximum(
            jnp.dot(x, w1_ref[l], preferred_element_type=jnp.float32)
            + b1_ref[l], 0.0)
        f = jnp.dot(h, w2_ref[l], preferred_element_type=jnp.float32) + b2_ref[l]
        x = _layernorm(x + f, ln_ref[l, 4], ln_ref[l, 5])

    out_ref[...] = x.astype(out_ref.dtype)


def _kernel_with_mask(x_ref, word_ref, mask_ref, *rest, **statics):
    _refined_transformer_body(x_ref, word_ref, mask_ref, *rest, **statics)


def _kernel_no_mask(x_ref, word_ref, *rest, **statics):
    _refined_transformer_body(x_ref, word_ref, None, *rest, **statics)


# ----------------------------- wrapper --------------------------------------
def refined_transformer_forward(packed_params, src, word_tokens=None,
                                src_mask=None):
    """Mirrors Refined_Transformer.forward; the whole layer stack runs inside
    one grid-less pallas_call with activations resident in VMEM."""
    if word_tokens is None:
        # TODO(synk): the reference refined_layer's handling of
        # word_tokens=None is unspecified; default to attending to src itself.
        word_tokens = src
    B, S, D = src.shape
    T = word_tokens.shape[1]
    L = packed_params[0].shape[0]

    x2 = src.reshape(B * S, D)
    wt2 = word_tokens.reshape(B * T, D)

    statics = dict(num_layers=L, num_heads=N_HEAD, d_head=D_HEAD,
                   batch=B, seq_q=S, seq_kv=T)
    has_mask = src_mask is not None
    if has_mask:
        kernel = functools.partial(_kernel_with_mask, **statics)
        inputs = (x2, wt2, src_mask.astype(jnp.float32)) + tuple(packed_params)
    else:
        # fast path: no mask DMA, no mask add inside the kernel
        kernel = functools.partial(_kernel_no_mask, **statics)
        inputs = (x2, wt2) + tuple(packed_params)

    vmem = pl.BlockSpec(memory_space=pltpu.MemorySpace.VMEM)
    out2 = pl.pallas_call(
        kernel,
        out_shape=jax.ShapeDtypeStruct((B * S, D), src.dtype),
        in_specs=[vmem] * len(inputs),
        out_specs=vmem,
    )(*inputs)
    return out2.reshape(B, S, D)


# ----------------------------- params ---------------------------------------
def init_layer_params(key):
    ks = jax.random.split(key, 3)
    scale = 1.0 / math.sqrt(D_MODEL)
    # w_attn: 0=Wq_self 1=Wk_self 2=Wv_self 3=Wo_self
    #         4=Wq_cross 5=Wk_cross 6=Wv_cross 7=Wo_cross
    w_attn = jax.random.normal(ks[0], (8, D_MODEL, D_MODEL), jnp.float32) * scale
    b_attn = jnp.zeros((8, D_MODEL), jnp.float32)
    w1 = jax.random.normal(ks[1], (D_MODEL, D_FF), jnp.float32) * scale
    b1 = jnp.zeros((D_FF,), jnp.float32)
    w2 = jax.random.normal(ks[2], (D_FF, D_MODEL), jnp.float32) * (1.0 / math.sqrt(D_FF))
    b2 = jnp.zeros((D_MODEL,), jnp.float32)
    # [g1, b1, g2, b2, g3, b3] for the three LayerNorms
    ln = jnp.stack([jnp.ones(D_MODEL), jnp.zeros(D_MODEL)] * 3).astype(jnp.float32)
    return (w_attn, b_attn, w1, b1, w2, b2, ln)


def pack_params(params_list):
    """Stack per-layer params on a leading L axis, fuse QKV weights, fold the
    1/sqrt(d_head) attention scale into the q projections, and concatenate the
    (layer-invariant-input) cross-attention KV weights along the lane axis so
    the kernel can project all layers' KV in one matmul."""
    scale = 1.0 / math.sqrt(D_HEAD)
    cols = {k: [] for k in ("w_qkv", "b_qkv", "w_os", "b_os", "w_qc", "b_qc",
                            "w_kvc", "b_kvc", "w_oc", "b_oc",
                            "w1", "b1", "w2", "b2", "ln")}
    for (w_attn, b_attn, w1, b1, w2, b2, ln) in params_list:
        cols["w_qkv"].append(jnp.concatenate(
            [w_attn[0] * scale, w_attn[1], w_attn[2]], axis=-1))
        cols["b_qkv"].append(jnp.concatenate(
            [b_attn[0] * scale, b_attn[1], b_attn[2]])[None, :])
        cols["w_os"].append(w_attn[3])
        cols["b_os"].append(b_attn[3][None, :])
        cols["w_qc"].append(w_attn[4] * scale)
        cols["b_qc"].append((b_attn[4] * scale)[None, :])
        cols["w_kvc"].append(jnp.concatenate([w_attn[5], w_attn[6]], axis=-1))
        cols["b_kvc"].append(jnp.concatenate([b_attn[5], b_attn[6]])[None, :])
        cols["w_oc"].append(w_attn[7])
        cols["b_oc"].append(b_attn[7][None, :])
        cols["w1"].append(w1)
        cols["b1"].append(b1.reshape(1, -1))
        cols["w2"].append(w2)
        cols["b2"].append(b2.reshape(1, -1))
        cols["ln"].append(ln.reshape(6, 1, -1))

    packed = {}
    for k in cols:
        if k in ("w_kvc", "b_kvc"):
            # lane-concatenate across layers: (D, L*2D) / (1, L*2D)
            packed[k] = jnp.concatenate(cols[k], axis=-1)
        else:
            packed[k] = jnp.stack(cols[k], axis=0)

    order = ("w_qkv", "b_qkv", "w_os", "b_os", "w_qc", "b_qc",
             "w_kvc", "b_kvc", "w_oc", "b_oc", "w1", "b1", "w2", "b2", "ln")
    return tuple(packed[k] for k in order)


# ----------------------------- pure-JAX reference ----------------------------
def _reference_layer(x, wtok, mask, params):
    w_attn, b_attn, w1, b1, w2, b2, ln = params

    def layer_norm(y, g, b):
        mu = jnp.mean(y, axis=-1, keepdims=True)
        var = jnp.mean((y - mu) ** 2, axis=-1, keepdims=True)
        return (y - mu) / jnp.sqrt(var + EPS) * g + b

    def mha(q, k, v, m):
        B = q.shape[0]

        def split(z):
            return z.reshape(B, -1, N_HEAD, D_HEAD).transpose(0, 2, 1, 3)

        qh, kh, vh = split(q), split(k), split(v)
        s = jnp.einsum("bhqd,bhkd->bhqk", qh, kh) / math.sqrt(D_HEAD)
        if m is not None:
            s = s + m
        p = jax.nn.softmax(s, axis=-1)
        o = jnp.einsum("bhqk,bhkd->bhqd", p, vh)
        return o.transpose(0, 2, 1, 3).reshape(B, -1, D_MODEL)

    q = x @ w_attn[0] + b_attn[0]
    k = x @ w_attn[1] + b_attn[1]
    v = x @ w_attn[2] + b_attn[2]
    a = mha(q, k, v, mask) @ w_attn[3] + b_attn[3]
    x = layer_norm(x + a, ln[0], ln[1])

    q = x @ w_attn[4] + b_attn[4]
    k = wtok @ w_attn[5] + b_attn[5]
    v = wtok @ w_attn[6] + b_attn[6]
    c = mha(q, k, v, None) @ w_attn[7] + b_attn[7]
    x = layer_norm(x + c, ln[2], ln[3])

    h = jnp.maximum(x @ w1 + b1, 0.0)
    f = h @ w2 + b2
    return layer_norm(x + f, ln[4], ln[5])


def reference_forward(params_list, src, word_tokens=None, src_mask=None):
    if word_tokens is None:
        word_tokens = src
    out = src
    for p in params_list:
        out = _reference_layer(out, word_tokens, src_mask, p)
    return out


# ----------------------------- main ------------------------------------------
if __name__ == "__main__":
    key = jax.random.PRNGKey(0)
    k_src, k_word, k_p = jax.random.split(key, 3)

    src = jax.random.normal(k_src, (BATCH, SEQ, D_MODEL), jnp.float32)
    word_tokens = jax.random.normal(k_word, (BATCH, TOK, D_MODEL), jnp.float32)

    # num_layers deep copies of the same refined layer (same weights),
    # matching _get_clones(module, N) semantics.
    layer_params = init_layer_params(k_p)
    params_list = [layer_params for _ in range(NUM_LAYERS)]
    packed = pack_params(params_list)

    # --- no-mask fast path (src_mask=None default of the module) ---
    out = refined_transformer_forward(packed, src, word_tokens=word_tokens,
                                      src_mask=None)
    out = jax.block_until_ready(out)
    ref = reference_forward(params_list, src, word_tokens=word_tokens,
                            src_mask=None)
    assert out.shape == (BATCH, SEQ, D_MODEL)
    assert bool(jnp.all(jnp.isfinite(out)))
    err = float(jnp.max(jnp.abs(out - ref)))
    assert err < 5e-2, f"no-mask path mismatch vs reference: {err}"

    # --- masked path (additive causal-style mask) ---
    causal = jnp.where(jnp.arange(SEQ)[:, None] >= jnp.arange(SEQ)[None, :],
                       0.0, -1e9).astype(jnp.float32)
    out_m = refined_transformer_forward(packed, src, word_tokens=word_tokens,
                                        src_mask=causal)
    out_m = jax.block_until_ready(out_m)
    ref_m = reference_forward(params_list, src, word_tokens=word_tokens,
                              src_mask=causal)
    err_m = float(jnp.max(jnp.abs(out_m - ref_m)))
    assert bool(jnp.all(jnp.isfinite(out_m)))
    assert err_m < 5e-2, f"masked path mismatch vs reference: {err_m}"

    print("KERNEL_OK")
</pallas_src>

<mosaic_0001>
module attributes {stable_mosaic.version = 11 : i64} {
  func.func @_kernel_no_mask(%arg0: memref<16x32xf32, #tpu.memory_space<vmem>>, %arg1: memref<16x32xf32, #tpu.memory_space<vmem>>, %arg2: memref<2x32x96xf32, #tpu.memory_space<vmem>>, %arg3: memref<2x1x96xf32, #tpu.memory_space<vmem>>, %arg4: memref<2x32x32xf32, #tpu.memory_space<vmem>>, %arg5: memref<2x1x32xf32, #tpu.memory_space<vmem>>, %arg6: memref<2x32x32xf32, #tpu.memory_space<vmem>>, %arg7: memref<2x1x32xf32, #tpu.memory_space<vmem>>, %arg8: memref<32x128xf32, #tpu.memory_space<vmem>>, %arg9: memref<1x128xf32, #tpu.memory_space<vmem>>, %arg10: memref<2x32x32xf32, #tpu.memory_space<vmem>>, %arg11: memref<2x1x32xf32, #tpu.memory_space<vmem>>, %arg12: memref<2x32x64xf32, #tpu.memory_space<vmem>>, %arg13: memref<2x1x64xf32, #tpu.memory_space<vmem>>, %arg14: memref<2x64x32xf32, #tpu.memory_space<vmem>>, %arg15: memref<2x1x32xf32, #tpu.memory_space<vmem>>, %arg16: memref<2x6x1x32xf32, #tpu.memory_space<vmem>>, %arg17: memref<16x32xf32, #tpu.memory_space<vmem>>) attributes {dimension_semantics = [], scalar_prefetch = 0 : i64, scratch_operands = 0 : i64, tpu.core_type = #tpu.core_type<tc>} {
    %c0 = arith.constant 0 : index
    %c0_0 = arith.constant 0 : index
    %0 = vector.load %arg0[%c0, %c0_0] : memref<16x32xf32, #tpu.memory_space<vmem>>, vector<16x32xf32>
    %c0_1 = arith.constant 0 : index
    %c0_2 = arith.constant 0 : index
    %1 = vector.load %arg1[%c0_1, %c0_2] : memref<16x32xf32, #tpu.memory_space<vmem>>, vector<16x32xf32>
    %c0_3 = arith.constant 0 : index
    %c0_4 = arith.constant 0 : index
    %2 = vector.load %arg8[%c0_3, %c0_4] : memref<32x128xf32, #tpu.memory_space<vmem>>, vector<32x128xf32>
    %cst = arith.constant dense<0.000000e+00> : vector<16x128xf32>
    %3 = tpu.matmul %1, %2, %cst {dimension_numbers = #tpu.dot_dimension_numbers<[1], [0], [0], [1], [0, 0, 1, 1], [], []>} : vector<16x32xf32>, vector<32x128xf32>, vector<16x128xf32> -> vector<16x128xf32>
    %c0_5 = arith.constant 0 : index
    %c0_6 = arith.constant 0 : index
    %4 = vector.load %arg9[%c0_5, %c0_6] : memref<1x128xf32, #tpu.memory_space<vmem>>, vector<1x128xf32>
    %5 = vector.broadcast %4 : vector<1x128xf32> to vector<16x128xf32>
    %6 = arith.addf %3, %5 : vector<16x128xf32>
    %c0_7 = arith.constant 0 : index
    %c0_8 = arith.constant 0 : index
    %c0_9 = arith.constant 0 : index
    %7 = vector.load %arg2[%c0_7, %c0_8, %c0_9] : memref<2x32x96xf32, #tpu.memory_space<vmem>>, vector<1x32x96xf32>
    %8 = vector.shape_cast %7 : vector<1x32x96xf32> to vector<32x96xf32>
    %cst_10 = arith.constant dense<0.000000e+00> : vector<16x96xf32>
    %9 = tpu.matmul %0, %8, %cst_10 {dimension_numbers = #tpu.dot_dimension_numbers<[1], [0], [0], [1], [0, 0, 1, 1], [], []>} : vector<16x32xf32>, vector<32x96xf32>, vector<16x96xf32> -> vector<16x96xf32>
    %c0_11 = arith.constant 0 : index
    %c0_12 = arith.constant 0 : index
    %c0_13 = arith.constant 0 : index
    %10 = vector.load %arg3[%c0_11, %c0_12, %c0_13] : memref<2x1x96xf32, #tpu.memory_space<vmem>>, vector<1x1x96xf32>
    %11 = vector.shape_cast %10 : vector<1x1x96xf32> to vector<1x96xf32>
    %12 = vector.broadcast %11 : vector<1x96xf32> to vector<16x96xf32>
    %13 = arith.addf %9, %12 : vector<16x96xf32>
    %c0_14 = arith.constant 0 : index
    %c0_15 = arith.constant 0 : index
    %c0_16 = arith.constant 0 : index
    %14 = vector.load %arg5[%c0_14, %c0_15, %c0_16] : memref<2x1x32xf32, #tpu.memory_space<vmem>>, vector<1x1x32xf32>
    %15 = vector.shape_cast %14 : vector<1x1x32xf32> to vector<1x32xf32>
    %16 = vector.shape_cast %13 : vector<16x96xf32> to vector<2x8x96xf32>
    %17 = vector.shape_cast %13 : vector<16x96xf32> to vector<2x8x96xf32>
    %18 = vector.shape_cast %15 : vector<1x32xf32> to vector<1x32xf32>
    %19 = vector.broadcast %18 : vector<1x32xf32> to vector<16x32xf32>
    %20 = vector.extract_strided_slice %16 {offsets = [0, 0, 0], sizes = [2, 8, 8], strides = [1, 1, 1]} : vector<2x8x96xf32> to vector<2x8x8xf32>
    %21 = vector.extract_strided_slice %17 {offsets = [0, 0, 32], sizes = [2, 8, 8], strides = [1, 1, 1]} : vector<2x8x96xf32> to vector<2x8x8xf32>
    %22 = vector.extract_strided_slice %17 {offsets = [0, 0, 64], sizes = [2, 8, 8], strides = [1, 1, 1]} : vector<2x8x96xf32> to vector<2x8x8xf32>
    "tpu.trace_start"() <{level = 10 : i32, message = "bqd,bkd->bqk"}> : () -> ()
    %cst_17 = arith.constant dense<0.000000e+00> : vector<2x8x8xf32>
    %23 = tpu.matmul %20, %21, %cst_17 {dimension_numbers = #tpu.dot_dimension_numbers<[2], [2], [1], [1], [0, 0, 0, 1, 1, 1], [0], [0]>} : vector<2x8x8xf32>, vector<2x8x8xf32>, vector<2x8x8xf32> -> vector<2x8x8xf32>
    "tpu.trace_stop"() : () -> ()
    %cst_18 = arith.constant dense<0xFF800000> : vector<2x8xf32>
    %24 = vector.multi_reduction <maximumf>, %23, %cst_18 [2] : vector<2x8x8xf32> to vector<2x8xf32>
    %25 = vector.shape_cast %24 : vector<2x8xf32> to vector<2x8x1xf32>
    %26 = vector.broadcast %25 : vector<2x8x1xf32> to vector<2x8x8xf32>
    %27 = arith.subf %23, %26 : vector<2x8x8xf32>
    %28 = math.exp %27 : vector<2x8x8xf32>
    %cst_19 = arith.constant dense<0.000000e+00> : vector<2x8xf32>
    %29 = vector.multi_reduction <add>, %28, %cst_19 [2] : vector<2x8x8xf32> to vector<2x8xf32>
    %30 = vector.shape_cast %29 : vector<2x8xf32> to vector<2x8x1xf32>
    %31 = tpu.reciprocal %30 {approx = true} : vector<2x8x1xf32> -> vector<2x8x1xf32>
    %32 = vector.broadcast %31 : vector<2x8x1xf32> to vector<2x8x8xf32>
    %33 = arith.mulf %28, %32 : vector<2x8x8xf32>
    "tpu.trace_start"() <{level = 10 : i32, message = "bqk,bkd->bqd"}> : () -> ()
    %cst_20 = arith.constant dense<0.000000e+00> : vector<2x8x8xf32>
    %34 = tpu.matmul %33, %22, %cst_20 {dimension_numbers = #tpu.dot_dimension_numbers<[2], [1], [1], [2], [0, 0, 0, 1, 1, 2], [0], [0]>} : vector<2x8x8xf32>, vector<2x8x8xf32>, vector<2x8x8xf32> -> vector<2x8x8xf32>
    "tpu.trace_stop"() : () -> ()
    %35 = vector.shape_cast %34 : vector<2x8x8xf32> to vector<16x8xf32>
    %c0_i32 = arith.constant 0 : i32
    %c0_i32_21 = arith.constant 0 : i32
    %c0_i32_22 = arith.constant 0 : i32
    %36 = tpu.memref_slice %arg4[%c0_i32, %c0_i32_21, %c0_i32_22] : memref<2x32x32xf32, #tpu.memory_space<vmem>> -> memref<1x32x32xf32, #tpu.memory_space<vmem>>
    %37 = tpu.memref_squeeze %36 : memref<1x32x32xf32, #tpu.memory_space<vmem>> -> memref<32x32xf32, #tpu.memory_space<vmem>>
    %c0_23 = arith.constant 0 : index
    %c0_24 = arith.constant 0 : index
    %38 = vector.load %37[%c0_23, %c0_24] : memref<32x32xf32, #tpu.memory_space<vmem>>, vector<8x32xf32>
    %cst_25 = arith.constant dense<0.000000e+00> : vector<16x32xf32>
    %39 = tpu.matmul %35, %38, %cst_25 {dimension_numbers = #tpu.dot_dimension_numbers<[1], [0], [0], [1], [0, 0, 1, 1], [], []>} : vector<16x8xf32>, vector<8x32xf32>, vector<16x32xf32> -> vector<16x32xf32>
    %40 = arith.addf %19, %39 : vector<16x32xf32>
    %41 = vector.extract_strided_slice %16 {offsets = [0, 0, 8], sizes = [2, 8, 8], strides = [1, 1, 1]} : vector<2x8x96xf32> to vector<2x8x8xf32>
    %42 = vector.extract_strided_slice %17 {offsets = [0, 0, 40], sizes = [2, 8, 8], strides = [1, 1, 1]} : vector<2x8x96xf32> to vector<2x8x8xf32>
    %43 = vector.extract_strided_slice %17 {offsets = [0, 0, 72], sizes = [2, 8, 8], strides = [1, 1, 1]} : vector<2x8x96xf32> to vector<2x8x8xf32>
    "tpu.trace_start"() <{level = 10 : i32, message = "bqd,bkd->bqk"}> : () -> ()
    %cst_26 = arith.constant dense<0.000000e+00> : vector<2x8x8xf32>
    %44 = tpu.matmul %41, %42, %cst_26 {dimension_numbers = #tpu.dot_dimension_numbers<[2], [2], [1], [1], [0, 0, 0, 1, 1, 1], [0], [0]>} : vector<2x8x8xf32>, vector<2x8x8xf32>, vector<2x8x8xf32> -> vector<2x8x8xf32>
    "tpu.trace_stop"() : () -> ()
    %cst_27 = arith.constant dense<0xFF800000> : vector<2x8xf32>
    %45 = vector.multi_reduction <maximumf>, %44, %cst_27 [2] : vector<2x8x8xf32> to vector<2x8xf32>
    %46 = vector.shape_cast %45 : vector<2x8xf32> to vector<2x8x1xf32>
    %47 = vector.broadcast %46 : vector<2x8x1xf32> to vector<2x8x8xf32>
    %48 = arith.subf %44, %47 : vector<2x8x8xf32>
    %49 = math.exp %48 : vector<2x8x8xf32>
    %cst_28 = arith.constant dense<0.000000e+00> : vector<2x8xf32>
    %50 = vector.multi_reduction <add>, %49, %cst_28 [2] : vector<2x8x8xf32> to vector<2x8xf32>
    %51 = vector.shape_cast %50 : vector<2x8xf32> to vector<2x8x1xf32>
    %52 = tpu.reciprocal %51 {approx = true} : vector<2x8x1xf32> -> vector<2x8x1xf32>
    %53 = vector.broadcast %52 : vector<2x8x1xf32> to vector<2x8x8xf32>
    %54 = arith.mulf %49, %53 : vector<2x8x8xf32>
    "tpu.trace_start"() <{level = 10 : i32, message = "bqk,bkd->bqd"}> : () -> ()
    %cst_29 = arith.constant dense<0.000000e+00> : vector<2x8x8xf32>
    %55 = tpu.matmul %54, %43, %cst_29 {dimension_numbers = #tpu.dot_dimension_numbers<[2], [1], [1], [2], [0, 0, 0, 1, 1, 2], [0], [0]>} : vector<2x8x8xf32>, vector<2x8x8xf32>, vector<2x8x8xf32> -> vector<2x8x8xf32>
    "tpu.trace_stop"() : () -> ()
    %56 = vector.shape_cast %55 : vector<2x8x8xf32> to vector<16x8xf32>
    %c0_i32_30 = arith.constant 0 : i32
    %c0_i32_31 = arith.constant 0 : i32
    %c0_i32_32 = arith.constant 0 : i32
    %57 = tpu.memref_slice %arg4[%c0_i32_30, %c0_i32_31, %c0_i32_32] : memref<2x32x32xf32, #tpu.memory_space<vmem>> -> memref<1x32x32xf32, #tpu.memory_space<vmem>>
    %58 = tpu.memref_squeeze %57 : memref<1x32x32xf32, #tpu.memory_space<vmem>> -> memref<32x32xf32, #tpu.memory_space<vmem>>
    %c8 = arith.constant 8 : index
    %c0_33 = arith.constant 0 : index
    %59 = vector.load %58[%c8, %c0_33] : memref<32x32xf32, #tpu.memory_space<vmem>>, vector<8x32xf32>
    %cst_34 = arith.constant dense<0.000000e+00> : vector<16x32xf32>
    %60 = tpu.matmul %56, %59, %cst_34 {dimension_numbers = #tpu.dot_dimension_numbers<[1], [0], [0], [1], [0, 0, 1, 1], [], []>} : vector<16x8xf32>, vector<8x32xf32>, vector<16x32xf32> -> vector<16x32xf32>
    %61 = arith.addf %40, %60 : vector<16x32xf32>
    %62 = vector.extract_strided_slice %16 {offsets = [0, 0, 16], sizes = [2, 8, 8], strides = [1, 1, 1]} : vector<2x8x96xf32> to vector<2x8x8xf32>
    %63 = vector.extract_strided_slice %17 {offsets = [0, 0, 48], sizes = [2, 8, 8], strides = [1, 1, 1]} : vector<2x8x96xf32> to vector<2x8x8xf32>
    %64 = vector.extract_strided_slice %17 {offsets = [0, 0, 80], sizes = [2, 8, 8], strides = [1, 1, 1]} : vector<2x8x96xf32> to vector<2x8x8xf32>
    "tpu.trace_start"() <{level = 10 : i32, message = "bqd,bkd->bqk"}> : () -> ()
    %cst_35 = arith.constant dense<0.000000e+00> : vector<2x8x8xf32>
    %65 = tpu.matmul %62, %63, %cst_35 {dimension_numbers = #tpu.dot_dimension_numbers<[2], [2], [1], [1], [0, 0, 0, 1, 1, 1], [0], [0]>} : vector<2x8x8xf32>, vector<2x8x8xf32>, vector<2x8x8xf32> -> vector<2x8x8xf32>
    "tpu.trace_stop"() : () -> ()
    %cst_36 = arith.constant dense<0xFF800000> : vector<2x8xf32>
    %66 = vector.multi_reduction <maximumf>, %65, %cst_36 [2] : vector<2x8x8xf32> to vector<2x8xf32>
    %67 = vector.shape_cast %66 : vector<2x8xf32> to vector<2x8x1xf32>
    %68 = vector.broadcast %67 : vector<2x8x1xf32> to vector<2x8x8xf32>
    %69 = arith.subf %65, %68 : vector<2x8x8xf32>
    %70 = math.exp %69 : vector<2x8x8xf32>
    %cst_37 = arith.constant dense<0.000000e+00> : vector<2x8xf32>
    %71 = vector.multi_reduction <add>, %70, %cst_37 [2] : vector<2x8x8xf32> to vector<2x8xf32>
    %72 = vector.shape_cast %71 : vector<2x8xf32> to vector<2x8x1xf32>
    %73 = tpu.reciprocal %72 {approx = true} : vector<2x8x1xf32> -> vector<2x8x1xf32>
    %74 = vector.broadcast %73 : vector<2x8x1xf32> to vector<2x8x8xf32>
    %75 = arith.mulf %70, %74 : vector<2x8x8xf32>
    "tpu.trace_start"() <{level = 10 : i32, message = "bqk,bkd->bqd"}> : () -> ()
    %cst_38 = arith.constant dense<0.000000e+00> : vector<2x8x8xf32>
    %76 = tpu.matmul %75, %64, %cst_38 {dimension_numbers = #tpu.dot_dimension_numbers<[2], [1], [1], [2], [0, 0, 0, 1, 1, 2], [0], [0]>} : vector<2x8x8xf32>, vector<2x8x8xf32>, vector<2x8x8xf32> -> vector<2x8x8xf32>
    "tpu.trace_stop"() : () -> ()
    %77 = vector.shape_cast %76 : vector<2x8x8xf32> to vector<16x8xf32>
    %c0_i32_39 = arith.constant 0 : i32
    %c0_i32_40 = arith.constant 0 : i32
    %c0_i32_41 = arith.constant 0 : i32
    %78 = tpu.memref_slice %arg4[%c0_i32_39, %c0_i32_40, %c0_i32_41] : memref<2x32x32xf32, #tpu.memory_space<vmem>> -> memref<1x32x32xf32, #tpu.memory_space<vmem>>
    %79 = tpu.memref_squeeze %78 : memref<1x32x32xf32, #tpu.memory_space<vmem>> -> memref<32x32xf32, #tpu.memory_space<vmem>>
    %c16 = arith.constant 16 : index
    %c0_42 = arith.constant 0 : index
    %80 = vector.load %79[%c16, %c0_42] : memref<32x32xf32, #tpu.memory_space<vmem>>, vector<8x32xf32>
    %cst_43 = arith.constant dense<0.000000e+00> : vector<16x32xf32>
    %81 = tpu.matmul %77, %80, %cst_43 {dimension_numbers = #tpu.dot_dimension_numbers<[1], [0], [0], [1], [0, 0, 1, 1], [], []>} : vector<16x8xf32>, vector<8x32xf32>, vector<16x32xf32> -> vector<16x32xf32>
    %82 = arith.addf %61, %81 : vector<16x32xf32>
    %83 = vector.extract_strided_slice %16 {offsets = [0, 0, 24], sizes = [2, 8, 8], strides = [1, 1, 1]} : vector<2x8x96xf32> to vector<2x8x8xf32>
    %84 = vector.extract_strided_slice %17 {offsets = [0, 0, 56], sizes = [2, 8, 8], strides = [1, 1, 1]} : vector<2x8x96xf32> to vector<2x8x8xf32>
    %85 = vector.extract_strided_slice %17 {offsets = [0, 0, 88], sizes = [2, 8, 8], strides = [1, 1, 1]} : vector<2x8x96xf32> to vector<2x8x8xf32>
    "tpu.trace_start"() <{level = 10 : i32, message = "bqd,bkd->bqk"}> : () -> ()
    %cst_44 = arith.constant dense<0.000000e+00> : vector<2x8x8xf32>
    %86 = tpu.matmul %83, %84, %cst_44 {dimension_numbers = #tpu.dot_dimension_numbers<[2], [2], [1], [1], [0, 0, 0, 1, 1, 1], [0], [0]>} : vector<2x8x8xf32>, vector<2x8x8xf32>, vector<2x8x8xf32> -> vector<2x8x8xf32>
    "tpu.trace_stop"() : () -> ()
    %cst_45 = arith.constant dense<0xFF800000> : vector<2x8xf32>
    %87 = vector.multi_reduction <maximumf>, %86, %cst_45 [2] : vector<2x8x8xf32> to vector<2x8xf32>
    %88 = vector.shape_cast %87 : vector<2x8xf32> to vector<2x8x1xf32>
    %89 = vector.broadcast %88 : vector<2x8x1xf32> to vector<2x8x8xf32>
    %90 = arith.subf %86, %89 : vector<2x8x8xf32>
    %91 = math.exp %90 : vector<2x8x8xf32>
    %cst_46 = arith.constant dense<0.000000e+00> : vector<2x8xf32>
    %92 = vector.multi_reduction <add>, %91, %cst_46 [2] : vector<2x8x8xf32> to vector<2x8xf32>
    %93 = vector.shape_cast %92 : vector<2x8xf32> to vector<2x8x1xf32>
    %94 = tpu.reciprocal %93 {approx = true} : vector<2x8x1xf32> -> vector<2x8x1xf32>
    %95 = vector.broadcast %94 : vector<2x8x1xf32> to vector<2x8x8xf32>
    %96 = arith.mulf %91, %95 : vector<2x8x8xf32>
    "tpu.trace_start"() <{level = 10 : i32, message = "bqk,bkd->bqd"}> : () -> ()
    %cst_47 = arith.constant dense<0.000000e+00> : vector<2x8x8xf32>
    %97 = tpu.matmul %96, %85, %cst_47 {dimension_numbers = #tpu.dot_dimension_numbers<[2], [1], [1], [2], [0, 0, 0, 1, 1, 2], [0], [0]>} : vector<2x8x8xf32>, vector<2x8x8xf32>, vector<2x8x8xf32> -> vector<2x8x8xf32>
    "tpu.trace_stop"() : () -> ()
    %98 = vector.shape_cast %97 : vector<2x8x8xf32> to vector<16x8xf32>
    %c0_i32_48 = arith.constant 0 : i32
    %c0_i32_49 = arith.constant 0 : i32
    %c0_i32_50 = arith.constant 0 : i32
    %99 = tpu.memref_slice %arg4[%c0_i32_48, %c0_i32_49, %c0_i32_50] : memref<2x32x32xf32, #tpu.memory_space<vmem>> -> memref<1x32x32xf32, #tpu.memory_space<vmem>>
    %100 = tpu.memref_squeeze %99 : memref<1x32x32xf32, #tpu.memory_space<vmem>> -> memref<32x32xf32, #tpu.memory_space<vmem>>
    %c24 = arith.constant 24 : index
    %c0_51 = arith.constant 0 : index
    %101 = vector.load %100[%c24, %c0_51] : memref<32x32xf32, #tpu.memory_space<vmem>>, vector<8x32xf32>
    %cst_52 = arith.constant dense<0.000000e+00> : vector<16x32xf32>
    %102 = tpu.matmul %98, %101, %cst_52 {dimension_numbers = #tpu.dot_dimension_numbers<[1], [0], [0], [1], [0, 0, 1, 1], [], []>} : vector<16x8xf32>, vector<8x32xf32>, vector<16x32xf32> -> vector<16x32xf32>
    %103 = arith.addf %82, %102 : vector<16x32xf32>
    %104 = arith.addf %0, %103 : vector<16x32xf32>
    %c0_53 = arith.constant 0 : index
    %c0_54 = arith.constant 0 : index
    %c0_55 = arith.constant 0 : index
    %c0_56 = arith.constant 0 : index
    %105 = vector.load %arg16[%c0_53, %c0_54, %c0_55, %c0_56] : memref<2x6x1x32xf32, #tpu.memory_space<vmem>>, vector<1x1x1x32xf32>
    %106 = vector.shape_cast %105 : vector<1x1x1x32xf32> to vector<1x32xf32>
    %c0_57 = arith.constant 0 : index
    %c1 = arith.constant 1 : index
    %c0_58 = arith.constant 0 : index
    %c0_59 = arith.constant 0 : index
    %107 = vector.load %arg16[%c0_57, %c1, %c0_58, %c0_59] : memref<2x6x1x32xf32, #tpu.memory_space<vmem>>, vector<1x1x1x32xf32>
    %108 = vector.shape_cast %107 : vector<1x1x1x32xf32> to vector<1x32xf32>
    %cst_60 = arith.constant dense<0.000000e+00> : vector<16xf32>
    %109 = vector.multi_reduction <add>, %104, %cst_60 [1] : vector<16x32xf32> to vector<16xf32>
    %110 = vector.shape_cast %109 : vector<16xf32> to vector<16x1xf32>
    %cst_61 = arith.constant 3.200000e+01 : f32
    %111 = vector.broadcast %cst_61 : f32 to vector<16x1xf32>
    %112 = arith.divf %110, %111 : vector<16x1xf32>
    %113 = vector.broadcast %112 : vector<16x1xf32> to vector<16x32xf32>
    %114 = arith.subf %104, %113 : vector<16x32xf32>
    %115 = arith.mulf %114, %114 : vector<16x32xf32>
    %cst_62 = arith.constant dense<0.000000e+00> : vector<16xf32>
    %116 = vector.multi_reduction <add>, %115, %cst_62 [1] : vector<16x32xf32> to vector<16xf32>
    %117 = vector.shape_cast %116 : vector<16xf32> to vector<16x1xf32>
    %cst_63 = arith.constant 3.200000e+01 : f32
    %118 = vector.broadcast %cst_63 : f32 to vector<16x1xf32>
    %119 = arith.divf %117, %118 : vector<16x1xf32>
    %120 = vector.broadcast %112 : vector<16x1xf32> to vector<16x32xf32>
    %121 = arith.subf %104, %120 : vector<16x32xf32>
    %cst_64 = arith.constant 9.99999974E-6 : f32
    %122 = vector.broadcast %cst_64 : f32 to vector<16x1xf32>
    %123 = arith.addf %119, %122 : vector<16x1xf32>
    %124 = math.rsqrt %123 : vector<16x1xf32>
    %125 = vector.broadcast %124 : vector<16x1xf32> to vector<16x32xf32>
    %126 = arith.mulf %121, %125 : vector<16x32xf32>
    %127 = vector.broadcast %106 : vector<1x32xf32> to vector<16x32xf32>
    %128 = arith.mulf %126, %127 : vector<16x32xf32>
    %129 = vector.broadcast %108 : vector<1x32xf32> to vector<16x32xf32>
    %130 = arith.addf %128, %129 : vector<16x32xf32>
    %c0_65 = arith.constant 0 : index
    %c0_66 = arith.constant 0 : index
    %c0_67 = arith.constant 0 : index
    %131 = vector.load %arg6[%c0_65, %c0_66, %c0_67] : memref<2x32x32xf32, #tpu.memory_space<vmem>>, vector<1x32x32xf32>
    %132 = vector.shape_cast %131 : vector<1x32x32xf32> to vector<32x32xf32>
    %cst_68 = arith.constant dense<0.000000e+00> : vector<16x32xf32>
    %133 = tpu.matmul %130, %132, %cst_68 {dimension_numbers = #tpu.dot_dimension_numbers<[1], [0], [0], [1], [0, 0, 1, 1], [], []>} : vector<16x32xf32>, vector<32x32xf32>, vector<16x32xf32> -> vector<16x32xf32>
    %c0_69 = arith.constant 0 : index
    %c0_70 = arith.constant 0 : index
    %c0_71 = arith.constant 0 : index
    %134 = vector.load %arg7[%c0_69, %c0_70, %c0_71] : memref<2x1x32xf32, #tpu.memory_space<vmem>>, vector<1x1x32xf32>
    %135 = vector.shape_cast %134 : vector<1x1x32xf32> to vector<1x32xf32>
    %136 = vector.broadcast %135 : vector<1x32xf32> to vector<16x32xf32>
    %137 = arith.addf %133, %136 : vector<16x32xf32>
    %138 = vector.extract_strided_slice %6 {offsets = [0, 0], sizes = [16, 64], strides = [1, 1]} : vector<16x128xf32> to vector<16x64xf32>
    %c0_72 = arith.constant 0 : index
    %c0_73 = arith.constant 0 : index
    %c0_74 = arith.constant 0 : index
    %139 = vector.load %arg11[%c0_72, %c0_73, %c0_74] : memref<2x1x32xf32, #tpu.memory_space<vmem>>, vector<1x1x32xf32>
    %140 = vector.shape_cast %139 : vector<1x1x32xf32> to vector<1x32xf32>
    %141 = vector.shape_cast %137 : vector<16x32xf32> to vector<2x8x32xf32>
    %142 = vector.shape_cast %138 : vector<16x64xf32> to vector<2x8x64xf32>
    %143 = vector.shape_cast %140 : vector<1x32xf32> to vector<1x32xf32>
    %144 = vector.broadcast %143 : vector<1x32xf32> to vector<16x32xf32>
    %145 = vector.extract_strided_slice %141 {offsets = [0, 0, 0], sizes = [2, 8, 8], strides = [1, 1, 1]} : vector<2x8x32xf32> to vector<2x8x8xf32>
    %146 = vector.extract_strided_slice %142 {offsets = [0, 0, 0], sizes = [2, 8, 8], strides = [1, 1, 1]} : vector<2x8x64xf32> to vector<2x8x8xf32>
    %147 = vector.extract_strided_slice %142 {offsets = [0, 0, 32], sizes = [2, 8, 8], strides = [1, 1, 1]} : vector<2x8x64xf32> to vector<2x8x8xf32>
    "tpu.trace_start"() <{level = 10 : i32, message = "bqd,bkd->bqk"}> : () -> ()
    %cst_75 = arith.constant dense<0.000000e+00> : vector<2x8x8xf32>
    %148 = tpu.matmul %145, %146, %cst_75 {dimension_numbers = #tpu.dot_dimension_numbers<[2], [2], [1], [1], [0, 0, 0, 1, 1, 1], [0], [0]>} : vector<2x8x8xf32>, vector<2x8x8xf32>, vector<2x8x8xf32> -> vector<2x8x8xf32>
    "tpu.trace_stop"() : () -> ()
    %cst_76 = arith.constant dense<0xFF800000> : vector<2x8xf32>
    %149 = vector.multi_reduction <maximumf>, %148, %cst_76 [2] : vector<2x8x8xf32> to vector<2x8xf32>
    %150 = vector.shape_cast %149 : vector<2x8xf32> to vector<2x8x1xf32>
    %151 = vector.broadcast %150 : vector<2x8x1xf32> to vector<2x8x8xf32>
    %152 = arith.subf %148, %151 : vector<2x8x8xf32>
    %153 = math.exp %152 : vector<2x8x8xf32>
    %cst_77 = arith.constant dense<0.000000e+00> : vector<2x8xf32>
    %154 = vector.multi_reduction <add>, %153, %cst_77 [2] : vector<2x8x8xf32> to vector<2x8xf32>
    %155 = vector.shape_cast %154 : vector<2x8xf32> to vector<2x8x1xf32>
    %156 = tpu.reciprocal %155 {approx = true} : vector<2x8x1xf32> -> vector<2x8x1xf32>
    %157 = vector.broadcast %156 : vector<2x8x1xf32> to vector<2x8x8xf32>
    %158 = arith.mulf %153, %157 : vector<2x8x8xf32>
    "tpu.trace_start"() <{level = 10 : i32, message = "bqk,bkd->bqd"}> : () -> ()
    %cst_78 = arith.constant dense<0.000000e+00> : vector<2x8x8xf32>
    %159 = tpu.matmul %158, %147, %cst_78 {dimension_numbers = #tpu.dot_dimension_numbers<[2], [1], [1], [2], [0, 0, 0, 1, 1, 2], [0], [0]>} : vector<2x8x8xf32>, vector<2x8x8xf32>, vector<2x8x8xf32> -> vector<2x8x8xf32>
    "tpu.trace_stop"() : () -> ()
    %160 = vector.shape_cast %159 : vector<2x8x8xf32> to vector<16x8xf32>
    %c0_i32_79 = arith.constant 0 : i32
    %c0_i32_80 = arith.constant 0 : i32
    %c0_i32_81 = arith.constant 0 : i32
    %161 = tpu.memref_slice %arg10[%c0_i32_79, %c0_i32_80, %c0_i32_81] : memref<2x32x32xf32, #tpu.memory_space<vmem>> -> memref<1x32x32xf32, #tpu.memory_space<vmem>>
    %162 = tpu.memref_squeeze %161 : memref<1x32x32xf32, #tpu.memory_space<vmem>> -> memref<32x32xf32, #tpu.memory_space<vmem>>
    %c0_82 = arith.constant 0 : index
    %c0_83 = arith.constant 0 : index
    %163 = vector.load %162[%c0_82, %c0_83] : memref<32x32xf32, #tpu.memory_space<vmem>>, vector<8x32xf32>
    %cst_84 = arith.constant dense<0.000000e+00> : vector<16x32xf32>
    %164 = tpu.matmul %160, %163, %cst_84 {dimension_numbers = #tpu.dot_dimension_numbers<[1], [0], [0], [1], [0, 0, 1, 1], [], []>} : vector<16x8xf32>, vector<8x32xf32>, vector<16x32xf32> -> vector<16x32xf32>
    %165 = arith.addf %144, %164 : vector<16x32xf32>
    %166 = vector.extract_strided_slice %141 {offsets = [0, 0, 8], sizes = [2, 8, 8], strides = [1, 1, 1]} : vector<2x8x32xf32> to vector<2x8x8xf32>
    %167 = vector.extract_strided_slice %142 {offsets = [0, 0, 8], sizes = [2, 8, 8], strides = [1, 1, 1]} : vector<2x8x64xf32> to vector<2x8x8xf32>
    %168 = vector.extract_strided_slice %142 {offsets = [0, 0, 40], sizes = [2, 8, 8], strides = [1, 1, 1]} : vector<2x8x64xf32> to vector<2x8x8xf32>
    "tpu.trace_start"() <{level = 10 : i32, message = "bqd,bkd->bqk"}> : () -> ()
    %cst_85 = arith.constant dense<0.000000e+00> : vector<2x8x8xf32>
    %169 = tpu.matmul %166, %167, %cst_85 {dimension_numbers = #tpu.dot_dimension_numbers<[2], [2], [1], [1], [0, 0, 0, 1, 1, 1], [0], [0]>} : vector<2x8x8xf32>, vector<2x8x8xf32>, vector<2x8x8xf32> -> vector<2x8x8xf32>
    "tpu.trace_stop"() : () -> ()
    %cst_86 = arith.constant dense<0xFF800000> : vector<2x8xf32>
    %170 = vector.multi_reduction <maximumf>, %169, %cst_86 [2] : vector<2x8x8xf32> to vector<2x8xf32>
    %171 = vector.shape_cast %170 : vector<2x8xf32> to vector<2x8x1xf32>
    %172 = vector.broadcast %171 : vector<2x8x1xf32> to vector<2x8x8xf32>
    %173 = arith.subf %169, %172 : vector<2x8x8xf32>
    %174 = math.exp %173 : vector<2x8x8xf32>
    %cst_87 = arith.constant dense<0.000000e+00> : vector<2x8xf32>
    %175 = vector.multi_reduction <add>, %174, %cst_87 [2] : vector<2x8x8xf32> to vector<2x8xf32>
    %176 = vector.shape_cast %175 : vector<2x8xf32> to vector<2x8x1xf32>
    %177 = tpu.reciprocal %176 {approx = true} : vector<2x8x1xf32> -> vector<2x8x1xf32>
    %178 = vector.broadcast %177 : vector<2x8x1xf32> to vector<2x8x8xf32>
    %179 = arith.mulf %174, %178 : vector<2x8x8xf32>
    "tpu.trace_start"() <{level = 10 : i32, message = "bqk,bkd->bqd"}> : () -> ()
    %cst_88 = arith.constant dense<0.000000e+00> : vector<2x8x8xf32>
    %180 = tpu.matmul %179, %168, %cst_88 {dimension_numbers = #tpu.dot_dimension_numbers<[2], [1], [1], [2], [0, 0, 0, 1, 1, 2], [0], [0]>} : vector<2x8x8xf32>, vector<2x8x8xf32>, vector<2x8x8xf32> -> vector<2x8x8xf32>
    "tpu.trace_stop"() : () -> ()
    %181 = vector.shape_cast %180 : vector<2x8x8xf32> to vector<16x8xf32>
    %c0_i32_89 = arith.constant 0 : i32
    %c0_i32_90 = arith.constant 0 : i32
    %c0_i32_91 = arith.constant 0 : i32
    %182 = tpu.memref_slice %arg10[%c0_i32_89, %c0_i32_90, %c0_i32_91] : memref<2x32x32xf32, #tpu.memory_space<vmem>> -> memref<1x32x32xf32, #tpu.memory_space<vmem>>
    %183 = tpu.memref_squeeze %182 : memref<1x32x32xf32, #tpu.memory_space<vmem>> -> memref<32x32xf32, #tpu.memory_space<vmem>>
    %c8_92 = arith.constant 8 : index
    %c0_93 = arith.constant 0 : index
    %184 = vector.load %183[%c8_92, %c0_93] : memref<32x32xf32, #tpu.memory_space<vmem>>, vector<8x32xf32>
    %cst_94 = arith.constant dense<0.000000e+00> : vector<16x32xf32>
    %185 = tpu.matmul %181, %184, %cst_94 {dimension_numbers = #tpu.dot_dimension_numbers<[1], [0], [0], [1], [0, 0, 1, 1], [], []>} : vector<16x8xf32>, vector<8x32xf32>, vector<16x32xf32> -> vector<16x32xf32>
    %186 = arith.addf %165, %185 : vector<16x32xf32>
    %187 = vector.extract_strided_slice %141 {offsets = [0, 0, 16], sizes = [2, 8, 8], strides = [1, 1, 1]} : vector<2x8x32xf32> to vector<2x8x8xf32>
    %188 = vector.extract_strided_slice %142 {offsets = [0, 0, 16], sizes = [2, 8, 8], strides = [1, 1, 1]} : vector<2x8x64xf32> to vector<2x8x8xf32>
    %189 = vector.extract_strided_slice %142 {offsets = [0, 0, 48], sizes = [2, 8, 8], strides = [1, 1, 1]} : vector<2x8x64xf32> to vector<2x8x8xf32>
    "tpu.trace_start"() <{level = 10 : i32, message = "bqd,bkd->bqk"}> : () -> ()
    %cst_95 = arith.constant dense<0.000000e+00> : vector<2x8x8xf32>
    %190 = tpu.matmul %187, %188, %cst_95 {dimension_numbers = #tpu.dot_dimension_numbers<[2], [2], [1], [1], [0, 0, 0, 1, 1, 1], [0], [0]>} : vector<2x8x8xf32>, vector<2x8x8xf32>, vector<2x8x8xf32> -> vector<2x8x8xf32>
    "tpu.trace_stop"() : () -> ()
    %cst_96 = arith.constant dense<0xFF800000> : vector<2x8xf32>
    %191 = vector.multi_reduction <maximumf>, %190, %cst_96 [2] : vector<2x8x8xf32> to vector<2x8xf32>
    %192 = vector.shape_cast %191 : vector<2x8xf32> to vector<2x8x1xf32>
    %193 = vector.broadcast %192 : vector<2x8x1xf32> to vector<2x8x8xf32>
    %194 = arith.subf %190, %193 : vector<2x8x8xf32>
    %195 = math.exp %194 : vector<2x8x8xf32>
    %cst_97 = arith.constant dense<0.000000e+00> : vector<2x8xf32>
    %196 = vector.multi_reduction <add>, %195, %cst_97 [2] : vector<2x8x8xf32> to vector<2x8xf32>
    %197 = vector.shape_cast %196 : vector<2x8xf32> to vector<2x8x1xf32>
    %198 = tpu.reciprocal %197 {approx = true} : vector<2x8x1xf32> -> vector<2x8x1xf32>
    %199 = vector.broadcast %198 : vector<2x8x1xf32> to vector<2x8x8xf32>
    %200 = arith.mulf %195, %199 : vector<2x8x8xf32>
    "tpu.trace_start"() <{level = 10 : i32, message = "bqk,bkd->bqd"}> : () -> ()
    %cst_98 = arith.constant dense<0.000000e+00> : vector<2x8x8xf32>
    %201 = tpu.matmul %200, %189, %cst_98 {dimension_numbers = #tpu.dot_dimension_numbers<[2], [1], [1], [2], [0, 0, 0, 1, 1, 2], [0], [0]>} : vector<2x8x8xf32>, vector<2x8x8xf32>, vector<2x8x8xf32> -> vector<2x8x8xf32>
    "tpu.trace_stop"() : () -> ()
    %202 = vector.shape_cast %201 : vector<2x8x8xf32> to vector<16x8xf32>
    %c0_i32_99 = arith.constant 0 : i32
    %c0_i32_100 = arith.constant 0 : i32
    %c0_i32_101 = arith.constant 0 : i32
    %203 = tpu.memref_slice %arg10[%c0_i32_99, %c0_i32_100, %c0_i32_101] : memref<2x32x32xf32, #tpu.memory_space<vmem>> -> memref<1x32x32xf32, #tpu.memory_space<vmem>>
    %204 = tpu.memref_squeeze %203 : memref<1x32x32xf32, #tpu.memory_space<vmem>> -> memref<32x32xf32, #tpu.memory_space<vmem>>
    %c16_102 = arith.constant 16 : index
    %c0_103 = arith.constant 0 : index
    %205 = vector.load %204[%c16_102, %c0_103] : memref<32x32xf32, #tpu.memory_space<vmem>>, vector<8x32xf32>
    %cst_104 = arith.constant dense<0.000000e+00> : vector<16x32xf32>
    %206 = tpu.matmul %202, %205, %cst_104 {dimension_numbers = #tpu.dot_dimension_numbers<[1], [0], [0], [1], [0, 0, 1, 1], [], []>} : vector<16x8xf32>, vector<8x32xf32>, vector<16x32xf32> -> vector<16x32xf32>
    %207 = arith.addf %186, %206 : vector<16x32xf32>
    %208 = vector.extract_strided_slice %141 {offsets = [0, 0, 24], sizes = [2, 8, 8], strides = [1, 1, 1]} : vector<2x8x32xf32> to vector<2x8x8xf32>
    %209 = vector.extract_strided_slice %142 {offsets = [0, 0, 24], sizes = [2, 8, 8], strides = [1, 1, 1]} : vector<2x8x64xf32> to vector<2x8x8xf32>
    %210 = vector.extract_strided_slice %142 {offsets = [0, 0, 56], sizes = [2, 8, 8], strides = [1, 1, 1]} : vector<2x8x64xf32> to vector<2x8x8xf32>
    "tpu.trace_start"() <{level = 10 : i32, message = "bqd,bkd->bqk"}> : () -> ()
    %cst_105 = arith.constant dense<0.000000e+00> : vector<2x8x8xf32>
    %211 = tpu.matmul %208, %209, %cst_105 {dimension_numbers = #tpu.dot_dimension_numbers<[2], [2], [1], [1], [0, 0, 0, 1, 1, 1], [0], [0]>} : vector<2x8x8xf32>, vector<2x8x8xf32>, vector<2x8x8xf32> -> vector<2x8x8xf32>
    "tpu.trace_stop"() : () -> ()
    %cst_106 = arith.constant dense<0xFF800000> : vector<2x8xf32>
    %212 = vector.multi_reduction <maximumf>, %211, %cst_106 [2] : vector<2x8x8xf32> to vector<2x8xf32>
    %213 = vector.shape_cast %212 : vector<2x8xf32> to vector<2x8x1xf32>
    %214 = vector.broadcast %213 : vector<2x8x1xf32> to vector<2x8x8xf32>
    %215 = arith.subf %211, %214 : vector<2x8x8xf32>
    %216 = math.exp %215 : vector<2x8x8xf32>
    %cst_107 = arith.constant dense<0.000000e+00> : vector<2x8xf32>
    %217 = vector.multi_reduction <add>, %216, %cst_107 [2] : vector<2x8x8xf32> to vector<2x8xf32>
    %218 = vector.shape_cast %217 : vector<2x8xf32> to vector<2x8x1xf32>
    %219 = tpu.reciprocal %218 {approx = true} : vector<2x8x1xf32> -> vector<2x8x1xf32>
    %220 = vector.broadcast %219 : vector<2x8x1xf32> to vector<2x8x8xf32>
    %221 = arith.mulf %216, %220 : vector<2x8x8xf32>
    "tpu.trace_start"() <{level = 10 : i32, message = "bqk,bkd->bqd"}> : () -> ()
    %cst_108 = arith.constant dense<0.000000e+00> : vector<2x8x8xf32>
    %222 = tpu.matmul %221, %210, %cst_108 {dimension_numbers = #tpu.dot_dimension_numbers<[2], [1], [1], [2], [0, 0, 0, 1, 1, 2], [0], [0]>} : vector<2x8x8xf32>, vector<2x8x8xf32>, vector<2x8x8xf32> -> vector<2x8x8xf32>
    "tpu.trace_stop"() : () -> ()
    %223 = vector.shape_cast %222 : vector<2x8x8xf32> to vector<16x8xf32>
    %c0_i32_109 = arith.constant 0 : i32
    %c0_i32_110 = arith.constant 0 : i32
    %c0_i32_111 = arith.constant 0 : i32
    %224 = tpu.memref_slice %arg10[%c0_i32_109, %c0_i32_110, %c0_i32_111] : memref<2x32x32xf32, #tpu.memory_space<vmem>> -> memref<1x32x32xf32, #tpu.memory_space<vmem>>
    %225 = tpu.memref_squeeze %224 : memref<1x32x32xf32, #tpu.memory_space<vmem>> -> memref<32x32xf32, #tpu.memory_space<vmem>>
    %c24_112 = arith.constant 24 : index
    %c0_113 = arith.constant 0 : index
    %226 = vector.load %225[%c24_112, %c0_113] : memref<32x32xf32, #tpu.memory_space<vmem>>, vector<8x32xf32>
    %cst_114 = arith.constant dense<0.000000e+00> : vector<16x32xf32>
    %227 = tpu.matmul %223, %226, %cst_114 {dimension_numbers = #tpu.dot_dimension_numbers<[1], [0], [0], [1], [0, 0, 1, 1], [], []>} : vector<16x8xf32>, vector<8x32xf32>, vector<16x32xf32> -> vector<16x32xf32>
    %228 = arith.addf %207, %227 : vector<16x32xf32>
    %229 = arith.addf %130, %228 : vector<16x32xf32>
    %c0_115 = arith.constant 0 : index
    %c2 = arith.constant 2 : index
    %c0_116 = arith.constant 0 : index
    %c0_117 = arith.constant 0 : index
    %230 = vector.load %arg16[%c0_115, %c2, %c0_116, %c0_117] : memref<2x6x1x32xf32, #tpu.memory_space<vmem>>, vector<1x1x1x32xf32>
    %231 = vector.shape_cast %230 : vector<1x1x1x32xf32> to vector<1x32xf32>
    %c0_118 = arith.constant 0 : index
    %c3 = arith.constant 3 : index
    %c0_119 = arith.constant 0 : index
    %c0_120 = arith.constant 0 : index
    %232 = vector.load %arg16[%c0_118, %c3, %c0_119, %c0_120] : memref<2x6x1x32xf32, #tpu.memory_space<vmem>>, vector<1x1x1x32xf32>
    %233 = vector.shape_cast %232 : vector<1x1x1x32xf32> to vector<1x32xf32>
    %cst_121 = arith.constant dense<0.000000e+00> : vector<16xf32>
    %234 = vector.multi_reduction <add>, %229, %cst_121 [1] : vector<16x32xf32> to vector<16xf32>
    %235 = vector.shape_cast %234 : vector<16xf32> to vector<16x1xf32>
    %cst_122 = arith.constant 3.200000e+01 : f32
    %236 = vector.broadcast %cst_122 : f32 to vector<16x1xf32>
    %237 = arith.divf %235, %236 : vector<16x1xf32>
    %238 = vector.broadcast %237 : vector<16x1xf32> to vector<16x32xf32>
    %239 = arith.subf %229, %238 : vector<16x32xf32>
    %240 = arith.mulf %239, %239 : vector<16x32xf32>
    %cst_123 = arith.constant dense<0.000000e+00> : vector<16xf32>
    %241 = vector.multi_reduction <add>, %240, %cst_123 [1] : vector<16x32xf32> to vector<16xf32>
    %242 = vector.shape_cast %241 : vector<16xf32> to vector<16x1xf32>
    %cst_124 = arith.constant 3.200000e+01 : f32
    %243 = vector.broadcast %cst_124 : f32 to vector<16x1xf32>
    %244 = arith.divf %242, %243 : vector<16x1xf32>
    %245 = vector.broadcast %237 : vector<16x1xf32> to vector<16x32xf32>
    %246 = arith.subf %229, %245 : vector<16x32xf32>
    %cst_125 = arith.constant 9.99999974E-6 : f32
    %247 = vector.broadcast %cst_125 : f32 to vector<16x1xf32>
    %248 = arith.addf %244, %247 : vector<16x1xf32>
    %249 = math.rsqrt %248 : vector<16x1xf32>
    %250 = vector.broadcast %249 : vector<16x1xf32> to vector<16x32xf32>
    %251 = arith.mulf %246, %250 : vector<16x32xf32>
    %252 = vector.broadcast %231 : vector<1x32xf32> to vector<16x32xf32>
    %253 = arith.mulf %251, %252 : vector<16x32xf32>
    %254 = vector.broadcast %233 : vector<1x32xf32> to vector<16x32xf32>
    %255 = arith.addf %253, %254 : vector<16x32xf32>
    %c0_126 = arith.constant 0 : index
    %c0_127 = arith.constant 0 : index
    %c0_128 = arith.constant 0 : index
    %256 = vector.load %arg12[%c0_126, %c0_127, %c0_128] : memref<2x32x64xf32, #tpu.memory_space<vmem>>, vector<1x32x64xf32>
    %257 = vector.shape_cast %256 : vector<1x32x64xf32> to vector<32x64xf32>
    %cst_129 = arith.constant dense<0.000000e+00> : vector<16x64xf32>
    %258 = tpu.matmul %255, %257, %cst_129 {dimension_numbers = #tpu.dot_dimension_numbers<[1], [0], [0], [1], [0, 0, 1, 1], [], []>} : vector<16x32xf32>, vector<32x64xf32>, vector<16x64xf32> -> vector<16x64xf32>
    %c0_130 = arith.constant 0 : index
    %c0_131 = arith.constant 0 : index
    %c0_132 = arith.constant 0 : index
    %259 = vector.load %arg13[%c0_130, %c0_131, %c0_132] : memref<2x1x64xf32, #tpu.memory_space<vmem>>, vector<1x1x64xf32>
    %260 = vector.shape_cast %259 : vector<1x1x64xf32> to vector<1x64xf32>
    %261 = vector.broadcast %260 : vector<1x64xf32> to vector<16x64xf32>
    %262 = arith.addf %258, %261 : vector<16x64xf32>
    %cst_133 = arith.constant 0.000000e+00 : f32
    %263 = vector.broadcast %cst_133 : f32 to vector<16x64xf32>
    %264 = arith.maximumf %262, %263 : vector<16x64xf32>
    %c0_134 = arith.constant 0 : index
    %c0_135 = arith.constant 0 : index
    %c0_136 = arith.constant 0 : index
    %265 = vector.load %arg14[%c0_134, %c0_135, %c0_136] : memref<2x64x32xf32, #tpu.memory_space<vmem>>, vector<1x64x32xf32>
    %266 = vector.shape_cast %265 : vector<1x64x32xf32> to vector<64x32xf32>
    %cst_137 = arith.constant dense<0.000000e+00> : vector<16x32xf32>
    %267 = tpu.matmul %264, %266, %cst_137 {dimension_numbers = #tpu.dot_dimension_numbers<[1], [0], [0], [1], [0, 0, 1, 1], [], []>} : vector<16x64xf32>, vector<64x32xf32>, vector<16x32xf32> -> vector<16x32xf32>
    %c0_138 = arith.constant 0 : index
    %c0_139 = arith.constant 0 : index
    %c0_140 = arith.constant 0 : index
    %268 = vector.load %arg15[%c0_138, %c0_139, %c0_140] : memref<2x1x32xf32, #tpu.memory_space<vmem>>, vector<1x1x32xf32>
    %269 = vector.shape_cast %268 : vector<1x1x32xf32> to vector<1x32xf32>
    %270 = vector.broadcast %269 : vector<1x32xf32> to vector<16x32xf32>
    %271 = arith.addf %267, %270 : vector<16x32xf32>
    %272 = arith.addf %255, %271 : vector<16x32xf32>
    %c0_141 = arith.constant 0 : index
    %c4 = arith.constant 4 : index
    %c0_142 = arith.constant 0 : index
    %c0_143 = arith.constant 0 : index
    %273 = vector.load %arg16[%c0_141, %c4, %c0_142, %c0_143] : memref<2x6x1x32xf32, #tpu.memory_space<vmem>>, vector<1x1x1x32xf32>
    %274 = vector.shape_cast %273 : vector<1x1x1x32xf32> to vector<1x32xf32>
    %c0_144 = arith.constant 0 : index
    %c5 = arith.constant 5 : index
    %c0_145 = arith.constant 0 : index
    %c0_146 = arith.constant 0 : index
    %275 = vector.load %arg16[%c0_144, %c5, %c0_145, %c0_146] : memref<2x6x1x32xf32, #tpu.memory_space<vmem>>, vector<1x1x1x32xf32>
    %276 = vector.shape_cast %275 : vector<1x1x1x32xf32> to vector<1x32xf32>
    %cst_147 = arith.constant dense<0.000000e+00> : vector<16xf32>
    %277 = vector.multi_reduction <add>, %272, %cst_147 [1] : vector<16x32xf32> to vector<16xf32>
    %278 = vector.shape_cast %277 : vector<16xf32> to vector<16x1xf32>
    %cst_148 = arith.constant 3.200000e+01 : f32
    %279 = vector.broadcast %cst_148 : f32 to vector<16x1xf32>
    %280 = arith.divf %278, %279 : vector<16x1xf32>
    %281 = vector.broadcast %280 : vector<16x1xf32> to vector<16x32xf32>
    %282 = arith.subf %272, %281 : vector<16x32xf32>
    %283 = arith.mulf %282, %282 : vector<16x32xf32>
    %cst_149 = arith.constant dense<0.000000e+00> : vector<16xf32>
    %284 = vector.multi_reduction <add>, %283, %cst_149 [1] : vector<16x32xf32> to vector<16xf32>
    %285 = vector.shape_cast %284 : vector<16xf32> to vector<16x1xf32>
    %cst_150 = arith.constant 3.200000e+01 : f32
    %286 = vector.broadcast %cst_150 : f32 to vector<16x1xf32>
    %287 = arith.divf %285, %286 : vector<16x1xf32>
    %288 = vector.broadcast %280 : vector<16x1xf32> to vector<16x32xf32>
    %289 = arith.subf %272, %288 : vector<16x32xf32>
    %cst_151 = arith.constant 9.99999974E-6 : f32
    %290 = vector.broadcast %cst_151 : f32 to vector<16x1xf32>
    %291 = arith.addf %287, %290 : vector<16x1xf32>
    %292 = math.rsqrt %291 : vector<16x1xf32>
    %293 = vector.broadcast %292 : vector<16x1xf32> to vector<16x32xf32>
    %294 = arith.mulf %289, %293 : vector<16x32xf32>
    %295 = vector.broadcast %274 : vector<1x32xf32> to vector<16x32xf32>
    %296 = arith.mulf %294, %295 : vector<16x32xf32>
    %297 = vector.broadcast %276 : vector<1x32xf32> to vector<16x32xf32>
    %298 = arith.addf %296, %297 : vector<16x32xf32>
    %c1_152 = arith.constant 1 : index
    %c0_153 = arith.constant 0 : index
    %c0_154 = arith.constant 0 : index
    %299 = vector.load %arg2[%c1_152, %c0_153, %c0_154] : memref<2x32x96xf32, #tpu.memory_space<vmem>>, vector<1x32x96xf32>
    %300 = vector.shape_cast %299 : vector<1x32x96xf32> to vector<32x96xf32>
    %cst_155 = arith.constant dense<0.000000e+00> : vector<16x96xf32>
    %301 = tpu.matmul %298, %300, %cst_155 {dimension_numbers = #tpu.dot_dimension_numbers<[1], [0], [0], [1], [0, 0, 1, 1], [], []>} : vector<16x32xf32>, vector<32x96xf32>, vector<16x96xf32> -> vector<16x96xf32>
    %c1_156 = arith.constant 1 : index
    %c0_157 = arith.constant 0 : index
    %c0_158 = arith.constant 0 : index
    %302 = vector.load %arg3[%c1_156, %c0_157, %c0_158] : memref<2x1x96xf32, #tpu.memory_space<vmem>>, vector<1x1x96xf32>
    %303 = vector.shape_cast %302 : vector<1x1x96xf32> to vector<1x96xf32>
    %304 = vector.broadcast %303 : vector<1x96xf32> to vector<16x96xf32>
    %305 = arith.addf %301, %304 : vector<16x96xf32>
    %c1_159 = arith.constant 1 : index
    %c0_160 = arith.constant 0 : index
    %c0_161 = arith.constant 0 : index
    %306 = vector.load %arg5[%c1_159, %c0_160, %c0_161] : memref<2x1x32xf32, #tpu.memory_space<vmem>>, vector<1x1x32xf32>
    %307 = vector.shape_cast %306 : vector<1x1x32xf32> to vector<1x32xf32>
    %308 = vector.shape_cast %305 : vector<16x96xf32> to vector<2x8x96xf32>
    %309 = vector.shape_cast %305 : vector<16x96xf32> to vector<2x8x96xf32>
    %310 = vector.shape_cast %307 : vector<1x32xf32> to vector<1x32xf32>
    %311 = vector.broadcast %310 : vector<1x32xf32> to vector<16x32xf32>
    %312 = vector.extract_strided_slice %308 {offsets = [0, 0, 0], sizes = [2, 8, 8], strides = [1, 1, 1]} : vector<2x8x96xf32> to vector<2x8x8xf32>
    %313 = vector.extract_strided_slice %309 {offsets = [0, 0, 32], sizes = [2, 8, 8], strides = [1, 1, 1]} : vector<2x8x96xf32> to vector<2x8x8xf32>
    %314 = vector.extract_strided_slice %309 {offsets = [0, 0, 64], sizes = [2, 8, 8], strides = [1, 1, 1]} : vector<2x8x96xf32> to vector<2x8x8xf32>
    "tpu.trace_start"() <{level = 10 : i32, message = "bqd,bkd->bqk"}> : () -> ()
    %cst_162 = arith.constant dense<0.000000e+00> : vector<2x8x8xf32>
    %315 = tpu.matmul %312, %313, %cst_162 {dimension_numbers = #tpu.dot_dimension_numbers<[2], [2], [1], [1], [0, 0, 0, 1, 1, 1], [0], [0]>} : vector<2x8x8xf32>, vector<2x8x8xf32>, vector<2x8x8xf32> -> vector<2x8x8xf32>
    "tpu.trace_stop"() : () -> ()
    %cst_163 = arith.constant dense<0xFF800000> : vector<2x8xf32>
    %316 = vector.multi_reduction <maximumf>, %315, %cst_163 [2] : vector<2x8x8xf32> to vector<2x8xf32>
    %317 = vector.shape_cast %316 : vector<2x8xf32> to vector<2x8x1xf32>
    %318 = vector.broadcast %317 : vector<2x8x1xf32> to vector<2x8x8xf32>
    %319 = arith.subf %315, %318 : vector<2x8x8xf32>
    %320 = math.exp %319 : vector<2x8x8xf32>
    %cst_164 = arith.constant dense<0.000000e+00> : vector<2x8xf32>
    %321 = vector.multi_reduction <add>, %320, %cst_164 [2] : vector<2x8x8xf32> to vector<2x8xf32>
    %322 = vector.shape_cast %321 : vector<2x8xf32> to vector<2x8x1xf32>
    %323 = tpu.reciprocal %322 {approx = true} : vector<2x8x1xf32> -> vector<2x8x1xf32>
    %324 = vector.broadcast %323 : vector<2x8x1xf32> to vector<2x8x8xf32>
    %325 = arith.mulf %320, %324 : vector<2x8x8xf32>
    "tpu.trace_start"() <{level = 10 : i32, message = "bqk,bkd->bqd"}> : () -> ()
    %cst_165 = arith.constant dense<0.000000e+00> : vector<2x8x8xf32>
    %326 = tpu.matmul %325, %314, %cst_165 {dimension_numbers = #tpu.dot_dimension_numbers<[2], [1], [1], [2], [0, 0, 0, 1, 1, 2], [0], [0]>} : vector<2x8x8xf32>, vector<2x8x8xf32>, vector<2x8x8xf32> -> vector<2x8x8xf32>
    "tpu.trace_stop"() : () -> ()
    %327 = vector.shape_cast %326 : vector<2x8x8xf32> to vector<16x8xf32>
    %c1_i32 = arith.constant 1 : i32
    %c0_i32_166 = arith.constant 0 : i32
    %c0_i32_167 = arith.constant 0 : i32
    %328 = tpu.memref_slice %arg4[%c1_i32, %c0_i32_166, %c0_i32_167] : memref<2x32x32xf32, #tpu.memory_space<vmem>> -> memref<1x32x32xf32, #tpu.memory_space<vmem>>
    %329 = tpu.memref_squeeze %328 : memref<1x32x32xf32, #tpu.memory_space<vmem>> -> memref<32x32xf32, #tpu.memory_space<vmem>>
    %c0_168 = arith.constant 0 : index
    %c0_169 = arith.constant 0 : index
    %330 = vector.load %329[%c0_168, %c0_169] : memref<32x32xf32, #tpu.memory_space<vmem>>, vector<8x32xf32>
    %cst_170 = arith.constant dense<0.000000e+00> : vector<16x32xf32>
    %331 = tpu.matmul %327, %330, %cst_170 {dimension_numbers = #tpu.dot_dimension_numbers<[1], [0], [0], [1], [0, 0, 1, 1], [], []>} : vector<16x8xf32>, vector<8x32xf32>, vector<16x32xf32> -> vector<16x32xf32>
    %332 = arith.addf %311, %331 : vector<16x32xf32>
    %333 = vector.extract_strided_slice %308 {offsets = [0, 0, 8], sizes = [2, 8, 8], strides = [1, 1, 1]} : vector<2x8x96xf32> to vector<2x8x8xf32>
    %334 = vector.extract_strided_slice %309 {offsets = [0, 0, 40], sizes = [2, 8, 8], strides = [1, 1, 1]} : vector<2x8x96xf32> to vector<2x8x8xf32>
    %335 = vector.extract_strided_slice %309 {offsets = [0, 0, 72], sizes = [2, 8, 8], strides = [1, 1, 1]} : vector<2x8x96xf32> to vector<2x8x8xf32>
    "tpu.trace_start"() <{level = 10 : i32, message = "bqd,bkd->bqk"}> : () -> ()
    %cst_171 = arith.constant dense<0.000000e+00> : vector<2x8x8xf32>
    %336 = tpu.matmul %333, %334, %cst_171 {dimension_numbers = #tpu.dot_dimension_numbers<[2], [2], [1], [1], [0, 0, 0, 1, 1, 1], [0], [0]>} : vector<2x8x8xf32>, vector<2x8x8xf32>, vector<2x8x8xf32> -> vector<2x8x8xf32>
    "tpu.trace_stop"() : () -> ()
    %cst_172 = arith.constant dense<0xFF800000> : vector<2x8xf32>
    %337 = vector.multi_reduction <maximumf>, %336, %cst_172 [2] : vector<2x8x8xf32> to vector<2x8xf32>
    %338 = vector.shape_cast %337 : vector<2x8xf32> to vector<2x8x1xf32>
    %339 = vector.broadcast %338 : vector<2x8x1xf32> to vector<2x8x8xf32>
    %340 = arith.subf %336, %339 : vector<2x8x8xf32>
    %341 = math.exp %340 : vector<2x8x8xf32>
    %cst_173 = arith.constant dense<0.000000e+00> : vector<2x8xf32>
    %342 = vector.multi_reduction <add>, %341, %cst_173 [2] : vector<2x8x8xf32> to vector<2x8xf32>
    %343 = vector.shape_cast %342 : vector<2x8xf32> to vector<2x8x1xf32>
    %344 = tpu.reciprocal %343 {approx = true} : vector<2x8x1xf32> -> vector<2x8x1xf32>
    %345 = vector.broadcast %344 : vector<2x8x1xf32> to vector<2x8x8xf32>
    %346 = arith.mulf %341, %345 : vector<2x8x8xf32>
    "tpu.trace_start"() <{level = 10 : i32, message = "bqk,bkd->bqd"}> : () -> ()
    %cst_174 = arith.constant dense<0.000000e+00> : vector<2x8x8xf32>
    %347 = tpu.matmul %346, %335, %cst_174 {dimension_numbers = #tpu.dot_dimension_numbers<[2], [1], [1], [2], [0, 0, 0, 1, 1, 2], [0], [0]>} : vector<2x8x8xf32>, vector<2x8x8xf32>, vector<2x8x8xf32> -> vector<2x8x8xf32>
    "tpu.trace_stop"() : () -> ()
    %348 = vector.shape_cast %347 : vector<2x8x8xf32> to vector<16x8xf32>
    %c1_i32_175 = arith.constant 1 : i32
    %c0_i32_176 = arith.constant 0 : i32
    %c0_i32_177 = arith.constant 0 : i32
    %349 = tpu.memref_slice %arg4[%c1_i32_175, %c0_i32_176, %c0_i32_177] : memref<2x32x32xf32, #tpu.memory_space<vmem>> -> memref<1x32x32xf32, #tpu.memory_space<vmem>>
    %350 = tpu.memref_squeeze %349 : memref<1x32x32xf32, #tpu.memory_space<vmem>> -> memref<32x32xf32, #tpu.memory_space<vmem>>
    %c8_178 = arith.constant 8 : index
    %c0_179 = arith.constant 0 : index
    %351 = vector.load %350[%c8_178, %c0_179] : memref<32x32xf32, #tpu.memory_space<vmem>>, vector<8x32xf32>
    %cst_180 = arith.constant dense<0.000000e+00> : vector<16x32xf32>
    %352 = tpu.matmul %348, %351, %cst_180 {dimension_numbers = #tpu.dot_dimension_numbers<[1], [0], [0], [1], [0, 0, 1, 1], [], []>} : vector<16x8xf32>, vector<8x32xf32>, vector<16x32xf32> -> vector<16x32xf32>
    %353 = arith.addf %332, %352 : vector<16x32xf32>
    %354 = vector.extract_strided_slice %308 {offsets = [0, 0, 16], sizes = [2, 8, 8], strides = [1, 1, 1]} : vector<2x8x96xf32> to vector<2x8x8xf32>
    %355 = vector.extract_strided_slice %309 {offsets = [0, 0, 48], sizes = [2, 8, 8], strides = [1, 1, 1]} : vector<2x8x96xf32> to vector<2x8x8xf32>
    %356 = vector.extract_strided_slice %309 {offsets = [0, 0, 80], sizes = [2, 8, 8], strides = [1, 1, 1]} : vector<2x8x96xf32> to vector<2x8x8xf32>
    "tpu.trace_start"() <{level = 10 : i32, message = "bqd,bkd->bqk"}> : () -> ()
    %cst_181 = arith.constant dense<0.000000e+00> : vector<2x8x8xf32>
    %357 = tpu.matmul %354, %355, %cst_181 {dimension_numbers = #tpu.dot_dimension_numbers<[2], [2], [1], [1], [0, 0, 0, 1, 1, 1], [0], [0]>} : vector<2x8x8xf32>, vector<2x8x8xf32>, vector<2x8x8xf32> -> vector<2x8x8xf32>
    "tpu.trace_stop"() : () -> ()
    %cst_182 = arith.constant dense<0xFF800000> : vector<2x8xf32>
    %358 = vector.multi_reduction <maximumf>, %357, %cst_182 [2] : vector<2x8x8xf32> to vector<2x8xf32>
    %359 = vector.shape_cast %358 : vector<2x8xf32> to vector<2x8x1xf32>
    %360 = vector.broadcast %359 : vector<2x8x1xf32> to vector<2x8x8xf32>
    %361 = arith.subf %357, %360 : vector<2x8x8xf32>
    %362 = math.exp %361 : vector<2x8x8xf32>
    %cst_183 = arith.constant dense<0.000000e+00> : vector<2x8xf32>
    %363 = vector.multi_reduction <add>, %362, %cst_183 [2] : vector<2x8x8xf32> to vector<2x8xf32>
    %364 = vector.shape_cast %363 : vector<2x8xf32> to vector<2x8x1xf32>
    %365 = tpu.reciprocal %364 {approx = true} : vector<2x8x1xf32> -> vector<2x8x1xf32>
    %366 = vector.broadcast %365 : vector<2x8x1xf32> to vector<2x8x8xf32>
    %367 = arith.mulf %362, %366 : vector<2x8x8xf32>
    "tpu.trace_start"() <{level = 10 : i32, message = "bqk,bkd->bqd"}> : () -> ()
    %cst_184 = arith.constant dense<0.000000e+00> : vector<2x8x8xf32>
    %368 = tpu.matmul %367, %356, %cst_184 {dimension_numbers = #tpu.dot_dimension_numbers<[2], [1], [1], [2], [0, 0, 0, 1, 1, 2], [0], [0]>} : vector<2x8x8xf32>, vector<2x8x8xf32>, vector<2x8x8xf32> -> vector<2x8x8xf32>
    "tpu.trace_stop"() : () -> ()
    %369 = vector.shape_cast %368 : vector<2x8x8xf32> to vector<16x8xf32>
    %c1_i32_185 = arith.constant 1 : i32
    %c0_i32_186 = arith.constant 0 : i32
    %c0_i32_187 = arith.constant 0 : i32
    %370 = tpu.memref_slice %arg4[%c1_i32_185, %c0_i32_186, %c0_i32_187] : memref<2x32x32xf32, #tpu.memory_space<vmem>> -> memref<1x32x32xf32, #tpu.memory_space<vmem>>
    %371 = tpu.memref_squeeze %370 : memref<1x32x32xf32, #tpu.memory_space<vmem>> -> memref<32x32xf32, #tpu.memory_space<vmem>>
    %c16_188 = arith.constant 16 : index
    %c0_189 = arith.constant 0 : index
    %372 = vector.load %371[%c16_188, %c0_189] : memref<32x32xf32, #tpu.memory_space<vmem>>, vector<8x32xf32>
    %cst_190 = arith.constant dense<0.000000e+00> : vector<16x32xf32>
    %373 = tpu.matmul %369, %372, %cst_190 {dimension_numbers = #tpu.dot_dimension_numbers<[1], [0], [0], [1], [0, 0, 1, 1], [], []>} : vector<16x8xf32>, vector<8x32xf32>, vector<16x32xf32> -> vector<16x32xf32>
    %374 = arith.addf %353, %373 : vector<16x32xf32>
    %375 = vector.extract_strided_slice %308 {offsets = [0, 0, 24], sizes = [2, 8, 8], strides = [1, 1, 1]} : vector<2x8x96xf32> to vector<2x8x8xf32>
    %376 = vector.extract_strided_slice %309 {offsets = [0, 0, 56], sizes = [2, 8, 8], strides = [1, 1, 1]} : vector<2x8x96xf32> to vector<2x8x8xf32>
    %377 = vector.extract_strided_slice %309 {offsets = [0, 0, 88], sizes = [2, 8, 8], strides = [1, 1, 1]} : vector<2x8x96xf32> to vector<2x8x8xf32>
    "tpu.trace_start"() <{level = 10 : i32, message = "bqd,bkd->bqk"}> : () -> ()
    %cst_191 = arith.constant dense<0.000000e+00> : vector<2x8x8xf32>
    %378 = tpu.matmul %375, %376, %cst_191 {dimension_numbers = #tpu.dot_dimension_numbers<[2], [2], [1], [1], [0, 0, 0, 1, 1, 1], [0], [0]>} : vector<2x8x8xf32>, vector<2x8x8xf32>, vector<2x8x8xf32> -> vector<2x8x8xf32>
    "tpu.trace_stop"() : () -> ()
    %cst_192 = arith.constant dense<0xFF800000> : vector<2x8xf32>
    %379 = vector.multi_reduction <maximumf>, %378, %cst_192 [2] : vector<2x8x8xf32> to vector<2x8xf32>
    %380 = vector.shape_cast %379 : vector<2x8xf32> to vector<2x8x1xf32>
    %381 = vector.broadcast %380 : vector<2x8x1xf32> to vector<2x8x8xf32>
    %382 = arith.subf %378, %381 : vector<2x8x8xf32>
    %383 = math.exp %382 : vector<2x8x8xf32>
    %cst_193 = arith.constant dense<0.000000e+00> : vector<2x8xf32>
    %384 = vector.multi_reduction <add>, %383, %cst_193 [2] : vector<2x8x8xf32> to vector<2x8xf32>
    %385 = vector.shape_cast %384 : vector<2x8xf32> to vector<2x8x1xf32>
    %386 = tpu.reciprocal %385 {approx = true} : vector<2x8x1xf32> -> vector<2x8x1xf32>
    %387 = vector.broadcast %386 : vector<2x8x1xf32> to vector<2x8x8xf32>
    %388 = arith.mulf %383, %387 : vector<2x8x8xf32>
    "tpu.trace_start"() <{level = 10 : i32, message = "bqk,bkd->bqd"}> : () -> ()
    %cst_194 = arith.constant dense<0.000000e+00> : vector<2x8x8xf32>
    %389 = tpu.matmul %388, %377, %cst_194 {dimension_numbers = #tpu.dot_dimension_numbers<[2], [1], [1], [2], [0, 0, 0, 1, 1, 2], [0], [0]>} : vector<2x8x8xf32>, vector<2x8x8xf32>, vector<2x8x8xf32> -> vector<2x8x8xf32>
    "tpu.trace_stop"() : () -> ()
    %390 = vector.shape_cast %389 : vector<2x8x8xf32> to vector<16x8xf32>
    %c1_i32_195 = arith.constant 1 : i32
    %c0_i32_196 = arith.constant 0 : i32
    %c0_i32_197 = arith.constant 0 : i32
    %391 = tpu.memref_slice %arg4[%c1_i32_195, %c0_i32_196, %c0_i32_197] : memref<2x32x32xf32, #tpu.memory_space<vmem>> -> memref<1x32x32xf32, #tpu.memory_space<vmem>>
    %392 = tpu.memref_squeeze %391 : memref<1x32x32xf32, #tpu.memory_space<vmem>> -> memref<32x32xf32, #tpu.memory_space<vmem>>
    %c24_198 = arith.constant 24 : index
    %c0_199 = arith.constant 0 : index
    %393 = vector.load %392[%c24_198, %c0_199] : memref<32x32xf32, #tpu.memory_space<vmem>>, vector<8x32xf32>
    %cst_200 = arith.constant dense<0.000000e+00> : vector<16x32xf32>
    %394 = tpu.matmul %390, %393, %cst_200 {dimension_numbers = #tpu.dot_dimension_numbers<[1], [0], [0], [1], [0, 0, 1, 1], [], []>} : vector<16x8xf32>, vector<8x32xf32>, vector<16x32xf32> -> vector<16x32xf32>
    %395 = arith.addf %374, %394 : vector<16x32xf32>
    %396 = arith.addf %298, %395 : vector<16x32xf32>
    %c1_201 = arith.constant 1 : index
    %c0_202 = arith.constant 0 : index
    %c0_203 = arith.constant 0 : index
    %c0_204 = arith.constant 0 : index
    %397 = vector.load %arg16[%c1_201, %c0_202, %c0_203, %c0_204] : memref<2x6x1x32xf32, #tpu.memory_space<vmem>>, vector<1x1x1x32xf32>
    %398 = vector.shape_cast %397 : vector<1x1x1x32xf32> to vector<1x32xf32>
    %c1_205 = arith.constant 1 : index
    %c1_206 = arith.constant 1 : index
    %c0_207 = arith.constant 0 : index
    %c0_208 = arith.constant 0 : index
    %399 = vector.load %arg16[%c1_205, %c1_206, %c0_207, %c0_208] : memref<2x6x1x32xf32, #tpu.memory_space<vmem>>, vector<1x1x1x32xf32>
    %400 = vector.shape_cast %399 : vector<1x1x1x32xf32> to vector<1x32xf32>
    %cst_209 = arith.constant dense<0.000000e+00> : vector<16xf32>
    %401 = vector.multi_reduction <add>, %396, %cst_209 [1] : vector<16x32xf32> to vector<16xf32>
    %402 = vector.shape_cast %401 : vector<16xf32> to vector<16x1xf32>
    %cst_210 = arith.constant 3.200000e+01 : f32
    %403 = vector.broadcast %cst_210 : f32 to vector<16x1xf32>
    %404 = arith.divf %402, %403 : vector<16x1xf32>
    %405 = vector.broadcast %404 : vector<16x1xf32> to vector<16x32xf32>
    %406 = arith.subf %396, %405 : vector<16x32xf32>
    %407 = arith.mulf %406, %406 : vector<16x32xf32>
    %cst_211 = arith.constant dense<0.000000e+00> : vector<16xf32>
    %408 = vector.multi_reduction <add>, %407, %cst_211 [1] : vector<16x32xf32> to vector<16xf32>
    %409 = vector.shape_cast %408 : vector<16xf32> to vector<16x1xf32>
    %cst_212 = arith.constant 3.200000e+01 : f32
    %410 = vector.broadcast %cst_212 : f32 to vector<16x1xf32>
    %411 = arith.divf %409, %410 : vector<16x1xf32>
    %412 = vector.broadcast %404 : vector<16x1xf32> to vector<16x32xf32>
    %413 = arith.subf %396, %412 : vector<16x32xf32>
    %cst_213 = arith.constant 9.99999974E-6 : f32
    %414 = vector.broadcast %cst_213 : f32 to vector<16x1xf32>
    %415 = arith.addf %411, %414 : vector<16x1xf32>
    %416 = math.rsqrt %415 : vector<16x1xf32>
    %417 = vector.broadcast %416 : vector<16x1xf32> to vector<16x32xf32>
    %418 = arith.mulf %413, %417 : vector<16x32xf32>
    %419 = vector.broadcast %398 : vector<1x32xf32> to vector<16x32xf32>
    %420 = arith.mulf %418, %419 : vector<16x32xf32>
    %421 = vector.broadcast %400 : vector<1x32xf32> to vector<16x32xf32>
    %422 = arith.addf %420, %421 : vector<16x32xf32>
    %c1_214 = arith.constant 1 : index
    %c0_215 = arith.constant 0 : index
    %c0_216 = arith.constant 0 : index
    %423 = vector.load %arg6[%c1_214, %c0_215, %c0_216] : memref<2x32x32xf32, #tpu.memory_space<vmem>>, vector<1x32x32xf32>
    %424 = vector.shape_cast %423 : vector<1x32x32xf32> to vector<32x32xf32>
    %cst_217 = arith.constant dense<0.000000e+00> : vector<16x32xf32>
    %425 = tpu.matmul %422, %424, %cst_217 {dimension_numbers = #tpu.dot_dimension_numbers<[1], [0], [0], [1], [0, 0, 1, 1], [], []>} : vector<16x32xf32>, vector<32x32xf32>, vector<16x32xf32> -> vector<16x32xf32>
    %c1_218 = arith.constant 1 : index
    %c0_219 = arith.constant 0 : index
    %c0_220 = arith.constant 0 : index
    %426 = vector.load %arg7[%c1_218, %c0_219, %c0_220] : memref<2x1x32xf32, #tpu.memory_space<vmem>>, vector<1x1x32xf32>
    %427 = vector.shape_cast %426 : vector<1x1x32xf32> to vector<1x32xf32>
    %428 = vector.broadcast %427 : vector<1x32xf32> to vector<16x32xf32>
    %429 = arith.addf %425, %428 : vector<16x32xf32>
    %430 = vector.extract_strided_slice %6 {offsets = [0, 64], sizes = [16, 64], strides = [1, 1]} : vector<16x128xf32> to vector<16x64xf32>
    %c1_221 = arith.constant 1 : index
    %c0_222 = arith.constant 0 : index
    %c0_223 = arith.constant 0 : index
    %431 = vector.load %arg11[%c1_221, %c0_222, %c0_223] : memref<2x1x32xf32, #tpu.memory_space<vmem>>, vector<1x1x32xf32>
    %432 = vector.shape_cast %431 : vector<1x1x32xf32> to vector<1x32xf32>
    %433 = vector.shape_cast %429 : vector<16x32xf32> to vector<2x8x32xf32>
    %434 = vector.shape_cast %430 : vector<16x64xf32> to vector<2x8x64xf32>
    %435 = vector.shape_cast %432 : vector<1x32xf32> to vector<1x32xf32>
    %436 = vector.broadcast %435 : vector<1x32xf32> to vector<16x32xf32>
    %437 = vector.extract_strided_slice %433 {offsets = [0, 0, 0], sizes = [2, 8, 8], strides = [1, 1, 1]} : vector<2x8x32xf32> to vector<2x8x8xf32>
    %438 = vector.extract_strided_slice %434 {offsets = [0, 0, 0], sizes = [2, 8, 8], strides = [1, 1, 1]} : vector<2x8x64xf32> to vector<2x8x8xf32>
    %439 = vector.extract_strided_slice %434 {offsets = [0, 0, 32], sizes = [2, 8, 8], strides = [1, 1, 1]} : vector<2x8x64xf32> to vector<2x8x8xf32>
    "tpu.trace_start"() <{level = 10 : i32, message = "bqd,bkd->bqk"}> : () -> ()
    %cst_224 = arith.constant dense<0.000000e+00> : vector<2x8x8xf32>
    %440 = tpu.matmul %437, %438, %cst_224 {dimension_numbers = #tpu.dot_dimension_numbers<[2], [2], [1], [1], [0, 0, 0, 1, 1, 1], [0], [0]>} : vector<2x8x8xf32>, vector<2x8x8xf32>, vector<2x8x8xf32> -> vector<2x8x8xf32>
    "tpu.trace_stop"() : () -> ()
    %cst_225 = arith.constant dense<0xFF800000> : vector<2x8xf32>
    %441 = vector.multi_reduction <maximumf>, %440, %cst_225 [2] : vector<2x8x8xf32> to vector<2x8xf32>
    %442 = vector.shape_cast %441 : vector<2x8xf32> to vector<2x8x1xf32>
    %443 = vector.broadcast %442 : vector<2x8x1xf32> to vector<2x8x8xf32>
    %444 = arith.subf %440, %443 : vector<2x8x8xf32>
    %445 = math.exp %444 : vector<2x8x8xf32>
    %cst_226 = arith.constant dense<0.000000e+00> : vector<2x8xf32>
    %446 = vector.multi_reduction <add>, %445, %cst_226 [2] : vector<2x8x8xf32> to vector<2x8xf32>
    %447 = vector.shape_cast %446 : vector<2x8xf32> to vector<2x8x1xf32>
    %448 = tpu.reciprocal %447 {approx = true} : vector<2x8x1xf32> -> vector<2x8x1xf32>
    %449 = vector.broadcast %448 : vector<2x8x1xf32> to vector<2x8x8xf32>
    %450 = arith.mulf %445, %449 : vector<2x8x8xf32>
    "tpu.trace_start"() <{level = 10 : i32, message = "bqk,bkd->bqd"}> : () -> ()
    %cst_227 = arith.constant dense<0.000000e+00> : vector<2x8x8xf32>
    %451 = tpu.matmul %450, %439, %cst_227 {dimension_numbers = #tpu.dot_dimension_numbers<[2], [1], [1], [2], [0, 0, 0, 1, 1, 2], [0], [0]>} : vector<2x8x8xf32>, vector<2x8x8xf32>, vector<2x8x8xf32> -> vector<2x8x8xf32>
    "tpu.trace_stop"() : () -> ()
    %452 = vector.shape_cast %451 : vector<2x8x8xf32> to vector<16x8xf32>
    %c1_i32_228 = arith.constant 1 : i32
    %c0_i32_229 = arith.constant 0 : i32
    %c0_i32_230 = arith.constant 0 : i32
    %453 = tpu.memref_slice %arg10[%c1_i32_228, %c0_i32_229, %c0_i32_230] : memref<2x32x32xf32, #tpu.memory_space<vmem>> -> memref<1x32x32xf32, #tpu.memory_space<vmem>>
    %454 = tpu.memref_squeeze %453 : memref<1x32x32xf32, #tpu.memory_space<vmem>> -> memref<32x32xf32, #tpu.memory_space<vmem>>
    %c0_231 = arith.constant 0 : index
    %c0_232 = arith.constant 0 : index
    %455 = vector.load %454[%c0_231, %c0_232] : memref<32x32xf32, #tpu.memory_space<vmem>>, vector<8x32xf32>
    %cst_233 = arith.constant dense<0.000000e+00> : vector<16x32xf32>
    %456 = tpu.matmul %452, %455, %cst_233 {dimension_numbers = #tpu.dot_dimension_numbers<[1], [0], [0], [1], [0, 0, 1, 1], [], []>} : vector<16x8xf32>, vector<8x32xf32>, vector<16x32xf32> -> vector<16x32xf32>
    %457 = arith.addf %436, %456 : vector<16x32xf32>
    %458 = vector.extract_strided_slice %433 {offsets = [0, 0, 8], sizes = [2, 8, 8], strides = [1, 1, 1]} : vector<2x8x32xf32> to vector<2x8x8xf32>
    %459 = vector.extract_strided_slice %434 {offsets = [0, 0, 8], sizes = [2, 8, 8], strides = [1, 1, 1]} : vector<2x8x64xf32> to vector<2x8x8xf32>
    %460 = vector.extract_strided_slice %434 {offsets = [0, 0, 40], sizes = [2, 8, 8], strides = [1, 1, 1]} : vector<2x8x64xf32> to vector<2x8x8xf32>
    "tpu.trace_start"() <{level = 10 : i32, message = "bqd,bkd->bqk"}> : () -> ()
    %cst_234 = arith.constant dense<0.000000e+00> : vector<2x8x8xf32>
    %461 = tpu.matmul %458, %459, %cst_234 {dimension_numbers = #tpu.dot_dimension_numbers<[2], [2], [1], [1], [0, 0, 0, 1, 1, 1], [0], [0]>} : vector<2x8x8xf32>, vector<2x8x8xf32>, vector<2x8x8xf32> -> vector<2x8x8xf32>
    "tpu.trace_stop"() : () -> ()
    %cst_235 = arith.constant dense<0xFF800000> : vector<2x8xf32>
    %462 = vector.multi_reduction <maximumf>, %461, %cst_235 [2] : vector<2x8x8xf32> to vector<2x8xf32>
    %463 = vector.shape_cast %462 : vector<2x8xf32> to vector<2x8x1xf32>
    %464 = vector.broadcast %463 : vector<2x8x1xf32> to vector<2x8x8xf32>
    %465 = arith.subf %461, %464 : vector<2x8x8xf32>
    %466 = math.exp %465 : vector<2x8x8xf32>
    %cst_236 = arith.constant dense<0.000000e+00> : vector<2x8xf32>
    %467 = vector.multi_reduction <add>, %466, %cst_236 [2] : vector<2x8x8xf32> to vector<2x8xf32>
    %468 = vector.shape_cast %467 : vector<2x8xf32> to vector<2x8x1xf32>
    %469 = tpu.reciprocal %468 {approx = true} : vector<2x8x1xf32> -> vector<2x8x1xf32>
    %470 = vector.broadcast %469 : vector<2x8x1xf32> to vector<2x8x8xf32>
    %471 = arith.mulf %466, %470 : vector<2x8x8xf32>
    "tpu.trace_start"() <{level = 10 : i32, message = "bqk,bkd->bqd"}> : () -> ()
    %cst_237 = arith.constant dense<0.000000e+00> : vector<2x8x8xf32>
    %472 = tpu.matmul %471, %460, %cst_237 {dimension_numbers = #tpu.dot_dimension_numbers<[2], [1], [1], [2], [0, 0, 0, 1, 1, 2], [0], [0]>} : vector<2x8x8xf32>, vector<2x8x8xf32>, vector<2x8x8xf32> -> vector<2x8x8xf32>
    "tpu.trace_stop"() : () -> ()
    %473 = vector.shape_cast %472 : vector<2x8x8xf32> to vector<16x8xf32>
    %c1_i32_238 = arith.constant 1 : i32
    %c0_i32_239 = arith.constant 0 : i32
    %c0_i32_240 = arith.constant 0 : i32
    %474 = tpu.memref_slice %arg10[%c1_i32_238, %c0_i32_239, %c0_i32_240] : memref<2x32x32xf32, #tpu.memory_space<vmem>> -> memref<1x32x32xf32, #tpu.memory_space<vmem>>
    %475 = tpu.memref_squeeze %474 : memref<1x32x32xf32, #tpu.memory_space<vmem>> -> memref<32x32xf32, #tpu.memory_space<vmem>>
    %c8_241 = arith.constant 8 : index
    %c0_242 = arith.constant 0 : index
    %476 = vector.load %475[%c8_241, %c0_242] : memref<32x32xf32, #tpu.memory_space<vmem>>, vector<8x32xf32>
    %cst_243 = arith.constant dense<0.000000e+00> : vector<16x32xf32>
    %477 = tpu.matmul %473, %476, %cst_243 {dimension_numbers = #tpu.dot_dimension_numbers<[1], [0], [0], [1], [0, 0, 1, 1], [], []>} : vector<16x8xf32>, vector<8x32xf32>, vector<16x32xf32> -> vector<16x32xf32>
    %478 = arith.addf %457, %477 : vector<16x32xf32>
    %479 = vector.extract_strided_slice %433 {offsets = [0, 0, 16], sizes = [2, 8, 8], strides = [1, 1, 1]} : vector<2x8x32xf32> to vector<2x8x8xf32>
    %480 = vector.extract_strided_slice %434 {offsets = [0, 0, 16], sizes = [2, 8, 8], strides = [1, 1, 1]} : vector<2x8x64xf32> to vector<2x8x8xf32>
    %481 = vector.extract_strided_slice %434 {offsets = [0, 0, 48], sizes = [2, 8, 8], strides = [1, 1, 1]} : vector<2x8x64xf32> to vector<2x8x8xf32>
    "tpu.trace_start"() <{level = 10 : i32, message = "bqd,bkd->bqk"}> : () -> ()
    %cst_244 = arith.constant dense<0.000000e+00> : vector<2x8x8xf32>
    %482 = tpu.matmul %479, %480, %cst_244 {dimension_numbers = #tpu.dot_dimension_numbers<[2], [2], [1], [1], [0, 0, 0, 1, 1, 1], [0], [0]>} : vector<2x8x8xf32>, vector<2x8x8xf32>, vector<2x8x8xf32> -> vector<2x8x8xf32>
    "tpu.trace_stop"() : () -> ()
    %cst_245 = arith.constant dense<0xFF800000> : vector<2x8xf32>
    %483 = vector.multi_reduction <maximumf>, %482, %cst_245 [2] : vector<2x8x8xf32> to vector<2x8xf32>
    %484 = vector.shape_cast %483 : vector<2x8xf32> to vector<2x8x1xf32>
    %485 = vector.broadcast %484 : vector<2x8x1xf32> to vector<2x8x8xf32>
    %486 = arith.subf %482, %485 : vector<2x8x8xf32>
    %487 = math.exp %486 : vector<2x8x8xf32>
    %cst_246 = arith.constant dense<0.000000e+00> : vector<2x8xf32>
    %488 = vector.multi_reduction <add>, %487, %cst_246 [2] : vector<2x8x8xf32> to vector<2x8xf32>
    %489 = vector.shape_cast %488 : vector<2x8xf32> to vector<2x8x1xf32>
    %490 = tpu.reciprocal %489 {approx = true} : vector<2x8x1xf32> -> vector<2x8x1xf32>
    %491 = vector.broadcast %490 : vector<2x8x1xf32> to vector<2x8x8xf32>
    %492 = arith.mulf %487, %491 : vector<2x8x8xf32>
    "tpu.trace_start"() <{level = 10 : i32, message = "bqk,bkd->bqd"}> : () -> ()
    %cst_247 = arith.constant dense<0.000000e+00> : vector<2x8x8xf32>
    %493 = tpu.matmul %492, %481, %cst_247 {dimension_numbers = #tpu.dot_dimension_numbers<[2], [1], [1], [2], [0, 0, 0, 1, 1, 2], [0], [0]>} : vector<2x8x8xf32>, vector<2x8x8xf32>, vector<2x8x8xf32> -> vector<2x8x8xf32>
    "tpu.trace_stop"() : () -> ()
    %494 = vector.shape_cast %493 : vector<2x8x8xf32> to vector<16x8xf32>
    %c1_i32_248 = arith.constant 1 : i32
    %c0_i32_249 = arith.constant 0 : i32
    %c0_i32_250 = arith.constant 0 : i32
    %495 = tpu.memref_slice %arg10[%c1_i32_248, %c0_i32_249, %c0_i32_250] : memref<2x32x32xf32, #tpu.memory_space<vmem>> -> memref<1x32x32xf32, #tpu.memory_space<vmem>>
    %496 = tpu.memref_squeeze %495 : memref<1x32x32xf32, #tpu.memory_space<vmem>> -> memref<32x32xf32, #tpu.memory_space<vmem>>
    %c16_251 = arith.constant 16 : index
    %c0_252 = arith.constant 0 : index
    %497 = vector.load %496[%c16_251, %c0_252] : memref<32x32xf32, #tpu.memory_space<vmem>>, vector<8x32xf32>
    %cst_253 = arith.constant dense<0.000000e+00> : vector<16x32xf32>
    %498 = tpu.matmul %494, %497, %cst_253 {dimension_numbers = #tpu.dot_dimension_numbers<[1], [0], [0], [1], [0, 0, 1, 1], [], []>} : vector<16x8xf32>, vector<8x32xf32>, vector<16x32xf32> -> vector<16x32xf32>
    %499 = arith.addf %478, %498 : vector<16x32xf32>
    %500 = vector.extract_strided_slice %433 {offsets = [0, 0, 24], sizes = [2, 8, 8], strides = [1, 1, 1]} : vector<2x8x32xf32> to vector<2x8x8xf32>
    %501 = vector.extract_strided_slice %434 {offsets = [0, 0, 24], sizes = [2, 8, 8], strides = [1, 1, 1]} : vector<2x8x64xf32> to vector<2x8x8xf32>
    %502 = vector.extract_strided_slice %434 {offsets = [0, 0, 56], sizes = [2, 8, 8], strides = [1, 1, 1]} : vector<2x8x64xf32> to vector<2x8x8xf32>
    "tpu.trace_start"() <{level = 10 : i32, message = "bqd,bkd->bqk"}> : () -> ()
    %cst_254 = arith.constant dense<0.000000e+00> : vector<2x8x8xf32>
    %503 = tpu.matmul %500, %501, %cst_254 {dimension_numbers = #tpu.dot_dimension_numbers<[2], [2], [1], [1], [0, 0, 0, 1, 1, 1], [0], [0]>} : vector<2x8x8xf32>, vector<2x8x8xf32>, vector<2x8x8xf32> -> vector<2x8x8xf32>
    "tpu.trace_stop"() : () -> ()
    %cst_255 = arith.constant dense<0xFF800000> : vector<2x8xf32>
    %504 = vector.multi_reduction <maximumf>, %503, %cst_255 [2] : vector<2x8x8xf32> to vector<2x8xf32>
    %505 = vector.shape_cast %504 : vector<2x8xf32> to vector<2x8x1xf32>
    %506 = vector.broadcast %505 : vector<2x8x1xf32> to vector<2x8x8xf32>
    %507 = arith.subf %503, %506 : vector<2x8x8xf32>
    %508 = math.exp %507 : vector<2x8x8xf32>
    %cst_256 = arith.constant dense<0.000000e+00> : vector<2x8xf32>
    %509 = vector.multi_reduction <add>, %508, %cst_256 [2] : vector<2x8x8xf32> to vector<2x8xf32>
    %510 = vector.shape_cast %509 : vector<2x8xf32> to vector<2x8x1xf32>
    %511 = tpu.reciprocal %510 {approx = true} : vector<2x8x1xf32> -> vector<2x8x1xf32>
    %512 = vector.broadcast %511 : vector<2x8x1xf32> to vector<2x8x8xf32>
    %513 = arith.mulf %508, %512 : vector<2x8x8xf32>
    "tpu.trace_start"() <{level = 10 : i32, message = "bqk,bkd->bqd"}> : () -> ()
    %cst_257 = arith.constant dense<0.000000e+00> : vector<2x8x8xf32>
    %514 = tpu.matmul %513, %502, %cst_257 {dimension_numbers = #tpu.dot_dimension_numbers<[2], [1], [1], [2], [0, 0, 0, 1, 1, 2], [0], [0]>} : vector<2x8x8xf32>, vector<2x8x8xf32>, vector<2x8x8xf32> -> vector<2x8x8xf32>
    "tpu.trace_stop"() : () -> ()
    %515 = vector.shape_cast %514 : vector<2x8x8xf32> to vector<16x8xf32>
    %c1_i32_258 = arith.constant 1 : i32
    %c0_i32_259 = arith.constant 0 : i32
    %c0_i32_260 = arith.constant 0 : i32
    %516 = tpu.memref_slice %arg10[%c1_i32_258, %c0_i32_259, %c0_i32_260] : memref<2x32x32xf32, #tpu.memory_space<vmem>> -> memref<1x32x32xf32, #tpu.memory_space<vmem>>
    %517 = tpu.memref_squeeze %516 : memref<1x32x32xf32, #tpu.memory_space<vmem>> -> memref<32x32xf32, #tpu.memory_space<vmem>>
    %c24_261 = arith.constant 24 : index
    %c0_262 = arith.constant 0 : index
    %518 = vector.load %517[%c24_261, %c0_262] : memref<32x32xf32, #tpu.memory_space<vmem>>, vector<8x32xf32>
    %cst_263 = arith.constant dense<0.000000e+00> : vector<16x32xf32>
    %519 = tpu.matmul %515, %518, %cst_263 {dimension_numbers = #tpu.dot_dimension_numbers<[1], [0], [0], [1], [0, 0, 1, 1], [], []>} : vector<16x8xf32>, vector<8x32xf32>, vector<16x32xf32> -> vector<16x32xf32>
    %520 = arith.addf %499, %519 : vector<16x32xf32>
    %521 = arith.addf %422, %520 : vector<16x32xf32>
    %c1_264 = arith.constant 1 : index
    %c2_265 = arith.constant 2 : index
    %c0_266 = arith.constant 0 : index
    %c0_267 = arith.constant 0 : index
    %522 = vector.load %arg16[%c1_264, %c2_265, %c0_266, %c0_267] : memref<2x6x1x32xf32, #tpu.memory_space<vmem>>, vector<1x1x1x32xf32>
    %523 = vector.shape_cast %522 : vector<1x1x1x32xf32> to vector<1x32xf32>
    %c1_268 = arith.constant 1 : index
    %c3_269 = arith.constant 3 : index
    %c0_270 = arith.constant 0 : index
    %c0_271 = arith.constant 0 : index
    %524 = vector.load %arg16[%c1_268, %c3_269, %c0_270, %c0_271] : memref<2x6x1x32xf32, #tpu.memory_space<vmem>>, vector<1x1x1x32xf32>
    %525 = vector.shape_cast %524 : vector<1x1x1x32xf32> to vector<1x32xf32>
    %cst_272 = arith.constant dense<0.000000e+00> : vector<16xf32>
    %526 = vector.multi_reduction <add>, %521, %cst_272 [1] : vector<16x32xf32> to vector<16xf32>
    %527 = vector.shape_cast %526 : vector<16xf32> to vector<16x1xf32>
    %cst_273 = arith.constant 3.200000e+01 : f32
    %528 = vector.broadcast %cst_273 : f32 to vector<16x1xf32>
    %529 = arith.divf %527, %528 : vector<16x1xf32>
    %530 = vector.broadcast %529 : vector<16x1xf32> to vector<16x32xf32>
    %531 = arith.subf %521, %530 : vector<16x32xf32>
    %532 = arith.mulf %531, %531 : vector<16x32xf32>
    %cst_274 = arith.constant dense<0.000000e+00> : vector<16xf32>
    %533 = vector.multi_reduction <add>, %532, %cst_274 [1] : vector<16x32xf32> to vector<16xf32>
    %534 = vector.shape_cast %533 : vector<16xf32> to vector<16x1xf32>
    %cst_275 = arith.constant 3.200000e+01 : f32
    %535 = vector.broadcast %cst_275 : f32 to vector<16x1xf32>
    %536 = arith.divf %534, %535 : vector<16x1xf32>
    %537 = vector.broadcast %529 : vector<16x1xf32> to vector<16x32xf32>
    %538 = arith.subf %521, %537 : vector<16x32xf32>
    %cst_276 = arith.constant 9.99999974E-6 : f32
    %539 = vector.broadcast %cst_276 : f32 to vector<16x1xf32>
    %540 = arith.addf %536, %539 : vector<16x1xf32>
    %541 = math.rsqrt %540 : vector<16x1xf32>
    %542 = vector.broadcast %541 : vector<16x1xf32> to vector<16x32xf32>
    %543 = arith.mulf %538, %542 : vector<16x32xf32>
    %544 = vector.broadcast %523 : vector<1x32xf32> to vector<16x32xf32>
    %545 = arith.mulf %543, %544 : vector<16x32xf32>
    %546 = vector.broadcast %525 : vector<1x32xf32> to vector<16x32xf32>
    %547 = arith.addf %545, %546 : vector<16x32xf32>
    %c1_277 = arith.constant 1 : index
    %c0_278 = arith.constant 0 : index
    %c0_279 = arith.constant 0 : index
    %548 = vector.load %arg12[%c1_277, %c0_278, %c0_279] : memref<2x32x64xf32, #tpu.memory_space<vmem>>, vector<1x32x64xf32>
    %549 = vector.shape_cast %548 : vector<1x32x64xf32> to vector<32x64xf32>
    %cst_280 = arith.constant dense<0.000000e+00> : vector<16x64xf32>
    %550 = tpu.matmul %547, %549, %cst_280 {dimension_numbers = #tpu.dot_dimension_numbers<[1], [0], [0], [1], [0, 0, 1, 1], [], []>} : vector<16x32xf32>, vector<32x64xf32>, vector<16x64xf32> -> vector<16x64xf32>
    %c1_281 = arith.constant 1 : index
    %c0_282 = arith.constant 0 : index
    %c0_283 = arith.constant 0 : index
    %551 = vector.load %arg13[%c1_281, %c0_282, %c0_283] : memref<2x1x64xf32, #tpu.memory_space<vmem>>, vector<1x1x64xf32>
    %552 = vector.shape_cast %551 : vector<1x1x64xf32> to vector<1x64xf32>
    %553 = vector.broadcast %552 : vector<1x64xf32> to vector<16x64xf32>
    %554 = arith.addf %550, %553 : vector<16x64xf32>
    %cst_284 = arith.constant 0.000000e+00 : f32
    %555 = vector.broadcast %cst_284 : f32 to vector<16x64xf32>
    %556 = arith.maximumf %554, %555 : vector<16x64xf32>
    %c1_285 = arith.constant 1 : index
    %c0_286 = arith.constant 0 : index
    %c0_287 = arith.constant 0 : index
    %557 = vector.load %arg14[%c1_285, %c0_286, %c0_287] : memref<2x64x32xf32, #tpu.memory_space<vmem>>, vector<1x64x32xf32>
    %558 = vector.shape_cast %557 : vector<1x64x32xf32> to vector<64x32xf32>
    %cst_288 = arith.constant dense<0.000000e+00> : vector<16x32xf32>
    %559 = tpu.matmul %556, %558, %cst_288 {dimension_numbers = #tpu.dot_dimension_numbers<[1], [0], [0], [1], [0, 0, 1, 1], [], []>} : vector<16x64xf32>, vector<64x32xf32>, vector<16x32xf32> -> vector<16x32xf32>
    %c1_289 = arith.constant 1 : index
    %c0_290 = arith.constant 0 : index
    %c0_291 = arith.constant 0 : index
    %560 = vector.load %arg15[%c1_289, %c0_290, %c0_291] : memref<2x1x32xf32, #tpu.memory_space<vmem>>, vector<1x1x32xf32>
    %561 = vector.shape_cast %560 : vector<1x1x32xf32> to vector<1x32xf32>
    %562 = vector.broadcast %561 : vector<1x32xf32> to vector<16x32xf32>
    %563 = arith.addf %559, %562 : vector<16x32xf32>
    %564 = arith.addf %547, %563 : vector<16x32xf32>
    %c1_292 = arith.constant 1 : index
    %c4_293 = arith.constant 4 : index
    %c0_294 = arith.constant 0 : index
    %c0_295 = arith.constant 0 : index
    %565 = vector.load %arg16[%c1_292, %c4_293, %c0_294, %c0_295] : memref<2x6x1x32xf32, #tpu.memory_space<vmem>>, vector<1x1x1x32xf32>
    %566 = vector.shape_cast %565 : vector<1x1x1x32xf32> to vector<1x32xf32>
    %c1_296 = arith.constant 1 : index
    %c5_297 = arith.constant 5 : index
    %c0_298 = arith.constant 0 : index
    %c0_299 = arith.constant 0 : index
    %567 = vector.load %arg16[%c1_296, %c5_297, %c0_298, %c0_299] : memref<2x6x1x32xf32, #tpu.memory_space<vmem>>, vector<1x1x1x32xf32>
    %568 = vector.shape_cast %567 : vector<1x1x1x32xf32> to vector<1x32xf32>
    %cst_300 = arith.constant dense<0.000000e+00> : vector<16xf32>
    %569 = vector.multi_reduction <add>, %564, %cst_300 [1] : vector<16x32xf32> to vector<16xf32>
    %570 = vector.shape_cast %569 : vector<16xf32> to vector<16x1xf32>
    %cst_301 = arith.constant 3.200000e+01 : f32
    %571 = vector.broadcast %cst_301 : f32 to vector<16x1xf32>
    %572 = arith.divf %570, %571 : vector<16x1xf32>
    %573 = vector.broadcast %572 : vector<16x1xf32> to vector<16x32xf32>
    %574 = arith.subf %564, %573 : vector<16x32xf32>
    %575 = arith.mulf %574, %574 : vector<16x32xf32>
    %cst_302 = arith.constant dense<0.000000e+00> : vector<16xf32>
    %576 = vector.multi_reduction <add>, %575, %cst_302 [1] : vector<16x32xf32> to vector<16xf32>
    %577 = vector.shape_cast %576 : vector<16xf32> to vector<16x1xf32>
    %cst_303 = arith.constant 3.200000e+01 : f32
    %578 = vector.broadcast %cst_303 : f32 to vector<16x1xf32>
    %579 = arith.divf %577, %578 : vector<16x1xf32>
    %580 = vector.broadcast %572 : vector<16x1xf32> to vector<16x32xf32>
    %581 = arith.subf %564, %580 : vector<16x32xf32>
    %cst_304 = arith.constant 9.99999974E-6 : f32
    %582 = vector.broadcast %cst_304 : f32 to vector<16x1xf32>
    %583 = arith.addf %579, %582 : vector<16x1xf32>
    %584 = math.rsqrt %583 : vector<16x1xf32>
    %585 = vector.broadcast %584 : vector<16x1xf32> to vector<16x32xf32>
    %586 = arith.mulf %581, %585 : vector<16x32xf32>
    %587 = vector.broadcast %566 : vector<1x32xf32> to vector<16x32xf32>
    %588 = arith.mulf %586, %587 : vector<16x32xf32>
    %589 = vector.broadcast %568 : vector<1x32xf32> to vector<16x32xf32>
    %590 = arith.addf %588, %589 : vector<16x32xf32>
    %c0_305 = arith.constant 0 : index
    %c0_306 = arith.constant 0 : index
    %591 = vector.load %arg17[%c0_305, %c0_306] : memref<16x32xf32, #tpu.memory_space<vmem>>, vector<16x32xf32>
    tpu.vector_store %arg17[%c0_305, %c0_306], %590 {strides = array<i32>} : memref<16x32xf32, #tpu.memory_space<vmem>>, vector<16x32xf32>,
    return
  }
}

</mosaic_0001>

<llo_original>
// kernel: tpu_custom_call.1
$region0: #{tpu_custom_call.1}
  #allocation0 [shape = 'u32[]', space=smem, size = 0x4, offset = 0x4, fixed_abs, tag = 'smem constant byte address 0x4 - core index']
  #allocation1 [shape = 'u32[144,128]{1,0:T(1,128)}', space=vmem, size = 0x12000, scoped, tag = 'internal scratch']
  %s0 = inlined_call_operand.hbm [shape: f32[16,32], index: 0, kind: input, shape index: {}]
  %s1 = inlined_call_operand.hbm [shape: f32[16,32], index: 1, kind: input, shape index: {}]
  %s2 = inlined_call_operand.vmem [shape: f32[2,32,96], index: 2, kind: input, shape index: {}]
  %s3 = inlined_call_operand.vmem [shape: f32[2,1,96], index: 3, kind: input, shape index: {}]
  %s4 = inlined_call_operand.vmem [shape: f32[2,32,32], index: 4, kind: input, shape index: {}]
  %s5 = inlined_call_operand.hbm [shape: f32[2,1,32], index: 5, kind: input, shape index: {}]
  %s6 = inlined_call_operand.vmem [shape: f32[2,32,32], index: 6, kind: input, shape index: {}]
  %s7 = inlined_call_operand.hbm [shape: f32[2,1,32], index: 7, kind: input, shape index: {}]
  %s8 = inlined_call_operand.hbm [shape: f32[32,128], index: 8, kind: input, shape index: {}]
  %s9 = inlined_call_operand.hbm [shape: f32[1,128], index: 9, kind: input, shape index: {}]
  %s10 = inlined_call_operand.hbm [shape: f32[2,32,32], index: 10, kind: input, shape index: {}]
  %s11 = inlined_call_operand.vmem [shape: f32[2,1,32], index: 11, kind: input, shape index: {}]
  %s12 = inlined_call_operand.hbm [shape: f32[2,32,64], index: 12, kind: input, shape index: {}]
  %s13 = inlined_call_operand.vmem [shape: f32[2,1,64], index: 13, kind: input, shape index: {}]
  %s14 = inlined_call_operand.vmem [shape: f32[2,64,32], index: 14, kind: input, shape index: {}]
  %s15 = inlined_call_operand.vmem [shape: f32[2,1,32], index: 15, kind: input, shape index: {}]
  %s16 = inlined_call_operand.vmem [shape: f32[2,6,1,32], index: 16, kind: input, shape index: {}]
  %s17 = inlined_call_operand.hbm [shape: f32[16,32], index: 17, kind: output, shape index: {}]
  %s18 = sld [smem:[#allocation0]]
  $region110: #{tpu_custom_call.1} parent=0
    _
  %s20 = ssub.s32 1, %s18
  %s21 = scalar_select 0, %s20, %s18
  $region1: #{tpu_custom_call.1} parent=0
    #allocation2 [shape = 'u8[8192]{0}', space=vmem, size = 0x2000, scoped, tag = 'input window, operand 0, single buffered']
    #allocation3 [shape = 's32[1]{0}', space=sflag, size = 0x4, scoped, tag = 'scoped memory for tpu_custom_call.1']
    #allocation4 [shape = 's32[1]{0}', space=sflag, size = 0x4, scoped, tag = 'scoped memory for tpu_custom_call.1']
    #allocation5 [shape = 'u8[8192]{0}', space=vmem, size = 0x2000, scoped, tag = 'input window, operand 1, single buffered']
    #allocation6 [shape = 's32[1]{0}', space=sflag, size = 0x4, scoped, tag = 'scoped memory for tpu_custom_call.1']
    #allocation7 [shape = 'u8[1024]{0}', space=vmem, size = 0x400, scoped, tag = 'input window, operand 5, single buffered']
    #allocation8 [shape = 'u8[1024]{0}', space=vmem, size = 0x400, scoped, tag = 'input window, operand 7, single buffered']
    #allocation9 [shape = 's32[1]{0}', space=sflag, size = 0x4, scoped, tag = 'scoped memory for tpu_custom_call.1']
    #allocation10 [shape = 'u8[16384]{0}', space=vmem, size = 0x4000, scoped, tag = 'input window, operand 8, single buffered']
    #allocation11 [shape = 'u8[512]{0}', space=vmem, size = 0x400, scoped, tag = 'input window, operand 9, single buffered']
    #allocation12 [shape = 's32[1]{0}', space=sflag, size = 0x4, scoped, tag = 'scoped memory for tpu_custom_call.1']
    #allocation13 [shape = 'u8[32768]{0}', space=vmem, size = 0x8000, scoped, tag = 'input window, operand 10, single buffered']
    #allocation14 [shape = 'u8[32768]{0}', space=vmem, size = 0x8000, scoped, tag = 'input window, operand 12, single buffered']
    #allocation15 [shape = 's32[1]{0}', space=sflag, size = 0x4, scoped, tag = 'scoped memory for tpu_custom_call.1']
    #allocation16 [shape = 'u8[8192]{0}', space=vmem, size = 0x2000, scoped, tag = 'output window, operand 0, single buffered']
    %22 = vsyncpa [#allocation3], 0
    %23 = vsyncpa [#allocation6], 0
    %24 = vsyncpa [#allocation9], 0
    %25 = vsyncpa [#allocation12], 0
    %26 = vsyncpa [#allocation15], 0
    %27 = vsyncpa [#allocation4], 0
    // Predicated region
    $region2: #{tpu_custom_call.1} parent=1 // pred_check
      _
    $region3: #{tpu_custom_call.1} parent=1 // pred_check_branch
      %29 = sbr.rel (0) target = $region5
    $region4: #{tpu_custom_call.1} parent=1 // pred_region
      %s31 = ssub.s32 256, 256
      %32 = vsyncadd [#allocation3], %s31
      %s33 = sshll.u32 [#allocation2], 4
      %s34 = int_to_ptr.vmem [resolvable:$true] %s33
      %39 = dma.hbm_to_vmem [thread:$0]  %s0, 256, %s34, [#allocation3], 128, 128, 8
    $region5: #{tpu_custom_call.1} parent=1 // pred_fallthru
      _
    // Predicated region
    $region6: #{tpu_custom_call.1} parent=1 // pred_check
      _
    $region7: #{tpu_custom_call.1} parent=1 // pred_check_branch
      %41 = sbr.rel (0) target = $region9
    $region8: #{tpu_custom_call.1} parent=1 // pred_region
      %s43 = ssub.s32 256, 256
      %44 = vsyncadd [#allocation6], %s43
      %s45 = sshll.u32 [#allocation5], 4
      %s46 = int_to_ptr.vmem [resolvable:$true] %s45
      %51 = dma.hbm_to_vmem [thread:$0]  %s1, 256, %s46, [#allocation6], 128, 128, 8
    $region9: #{tpu_custom_call.1} parent=1 // pred_fallthru
      _
    // Predicated region
    $region10: #{tpu_custom_call.1} parent=1 // pred_check
      _
    $region11: #{tpu_custom_call.1} parent=1 // pred_check_branch
      %53 = sbr.rel (0) target = $region13
    $region12: #{tpu_custom_call.1} parent=1 // pred_region
      _
    $region13: #{tpu_custom_call.1} parent=1 // pred_fallthru
      _
    // Predicated region
    $region14: #{tpu_custom_call.1} parent=1 // pred_check
      _
    $region15: #{tpu_custom_call.1} parent=1 // pred_check_branch
      %55 = sbr.rel (0) target = $region17
    $region16: #{tpu_custom_call.1} parent=1 // pred_region
      _
    $region17: #{tpu_custom_call.1} parent=1 // pred_fallthru
      _
    // Predicated region
    $region18: #{tpu_custom_call.1} parent=1 // pred_check
      _
    $region19: #{tpu_custom_call.1} parent=1 // pred_check_branch
      %57 = sbr.rel (0) target = $region21
    $region20: #{tpu_custom_call.1} parent=1 // pred_region
      _
    $region21: #{tpu_custom_call.1} parent=1 // pred_fallthru
      _
    // Predicated region
    $region22: #{tpu_custom_call.1} parent=1 // pred_check
      _
    $region23: #{tpu_custom_call.1} parent=1 // pred_check_branch
      %59 = sbr.rel (0) target = $region25
    $region24: #{tpu_custom_call.1} parent=1 // pred_region
      %s61 = ssub.s32 32, 32
      %62 = vsyncadd [#allocation6], %s61
      %s63 = sshll.u32 [#allocation7], 4
      %s64 = int_to_ptr.vmem [resolvable:$true] %s63
      %69 = dma.hbm_to_vmem [thread:$0]  %s5, 32, %s64, [#allocation6], 16, 16, 1
    $region25: #{tpu_custom_call.1} parent=1 // pred_fallthru
      _
    // Predicated region
    $region26: #{tpu_custom_call.1} parent=1 // pred_check
      _
    $region27: #{tpu_custom_call.1} parent=1 // pred_check_branch
      %71 = sbr.rel (0) target = $region29
    $region28: #{tpu_custom_call.1} parent=1 // pred_region
      _
    $region29: #{tpu_custom_call.1} parent=1 // pred_fallthru
      _
    // Predicated region
    $region30: #{tpu_custom_call.1} parent=1 // pred_check
      _
    $region31: #{tpu_custom_call.1} parent=1 // pred_check_branch
      %73 = sbr.rel (0) target = $region33
    $region32: #{tpu_custom_call.1} parent=1 // pred_region
      %s75 = ssub.s32 32, 32
      %76 = vsyncadd [#allocation9], %s75
      %s77 = sshll.u32 [#allocation8], 4
      %s78 = int_to_ptr.vmem [resolvable:$true] %s77
      %83 = dma.hbm_to_vmem [thread:$0]  %s7, 32, %s78, [#allocation9], 16, 16, 1
    $region33: #{tpu_custom_call.1} parent=1 // pred_fallthru
      _
    // Predicated region
    $region34: #{tpu_custom_call.1} parent=1 // pred_check
      _
    $region35: #{tpu_custom_call.1} parent=1 // pred_check_branch
      %85 = sbr.rel (0) target = $region37
    $region36: #{tpu_custom_call.1} parent=1 // pred_region
      %s87 = ssub.s32 512, 512
      %88 = vsyncadd [#allocation9], %s87
      %s89 = sshll.u32 [#allocation10], 4
      %s90 = int_to_ptr.vmem [resolvable:$true] %s89
      %95 = dma.hbm_to_vmem [thread:$0]  %s8, 512, %s90, [#allocation9], 128, 128, 8
    $region37: #{tpu_custom_call.1} parent=1 // pred_fallthru
      _
    // Predicated region
    $region38: #{tpu_custom_call.1} parent=1 // pred_check
      _
    $region39: #{tpu_custom_call.1} parent=1 // pred_check_branch
      %97 = sbr.rel (0) target = $region41
    $region40: #{tpu_custom_call.1} parent=1 // pred_region
      %s99 = ssub.s32 16, 16
      %100 = vsyncadd [#allocation12], %s99
      %s102 = sshll.u32 [#allocation11], 4
      %s103 = int_to_ptr.vmem [resolvable:$true] %s102
      %105 = dma.hbm_to_vmem [thread:$0]  %s9, 16, %s103, [#allocation12]
    $region41: #{tpu_custom_call.1} parent=1 // pred_fallthru
      _
    // Predicated region
    $region42: #{tpu_custom_call.1} parent=1 // pred_check
      _
    $region43: #{tpu_custom_call.1} parent=1 // pred_check_branch
      %107 = sbr.rel (0) target = $region45
    $region44: #{tpu_custom_call.1} parent=1 // pred_region
      %s109 = ssub.s32 1024, 1024
      %110 = vsyncadd [#allocation12], %s109
      %s111 = sshll.u32 [#allocation13], 4
      %s112 = int_to_ptr.vmem [resolvable:$true] %s111
      %117 = dma.hbm_to_vmem [thread:$0]  %s10, 1024, %s112, [#allocation12], 128, 128, 8
    $region45: #{tpu_custom_call.1} parent=1 // pred_fallthru
      _
    // Predicated region
    $region46: #{tpu_custom_call.1} parent=1 // pred_check
      _
    $region47: #{tpu_custom_call.1} parent=1 // pred_check_branch
      %119 = sbr.rel (0) target = $region49
    $region48: #{tpu_custom_call.1} parent=1 // pred_region
      _
    $region49: #{tpu_custom_call.1} parent=1 // pred_fallthru
      _
    // Predicated region
    $region50: #{tpu_custom_call.1} parent=1 // pred_check
      _
    $region51: #{tpu_custom_call.1} parent=1 // pred_check_branch
      %121 = sbr.rel (0) target = $region53
    $region52: #{tpu_custom_call.1} parent=1 // pred_region
      %s123 = ssub.s32 1024, 1024
      %124 = vsyncadd [#allocation15], %s123
      %s125 = sshll.u32 [#allocation14], 4
      %s126 = int_to_ptr.vmem [resolvable:$true] %s125
      %131 = dma.hbm_to_vmem [thread:$0]  %s12, 1024, %s126, [#allocation15], 128, 128, 8
    $region53: #{tpu_custom_call.1} parent=1 // pred_fallthru
      _
    // Predicated region
    $region54: #{tpu_custom_call.1} parent=1 // pred_check
      _
    $region55: #{tpu_custom_call.1} parent=1 // pred_check_branch
      %133 = sbr.rel (0) target = $region57
    $region56: #{tpu_custom_call.1} parent=1 // pred_region
      _
    $region57: #{tpu_custom_call.1} parent=1 // pred_fallthru
      _
    // Predicated region
    $region58: #{tpu_custom_call.1} parent=1 // pred_check
      _
    $region59: #{tpu_custom_call.1} parent=1 // pred_check_branch
      %135 = sbr.rel (0) target = $region61
    $region60: #{tpu_custom_call.1} parent=1 // pred_region
      _
    $region61: #{tpu_custom_call.1} parent=1 // pred_fallthru
      _
    // Predicated region
    $region62: #{tpu_custom_call.1} parent=1 // pred_check
      _
    $region63: #{tpu_custom_call.1} parent=1 // pred_check_branch
      %137 = sbr.rel (0) target = $region65
    $region64: #{tpu_custom_call.1} parent=1 // pred_region
      _
    $region65: #{tpu_custom_call.1} parent=1 // pred_fallthru
      _
    // Predicated region
    $region66: #{tpu_custom_call.1} parent=1 // pred_check
      _
    $region67: #{tpu_custom_call.1} parent=1 // pred_check_branch
      %139 = sbr.rel (0) target = $region69
    $region68: #{tpu_custom_call.1} parent=1 // pred_region
      _
    $region69: #{tpu_custom_call.1} parent=1 // pred_fallthru
      _
    // Predicated region
    $region70: #{tpu_custom_call.1} parent=1 // pred_check
      _
    $region71: #{tpu_custom_call.1} parent=1 // pred_check_branch
      %141 = sbr.rel (0) target = $region73
    $region72: #{tpu_custom_call.1} parent=1 // pred_region
      %142 = dma.done [#allocation3], 256
    $region73: #{tpu_custom_call.1} parent=1 // pred_fallthru
      _
    // Predicated region
    $region74: #{tpu_custom_call.1} parent=1 // pred_check
      _
    $region75: #{tpu_custom_call.1} parent=1 // pred_check_branch
      %144 = sbr.rel (0) target = $region77
    $region76: #{tpu_custom_call.1} parent=1 // pred_region
      %145 = dma.done [#allocation6], 256
    $region77: #{tpu_custom_call.1} parent=1 // pred_fallthru
      _
    // Predicated region
    $region78: #{tpu_custom_call.1} parent=1 // pred_check
      _
    $region79: #{tpu_custom_call.1} parent=1 // pred_check_branch
      %147 = sbr.rel (0) target = $region81
    $region80: #{tpu_custom_call.1} parent=1 // pred_region
      %148 = dma.done [#allocation6], 32
    $region81: #{tpu_custom_call.1} parent=1 // pred_fallthru
      _
    // Predicated region
    $region82: #{tpu_custom_call.1} parent=1 // pred_check
      _
    $region83: #{tpu_custom_call.1} parent=1 // pred_check_branch
      %150 = sbr.rel (0) target = $region85
    $region84: #{tpu_custom_call.1} parent=1 // pred_region
      %151 = dma.done [#allocation9], 32
    $region85: #{tpu_custom_call.1} parent=1 // pred_fallthru
      _
    // Predicated region
    $region86: #{tpu_custom_call.1} parent=1 // pred_check
      _
    $region87: #{tpu_custom_call.1} parent=1 // pred_check_branch
      %153 = sbr.rel (0) target = $region89
    $region88: #{tpu_custom_call.1} parent=1 // pred_region
      %154 = dma.done [#allocation9], 512
    $region89: #{tpu_custom_call.1} parent=1 // pred_fallthru
      _
    // Predicated region
    $region90: #{tpu_custom_call.1} parent=1 // pred_check
      _
    $region91: #{tpu_custom_call.1} parent=1 // pred_check_branch
      %156 = sbr.rel (0) target = $region93
    $region92: #{tpu_custom_call.1} parent=1 // pred_region
      %157 = dma.done [#allocation12], 16
    $region93: #{tpu_custom_call.1} parent=1 // pred_fallthru
      _
    // Predicated region
    $region94: #{tpu_custom_call.1} parent=1 // pred_check
      _
    $region95: #{tpu_custom_call.1} parent=1 // pred_check_branch
      %159 = sbr.rel (0) target = $region97
    $region96: #{tpu_custom_call.1} parent=1 // pred_region
      %160 = dma.done [#allocation12], 1024
    $region97: #{tpu_custom_call.1} parent=1 // pred_fallthru
      _
    // Predicated region
    $region98: #{tpu_custom_call.1} parent=1 // pred_check
      _
    $region99: #{tpu_custom_call.1} parent=1 // pred_check_branch
      %162 = sbr.rel (0) target = $region101
    $region100: #{tpu_custom_call.1} parent=1 // pred_region
      %163 = dma.done [#allocation15], 1024
    $region101: #{tpu_custom_call.1} parent=1 // pred_fallthru
      _
    %v164 = vld [vmem:[#allocation2] sm:$0xff]
    %v165 = vld [vmem:[#allocation2 + $0x8] sm:$0xff]
    %v166 = vld [vmem:[#allocation5] sm:$0xff]
    %v167 = vld [vmem:[#allocation5 + $0x8] sm:$0xff]
    %v168 = vld [vmem:[#allocation10] sm:$0xff]
    %v169 = vld [vmem:[#allocation10 + $0x8] sm:$0xff]
    %v170 = vld [vmem:[#allocation10 + $0x10] sm:$0xff]
    %v171 = vld [vmem:[#allocation10 + $0x18] sm:$0xff]
    %v172 = vld [vmem:[#allocation11] sm:$0x1]
    %v174 = vlaneseq
    %v175 = vshrl.u32 %v174, 7
    %v176 = vsub.s32 0, %v175
    %v177 = vrot.slane %v172, %v176
    %vm179 = vcmask 261120
    %v181 = vsel %vm179, %v166, 0
    %v184 = vsel %vm179, %v167, 0
    %186 = vmatprep.subr.mxu0 0.0
    %187 = vmatpush1.msra.mxu0 0.0
    %188 = vmatprep.subr.mxu0 0.0
    %189 = vmatpush1.msra.mxu0 0.0
    %190 = vmatprep.subr.mxu0 0.0
    %191 = vmatpush1.msra.mxu0 0.0
    %192 = vmatprep.subr.mxu0 0.0
    %193 = vmatpush1.msra.mxu0 0.0
    %194 = vmatprep.subr.mxu0 0.0
    %195 = vmatpush1.msra.mxu0 0.0
    %196 = vmatprep.subr.mxu0 0.0
    %197 = vmatpush1.msra.mxu0 0.0
    %198 = vmatprep.subr.mxu0 0.0
    %199 = vmatpush1.msra.mxu0 0.0
    %200 = vmatprep.subr.mxu0 0.0
    %201 = vmatpush1.msra.mxu0 0.0
    %202 = vmatprep.subr.mxu0 0.0
    %203 = vmatpush1.msra.mxu0 0.0
    %204 = vmatprep.subr.mxu0 0.0
    %205 = vmatpush1.msra.mxu0 0.0
    %206 = vmatprep.subr.mxu0 0.0
    %207 = vmatpush1.msra.mxu0 0.0
    %208 = vmatprep.subr.mxu0 0.0
    %209 = vmatpush1.msra.mxu0 0.0
    %210 = vmatprep.subr.mxu0 0.0
    %211 = vmatpush1.msra.mxu0 %v171
    %212 = vmatprep.subr.mxu0 0.0
    %213 = vmatpush1.msra.mxu0 %v170
    %214 = vmatprep.subr.mxu0 0.0
    %215 = vmatpush1.msra.mxu0 %v169
    %216 = vmatprep.subr.mxu0 0.0
    %217 = vmatpush1.msra.mxu0 %v168
    %218 = vmatprep.subr.mxu0 0.0
    %219 = vmatpush2.msra.mxu0 0.0
    %220 = vmatprep.subr.mxu0 0.0
    %221 = vmatpush2.msra.mxu0 0.0
    %222 = vmatprep.subr.mxu0 0.0
    %223 = vmatpush2.msra.mxu0 0.0
    %224 = vmatprep.subr.mxu0 0.0
    %225 = vmatpush2.msra.mxu0 0.0
    %226 = vmatprep.subr.mxu0 0.0
    %227 = vmatpush2.msra.mxu0 0.0
    %228 = vmatprep.subr.mxu0 0.0
    %229 = vmatpush2.msra.mxu0 0.0
    %230 = vmatprep.subr.mxu0 0.0
    %231 = vmatpush2.msra.mxu0 0.0
    %232 = vmatprep.subr.mxu0 0.0
    %233 = vmatpush2.msra.mxu0 0.0
    %234 = vmatprep.subr.mxu0 0.0
    %235 = vmatpush2.msra.mxu0 0.0
    %236 = vmatprep.subr.mxu0 0.0
    %237 = vmatpush2.msra.mxu0 0.0
    %238 = vmatprep.subr.mxu0 0.0
    %239 = vmatpush2.msra.mxu0 0.0
    %240 = vmatprep.subr.mxu0 0.0
    %241 = vmatpush2.msra.mxu0 0.0
    %242 = vmatprep.subr.mxu0 0.0
    %243 = vmatpush2.msra.mxu0 0.0
    %244 = vmatprep.subr.mxu0 0.0
    %245 = vmatpush2.msra.mxu0 0.0
    %246 = vmatprep.subr.mxu0 0.0
    %247 = vmatpush2.msra.mxu0 0.0
    %248 = vmatprep.subr.mxu0 0.0
    %249 = vmatpush2.msra.mxu0 0.0
    %250 = vmatprep.mubr.f32.mxu0 0.0
    %251 = vmatmul.mubr.f32.gmra.mxu0 %v181
    %v252 = vpop.f32.mrf.mxu0
    %v253 = vadd.f32 %v177, %v252
    %v254 = vpop.f32.mrf.mxu0
    %255 = vmatprep.mubr.f32.mxu0 0.0
    %256 = vmatmul.mubr.f32.gmra.mxu0 %v184
    %v257 = vpop.f32.mrf.mxu0
    %v258 = vadd.f32 %v177, %v257
    %v259 = vpop.f32.mrf.mxu0
    %260 = vdwg.mxu0
    %v261 = vld [vmem:[%s2] sm:$0xff]
    %v262 = vld [vmem:[%s2 + $0x8] sm:$0xff]
    %v263 = vld [vmem:[%s2 + $0x10] sm:$0xff]
    %v264 = vld [vmem:[%s2 + $0x18] sm:$0xff]
    %v265 = vld [vmem:[%s3] sm:$0x1]
    %v267 = vlaneseq
    %v268 = vshrl.u32 %v267, 7
    %v269 = vsub.s32 0, %v268
    %v270 = vrot.slane %v265, %v269
    %v273 = vsel %vm179, %v164, 0
    %v276 = vsel %vm179, %v165, 0
    %278 = vmatprep.subr.mxu0 0.0
    %279 = vmatpush1.msra.mxu0 0.0
    %280 = vmatprep.subr.mxu0 0.0
    %281 = vmatpush1.msra.mxu0 0.0
    %282 = vmatprep.subr.mxu0 0.0
    %283 = vmatpush1.msra.mxu0 0.0
    %284 = vmatprep.subr.mxu0 0.0
    %285 = vmatpush1.msra.mxu0 0.0
    %286 = vmatprep.subr.mxu0 0.0
    %287 = vmatpush1.msra.mxu0 0.0
    %288 = vmatprep.subr.mxu0 0.0
    %289 = vmatpush1.msra.mxu0 0.0
    %290 = vmatprep.subr.mxu0 0.0
    %291 = vmatpush1.msra.mxu0 0.0
    %292 = vmatprep.subr.mxu0 0.0
    %293 = vmatpush1.msra.mxu0 0.0
    %294 = vmatprep.subr.mxu0 0.0
    %295 = vmatpush1.msra.mxu0 0.0
    %296 = vmatprep.subr.mxu0 0.0
    %297 = vmatpush1.msra.mxu0 0.0
    %298 = vmatprep.subr.mxu0 0.0
    %299 = vmatpush1.msra.mxu0 0.0
    %300 = vmatprep.subr.mxu0 0.0
    %301 = vmatpush1.msra.mxu0 0.0
    %302 = vmatprep.subr.mxu0 0.0
    %303 = vmatpush1.msra.mxu0 %v264
    %304 = vmatprep.subr.mxu0 0.0
    %305 = vmatpush1.msra.mxu0 %v263
    %306 = vmatprep.subr.mxu0 0.0
    %307 = vmatpush1.msra.mxu0 %v262
    %308 = vmatprep.subr.mxu0 0.0
    %309 = vmatpush1.msra.mxu0 %v261
    %310 = vmatprep.subr.mxu0 0.0
    %311 = vmatpush2.msra.mxu0 0.0
    %312 = vmatprep.subr.mxu0 0.0
    %313 = vmatpush2.msra.mxu0 0.0
    %314 = vmatprep.subr.mxu0 0.0
    %315 = vmatpush2.msra.mxu0 0.0
    %316 = vmatprep.subr.mxu0 0.0
    %317 = vmatpush2.msra.mxu0 0.0
    %318 = vmatprep.subr.mxu0 0.0
    %319 = vmatpush2.msra.mxu0 0.0
    %320 = vmatprep.subr.mxu0 0.0
    %321 = vmatpush2.msra.mxu0 0.0
    %322 = vmatprep.subr.mxu0 0.0
    %323 = vmatpush2.msra.mxu0 0.0
    %324 = vmatprep.subr.mxu0 0.0
    %325 = vmatpush2.msra.mxu0 0.0
    %326 = vmatprep.subr.mxu0 0.0
    %327 = vmatpush2.msra.mxu0 0.0
    %328 = vmatprep.subr.mxu0 0.0
    %329 = vmatpush2.msra.mxu0 0.0
    %330 = vmatprep.subr.mxu0 0.0
    %331 = vmatpush2.msra.mxu0 0.0
    %332 = vmatprep.subr.mxu0 0.0
    %333 = vmatpush2.msra.mxu0 0.0
    %334 = vmatprep.subr.mxu0 0.0
    %335 = vmatpush2.msra.mxu0 0.0
    %336 = vmatprep.subr.mxu0 0.0
    %337 = vmatpush2.msra.mxu0 0.0
    %338 = vmatprep.subr.mxu0 0.0
    %339 = vmatpush2.msra.mxu0 0.0
    %340 = vmatprep.subr.mxu0 0.0
    %341 = vmatpush2.msra.mxu0 0.0
    %342 = vmatprep.mubr.f32.mxu0 0.0
    %343 = vmatmul.mubr.f32.gmra.mxu0 %v273
    %v344 = vpop.f32.mrf.mxu0
    %v345 = vadd.f32 %v270, %v344
    %v346 = vpop.f32.mrf.mxu0
    %347 = vmatprep.mubr.f32.mxu0 0.0
    %348 = vmatmul.mubr.f32.gmra.mxu0 %v276
    %v349 = vpop.f32.mrf.mxu0
    %v350 = vadd.f32 %v270, %v349
    %v351 = vpop.f32.mrf.mxu0
    %352 = vdwg.mxu0
    %v353 = vld [vmem:[#allocation7] sm:$0x1]
    %v355 = vlaneseq
    %v356 = vshrl.u32 %v355, 7
    %v357 = vsub.s32 0, %v356
    %v358 = vrot.slane %v353, %v357
    %361 = vrot.lane.b32.xlu0 %v345, 96
    %v362 = vpop.permute.xlu0 %361
    %vm363 = vcmask 64512
    %v364 = vsel %vm363, %v345, 0
    %v366 = vsel %vm363, %v362, 0
    %368 = vmatprep.subr.mxu0 0.0
    %369 = vmatpush1.xpose.msra.mxu0 0.0
    %370 = vmatprep.subr.mxu0 0.0
    %371 = vmatpush1.xpose.msra.mxu0 0.0
    %372 = vmatprep.subr.mxu0 0.0
    %373 = vmatpush1.xpose.msra.mxu0 0.0
    %374 = vmatprep.subr.mxu0 0.0
    %375 = vmatpush1.xpose.msra.mxu0 0.0
    %376 = vmatprep.subr.mxu0 0.0
    %377 = vmatpush1.xpose.msra.mxu0 0.0
    %378 = vmatprep.subr.mxu0 0.0
    %379 = vmatpush1.xpose.msra.mxu0 0.0
    %380 = vmatprep.subr.mxu0 0.0
    %381 = vmatpush1.xpose.msra.mxu0 0.0
    %382 = vmatprep.subr.mxu0 0.0
    %383 = vmatpush1.xpose.msra.mxu0 0.0
    %384 = vmatprep.subr.mxu0 0.0
    %385 = vmatpush1.xpose.msra.mxu0 0.0
    %386 = vmatprep.subr.mxu0 0.0
    %387 = vmatpush1.xpose.msra.mxu0 0.0
    %388 = vmatprep.subr.mxu0 0.0
    %389 = vmatpush1.xpose.msra.mxu0 0.0
    %390 = vmatprep.subr.mxu0 0.0
    %391 = vmatpush1.xpose.msra.mxu0 0.0
    %392 = vmatprep.subr.mxu0 0.0
    %393 = vmatpush1.xpose.msra.mxu0 0.0
    %394 = vmatprep.subr.mxu0 0.0
    %395 = vmatpush1.xpose.msra.mxu0 0.0
    %396 = vmatprep.subr.mxu0 0.0
    %397 = vmatpush1.xpose.msra.mxu0 0.0
    %398 = vmatprep.subr.mxu0 0.0
    %399 = vmatpush1.xpose.msra.mxu0 %v366
    %400 = vmatprep.subr.mxu0 0.0
    %401 = vmatpush2.xpose.msra.mxu0 0.0
    %402 = vmatprep.subr.mxu0 0.0
    %403 = vmatpush2.xpose.msra.mxu0 0.0
    %404 = vmatprep.subr.mxu0 0.0
    %405 = vmatpush2.xpose.msra.mxu0 0.0
    %406 = vmatprep.subr.mxu0 0.0
    %407 = vmatpush2.xpose.msra.mxu0 0.0
    %408 = vmatprep.subr.mxu0 0.0
    %409 = vmatpush2.xpose.msra.mxu0 0.0
    %410 = vmatprep.subr.mxu0 0.0
    %411 = vmatpush2.xpose.msra.mxu0 0.0
    %412 = vmatprep.subr.mxu0 0.0
    %413 = vmatpush2.xpose.msra.mxu0 0.0
    %414 = vmatprep.subr.mxu0 0.0
    %415 = vmatpush2.xpose.msra.mxu0 0.0
    %416 = vmatprep.subr.mxu0 0.0
    %417 = vmatpush2.xpose.msra.mxu0 0.0
    %418 = vmatprep.subr.mxu0 0.0
    %419 = vmatpush2.xpose.msra.mxu0 0.0
    %420 = vmatprep.subr.mxu0 0.0
    %421 = vmatpush2.xpose.msra.mxu0 0.0
    %422 = vmatprep.subr.mxu0 0.0
    %423 = vmatpush2.xpose.msra.mxu0 0.0
    %424 = vmatprep.subr.mxu0 0.0
    %425 = vmatpush2.xpose.msra.mxu0 0.0
    %426 = vmatprep.subr.mxu0 0.0
    %427 = vmatpush2.xpose.msra.mxu0 0.0
    %428 = vmatprep.subr.mxu0 0.0
    %429 = vmatpush2.xpose.msra.mxu0 0.0
    %430 = vmatprep.subr.mxu0 0.0
    %431 = vmatpush2.xpose.msra.mxu0 0.0
    %432 = vmatprep.mubr.f32.mxu0 0.0
    %433 = vmatmul.mubr.f32.gmra.mxu0 %v364
    %v434 = vpop.f32.mrf.mxu0
    %v435 = vadd.f32 0.0, %v434
    %v436 = vpop.f32.mrf.mxu0
    %437 = vdwg.mxu0
    %439 = vrot.lane.b32.xlu0 %v350, 96
    %v440 = vpop.permute.xlu0 %439
    %v441 = vsel %vm363, %v350, 0
    %v443 = vsel %vm363, %v440, 0
    %445 = vmatprep.subr.mxu0 0.0
    %446 = vmatpush1.xpose.msra.mxu0 0.0
    %447 = vmatprep.subr.mxu0 0.0
    %448 = vmatpush1.xpose.msra.mxu0 0.0
    %449 = vmatprep.subr.mxu0 0.0
    %450 = vmatpush1.xpose.msra.mxu0 0.0
    %451 = vmatprep.subr.mxu0 0.0
    %452 = vmatpush1.xpose.msra.mxu0 0.0
    %453 = vmatprep.subr.mxu0 0.0
    %454 = vmatpush1.xpose.msra.mxu0 0.0
    %455 = vmatprep.subr.mxu0 0.0
    %456 = vmatpush1.xpose.msra.mxu0 0.0
    %457 = vmatprep.subr.mxu0 0.0
    %458 = vmatpush1.xpose.msra.mxu0 0.0
    %459 = vmatprep.subr.mxu0 0.0
    %460 = vmatpush1.xpose.msra.mxu0 0.0
    %461 = vmatprep.subr.mxu0 0.0
    %462 = vmatpush1.xpose.msra.mxu0 0.0
    %463 = vmatprep.subr.mxu0 0.0
    %464 = vmatpush1.xpose.msra.mxu0 0.0
    %465 = vmatprep.subr.mxu0 0.0
    %466 = vmatpush1.xpose.msra.mxu0 0.0
    %467 = vmatprep.subr.mxu0 0.0
    %468 = vmatpush1.xpose.msra.mxu0 0.0
    %469 = vmatprep.subr.mxu0 0.0
    %470 = vmatpush1.xpose.msra.mxu0 0.0
    %471 = vmatprep.subr.mxu0 0.0
    %472 = vmatpush1.xpose.msra.mxu0 0.0
    %473 = vmatprep.subr.mxu0 0.0
    %474 = vmatpush1.xpose.msra.mxu0 0.0
    %475 = vmatprep.subr.mxu0 0.0
    %476 = vmatpush1.xpose.msra.mxu0 %v443
    %477 = vmatprep.subr.mxu0 0.0
    %478 = vmatpush2.xpose.msra.mxu0 0.0
    %479 = vmatprep.subr.mxu0 0.0
    %480 = vmatpush2.xpose.msra.mxu0 0.0
    %481 = vmatprep.subr.mxu0 0.0
    %482 = vmatpush2.xpose.msra.mxu0 0.0
    %483 = vmatprep.subr.mxu0 0.0
    %484 = vmatpush2.xpose.msra.mxu0 0.0
    %485 = vmatprep.subr.mxu0 0.0
    %486 = vmatpush2.xpose.msra.mxu0 0.0
    %487 = vmatprep.subr.mxu0 0.0
    %488 = vmatpush2.xpose.msra.mxu0 0.0
    %489 = vmatprep.subr.mxu0 0.0
    %490 = vmatpush2.xpose.msra.mxu0 0.0
    %491 = vmatprep.subr.mxu0 0.0
    %492 = vmatpush2.xpose.msra.mxu0 0.0
    %493 = vmatprep.subr.mxu0 0.0
    %494 = vmatpush2.xpose.msra.mxu0 0.0
    %495 = vmatprep.subr.mxu0 0.0
    %496 = vmatpush2.xpose.msra.mxu0 0.0
    %497 = vmatprep.subr.mxu0 0.0
    %498 = vmatpush2.xpose.msra.mxu0 0.0
    %499 = vmatprep.subr.mxu0 0.0
    %500 = vmatpush2.xpose.msra.mxu0 0.0
    %501 = vmatprep.subr.mxu0 0.0
    %502 = vmatpush2.xpose.msra.mxu0 0.0
    %503 = vmatprep.subr.mxu0 0.0
    %504 = vmatpush2.xpose.msra.mxu0 0.0
    %505 = vmatprep.subr.mxu0 0.0
    %506 = vmatpush2.xpose.msra.mxu0 0.0
    %507 = vmatprep.subr.mxu0 0.0
    %508 = vmatpush2.xpose.msra.mxu0 0.0
    %509 = vmatprep.mubr.f32.mxu0 0.0
    %510 = vmatmul.mubr.f32.gmra.mxu0 %v441
    %v511 = vpop.f32.mrf.mxu0
    %v512 = vadd.f32 0.0, %v511
    %v513 = vpop.f32.mrf.mxu0
    %514 = vdwg.mxu0
    %v515 = vsel %vm363, %v435, -inf
    %516 = vmax.xlane.f32.xlu0 %v515
    %v517 = vpop.xlane.xlu0 %516
    %v518 = vsel %vm363, %v512, -inf
    %519 = vmax.xlane.f32.xlu0 %v518
    %v520 = vpop.xlane.xlu0 %519
    %v521 = vsub.f32 %v435, %v517
    %v522 = vsub.f32 %v512, %v520
    %v523 = vmul.f32 %v521, 1.442695
    %v524 = vpow.pop %v523
    %v525 = vmul.f32 %v522, 1.442695
    %v526 = vpow.pop %v525
    %v527 = vsel %vm363, %v524, 0.0
    %528 = vadd.xlane.f32.xlu0 %v527
    %v529 = vpop.xlane.xlu0 %528
    %v530 = vsel %vm363, %v526, 0.0
    %531 = vadd.xlane.f32.xlu0 %v530
    %v532 = vpop.xlane.xlu0 %531
    %v533 = vrcp.pop %v529
    %v534 = vrcp.pop %v532
    %v535 = vmul.f32 %v524, %v533
    %v536 = vmul.f32 %v526, %v534
    %537 = vrot.lane.b32.xlu0 %v345, 64
    %v538 = vpop.permute.xlu0 %537
    %v541 = vsel %vm363, %v535, 0
    %543 = vmatprep.subr.mxu0 0.0
    %544 = vmatpush1.msra.mxu0 0.0
    %545 = vmatprep.subr.mxu0 0.0
    %546 = vmatpush1.msra.mxu0 0.0
    %547 = vmatprep.subr.mxu0 0.0
    %548 = vmatpush1.msra.mxu0 0.0
    %549 = vmatprep.subr.mxu0 0.0
    %550 = vmatpush1.msra.mxu0 0.0
    %551 = vmatprep.subr.mxu0 0.0
    %552 = vmatpush1.msra.mxu0 0.0
    %553 = vmatprep.subr.mxu0 0.0
    %554 = vmatpush1.msra.mxu0 0.0
    %555 = vmatprep.subr.mxu0 0.0
    %556 = vmatpush1.msra.mxu0 0.0
    %557 = vmatprep.subr.mxu0 0.0
    %558 = vmatpush1.msra.mxu0 0.0
    %559 = vmatprep.subr.mxu0 0.0
    %560 = vmatpush1.msra.mxu0 0.0
    %561 = vmatprep.subr.mxu0 0.0
    %562 = vmatpush1.msra.mxu0 0.0
    %563 = vmatprep.subr.mxu0 0.0
    %564 = vmatpush1.msra.mxu0 0.0
    %565 = vmatprep.subr.mxu0 0.0
    %566 = vmatpush1.msra.mxu0 0.0
    %567 = vmatprep.subr.mxu0 0.0
    %568 = vmatpush1.msra.mxu0 0.0
    %569 = vmatprep.subr.mxu0 0.0
    %570 = vmatpush1.msra.mxu0 0.0
    %571 = vmatprep.subr.mxu0 0.0
    %572 = vmatpush1.msra.mxu0 0.0
    %573 = vmatprep.subr.mxu0 0.0
    %574 = vmatpush1.msra.mxu0 %v538
    %575 = vmatprep.subr.mxu0 0.0
    %576 = vmatpush2.msra.mxu0 0.0
    %577 = vmatprep.subr.mxu0 0.0
    %578 = vmatpush2.msra.mxu0 0.0
    %579 = vmatprep.subr.mxu0 0.0
    %580 = vmatpush2.msra.mxu0 0.0
    %581 = vmatprep.subr.mxu0 0.0
    %582 = vmatpush2.msra.mxu0 0.0
    %583 = vmatprep.subr.mxu0 0.0
    %584 = vmatpush2.msra.mxu0 0.0
    %585 = vmatprep.subr.mxu0 0.0
    %586 = vmatpush2.msra.mxu0 0.0
    %587 = vmatprep.subr.mxu0 0.0
    %588 = vmatpush2.msra.mxu0 0.0
    %589 = vmatprep.subr.mxu0 0.0
    %590 = vmatpush2.msra.mxu0 0.0
    %591 = vmatprep.subr.mxu0 0.0
    %592 = vmatpush2.msra.mxu0 0.0
    %593 = vmatprep.subr.mxu0 0.0
    %594 = vmatpush2.msra.mxu0 0.0
    %595 = vmatprep.subr.mxu0 0.0
    %596 = vmatpush2.msra.mxu0 0.0
    %597 = vmatprep.subr.mxu0 0.0
    %598 = vmatpush2.msra.mxu0 0.0
    %599 = vmatprep.subr.mxu0 0.0
    %600 = vmatpush2.msra.mxu0 0.0
    %601 = vmatprep.subr.mxu0 0.0
    %602 = vmatpush2.msra.mxu0 0.0
    %603 = vmatprep.subr.mxu0 0.0
    %604 = vmatpush2.msra.mxu0 0.0
    %605 = vmatprep.subr.mxu0 0.0
    %606 = vmatpush2.msra.mxu0 0.0
    %607 = vmatprep.mubr.f32.mxu0 0.0
    %608 = vmatmul.mubr.f32.gmra.mxu0 %v541
    %v609 = vpop.f32.mrf.mxu0
    %v610 = vadd.f32 0.0, %v609
    %v611 = vpop.f32.mrf.mxu0
    %612 = vdwg.mxu0
    %613 = vrot.lane.b32.xlu0 %v350, 64
    %v614 = vpop.permute.xlu0 %613
    %v617 = vsel %vm363, %v536, 0
    %619 = vmatprep.subr.mxu0 0.0
    %620 = vmatpush1.msra.mxu0 0.0
    %621 = vmatprep.subr.mxu0 0.0
    %622 = vmatpush1.msra.mxu0 0.0
    %623 = vmatprep.subr.mxu0 0.0
    %624 = vmatpush1.msra.mxu0 0.0
    %625 = vmatprep.subr.mxu0 0.0
    %626 = vmatpush1.msra.mxu0 0.0
    %627 = vmatprep.subr.mxu0 0.0
    %628 = vmatpush1.msra.mxu0 0.0
    %629 = vmatprep.subr.mxu0 0.0
    %630 = vmatpush1.msra.mxu0 0.0
    %631 = vmatprep.subr.mxu0 0.0
    %632 = vmatpush1.msra.mxu0 0.0
    %633 = vmatprep.subr.mxu0 0.0
    %634 = vmatpush1.msra.mxu0 0.0
    %635 = vmatprep.subr.mxu0 0.0
    %636 = vmatpush1.msra.mxu0 0.0
    %637 = vmatprep.subr.mxu0 0.0
    %638 = vmatpush1.msra.mxu0 0.0
    %639 = vmatprep.subr.mxu0 0.0
    %640 = vmatpush1.msra.mxu0 0.0
    %641 = vmatprep.subr.mxu0 0.0
    %642 = vmatpush1.msra.mxu0 0.0
    %643 = vmatprep.subr.mxu0 0.0
    %644 = vmatpush1.msra.mxu0 0.0
    %645 = vmatprep.subr.mxu0 0.0
    %646 = vmatpush1.msra.mxu0 0.0
    %647 = vmatprep.subr.mxu0 0.0
    %648 = vmatpush1.msra.mxu0 0.0
    %649 = vmatprep.subr.mxu0 0.0
    %650 = vmatpush1.msra.mxu0 %v614
    %651 = vmatprep.subr.mxu0 0.0
    %652 = vmatpush2.msra.mxu0 0.0
    %653 = vmatprep.subr.mxu0 0.0
    %654 = vmatpush2.msra.mxu0 0.0
    %655 = vmatprep.subr.mxu0 0.0
    %656 = vmatpush2.msra.mxu0 0.0
    %657 = vmatprep.subr.mxu0 0.0
    %658 = vmatpush2.msra.mxu0 0.0
    %659 = vmatprep.subr.mxu0 0.0
    %660 = vmatpush2.msra.mxu0 0.0
    %661 = vmatprep.subr.mxu0 0.0
    %662 = vmatpush2.msra.mxu0 0.0
    %663 = vmatprep.subr.mxu0 0.0
    %664 = vmatpush2.msra.mxu0 0.0
    %665 = vmatprep.subr.mxu0 0.0
    %666 = vmatpush2.msra.mxu0 0.0
    %667 = vmatprep.subr.mxu0 0.0
    %668 = vmatpush2.msra.mxu0 0.0
    %669 = vmatprep.subr.mxu0 0.0
    %670 = vmatpush2.msra.mxu0 0.0
    %671 = vmatprep.subr.mxu0 0.0
    %672 = vmatpush2.msra.mxu0 0.0
    %673 = vmatprep.subr.mxu0 0.0
    %674 = vmatpush2.msra.mxu0 0.0
    %675 = vmatprep.subr.mxu0 0.0
    %676 = vmatpush2.msra.mxu0 0.0
    %677 = vmatprep.subr.mxu0 0.0
    %678 = vmatpush2.msra.mxu0 0.0
    %679 = vmatprep.subr.mxu0 0.0
    %680 = vmatpush2.msra.mxu0 0.0
    %681 = vmatprep.subr.mxu0 0.0
    %682 = vmatpush2.msra.mxu0 0.0
    %683 = vmatprep.mubr.f32.mxu0 0.0
    %684 = vmatmul.mubr.f32.gmra.mxu0 %v617
    %v685 = vpop.f32.mrf.mxu0
    %v686 = vadd.f32 0.0, %v685
    %v687 = vpop.f32.mrf.mxu0
    %688 = vdwg.mxu0
    %v689 = vld [vmem:[%s4] sm:$0xff]
    %v691 = vsel %vm363, %v610, 0
    %v694 = vsel %vm363, %v686, 0
    %696 = vmatprep.subr.mxu0 0.0
    %697 = vmatpush1.msra.mxu0 0.0
    %698 = vmatprep.subr.mxu0 0.0
    %699 = vmatpush1.msra.mxu0 0.0
    %700 = vmatprep.subr.mxu0 0.0
    %701 = vmatpush1.msra.mxu0 0.0
    %702 = vmatprep.subr.mxu0 0.0
    %703 = vmatpush1.msra.mxu0 0.0
    %704 = vmatprep.subr.mxu0 0.0
    %705 = vmatpush1.msra.mxu0 0.0
    %706 = vmatprep.subr.mxu0 0.0
    %707 = vmatpush1.msra.mxu0 0.0
    %708 = vmatprep.subr.mxu0 0.0
    %709 = vmatpush1.msra.mxu0 0.0
    %710 = vmatprep.subr.mxu0 0.0
    %711 = vmatpush1.msra.mxu0 0.0
    %712 = vmatprep.subr.mxu0 0.0
    %713 = vmatpush1.msra.mxu0 0.0
    %714 = vmatprep.subr.mxu0 0.0
    %715 = vmatpush1.msra.mxu0 0.0
    %716 = vmatprep.subr.mxu0 0.0
    %717 = vmatpush1.msra.mxu0 0.0
    %718 = vmatprep.subr.mxu0 0.0
    %719 = vmatpush1.msra.mxu0 0.0
    %720 = vmatprep.subr.mxu0 0.0
    %721 = vmatpush1.msra.mxu0 0.0
    %722 = vmatprep.subr.mxu0 0.0
    %723 = vmatpush1.msra.mxu0 0.0
    %724 = vmatprep.subr.mxu0 0.0
    %725 = vmatpush1.msra.mxu0 0.0
    %726 = vmatprep.subr.mxu0 0.0
    %727 = vmatpush1.msra.mxu0 %v689
    %728 = vmatprep.subr.mxu0 0.0
    %729 = vmatpush2.msra.mxu0 0.0
    %730 = vmatprep.subr.mxu0 0.0
    %731 = vmatpush2.msra.mxu0 0.0
    %732 = vmatprep.subr.mxu0 0.0
    %733 = vmatpush2.msra.mxu0 0.0
    %734 = vmatprep.subr.mxu0 0.0
    %735 = vmatpush2.msra.mxu0 0.0
    %736 = vmatprep.subr.mxu0 0.0
    %737 = vmatpush2.msra.mxu0 0.0
    %738 = vmatprep.subr.mxu0 0.0
    %739 = vmatpush2.msra.mxu0 0.0
    %740 = vmatprep.subr.mxu0 0.0
    %741 = vmatpush2.msra.mxu0 0.0
    %742 = vmatprep.subr.mxu0 0.0
    %743 = vmatpush2.msra.mxu0 0.0
    %744 = vmatprep.subr.mxu0 0.0
    %745 = vmatpush2.msra.mxu0 0.0
    %746 = vmatprep.subr.mxu0 0.0
    %747 = vmatpush2.msra.mxu0 0.0
    %748 = vmatprep.subr.mxu0 0.0
    %749 = vmatpush2.msra.mxu0 0.0
    %750 = vmatprep.subr.mxu0 0.0
    %751 = vmatpush2.msra.mxu0 0.0
    %752 = vmatprep.subr.mxu0 0.0
    %753 = vmatpush2.msra.mxu0 0.0
    %754 = vmatprep.subr.mxu0 0.0
    %755 = vmatpush2.msra.mxu0 0.0
    %756 = vmatprep.subr.mxu0 0.0
    %757 = vmatpush2.msra.mxu0 0.0
    %758 = vmatprep.subr.mxu0 0.0
    %759 = vmatpush2.msra.mxu0 0.0
    %760 = vmatprep.mubr.f32.mxu0 0.0
    %761 = vmatmul.mubr.f32.gmra.mxu0 %v691
    %v762 = vpop.f32.mrf.mxu0
    %v763 = vadd.f32 0.0, %v762
    %v764 = vpop.f32.mrf.mxu0
    %765 = vmatprep.mubr.f32.mxu0 0.0
    %766 = vmatmul.mubr.f32.gmra.mxu0 %v694
    %v767 = vpop.f32.mrf.mxu0
    %v768 = vadd.f32 0.0, %v767
    %v769 = vpop.f32.mrf.mxu0
    %770 = vdwg.mxu0
    %v771 = vadd.f32 %v358, %v763
    %v772 = vadd.f32 %v358, %v768
    %773 = vrot.lane.b32.xlu0 %v345, 120
    %v774 = vpop.permute.xlu0 %773
    %775 = vrot.lane.b32.xlu0 %v345, 88
    %v776 = vpop.permute.xlu0 %775
    %v777 = vsel %vm363, %v774, 0
    %v779 = vsel %vm363, %v776, 0
    %781 = vmatprep.subr.mxu0 0.0
    %782 = vmatpush1.xpose.msra.mxu0 0.0
    %783 = vmatprep.subr.mxu0 0.0
    %784 = vmatpush1.xpose.msra.mxu0 0.0
    %785 = vmatprep.subr.mxu0 0.0
    %786 = vmatpush1.xpose.msra.mxu0 0.0
    %787 = vmatprep.subr.mxu0 0.0
    %788 = vmatpush1.xpose.msra.mxu0 0.0
    %789 = vmatprep.subr.mxu0 0.0
    %790 = vmatpush1.xpose.msra.mxu0 0.0
    %791 = vmatprep.subr.mxu0 0.0
    %792 = vmatpush1.xpose.msra.mxu0 0.0
    %793 = vmatprep.subr.mxu0 0.0
    %794 = vmatpush1.xpose.msra.mxu0 0.0
    %795 = vmatprep.subr.mxu0 0.0
    %796 = vmatpush1.xpose.msra.mxu0 0.0
    %797 = vmatprep.subr.mxu0 0.0
    %798 = vmatpush1.xpose.msra.mxu0 0.0
    %799 = vmatprep.subr.mxu0 0.0
    %800 = vmatpush1.xpose.msra.mxu0 0.0
    %801 = vmatprep.subr.mxu0 0.0
    %802 = vmatpush1.xpose.msra.mxu0 0.0
    %803 = vmatprep.subr.mxu0 0.0
    %804 = vmatpush1.xpose.msra.mxu0 0.0
    %805 = vmatprep.subr.mxu0 0.0
    %806 = vmatpush1.xpose.msra.mxu0 0.0
    %807 = vmatprep.subr.mxu0 0.0
    %808 = vmatpush1.xpose.msra.mxu0 0.0
    %809 = vmatprep.subr.mxu0 0.0
    %810 = vmatpush1.xpose.msra.mxu0 0.0
    %811 = vmatprep.subr.mxu0 0.0
    %812 = vmatpush1.xpose.msra.mxu0 %v779
    %813 = vmatprep.subr.mxu0 0.0
    %814 = vmatpush2.xpose.msra.mxu0 0.0
    %815 = vmatprep.subr.mxu0 0.0
    %816 = vmatpush2.xpose.msra.mxu0 0.0
    %817 = vmatprep.subr.mxu0 0.0
    %818 = vmatpush2.xpose.msra.mxu0 0.0
    %819 = vmatprep.subr.mxu0 0.0
    %820 = vmatpush2.xpose.msra.mxu0 0.0
    %821 = vmatprep.subr.mxu0 0.0
    %822 = vmatpush2.xpose.msra.mxu0 0.0
    %823 = vmatprep.subr.mxu0 0.0
    %824 = vmatpush2.xpose.msra.mxu0 0.0
    %825 = vmatprep.subr.mxu0 0.0
    %826 = vmatpush2.xpose.msra.mxu0 0.0
    %827 = vmatprep.subr.mxu0 0.0
    %828 = vmatpush2.xpose.msra.mxu0 0.0
    %829 = vmatprep.subr.mxu0 0.0
    %830 = vmatpush2.xpose.msra.mxu0 0.0
    %831 = vmatprep.subr.mxu0 0.0
    %832 = vmatpush2.xpose.msra.mxu0 0.0
    %833 = vmatprep.subr.mxu0 0.0
    %834 = vmatpush2.xpose.msra.mxu0 0.0
    %835 = vmatprep.subr.mxu0 0.0
    %836 = vmatpush2.xpose.msra.mxu0 0.0
    %837 = vmatprep.subr.mxu0 0.0
    %838 = vmatpush2.xpose.msra.mxu0 0.0
    %839 = vmatprep.subr.mxu0 0.0
    %840 = vmatpush2.xpose.msra.mxu0 0.0
    %841 = vmatprep.subr.mxu0 0.0
    %842 = vmatpush2.xpose.msra.mxu0 0.0
    %843 = vmatprep.subr.mxu0 0.0
    %844 = vmatpush2.xpose.msra.mxu0 0.0
    %845 = vmatprep.mubr.f32.mxu0 0.0
    %846 = vmatmul.mubr.f32.gmra.mxu0 %v777
    %v847 = vpop.f32.mrf.mxu0
    %v848 = vadd.f32 0.0, %v847
    %v849 = vpop.f32.mrf.mxu0
    %850 = vdwg.mxu0
    %851 = vrot.lane.b32.xlu0 %v350, 120
    %v852 = vpop.permute.xlu0 %851
    %853 = vrot.lane.b32.xlu0 %v350, 88
    %v854 = vpop.permute.xlu0 %853
    %v855 = vsel %vm363, %v852, 0
    %v857 = vsel %vm363, %v854, 0
    %859 = vmatprep.subr.mxu0 0.0
    %860 = vmatpush1.xpose.msra.mxu0 0.0
    %861 = vmatprep.subr.mxu0 0.0
    %862 = vmatpush1.xpose.msra.mxu0 0.0
    %863 = vmatprep.subr.mxu0 0.0
    %864 = vmatpush1.xpose.msra.mxu0 0.0
    %865 = vmatprep.subr.mxu0 0.0
    %866 = vmatpush1.xpose.msra.mxu0 0.0
    %867 = vmatprep.subr.mxu0 0.0
    %868 = vmatpush1.xpose.msra.mxu0 0.0
    %869 = vmatprep.subr.mxu0 0.0
    %870 = vmatpush1.xpose.msra.mxu0 0.0
    %871 = vmatprep.subr.mxu0 0.0
    %872 = vmatpush1.xpose.msra.mxu0 0.0
    %873 = vmatprep.subr.mxu0 0.0
    %874 = vmatpush1.xpose.msra.mxu0 0.0
    %875 = vmatprep.subr.mxu0 0.0
    %876 = vmatpush1.xpose.msra.mxu0 0.0
    %877 = vmatprep.subr.mxu0 0.0
    %878 = vmatpush1.xpose.msra.mxu0 0.0
    %879 = vmatprep.subr.mxu0 0.0
    %880 = vmatpush1.xpose.msra.mxu0 0.0
    %881 = vmatprep.subr.mxu0 0.0
    %882 = vmatpush1.xpose.msra.mxu0 0.0
    %883 = vmatprep.subr.mxu0 0.0
    %884 = vmatpush1.xpose.msra.mxu0 0.0
    %885 = vmatprep.subr.mxu0 0.0
    %886 = vmatpush1.xpose.msra.mxu0 0.0
    %887 = vmatprep.subr.mxu0 0.0
    %888 = vmatpush1.xpose.msra.mxu0 0.0
    %889 = vmatprep.subr.mxu0 0.0
    %890 = vmatpush1.xpose.msra.mxu0 %v857
    %891 = vmatprep.subr.mxu0 0.0
    %892 = vmatpush2.xpose.msra.mxu0 0.0
    %893 = vmatprep.subr.mxu0 0.0
    %894 = vmatpush2.xpose.msra.mxu0 0.0
    %895 = vmatprep.subr.mxu0 0.0
    %896 = vmatpush2.xpose.msra.mxu0 0.0
    %897 = vmatprep.subr.mxu0 0.0
    %898 = vmatpush2.xpose.msra.mxu0 0.0
    %899 = vmatprep.subr.mxu0 0.0
    %900 = vmatpush2.xpose.msra.mxu0 0.0
    %901 = vmatprep.subr.mxu0 0.0
    %902 = vmatpush2.xpose.msra.mxu0 0.0
    %903 = vmatprep.subr.mxu0 0.0
    %904 = vmatpush2.xpose.msra.mxu0 0.0
    %905 = vmatprep.subr.mxu0 0.0
    %906 = vmatpush2.xpose.msra.mxu0 0.0
    %907 = vmatprep.subr.mxu0 0.0
    %908 = vmatpush2.xpose.msra.mxu0 0.0
    %909 = vmatprep.subr.mxu0 0.0
    %910 = vmatpush2.xpose.msra.mxu0 0.0
    %911 = vmatprep.subr.mxu0 0.0
    %912 = vmatpush2.xpose.msra.mxu0 0.0
    %913 = vmatprep.subr.mxu0 0.0
    %914 = vmatpush2.xpose.msra.mxu0 0.0
    %915 = vmatprep.subr.mxu0 0.0
    %916 = vmatpush2.xpose.msra.mxu0 0.0
    %917 = vmatprep.subr.mxu0 0.0
    %918 = vmatpush2.xpose.msra.mxu0 0.0
    %919 = vmatprep.subr.mxu0 0.0
    %920 = vmatpush2.xpose.msra.mxu0 0.0
    %921 = vmatprep.subr.mxu0 0.0
    %922 = vmatpush2.xpose.msra.mxu0 0.0
    %923 = vmatprep.mubr.f32.mxu0 0.0
    %924 = vmatmul.mubr.f32.gmra.mxu0 %v855
    %v925 = vpop.f32.mrf.mxu0
    %v926 = vadd.f32 0.0, %v925
    %v927 = vpop.f32.mrf.mxu0
    %928 = vdwg.mxu0
    %v929 = vsel %vm363, %v848, -inf
    %930 = vmax.xlane.f32.xlu0 %v929
    %v931 = vpop.xlane.xlu0 %930
    %v932 = vsel %vm363, %v926, -inf
    %933 = vmax.xlane.f32.xlu0 %v932
    %v934 = vpop.xlane.xlu0 %933
    %v935 = vsub.f32 %v848, %v931
    %v936 = vsub.f32 %v926, %v934
    %v937 = vmul.f32 %v935, 1.442695
    %v938 = vpow.pop %v937
    %v939 = vmul.f32 %v936, 1.442695
    %v940 = vpow.pop %v939
    %v941 = vsel %vm363, %v938, 0.0
    %942 = vadd.xlane.f32.xlu0 %v941
    %v943 = vpop.xlane.xlu0 %942
    %v944 = vsel %vm363, %v940, 0.0
    %945 = vadd.xlane.f32.xlu0 %v944
    %v946 = vpop.xlane.xlu0 %945
    %v947 = vrcp.pop %v943
    %v948 = vrcp.pop %v946
    %v949 = vmul.f32 %v938, %v947
    %v950 = vmul.f32 %v940, %v948
    %951 = vrot.lane.b32.xlu0 %v345, 56
    %v952 = vpop.permute.xlu0 %951
    %v955 = vsel %vm363, %v949, 0
    %957 = vmatprep.subr.mxu0 0.0
    %958 = vmatpush1.msra.mxu0 0.0
    %959 = vmatprep.subr.mxu0 0.0
    %960 = vmatpush1.msra.mxu0 0.0
    %961 = vmatprep.subr.mxu0 0.0
    %962 = vmatpush1.msra.mxu0 0.0
    %963 = vmatprep.subr.mxu0 0.0
    %964 = vmatpush1.msra.mxu0 0.0
    %965 = vmatprep.subr.mxu0 0.0
    %966 = vmatpush1.msra.mxu0 0.0
    %967 = vmatprep.subr.mxu0 0.0
    %968 = vmatpush1.msra.mxu0 0.0
    %969 = vmatprep.subr.mxu0 0.0
    %970 = vmatpush1.msra.mxu0 0.0
    %971 = vmatprep.subr.mxu0 0.0
    %972 = vmatpush1.msra.mxu0 0.0
    %973 = vmatprep.subr.mxu0 0.0
    %974 = vmatpush1.msra.mxu0 0.0
    %975 = vmatprep.subr.mxu0 0.0
    %976 = vmatpush1.msra.mxu0 0.0
    %977 = vmatprep.subr.mxu0 0.0
    %978 = vmatpush1.msra.mxu0 0.0
    %979 = vmatprep.subr.mxu0 0.0
    %980 = vmatpush1.msra.mxu0 0.0
    %981 = vmatprep.subr.mxu0 0.0
    %982 = vmatpush1.msra.mxu0 0.0
    %983 = vmatprep.subr.mxu0 0.0
    %984 = vmatpush1.msra.mxu0 0.0
    %985 = vmatprep.subr.mxu0 0.0
    %986 = vmatpush1.msra.mxu0 0.0
    %987 = vmatprep.subr.mxu0 0.0
    %988 = vmatpush1.msra.mxu0 %v952
    %989 = vmatprep.subr.mxu0 0.0
    %990 = vmatpush2.msra.mxu0 0.0
    %991 = vmatprep.subr.mxu0 0.0
    %992 = vmatpush2.msra.mxu0 0.0
    %993 = vmatprep.subr.mxu0 0.0
    %994 = vmatpush2.msra.mxu0 0.0
    %995 = vmatprep.subr.mxu0 0.0
    %996 = vmatpush2.msra.mxu0 0.0
    %997 = vmatprep.subr.mxu0 0.0
    %998 = vmatpush2.msra.mxu0 0.0
    %999 = vmatprep.subr.mxu0 0.0
    %1000 = vmatpush2.msra.mxu0 0.0
    %1001 = vmatprep.subr.mxu0 0.0
    %1002 = vmatpush2.msra.mxu0 0.0
    %1003 = vmatprep.subr.mxu0 0.0
    %1004 = vmatpush2.msra.mxu0 0.0
    %1005 = vmatprep.subr.mxu0 0.0
    %1006 = vmatpush2.msra.mxu0 0.0
    %1007 = vmatprep.subr.mxu0 0.0
    %1008 = vmatpush2.msra.mxu0 0.0
    %1009 = vmatprep.subr.mxu0 0.0
    %1010 = vmatpush2.msra.mxu0 0.0
    %1011 = vmatprep.subr.mxu0 0.0
    %1012 = vmatpush2.msra.mxu0 0.0
    %1013 = vmatprep.subr.mxu0 0.0
    %1014 = vmatpush2.msra.mxu0 0.0
    %1015 = vmatprep.subr.mxu0 0.0
    %1016 = vmatpush2.msra.mxu0 0.0
    %1017 = vmatprep.subr.mxu0 0.0
    %1018 = vmatpush2.msra.mxu0 0.0
    %1019 = vmatprep.subr.mxu0 0.0
    %1020 = vmatpush2.msra.mxu0 0.0
    %1021 = vmatprep.mubr.f32.mxu0 0.0
    %1022 = vmatmul.mubr.f32.gmra.mxu0 %v955
    %v1023 = vpop.f32.mrf.mxu0
    %v1024 = vadd.f32 0.0, %v1023
    %v1025 = vpop.f32.mrf.mxu0
    %1026 = vdwg.mxu0
    %1027 = vrot.lane.b32.xlu0 %v350, 56
    %v1028 = vpop.permute.xlu0 %1027
    %v1031 = vsel %vm363, %v950, 0
    %1033 = vmatprep.subr.mxu0 0.0
    %1034 = vmatpush1.msra.mxu0 0.0
    %1035 = vmatprep.subr.mxu0 0.0
    %1036 = vmatpush1.msra.mxu0 0.0
    %1037 = vmatprep.subr.mxu0 0.0
    %1038 = vmatpush1.msra.mxu0 0.0
    %1039 = vmatprep.subr.mxu0 0.0
    %1040 = vmatpush1.msra.mxu0 0.0
    %1041 = vmatprep.subr.mxu0 0.0
    %1042 = vmatpush1.msra.mxu0 0.0
    %1043 = vmatprep.subr.mxu0 0.0
    %1044 = vmatpush1.msra.mxu0 0.0
    %1045 = vmatprep.subr.mxu0 0.0
    %1046 = vmatpush1.msra.mxu0 0.0
    %1047 = vmatprep.subr.mxu0 0.0
    %1048 = vmatpush1.msra.mxu0 0.0
    %1049 = vmatprep.subr.mxu0 0.0
    %1050 = vmatpush1.msra.mxu0 0.0
    %1051 = vmatprep.subr.mxu0 0.0
    %1052 = vmatpush1.msra.mxu0 0.0
    %1053 = vmatprep.subr.mxu0 0.0
    %1054 = vmatpush1.msra.mxu0 0.0
    %1055 = vmatprep.subr.mxu0 0.0
    %1056 = vmatpush1.msra.mxu0 0.0
    %1057 = vmatprep.subr.mxu0 0.0
    %1058 = vmatpush1.msra.mxu0 0.0
    %1059 = vmatprep.subr.mxu0 0.0
    %1060 = vmatpush1.msra.mxu0 0.0
    %1061 = vmatprep.subr.mxu0 0.0
    %1062 = vmatpush1.msra.mxu0 0.0
    %1063 = vmatprep.subr.mxu0 0.0
    %1064 = vmatpush1.msra.mxu0 %v1028
    %1065 = vmatprep.subr.mxu0 0.0
    %1066 = vmatpush2.msra.mxu0 0.0
    %1067 = vmatprep.subr.mxu0 0.0
    %1068 = vmatpush2.msra.mxu0 0.0
    %1069 = vmatprep.subr.mxu0 0.0
    %1070 = vmatpush2.msra.mxu0 0.0
    %1071 = vmatprep.subr.mxu0 0.0
    %1072 = vmatpush2.msra.mxu0 0.0
    %1073 = vmatprep.subr.mxu0 0.0
    %1074 = vmatpush2.msra.mxu0 0.0
    %1075 = vmatprep.subr.mxu0 0.0
    %1076 = vmatpush2.msra.mxu0 0.0
    %1077 = vmatprep.subr.mxu0 0.0
    %1078 = vmatpush2.msra.mxu0 0.0
    %1079 = vmatprep.subr.mxu0 0.0
    %1080 = vmatpush2.msra.mxu0 0.0
    %1081 = vmatprep.subr.mxu0 0.0
    %1082 = vmatpush2.msra.mxu0 0.0
    %1083 = vmatprep.subr.mxu0 0.0
    %1084 = vmatpush2.msra.mxu0 0.0
    %1085 = vmatprep.subr.mxu0 0.0
    %1086 = vmatpush2.msra.mxu0 0.0
    %1087 = vmatprep.subr.mxu0 0.0
    %1088 = vmatpush2.msra.mxu0 0.0
    %1089 = vmatprep.subr.mxu0 0.0
    %1090 = vmatpush2.msra.mxu0 0.0
    %1091 = vmatprep.subr.mxu0 0.0
    %1092 = vmatpush2.msra.mxu0 0.0
    %1093 = vmatprep.subr.mxu0 0.0
    %1094 = vmatpush2.msra.mxu0 0.0
    %1095 = vmatprep.subr.mxu0 0.0
    %1096 = vmatpush2.msra.mxu0 0.0
    %1097 = vmatprep.mubr.f32.mxu0 0.0
    %1098 = vmatmul.mubr.f32.gmra.mxu0 %v1031
    %v1099 = vpop.f32.mrf.mxu0
    %v1100 = vadd.f32 0.0, %v1099
    %v1101 = vpop.f32.mrf.mxu0
    %1102 = vdwg.mxu0
    %v1103 = vld [vmem:[%s4 + $0x8] sm:$0xff]
    %v1105 = vsel %vm363, %v1024, 0
    %v1108 = vsel %vm363, %v1100, 0
    %1110 = vmatprep.subr.mxu0 0.0
    %1111 = vmatpush1.msra.mxu0 0.0
    %1112 = vmatprep.subr.mxu0 0.0
    %1113 = vmatpush1.msra.mxu0 0.0
    %1114 = vmatprep.subr.mxu0 0.0
    %1115 = vmatpush1.msra.mxu0 0.0
    %1116 = vmatprep.subr.mxu0 0.0
    %1117 = vmatpush1.msra.mxu0 0.0
    %1118 = vmatprep.subr.mxu0 0.0
    %1119 = vmatpush1.msra.mxu0 0.0
    %1120 = vmatprep.subr.mxu0 0.0
    %1121 = vmatpush1.msra.mxu0 0.0
    %1122 = vmatprep.subr.mxu0 0.0
    %1123 = vmatpush1.msra.mxu0 0.0
    %1124 = vmatprep.subr.mxu0 0.0
    %1125 = vmatpush1.msra.mxu0 0.0
    %1126 = vmatprep.subr.mxu0 0.0
    %1127 = vmatpush1.msra.mxu0 0.0
    %1128 = vmatprep.subr.mxu0 0.0
    %1129 = vmatpush1.msra.mxu0 0.0
    %1130 = vmatprep.subr.mxu0 0.0
    %1131 = vmatpush1.msra.mxu0 0.0
    %1132 = vmatprep.subr.mxu0 0.0
    %1133 = vmatpush1.msra.mxu0 0.0
    %1134 = vmatprep.subr.mxu0 0.0
    %1135 = vmatpush1.msra.mxu0 0.0
    %1136 = vmatprep.subr.mxu0 0.0
    %1137 = vmatpush1.msra.mxu0 0.0
    %1138 = vmatprep.subr.mxu0 0.0
    %1139 = vmatpush1.msra.mxu0 0.0
    %1140 = vmatprep.subr.mxu0 0.0
    %1141 = vmatpush1.msra.mxu0 %v1103
    %1142 = vmatprep.subr.mxu0 0.0
    %1143 = vmatpush2.msra.mxu0 0.0
    %1144 = vmatprep.subr.mxu0 0.0
    %1145 = vmatpush2.msra.mxu0 0.0
    %1146 = vmatprep.subr.mxu0 0.0
    %1147 = vmatpush2.msra.mxu0 0.0
    %1148 = vmatprep.subr.mxu0 0.0
    %1149 = vmatpush2.msra.mxu0 0.0
    %1150 = vmatprep.subr.mxu0 0.0
    %1151 = vmatpush2.msra.mxu0 0.0
    %1152 = vmatprep.subr.mxu0 0.0
    %1153 = vmatpush2.msra.mxu0 0.0
    %1154 = vmatprep.subr.mxu0 0.0
    %1155 = vmatpush2.msra.mxu0 0.0
    %1156 = vmatprep.subr.mxu0 0.0
    %1157 = vmatpush2.msra.mxu0 0.0
    %1158 = vmatprep.subr.mxu0 0.0
    %1159 = vmatpush2.msra.mxu0 0.0
    %1160 = vmatprep.subr.mxu0 0.0
    %1161 = vmatpush2.msra.mxu0 0.0
    %1162 = vmatprep.subr.mxu0 0.0
    %1163 = vmatpush2.msra.mxu0 0.0
    %1164 = vmatprep.subr.mxu0 0.0
    %1165 = vmatpush2.msra.mxu0 0.0
    %1166 = vmatprep.subr.mxu0 0.0
    %1167 = vmatpush2.msra.mxu0 0.0
    %1168 = vmatprep.subr.mxu0 0.0
    %1169 = vmatpush2.msra.mxu0 0.0
    %1170 = vmatprep.subr.mxu0 0.0
    %1171 = vmatpush2.msra.mxu0 0.0
    %1172 = vmatprep.subr.mxu0 0.0
    %1173 = vmatpush2.msra.mxu0 0.0
    %1174 = vmatprep.mubr.f32.mxu0 0.0
    %1175 = vmatmul.mubr.f32.gmra.mxu0 %v1105
    %v1176 = vpop.f32.mrf.mxu0
    %v1177 = vadd.f32 0.0, %v1176
    %v1178 = vpop.f32.mrf.mxu0
    %1179 = vmatprep.mubr.f32.mxu0 0.0
    %1180 = vmatmul.mubr.f32.gmra.mxu0 %v1108
    %v1181 = vpop.f32.mrf.mxu0
    %v1182 = vadd.f32 0.0, %v1181
    %v1183 = vpop.f32.mrf.mxu0
    %1184 = vdwg.mxu0
    %v1185 = vadd.f32 %v771, %v1177
    %v1186 = vadd.f32 %v772, %v1182
    %1187 = vrot.lane.b32.xlu0 %v345, 112
    %v1188 = vpop.permute.xlu0 %1187
    %1189 = vrot.lane.b32.xlu0 %v345, 80
    %v1190 = vpop.permute.xlu0 %1189
    %v1191 = vsel %vm363, %v1188, 0
    %v1193 = vsel %vm363, %v1190, 0
    %1195 = vmatprep.subr.mxu0 0.0
    %1196 = vmatpush1.xpose.msra.mxu0 0.0
    %1197 = vmatprep.subr.mxu0 0.0
    %1198 = vmatpush1.xpose.msra.mxu0 0.0
    %1199 = vmatprep.subr.mxu0 0.0
    %1200 = vmatpush1.xpose.msra.mxu0 0.0
    %1201 = vmatprep.subr.mxu0 0.0
    %1202 = vmatpush1.xpose.msra.mxu0 0.0
    %1203 = vmatprep.subr.mxu0 0.0
    %1204 = vmatpush1.xpose.msra.mxu0 0.0
    %1205 = vmatprep.subr.mxu0 0.0
    %1206 = vmatpush1.xpose.msra.mxu0 0.0
    %1207 = vmatprep.subr.mxu0 0.0
    %1208 = vmatpush1.xpose.msra.mxu0 0.0
    %1209 = vmatprep.subr.mxu0 0.0
    %1210 = vmatpush1.xpose.msra.mxu0 0.0
    %1211 = vmatprep.subr.mxu0 0.0
    %1212 = vmatpush1.xpose.msra.mxu0 0.0
    %1213 = vmatprep.subr.mxu0 0.0
    %1214 = vmatpush1.xpose.msra.mxu0 0.0
    %1215 = vmatprep.subr.mxu0 0.0
    %1216 = vmatpush1.xpose.msra.mxu0 0.0
    %1217 = vmatprep.subr.mxu0 0.0
    %1218 = vmatpush1.xpose.msra.mxu0 0.0
    %1219 = vmatprep.subr.mxu0 0.0
    %1220 = vmatpush1.xpose.msra.mxu0 0.0
    %1221 = vmatprep.subr.mxu0 0.0
    %1222 = vmatpush1.xpose.msra.mxu0 0.0
    %1223 = vmatprep.subr.mxu0 0.0
    %1224 = vmatpush1.xpose.msra.mxu0 0.0
    %1225 = vmatprep.subr.mxu0 0.0
    %1226 = vmatpush1.xpose.msra.mxu0 %v1193
    %1227 = vmatprep.subr.mxu0 0.0
    %1228 = vmatpush2.xpose.msra.mxu0 0.0
    %1229 = vmatprep.subr.mxu0 0.0
    %1230 = vmatpush2.xpose.msra.mxu0 0.0
    %1231 = vmatprep.subr.mxu0 0.0
    %1232 = vmatpush2.xpose.msra.mxu0 0.0
    %1233 = vmatprep.subr.mxu0 0.0
    %1234 = vmatpush2.xpose.msra.mxu0 0.0
    %1235 = vmatprep.subr.mxu0 0.0
    %1236 = vmatpush2.xpose.msra.mxu0 0.0
    %1237 = vmatprep.subr.mxu0 0.0
    %1238 = vmatpush2.xpose.msra.mxu0 0.0
    %1239 = vmatprep.subr.mxu0 0.0
    %1240 = vmatpush2.xpose.msra.mxu0 0.0
    %1241 = vmatprep.subr.mxu0 0.0
    %1242 = vmatpush2.xpose.msra.mxu0 0.0
    %1243 = vmatprep.subr.mxu0 0.0
    %1244 = vmatpush2.xpose.msra.mxu0 0.0
    %1245 = vmatprep.subr.mxu0 0.0
    %1246 = vmatpush2.xpose.msra.mxu0 0.0
    %1247 = vmatprep.subr.mxu0 0.0
    %1248 = vmatpush2.xpose.msra.mxu0 0.0
    %1249 = vmatprep.subr.mxu0 0.0
    %1250 = vmatpush2.xpose.msra.mxu0 0.0
    %1251 = vmatprep.subr.mxu0 0.0
    %1252 = vmatpush2.xpose.msra.mxu0 0.0
    %1253 = vmatprep.subr.mxu0 0.0
    %1254 = vmatpush2.xpose.msra.mxu0 0.0
    %1255 = vmatprep.subr.mxu0 0.0
    %1256 = vmatpush2.xpose.msra.mxu0 0.0
    %1257 = vmatprep.subr.mxu0 0.0
    %1258 = vmatpush2.xpose.msra.mxu0 0.0
    %1259 = vmatprep.mubr.f32.mxu0 0.0
    %1260 = vmatmul.mubr.f32.gmra.mxu0 %v1191
    %v1261 = vpop.f32.mrf.mxu0
    %v1262 = vadd.f32 0.0, %v1261
    %v1263 = vpop.f32.mrf.mxu0
    %1264 = vdwg.mxu0
    %1265 = vrot.lane.b32.xlu0 %v350, 112
    %v1266 = vpop.permute.xlu0 %1265
    %1267 = vrot.lane.b32.xlu0 %v350, 80
    %v1268 = vpop.permute.xlu0 %1267
    %v1269 = vsel %vm363, %v1266, 0
    %v1271 = vsel %vm363, %v1268, 0
    %1273 = vmatprep.subr.mxu0 0.0
    %1274 = vmatpush1.xpose.msra.mxu0 0.0
    %1275 = vmatprep.subr.mxu0 0.0
    %1276 = vmatpush1.xpose.msra.mxu0 0.0
    %1277 = vmatprep.subr.mxu0 0.0
    %1278 = vmatpush1.xpose.msra.mxu0 0.0
    %1279 = vmatprep.subr.mxu0 0.0
    %1280 = vmatpush1.xpose.msra.mxu0 0.0
    %1281 = vmatprep.subr.mxu0 0.0
    %1282 = vmatpush1.xpose.msra.mxu0 0.0
    %1283 = vmatprep.subr.mxu0 0.0
    %1284 = vmatpush1.xpose.msra.mxu0 0.0
    %1285 = vmatprep.subr.mxu0 0.0
    %1286 = vmatpush1.xpose.msra.mxu0 0.0
    %1287 = vmatprep.subr.mxu0 0.0
    %1288 = vmatpush1.xpose.msra.mxu0 0.0
    %1289 = vmatprep.subr.mxu0 0.0
    %1290 = vmatpush1.xpose.msra.mxu0 0.0
    %1291 = vmatprep.subr.mxu0 0.0
    %1292 = vmatpush1.xpose.msra.mxu0 0.0
    %1293 = vmatprep.subr.mxu0 0.0
    %1294 = vmatpush1.xpose.msra.mxu0 0.0
    %1295 = vmatprep.subr.mxu0 0.0
    %1296 = vmatpush1.xpose.msra.mxu0 0.0
    %1297 = vmatprep.subr.mxu0 0.0
    %1298 = vmatpush1.xpose.msra.mxu0 0.0
    %1299 = vmatprep.subr.mxu0 0.0
    %1300 = vmatpush1.xpose.msra.mxu0 0.0
    %1301 = vmatprep.subr.mxu0 0.0
    %1302 = vmatpush1.xpose.msra.mxu0 0.0
    %1303 = vmatprep.subr.mxu0 0.0
    %1304 = vmatpush1.xpose.msra.mxu0 %v1271
    %1305 = vmatprep.subr.mxu0 0.0
    %1306 = vmatpush2.xpose.msra.mxu0 0.0
    %1307 = vmatprep.subr.mxu0 0.0
    %1308 = vmatpush2.xpose.msra.mxu0 0.0
    %1309 = vmatprep.subr.mxu0 0.0
    %1310 = vmatpush2.xpose.msra.mxu0 0.0
    %1311 = vmatprep.subr.mxu0 0.0
    %1312 = vmatpush2.xpose.msra.mxu0 0.0
    %1313 = vmatprep.subr.mxu0 0.0
    %1314 = vmatpush2.xpose.msra.mxu0 0.0
    %1315 = vmatprep.subr.mxu0 0.0
    %1316 = vmatpush2.xpose.msra.mxu0 0.0
    %1317 = vmatprep.subr.mxu0 0.0
    %1318 = vmatpush2.xpose.msra.mxu0 0.0
    %1319 = vmatprep.subr.mxu0 0.0
    %1320 = vmatpush2.xpose.msra.mxu0 0.0
    %1321 = vmatprep.subr.mxu0 0.0
    %1322 = vmatpush2.xpose.msra.mxu0 0.0
    %1323 = vmatprep.subr.mxu0 0.0
    %1324 = vmatpush2.xpose.msra.mxu0 0.0
    %1325 = vmatprep.subr.mxu0 0.0
    %1326 = vmatpush2.xpose.msra.mxu0 0.0
    %1327 = vmatprep.subr.mxu0 0.0
    %1328 = vmatpush2.xpose.msra.mxu0 0.0
    %1329 = vmatprep.subr.mxu0 0.0
    %1330 = vmatpush2.xpose.msra.mxu0 0.0
    %1331 = vmatprep.subr.mxu0 0.0
    %1332 = vmatpush2.xpose.msra.mxu0 0.0
    %1333 = vmatprep.subr.mxu0 0.0
    %1334 = vmatpush2.xpose.msra.mxu0 0.0
    %1335 = vmatprep.subr.mxu0 0.0
    %1336 = vmatpush2.xpose.msra.mxu0 0.0
    %1337 = vmatprep.mubr.f32.mxu0 0.0
    %1338 = vmatmul.mubr.f32.gmra.mxu0 %v1269
    %v1339 = vpop.f32.mrf.mxu0
    %v1340 = vadd.f32 0.0, %v1339
    %v1341 = vpop.f32.mrf.mxu0
    %1342 = vdwg.mxu0
    %v1343 = vsel %vm363, %v1262, -inf
    %1344 = vmax.xlane.f32.xlu0 %v1343
    %v1345 = vpop.xlane.xlu0 %1344
    %v1346 = vsel %vm363, %v1340, -inf
    %1347 = vmax.xlane.f32.xlu0 %v1346
    %v1348 = vpop.xlane.xlu0 %1347
    %v1349 = vsub.f32 %v1262, %v1345
    %v1350 = vsub.f32 %v1340, %v1348
    %v1351 = vmul.f32 %v1349, 1.442695
    %v1352 = vpow.pop %v1351
    %v1353 = vmul.f32 %v1350, 1.442695
    %v1354 = vpow.pop %v1353
    %v1355 = vsel %vm363, %v1352, 0.0
    %1356 = vadd.xlane.f32.xlu0 %v1355
    %v1357 = vpop.xlane.xlu0 %1356
    %v1358 = vsel %vm363, %v1354, 0.0
    %1359 = vadd.xlane.f32.xlu0 %v1358
    %v1360 = vpop.xlane.xlu0 %1359
    %v1361 = vrcp.pop %v1357
    %v1362 = vrcp.pop %v1360
    %v1363 = vmul.f32 %v1352, %v1361
    %v1364 = vmul.f32 %v1354, %v1362
    %1365 = vrot.lane.b32.xlu0 %v345, 48
    %v1366 = vpop.permute.xlu0 %1365
    %v1369 = vsel %vm363, %v1363, 0
    %1371 = vmatprep.subr.mxu0 0.0
    %1372 = vmatpush1.msra.mxu0 0.0
    %1373 = vmatprep.subr.mxu0 0.0
    %1374 = vmatpush1.msra.mxu0 0.0
    %1375 = vmatprep.subr.mxu0 0.0
    %1376 = vmatpush1.msra.mxu0 0.0
    %1377 = vmatprep.subr.mxu0 0.0
    %1378 = vmatpush1.msra.mxu0 0.0
    %1379 = vmatprep.subr.mxu0 0.0
    %1380 = vmatpush1.msra.mxu0 0.0
    %1381 = vmatprep.subr.mxu0 0.0
    %1382 = vmatpush1.msra.mxu0 0.0
    %1383 = vmatprep.subr.mxu0 0.0
    %1384 = vmatpush1.msra.mxu0 0.0
    %1385 = vmatprep.subr.mxu0 0.0
    %1386 = vmatpush1.msra.mxu0 0.0
    %1387 = vmatprep.subr.mxu0 0.0
    %1388 = vmatpush1.msra.mxu0 0.0
    %1389 = vmatprep.subr.mxu0 0.0
    %1390 = vmatpush1.msra.mxu0 0.0
    %1391 = vmatprep.subr.mxu0 0.0
    %1392 = vmatpush1.msra.mxu0 0.0
    %1393 = vmatprep.subr.mxu0 0.0
    %1394 = vmatpush1.msra.mxu0 0.0
    %1395 = vmatprep.subr.mxu0 0.0
    %1396 = vmatpush1.msra.mxu0 0.0
    %1397 = vmatprep.subr.mxu0 0.0
    %1398 = vmatpush1.msra.mxu0 0.0
    %1399 = vmatprep.subr.mxu0 0.0
    %1400 = vmatpush1.msra.mxu0 0.0
    %1401 = vmatprep.subr.mxu0 0.0
    %1402 = vmatpush1.msra.mxu0 %v1366
    %1403 = vmatprep.subr.mxu0 0.0
    %1404 = vmatpush2.msra.mxu0 0.0
    %1405 = vmatprep.subr.mxu0 0.0
    %1406 = vmatpush2.msra.mxu0 0.0
    %1407 = vmatprep.subr.mxu0 0.0
    %1408 = vmatpush2.msra.mxu0 0.0
    %1409 = vmatprep.subr.mxu0 0.0
    %1410 = vmatpush2.msra.mxu0 0.0
    %1411 = vmatprep.subr.mxu0 0.0
    %1412 = vmatpush2.msra.mxu0 0.0
    %1413 = vmatprep.subr.mxu0 0.0
    %1414 = vmatpush2.msra.mxu0 0.0
    %1415 = vmatprep.subr.mxu0 0.0
    %1416 = vmatpush2.msra.mxu0 0.0
    %1417 = vmatprep.subr.mxu0 0.0
    %1418 = vmatpush2.msra.mxu0 0.0
    %1419 = vmatprep.subr.mxu0 0.0
    %1420 = vmatpush2.msra.mxu0 0.0
    %1421 = vmatprep.subr.mxu0 0.0
    %1422 = vmatpush2.msra.mxu0 0.0
    %1423 = vmatprep.subr.mxu0 0.0
    %1424 = vmatpush2.msra.mxu0 0.0
    %1425 = vmatprep.subr.mxu0 0.0
    %1426 = vmatpush2.msra.mxu0 0.0
    %1427 = vmatprep.subr.mxu0 0.0
    %1428 = vmatpush2.msra.mxu0 0.0
    %1429 = vmatprep.subr.mxu0 0.0
    %1430 = vmatpush2.msra.mxu0 0.0
    %1431 = vmatprep.subr.mxu0 0.0
    %1432 = vmatpush2.msra.mxu0 0.0
    %1433 = vmatprep.subr.mxu0 0.0
    %1434 = vmatpush2.msra.mxu0 0.0
    %1435 = vmatprep.mubr.f32.mxu0 0.0
    %1436 = vmatmul.mubr.f32.gmra.mxu0 %v1369
    %v1437 = vpop.f32.mrf.mxu0
    %v1438 = vadd.f32 0.0, %v1437
    %v1439 = vpop.f32.mrf.mxu0
    %1440 = vdwg.mxu0
    %1441 = vrot.lane.b32.xlu0 %v350, 48
    %v1442 = vpop.permute.xlu0 %1441
    %v1445 = vsel %vm363, %v1364, 0
    %1447 = vmatprep.subr.mxu0 0.0
    %1448 = vmatpush1.msra.mxu0 0.0
    %1449 = vmatprep.subr.mxu0 0.0
    %1450 = vmatpush1.msra.mxu0 0.0
    %1451 = vmatprep.subr.mxu0 0.0
    %1452 = vmatpush1.msra.mxu0 0.0
    %1453 = vmatprep.subr.mxu0 0.0
    %1454 = vmatpush1.msra.mxu0 0.0
    %1455 = vmatprep.subr.mxu0 0.0
    %1456 = vmatpush1.msra.mxu0 0.0
    %1457 = vmatprep.subr.mxu0 0.0
    %1458 = vmatpush1.msra.mxu0 0.0
    %1459 = vmatprep.subr.mxu0 0.0
    %1460 = vmatpush1.msra.mxu0 0.0
    %1461 = vmatprep.subr.mxu0 0.0
    %1462 = vmatpush1.msra.mxu0 0.0
    %1463 = vmatprep.subr.mxu0 0.0
    %1464 = vmatpush1.msra.mxu0 0.0
    %1465 = vmatprep.subr.mxu0 0.0
    %1466 = vmatpush1.msra.mxu0 0.0
    %1467 = vmatprep.subr.mxu0 0.0
    %1468 = vmatpush1.msra.mxu0 0.0
    %1469 = vmatprep.subr.mxu0 0.0
    %1470 = vmatpush1.msra.mxu0 0.0
    %1471 = vmatprep.subr.mxu0 0.0
    %1472 = vmatpush1.msra.mxu0 0.0
    %1473 = vmatprep.subr.mxu0 0.0
    %1474 = vmatpush1.msra.mxu0 0.0
    %1475 = vmatprep.subr.mxu0 0.0
    %1476 = vmatpush1.msra.mxu0 0.0
    %1477 = vmatprep.subr.mxu0 0.0
    %1478 = vmatpush1.msra.mxu0 %v1442
    %1479 = vmatprep.subr.mxu0 0.0
    %1480 = vmatpush2.msra.mxu0 0.0
    %1481 = vmatprep.subr.mxu0 0.0
    %1482 = vmatpush2.msra.mxu0 0.0
    %1483 = vmatprep.subr.mxu0 0.0
    %1484 = vmatpush2.msra.mxu0 0.0
    %1485 = vmatprep.subr.mxu0 0.0
    %1486 = vmatpush2.msra.mxu0 0.0
    %1487 = vmatprep.subr.mxu0 0.0
    %1488 = vmatpush2.msra.mxu0 0.0
    %1489 = vmatprep.subr.mxu0 0.0
    %1490 = vmatpush2.msra.mxu0 0.0
    %1491 = vmatprep.subr.mxu0 0.0
    %1492 = vmatpush2.msra.mxu0 0.0
    %1493 = vmatprep.subr.mxu0 0.0
    %1494 = vmatpush2.msra.mxu0 0.0
    %1495 = vmatprep.subr.mxu0 0.0
    %1496 = vmatpush2.msra.mxu0 0.0
    %1497 = vmatprep.subr.mxu0 0.0
    %1498 = vmatpush2.msra.mxu0 0.0
    %1499 = vmatprep.subr.mxu0 0.0
    %1500 = vmatpush2.msra.mxu0 0.0
    %1501 = vmatprep.subr.mxu0 0.0
    %1502 = vmatpush2.msra.mxu0 0.0
    %1503 = vmatprep.subr.mxu0 0.0
    %1504 = vmatpush2.msra.mxu0 0.0
    %1505 = vmatprep.subr.mxu0 0.0
    %1506 = vmatpush2.msra.mxu0 0.0
    %1507 = vmatprep.subr.mxu0 0.0
    %1508 = vmatpush2.msra.mxu0 0.0
    %1509 = vmatprep.subr.mxu0 0.0
    %1510 = vmatpush2.msra.mxu0 0.0
    %1511 = vmatprep.mubr.f32.mxu0 0.0
    %1512 = vmatmul.mubr.f32.gmra.mxu0 %v1445
    %v1513 = vpop.f32.mrf.mxu0
    %v1514 = vadd.f32 0.0, %v1513
    %v1515 = vpop.f32.mrf.mxu0
    %1516 = vdwg.mxu0
    %v1517 = vld [vmem:[%s4 + $0x10] sm:$0xff]
    %v1519 = vsel %vm363, %v1438, 0
    %v1522 = vsel %vm363, %v1514, 0
    %1524 = vmatprep.subr.mxu0 0.0
    %1525 = vmatpush1.msra.mxu0 0.0
    %1526 = vmatprep.subr.mxu0 0.0
    %1527 = vmatpush1.msra.mxu0 0.0
    %1528 = vmatprep.subr.mxu0 0.0
    %1529 = vmatpush1.msra.mxu0 0.0
    %1530 = vmatprep.subr.mxu0 0.0
    %1531 = vmatpush1.msra.mxu0 0.0
    %1532 = vmatprep.subr.mxu0 0.0
    %1533 = vmatpush1.msra.mxu0 0.0
    %1534 = vmatprep.subr.mxu0 0.0
    %1535 = vmatpush1.msra.mxu0 0.0
    %1536 = vmatprep.subr.mxu0 0.0
    %1537 = vmatpush1.msra.mxu0 0.0
    %1538 = vmatprep.subr.mxu0 0.0
    %1539 = vmatpush1.msra.mxu0 0.0
    %1540 = vmatprep.subr.mxu0 0.0
    %1541 = vmatpush1.msra.mxu0 0.0
    %1542 = vmatprep.subr.mxu0 0.0
    %1543 = vmatpush1.msra.mxu0 0.0
    %1544 = vmatprep.subr.mxu0 0.0
    %1545 = vmatpush1.msra.mxu0 0.0
    %1546 = vmatprep.subr.mxu0 0.0
    %1547 = vmatpush1.msra.mxu0 0.0
    %1548 = vmatprep.subr.mxu0 0.0
    %1549 = vmatpush1.msra.mxu0 0.0
    %1550 = vmatprep.subr.mxu0 0.0
    %1551 = vmatpush1.msra.mxu0 0.0
    %1552 = vmatprep.subr.mxu0 0.0
    %1553 = vmatpush1.msra.mxu0 0.0
    %1554 = vmatprep.subr.mxu0 0.0
    %1555 = vmatpush1.msra.mxu0 %v1517
    %1556 = vmatprep.subr.mxu0 0.0
    %1557 = vmatpush2.msra.mxu0 0.0
    %1558 = vmatprep.subr.mxu0 0.0
    %1559 = vmatpush2.msra.mxu0 0.0
    %1560 = vmatprep.subr.mxu0 0.0
    %1561 = vmatpush2.msra.mxu0 0.0
    %1562 = vmatprep.subr.mxu0 0.0
    %1563 = vmatpush2.msra.mxu0 0.0
    %1564 = vmatprep.subr.mxu0 0.0
    %1565 = vmatpush2.msra.mxu0 0.0
    %1566 = vmatprep.subr.mxu0 0.0
    %1567 = vmatpush2.msra.mxu0 0.0
    %1568 = vmatprep.subr.mxu0 0.0
    %1569 = vmatpush2.msra.mxu0 0.0
    %1570 = vmatprep.subr.mxu0 0.0
    %1571 = vmatpush2.msra.mxu0 0.0
    %1572 = vmatprep.subr.mxu0 0.0
    %1573 = vmatpush2.msra.mxu0 0.0
    %1574 = vmatprep.subr.mxu0 0.0
    %1575 = vmatpush2.msra.mxu0 0.0
    %1576 = vmatprep.subr.mxu0 0.0
    %1577 = vmatpush2.msra.mxu0 0.0
    %1578 = vmatprep.subr.mxu0 0.0
    %1579 = vmatpush2.msra.mxu0 0.0
    %1580 = vmatprep.subr.mxu0 0.0
    %1581 = vmatpush2.msra.mxu0 0.0
    %1582 = vmatprep.subr.mxu0 0.0
    %1583 = vmatpush2.msra.mxu0 0.0
    %1584 = vmatprep.subr.mxu0 0.0
    %1585 = vmatpush2.msra.mxu0 0.0
    %1586 = vmatprep.subr.mxu0 0.0
    %1587 = vmatpush2.msra.mxu0 0.0
    %1588 = vmatprep.mubr.f32.mxu0 0.0
    %1589 = vmatmul.mubr.f32.gmra.mxu0 %v1519
    %v1590 = vpop.f32.mrf.mxu0
    %v1591 = vadd.f32 0.0, %v1590
    %v1592 = vpop.f32.mrf.mxu0
    %1593 = vmatprep.mubr.f32.mxu0 0.0
    %1594 = vmatmul.mubr.f32.gmra.mxu0 %v1522
    %v1595 = vpop.f32.mrf.mxu0
    %v1596 = vadd.f32 0.0, %v1595
    %v1597 = vpop.f32.mrf.mxu0
    %1598 = vdwg.mxu0
    %v1599 = vadd.f32 %v1185, %v1591
    %v1600 = vadd.f32 %v1186, %v1596
    %1601 = vrot.lane.b32.xlu0 %v345, 104
    %v1602 = vpop.permute.xlu0 %1601
    %1603 = vrot.lane.b32.xlu0 %v345, 72
    %v1604 = vpop.permute.xlu0 %1603
    %v1605 = vsel %vm363, %v1602, 0
    %v1607 = vsel %vm363, %v1604, 0
    %1609 = vmatprep.subr.mxu0 0.0
    %1610 = vmatpush1.xpose.msra.mxu0 0.0
    %1611 = vmatprep.subr.mxu0 0.0
    %1612 = vmatpush1.xpose.msra.mxu0 0.0
    %1613 = vmatprep.subr.mxu0 0.0
    %1614 = vmatpush1.xpose.msra.mxu0 0.0
    %1615 = vmatprep.subr.mxu0 0.0
    %1616 = vmatpush1.xpose.msra.mxu0 0.0
    %1617 = vmatprep.subr.mxu0 0.0
    %1618 = vmatpush1.xpose.msra.mxu0 0.0
    %1619 = vmatprep.subr.mxu0 0.0
    %1620 = vmatpush1.xpose.msra.mxu0 0.0
    %1621 = vmatprep.subr.mxu0 0.0
    %1622 = vmatpush1.xpose.msra.mxu0 0.0
    %1623 = vmatprep.subr.mxu0 0.0
    %1624 = vmatpush1.xpose.msra.mxu0 0.0
    %1625 = vmatprep.subr.mxu0 0.0
    %1626 = vmatpush1.xpose.msra.mxu0 0.0
    %1627 = vmatprep.subr.mxu0 0.0
    %1628 = vmatpush1.xpose.msra.mxu0 0.0
    %1629 = vmatprep.subr.mxu0 0.0
    %1630 = vmatpush1.xpose.msra.mxu0 0.0
    %1631 = vmatprep.subr.mxu0 0.0
    %1632 = vmatpush1.xpose.msra.mxu0 0.0
    %1633 = vmatprep.subr.mxu0 0.0
    %1634 = vmatpush1.xpose.msra.mxu0 0.0
    %1635 = vmatprep.subr.mxu0 0.0
    %1636 = vmatpush1.xpose.msra.mxu0 0.0
    %1637 = vmatprep.subr.mxu0 0.0
    %1638 = vmatpush1.xpose.msra.mxu0 0.0
    %1639 = vmatprep.subr.mxu0 0.0
    %1640 = vmatpush1.xpose.msra.mxu0 %v1607
    %1641 = vmatprep.subr.mxu0 0.0
    %1642 = vmatpush2.xpose.msra.mxu0 0.0
    %1643 = vmatprep.subr.mxu0 0.0
    %1644 = vmatpush2.xpose.msra.mxu0 0.0
    %1645 = vmatprep.subr.mxu0 0.0
    %1646 = vmatpush2.xpose.msra.mxu0 0.0
    %1647 = vmatprep.subr.mxu0 0.0
    %1648 = vmatpush2.xpose.msra.mxu0 0.0
    %1649 = vmatprep.subr.mxu0 0.0
    %1650 = vmatpush2.xpose.msra.mxu0 0.0
    %1651 = vmatprep.subr.mxu0 0.0
    %1652 = vmatpush2.xpose.msra.mxu0 0.0
    %1653 = vmatprep.subr.mxu0 0.0
    %1654 = vmatpush2.xpose.msra.mxu0 0.0
    %1655 = vmatprep.subr.mxu0 0.0
    %1656 = vmatpush2.xpose.msra.mxu0 0.0
    %1657 = vmatprep.subr.mxu0 0.0
    %1658 = vmatpush2.xpose.msra.mxu0 0.0
    %1659 = vmatprep.subr.mxu0 0.0
    %1660 = vmatpush2.xpose.msra.mxu0 0.0
    %1661 = vmatprep.subr.mxu0 0.0
    %1662 = vmatpush2.xpose.msra.mxu0 0.0
    %1663 = vmatprep.subr.mxu0 0.0
    %1664 = vmatpush2.xpose.msra.mxu0 0.0
    %1665 = vmatprep.subr.mxu0 0.0
    %1666 = vmatpush2.xpose.msra.mxu0 0.0
    %1667 = vmatprep.subr.mxu0 0.0
    %1668 = vmatpush2.xpose.msra.mxu0 0.0
    %1669 = vmatprep.subr.mxu0 0.0
    %1670 = vmatpush2.xpose.msra.mxu0 0.0
    %1671 = vmatprep.subr.mxu0 0.0
    %1672 = vmatpush2.xpose.msra.mxu0 0.0
    %1673 = vmatprep.mubr.f32.mxu0 0.0
    %1674 = vmatmul.mubr.f32.gmra.mxu0 %v1605
    %v1675 = vpop.f32.mrf.mxu0
    %v1676 = vadd.f32 0.0, %v1675
    %v1677 = vpop.f32.mrf.mxu0
    %1678 = vdwg.mxu0
    %1679 = vrot.lane.b32.xlu0 %v350, 104
    %v1680 = vpop.permute.xlu0 %1679
    %1681 = vrot.lane.b32.xlu0 %v350, 72
    %v1682 = vpop.permute.xlu0 %1681
    %v1683 = vsel %vm363, %v1680, 0
    %v1685 = vsel %vm363, %v1682, 0
    %1687 = vmatprep.subr.mxu0 0.0
    %1688 = vmatpush1.xpose.msra.mxu0 0.0
    %1689 = vmatprep.subr.mxu0 0.0
    %1690 = vmatpush1.xpose.msra.mxu0 0.0
    %1691 = vmatprep.subr.mxu0 0.0
    %1692 = vmatpush1.xpose.msra.mxu0 0.0
    %1693 = vmatprep.subr.mxu0 0.0
    %1694 = vmatpush1.xpose.msra.mxu0 0.0
    %1695 = vmatprep.subr.mxu0 0.0
    %1696 = vmatpush1.xpose.msra.mxu0 0.0
    %1697 = vmatprep.subr.mxu0 0.0
    %1698 = vmatpush1.xpose.msra.mxu0 0.0
    %1699 = vmatprep.subr.mxu0 0.0
    %1700 = vmatpush1.xpose.msra.mxu0 0.0
    %1701 = vmatprep.subr.mxu0 0.0
    %1702 = vmatpush1.xpose.msra.mxu0 0.0
    %1703 = vmatprep.subr.mxu0 0.0
    %1704 = vmatpush1.xpose.msra.mxu0 0.0
    %1705 = vmatprep.subr.mxu0 0.0
    %1706 = vmatpush1.xpose.msra.mxu0 0.0
    %1707 = vmatprep.subr.mxu0 0.0
    %1708 = vmatpush1.xpose.msra.mxu0 0.0
    %1709 = vmatprep.subr.mxu0 0.0
    %1710 = vmatpush1.xpose.msra.mxu0 0.0
    %1711 = vmatprep.subr.mxu0 0.0
    %1712 = vmatpush1.xpose.msra.mxu0 0.0
    %1713 = vmatprep.subr.mxu0 0.0
    %1714 = vmatpush1.xpose.msra.mxu0 0.0
    %1715 = vmatprep.subr.mxu0 0.0
    %1716 = vmatpush1.xpose.msra.mxu0 0.0
    %1717 = vmatprep.subr.mxu0 0.0
    %1718 = vmatpush1.xpose.msra.mxu0 %v1685
    %1719 = vmatprep.subr.mxu0 0.0
    %1720 = vmatpush2.xpose.msra.mxu0 0.0
    %1721 = vmatprep.subr.mxu0 0.0
    %1722 = vmatpush2.xpose.msra.mxu0 0.0
    %1723 = vmatprep.subr.mxu0 0.0
    %1724 = vmatpush2.xpose.msra.mxu0 0.0
    %1725 = vmatprep.subr.mxu0 0.0
    %1726 = vmatpush2.xpose.msra.mxu0 0.0
    %1727 = vmatprep.subr.mxu0 0.0
    %1728 = vmatpush2.xpose.msra.mxu0 0.0
    %1729 = vmatprep.subr.mxu0 0.0
    %1730 = vmatpush2.xpose.msra.mxu0 0.0
    %1731 = vmatprep.subr.mxu0 0.0
    %1732 = vmatpush2.xpose.msra.mxu0 0.0
    %1733 = vmatprep.subr.mxu0 0.0
    %1734 = vmatpush2.xpose.msra.mxu0 0.0
    %1735 = vmatprep.subr.mxu0 0.0
    %1736 = vmatpush2.xpose.msra.mxu0 0.0
    %1737 = vmatprep.subr.mxu0 0.0
    %1738 = vmatpush2.xpose.msra.mxu0 0.0
    %1739 = vmatprep.subr.mxu0 0.0
    %1740 = vmatpush2.xpose.msra.mxu0 0.0
    %1741 = vmatprep.subr.mxu0 0.0
    %1742 = vmatpush2.xpose.msra.mxu0 0.0
    %1743 = vmatprep.subr.mxu0 0.0
    %1744 = vmatpush2.xpose.msra.mxu0 0.0
    %1745 = vmatprep.subr.mxu0 0.0
    %1746 = vmatpush2.xpose.msra.mxu0 0.0
    %1747 = vmatprep.subr.mxu0 0.0
    %1748 = vmatpush2.xpose.msra.mxu0 0.0
    %1749 = vmatprep.subr.mxu0 0.0
    %1750 = vmatpush2.xpose.msra.mxu0 0.0
    %1751 = vmatprep.mubr.f32.mxu0 0.0
    %1752 = vmatmul.mubr.f32.gmra.mxu0 %v1683
    %v1753 = vpop.f32.mrf.mxu0
    %v1754 = vadd.f32 0.0, %v1753
    %v1755 = vpop.f32.mrf.mxu0
    %1756 = vdwg.mxu0
    %v1757 = vsel %vm363, %v1676, -inf
    %1758 = vmax.xlane.f32.xlu0 %v1757
    %v1759 = vpop.xlane.xlu0 %1758
    %v1760 = vsel %vm363, %v1754, -inf
    %1761 = vmax.xlane.f32.xlu0 %v1760
    %v1762 = vpop.xlane.xlu0 %1761
    %v1763 = vsub.f32 %v1676, %v1759
    %v1764 = vsub.f32 %v1754, %v1762
    %v1765 = vmul.f32 %v1763, 1.442695
    %v1766 = vpow.pop %v1765
    %v1767 = vmul.f32 %v1764, 1.442695
    %v1768 = vpow.pop %v1767
    %v1769 = vsel %vm363, %v1766, 0.0
    %1770 = vadd.xlane.f32.xlu0 %v1769
    %v1771 = vpop.xlane.xlu0 %1770
    %v1772 = vsel %vm363, %v1768, 0.0
    %1773 = vadd.xlane.f32.xlu0 %v1772
    %v1774 = vpop.xlane.xlu0 %1773
    %v1775 = vrcp.pop %v1771
    %v1776 = vrcp.pop %v1774
    %v1777 = vmul.f32 %v1766, %v1775
    %v1778 = vmul.f32 %v1768, %v1776
    %1779 = vrot.lane.b32.xlu0 %v345, 40
    %v1780 = vpop.permute.xlu0 %1779
    %v1783 = vsel %vm363, %v1777, 0
    %1785 = vmatprep.subr.mxu0 0.0
    %1786 = vmatpush1.msra.mxu0 0.0
    %1787 = vmatprep.subr.mxu0 0.0
    %1788 = vmatpush1.msra.mxu0 0.0
    %1789 = vmatprep.subr.mxu0 0.0
    %1790 = vmatpush1.msra.mxu0 0.0
    %1791 = vmatprep.subr.mxu0 0.0
    %1792 = vmatpush1.msra.mxu0 0.0
    %1793 = vmatprep.subr.mxu0 0.0
    %1794 = vmatpush1.msra.mxu0 0.0
    %1795 = vmatprep.subr.mxu0 0.0
    %1796 = vmatpush1.msra.mxu0 0.0
    %1797 = vmatprep.subr.mxu0 0.0
    %1798 = vmatpush1.msra.mxu0 0.0
    %1799 = vmatprep.subr.mxu0 0.0
    %1800 = vmatpush1.msra.mxu0 0.0
    %1801 = vmatprep.subr.mxu0 0.0
    %1802 = vmatpush1.msra.mxu0 0.0
    %1803 = vmatprep.subr.mxu0 0.0
    %1804 = vmatpush1.msra.mxu0 0.0
    %1805 = vmatprep.subr.mxu0 0.0
    %1806 = vmatpush1.msra.mxu0 0.0
    %1807 = vmatprep.subr.mxu0 0.0
    %1808 = vmatpush1.msra.mxu0 0.0
    %1809 = vmatprep.subr.mxu0 0.0
    %1810 = vmatpush1.msra.mxu0 0.0
    %1811 = vmatprep.subr.mxu0 0.0
    %1812 = vmatpush1.msra.mxu0 0.0
    %1813 = vmatprep.subr.mxu0 0.0
    %1814 = vmatpush1.msra.mxu0 0.0
    %1815 = vmatprep.subr.mxu0 0.0
    %1816 = vmatpush1.msra.mxu0 %v1780
    %1817 = vmatprep.subr.mxu0 0.0
    %1818 = vmatpush2.msra.mxu0 0.0
    %1819 = vmatprep.subr.mxu0 0.0
    %1820 = vmatpush2.msra.mxu0 0.0
    %1821 = vmatprep.subr.mxu0 0.0
    %1822 = vmatpush2.msra.mxu0 0.0
    %1823 = vmatprep.subr.mxu0 0.0
    %1824 = vmatpush2.msra.mxu0 0.0
    %1825 = vmatprep.subr.mxu0 0.0
    %1826 = vmatpush2.msra.mxu0 0.0
    %1827 = vmatprep.subr.mxu0 0.0
    %1828 = vmatpush2.msra.mxu0 0.0
    %1829 = vmatprep.subr.mxu0 0.0
    %1830 = vmatpush2.msra.mxu0 0.0
    %1831 = vmatprep.subr.mxu0 0.0
    %1832 = vmatpush2.msra.mxu0 0.0
    %1833 = vmatprep.subr.mxu0 0.0
    %1834 = vmatpush2.msra.mxu0 0.0
    %1835 = vmatprep.subr.mxu0 0.0
    %1836 = vmatpush2.msra.mxu0 0.0
    %1837 = vmatprep.subr.mxu0 0.0
    %1838 = vmatpush2.msra.mxu0 0.0
    %1839 = vmatprep.subr.mxu0 0.0
    %1840 = vmatpush2.msra.mxu0 0.0
    %1841 = vmatprep.subr.mxu0 0.0
    %1842 = vmatpush2.msra.mxu0 0.0
    %1843 = vmatprep.subr.mxu0 0.0
    %1844 = vmatpush2.msra.mxu0 0.0
    %1845 = vmatprep.subr.mxu0 0.0
    %1846 = vmatpush2.msra.mxu0 0.0
    %1847 = vmatprep.subr.mxu0 0.0
    %1848 = vmatpush2.msra.mxu0 0.0
    %1849 = vmatprep.mubr.f32.mxu0 0.0
    %1850 = vmatmul.mubr.f32.gmra.mxu0 %v1783
    %v1851 = vpop.f32.mrf.mxu0
    %v1852 = vadd.f32 0.0, %v1851
    %v1853 = vpop.f32.mrf.mxu0
    %1854 = vdwg.mxu0
    %1855 = vrot.lane.b32.xlu0 %v350, 40
    %v1856 = vpop.permute.xlu0 %1855
    %v1859 = vsel %vm363, %v1778, 0
    %1861 = vmatprep.subr.mxu0 0.0
    %1862 = vmatpush1.msra.mxu0 0.0
    %1863 = vmatprep.subr.mxu0 0.0
    %1864 = vmatpush1.msra.mxu0 0.0
    %1865 = vmatprep.subr.mxu0 0.0
    %1866 = vmatpush1.msra.mxu0 0.0
    %1867 = vmatprep.subr.mxu0 0.0
    %1868 = vmatpush1.msra.mxu0 0.0
    %1869 = vmatprep.subr.mxu0 0.0
    %1870 = vmatpush1.msra.mxu0 0.0
    %1871 = vmatprep.subr.mxu0 0.0
    %1872 = vmatpush1.msra.mxu0 0.0
    %1873 = vmatprep.subr.mxu0 0.0
    %1874 = vmatpush1.msra.mxu0 0.0
    %1875 = vmatprep.subr.mxu0 0.0
    %1876 = vmatpush1.msra.mxu0 0.0
    %1877 = vmatprep.subr.mxu0 0.0
    %1878 = vmatpush1.msra.mxu0 0.0
    %1879 = vmatprep.subr.mxu0 0.0
    %1880 = vmatpush1.msra.mxu0 0.0
    %1881 = vmatprep.subr.mxu0 0.0
    %1882 = vmatpush1.msra.mxu0 0.0
    %1883 = vmatprep.subr.mxu0 0.0
    %1884 = vmatpush1.msra.mxu0 0.0
    %1885 = vmatprep.subr.mxu0 0.0
    %1886 = vmatpush1.msra.mxu0 0.0
    %1887 = vmatprep.subr.mxu0 0.0
    %1888 = vmatpush1.msra.mxu0 0.0
    %1889 = vmatprep.subr.mxu0 0.0
    %1890 = vmatpush1.msra.mxu0 0.0
    %1891 = vmatprep.subr.mxu0 0.0
    %1892 = vmatpush1.msra.mxu0 %v1856
    %1893 = vmatprep.subr.mxu0 0.0
    %1894 = vmatpush2.msra.mxu0 0.0
    %1895 = vmatprep.subr.mxu0 0.0
    %1896 = vmatpush2.msra.mxu0 0.0
    %1897 = vmatprep.subr.mxu0 0.0
    %1898 = vmatpush2.msra.mxu0 0.0
    %1899 = vmatprep.subr.mxu0 0.0
    %1900 = vmatpush2.msra.mxu0 0.0
    %1901 = vmatprep.subr.mxu0 0.0
    %1902 = vmatpush2.msra.mxu0 0.0
    %1903 = vmatprep.subr.mxu0 0.0
    %1904 = vmatpush2.msra.mxu0 0.0
    %1905 = vmatprep.subr.mxu0 0.0
    %1906 = vmatpush2.msra.mxu0 0.0
    %1907 = vmatprep.subr.mxu0 0.0
    %1908 = vmatpush2.msra.mxu0 0.0
    %1909 = vmatprep.subr.mxu0 0.0
    %1910 = vmatpush2.msra.mxu0 0.0
    %1911 = vmatprep.subr.mxu0 0.0
    %1912 = vmatpush2.msra.mxu0 0.0
    %1913 = vmatprep.subr.mxu0 0.0
    %1914 = vmatpush2.msra.mxu0 0.0
    %1915 = vmatprep.subr.mxu0 0.0
    %1916 = vmatpush2.msra.mxu0 0.0
    %1917 = vmatprep.subr.mxu0 0.0
    %1918 = vmatpush2.msra.mxu0 0.0
    %1919 = vmatprep.subr.mxu0 0.0
    %1920 = vmatpush2.msra.mxu0 0.0
    %1921 = vmatprep.subr.mxu0 0.0
    %1922 = vmatpush2.msra.mxu0 0.0
    %1923 = vmatprep.subr.mxu0 0.0
    %1924 = vmatpush2.msra.mxu0 0.0
    %1925 = vmatprep.mubr.f32.mxu0 0.0
    %1926 = vmatmul.mubr.f32.gmra.mxu0 %v1859
    %v1927 = vpop.f32.mrf.mxu0
    %v1928 = vadd.f32 0.0, %v1927
    %v1929 = vpop.f32.mrf.mxu0
    %1930 = vdwg.mxu0
    %v1931 = vld [vmem:[%s4 + $0x18] sm:$0xff]
    %v1933 = vsel %vm363, %v1852, 0
    %v1936 = vsel %vm363, %v1928, 0
    %1938 = vmatprep.subr.mxu0 0.0
    %1939 = vmatpush1.msra.mxu0 0.0
    %1940 = vmatprep.subr.mxu0 0.0
    %1941 = vmatpush1.msra.mxu0 0.0
    %1942 = vmatprep.subr.mxu0 0.0
    %1943 = vmatpush1.msra.mxu0 0.0
    %1944 = vmatprep.subr.mxu0 0.0
    %1945 = vmatpush1.msra.mxu0 0.0
    %1946 = vmatprep.subr.mxu0 0.0
    %1947 = vmatpush1.msra.mxu0 0.0
    %1948 = vmatprep.subr.mxu0 0.0
    %1949 = vmatpush1.msra.mxu0 0.0
    %1950 = vmatprep.subr.mxu0 0.0
    %1951 = vmatpush1.msra.mxu0 0.0
    %1952 = vmatprep.subr.mxu0 0.0
    %1953 = vmatpush1.msra.mxu0 0.0
    %1954 = vmatprep.subr.mxu0 0.0
    %1955 = vmatpush1.msra.mxu0 0.0
    %1956 = vmatprep.subr.mxu0 0.0
    %1957 = vmatpush1.msra.mxu0 0.0
    %1958 = vmatprep.subr.mxu0 0.0
    %1959 = vmatpush1.msra.mxu0 0.0
    %1960 = vmatprep.subr.mxu0 0.0
    %1961 = vmatpush1.msra.mxu0 0.0
    %1962 = vmatprep.subr.mxu0 0.0
    %1963 = vmatpush1.msra.mxu0 0.0
    %1964 = vmatprep.subr.mxu0 0.0
    %1965 = vmatpush1.msra.mxu0 0.0
    %1966 = vmatprep.subr.mxu0 0.0
    %1967 = vmatpush1.msra.mxu0 0.0
    %1968 = vmatprep.subr.mxu0 0.0
    %1969 = vmatpush1.msra.mxu0 %v1931
    %1970 = vmatprep.subr.mxu0 0.0
    %1971 = vmatpush2.msra.mxu0 0.0
    %1972 = vmatprep.subr.mxu0 0.0
    %1973 = vmatpush2.msra.mxu0 0.0
    %1974 = vmatprep.subr.mxu0 0.0
    %1975 = vmatpush2.msra.mxu0 0.0
    %1976 = vmatprep.subr.mxu0 0.0
    %1977 = vmatpush2.msra.mxu0 0.0
    %1978 = vmatprep.subr.mxu0 0.0
    %1979 = vmatpush2.msra.mxu0 0.0
    %1980 = vmatprep.subr.mxu0 0.0
    %1981 = vmatpush2.msra.mxu0 0.0
    %1982 = vmatprep.subr.mxu0 0.0
    %1983 = vmatpush2.msra.mxu0 0.0
    %1984 = vmatprep.subr.mxu0 0.0
    %1985 = vmatpush2.msra.mxu0 0.0
    %1986 = vmatprep.subr.mxu0 0.0
    %1987 = vmatpush2.msra.mxu0 0.0
    %1988 = vmatprep.subr.mxu0 0.0
    %1989 = vmatpush2.msra.mxu0 0.0
    %1990 = vmatprep.subr.mxu0 0.0
    %1991 = vmatpush2.msra.mxu0 0.0
    %1992 = vmatprep.subr.mxu0 0.0
    %1993 = vmatpush2.msra.mxu0 0.0
    %1994 = vmatprep.subr.mxu0 0.0
    %1995 = vmatpush2.msra.mxu0 0.0
    %1996 = vmatprep.subr.mxu0 0.0
    %1997 = vmatpush2.msra.mxu0 0.0
    %1998 = vmatprep.subr.mxu0 0.0
    %1999 = vmatpush2.msra.mxu0 0.0
    %2000 = vmatprep.subr.mxu0 0.0
    %2001 = vmatpush2.msra.mxu0 0.0
    %2002 = vmatprep.mubr.f32.mxu0 0.0
    %2003 = vmatmul.mubr.f32.gmra.mxu0 %v1933
    %v2004 = vpop.f32.mrf.mxu0
    %v2005 = vadd.f32 0.0, %v2004
    %v2006 = vpop.f32.mrf.mxu0
    %2007 = vmatprep.mubr.f32.mxu0 0.0
    %2008 = vmatmul.mubr.f32.gmra.mxu0 %v1936
    %v2009 = vpop.f32.mrf.mxu0
    %v2010 = vadd.f32 0.0, %v2009
    %v2011 = vpop.f32.mrf.mxu0
    %2012 = vdwg.mxu0
    %v2013 = vadd.f32 %v1599, %v2005
    %v2014 = vadd.f32 %v1600, %v2010
    %v2015 = vadd.f32 %v164, %v2013
    %v2016 = vadd.f32 %v165, %v2014
    %v2017 = vld [vmem:[%s16] sm:$0x1]
    %s2018 = scalar_lea.vmem %s16, 1
    %v2019 = vld [vmem:[%s2018] sm:$0x1]
    %v2020 = vsel %vm179, %v2015, 0.0
    %2021 = vadd.xlane.f32.xlu0 %v2020
    %v2022 = vpop.xlane.xlu0 %2021
    %v2023 = vsel %vm179, %v2016, 0.0
    %2024 = vadd.xlane.f32.xlu0 %v2023
    %v2025 = vpop.xlane.xlu0 %2024
    %v2026 = vrcp.pop 32.0
    %v2027 = vmul.f32 %v2022, %v2026
    %v2028 = vmul.f32 %v2025, %v2026
    %v2029 = vsub.f32 %v2015, %v2027
    %v2030 = vsub.f32 %v2016, %v2028
    %v2031 = vmul.f32 %v2029, %v2029
    %v2032 = vmul.f32 %v2030, %v2030
    %v2033 = vsel %vm179, %v2031, 0.0
    %2034 = vadd.xlane.f32.xlu0 %v2033
    %v2035 = vpop.xlane.xlu0 %2034
    %v2036 = vsel %vm179, %v2032, 0.0
    %2037 = vadd.xlane.f32.xlu0 %v2036
    %v2038 = vpop.xlane.xlu0 %2037
    %v2039 = vmul.f32 %v2035, %v2026
    %v2040 = vmul.f32 %v2038, %v2026
    %v2041 = vadd.f32 %v2039, 1e-05
    %v2042 = vadd.f32 %v2040, 1e-05
    %v2043 = vrsqrt.pop %v2041
    %v2044 = vrsqrt.pop %v2042
    %v2045 = vmul.f32 %v2029, %v2043
    %v2046 = vmul.f32 %v2030, %v2044
    %v2048 = vlaneseq
    %v2049 = vshrl.u32 %v2048, 7
    %v2050 = vsub.s32 0, %v2049
    %v2051 = vrot.slane %v2017, %v2050
    %v2053 = vmul.f32 %v2045, %v2051
    %v2054 = vmul.f32 %v2046, %v2051
    %v2056 = vlaneseq
    %v2057 = vshrl.u32 %v2056, 7
    %v2058 = vsub.s32 0, %v2057
    %v2059 = vrot.slane %v2019, %v2058
    %v2061 = vadd.f32 %v2053, %v2059
    %v2062 = vadd.f32 %v2054, %v2059
    %v2063 = vld [vmem:[%s6] sm:$0xff]
    %v2064 = vld [vmem:[%s6 + $0x8] sm:$0xff]
    %v2065 = vld [vmem:[%s6 + $0x10] sm:$0xff]
    %v2066 = vld [vmem:[%s6 + $0x18] sm:$0xff]
    %v2067 = vld [vmem:[#allocation8] sm:$0x1]
    %v2069 = vlaneseq
    %v2070 = vshrl.u32 %v2069, 7
    %v2071 = vsub.s32 0, %v2070
    %v2072 = vrot.slane %v2067, %v2071
    %v2075 = vsel %vm179, %v2061, 0
    %v2078 = vsel %vm179, %v2062, 0
    %2080 = vmatprep.subr.mxu0 0.0
    %2081 = vmatpush1.msra.mxu0 0.0
    %2082 = vmatprep.subr.mxu0 0.0
    %2083 = vmatpush1.msra.mxu0 0.0
    %2084 = vmatprep.subr.mxu0 0.0
    %2085 = vmatpush1.msra.mxu0 0.0
    %2086 = vmatprep.subr.mxu0 0.0
    %2087 = vmatpush1.msra.mxu0 0.0
    %2088 = vmatprep.subr.mxu0 0.0
    %2089 = vmatpush1.msra.mxu0 0.0
    %2090 = vmatprep.subr.mxu0 0.0
    %2091 = vmatpush1.msra.mxu0 0.0
    %2092 = vmatprep.subr.mxu0 0.0
    %2093 = vmatpush1.msra.mxu0 0.0
    %2094 = vmatprep.subr.mxu0 0.0
    %2095 = vmatpush1.msra.mxu0 0.0
    %2096 = vmatprep.subr.mxu0 0.0
    %2097 = vmatpush1.msra.mxu0 0.0
    %2098 = vmatprep.subr.mxu0 0.0
    %2099 = vmatpush1.msra.mxu0 0.0
    %2100 = vmatprep.subr.mxu0 0.0
    %2101 = vmatpush1.msra.mxu0 0.0
    %2102 = vmatprep.subr.mxu0 0.0
    %2103 = vmatpush1.msra.mxu0 0.0
    %2104 = vmatprep.subr.mxu0 0.0
    %2105 = vmatpush1.msra.mxu0 %v2066
    %2106 = vmatprep.subr.mxu0 0.0
    %2107 = vmatpush1.msra.mxu0 %v2065
    %2108 = vmatprep.subr.mxu0 0.0
    %2109 = vmatpush1.msra.mxu0 %v2064
    %2110 = vmatprep.subr.mxu0 0.0
    %2111 = vmatpush1.msra.mxu0 %v2063
    %2112 = vmatprep.subr.mxu0 0.0
    %2113 = vmatpush2.msra.mxu0 0.0
    %2114 = vmatprep.subr.mxu0 0.0
    %2115 = vmatpush2.msra.mxu0 0.0
    %2116 = vmatprep.subr.mxu0 0.0
    %2117 = vmatpush2.msra.mxu0 0.0
    %2118 = vmatprep.subr.mxu0 0.0
    %2119 = vmatpush2.msra.mxu0 0.0
    %2120 = vmatprep.subr.mxu0 0.0
    %2121 = vmatpush2.msra.mxu0 0.0
    %2122 = vmatprep.subr.mxu0 0.0
    %2123 = vmatpush2.msra.mxu0 0.0
    %2124 = vmatprep.subr.mxu0 0.0
    %2125 = vmatpush2.msra.mxu0 0.0
    %2126 = vmatprep.subr.mxu0 0.0
    %2127 = vmatpush2.msra.mxu0 0.0
    %2128 = vmatprep.subr.mxu0 0.0
    %2129 = vmatpush2.msra.mxu0 0.0
    %2130 = vmatprep.subr.mxu0 0.0
    %2131 = vmatpush2.msra.mxu0 0.0
    %2132 = vmatprep.subr.mxu0 0.0
    %2133 = vmatpush2.msra.mxu0 0.0
    %2134 = vmatprep.subr.mxu0 0.0
    %2135 = vmatpush2.msra.mxu0 0.0
    %2136 = vmatprep.subr.mxu0 0.0
    %2137 = vmatpush2.msra.mxu0 0.0
    %2138 = vmatprep.subr.mxu0 0.0
    %2139 = vmatpush2.msra.mxu0 0.0
    %2140 = vmatprep.subr.mxu0 0.0
    %2141 = vmatpush2.msra.mxu0 0.0
    %2142 = vmatprep.subr.mxu0 0.0
    %2143 = vmatpush2.msra.mxu0 0.0
    %2144 = vmatprep.mubr.f32.mxu0 0.0
    %2145 = vmatmul.mubr.f32.gmra.mxu0 %v2075
    %v2146 = vpop.f32.mrf.mxu0
    %v2147 = vadd.f32 %v2072, %v2146
    %v2148 = vpop.f32.mrf.mxu0
    %2149 = vmatprep.mubr.f32.mxu0 0.0
    %2150 = vmatmul.mubr.f32.gmra.mxu0 %v2078
    %v2151 = vpop.f32.mrf.mxu0
    %v2152 = vadd.f32 %v2072, %v2151
    %v2153 = vpop.f32.mrf.mxu0
    %2154 = vdwg.mxu0
    %v2155 = vld [vmem:[%s11] sm:$0x1]
    %v2157 = vlaneseq
    %v2158 = vshrl.u32 %v2157, 7
    %v2159 = vsub.s32 0, %v2158
    %v2160 = vrot.slane %v2155, %v2159
    %v2163 = vsel %vm363, %v2147, 0
    %v2166 = vsel %vm363, %v253, 0
    %2168 = vmatprep.subr.mxu0 0.0
    %2169 = vmatpush1.xpose.msra.mxu0 0.0
    %2170 = vmatprep.subr.mxu0 0.0
    %2171 = vmatpush1.xpose.msra.mxu0 0.0
    %2172 = vmatprep.subr.mxu0 0.0
    %2173 = vmatpush1.xpose.msra.mxu0 0.0
    %2174 = vmatprep.subr.mxu0 0.0
    %2175 = vmatpush1.xpose.msra.mxu0 0.0
    %2176 = vmatprep.subr.mxu0 0.0
    %2177 = vmatpush1.xpose.msra.mxu0 0.0
    %2178 = vmatprep.subr.mxu0 0.0
    %2179 = vmatpush1.xpose.msra.mxu0 0.0
    %2180 = vmatprep.subr.mxu0 0.0
    %2181 = vmatpush1.xpose.msra.mxu0 0.0
    %2182 = vmatprep.subr.mxu0 0.0
    %2183 = vmatpush1.xpose.msra.mxu0 0.0
    %2184 = vmatprep.subr.mxu0 0.0
    %2185 = vmatpush1.xpose.msra.mxu0 0.0
    %2186 = vmatprep.subr.mxu0 0.0
    %2187 = vmatpush1.xpose.msra.mxu0 0.0
    %2188 = vmatprep.subr.mxu0 0.0
    %2189 = vmatpush1.xpose.msra.mxu0 0.0
    %2190 = vmatprep.subr.mxu0 0.0
    %2191 = vmatpush1.xpose.msra.mxu0 0.0
    %2192 = vmatprep.subr.mxu0 0.0
    %2193 = vmatpush1.xpose.msra.mxu0 0.0
    %2194 = vmatprep.subr.mxu0 0.0
    %2195 = vmatpush1.xpose.msra.mxu0 0.0
    %2196 = vmatprep.subr.mxu0 0.0
    %2197 = vmatpush1.xpose.msra.mxu0 0.0
    %2198 = vmatprep.subr.mxu0 0.0
    %2199 = vmatpush1.xpose.msra.mxu0 %v2166
    %2200 = vmatprep.subr.mxu0 0.0
    %2201 = vmatpush2.xpose.msra.mxu0 0.0
    %2202 = vmatprep.subr.mxu0 0.0
    %2203 = vmatpush2.xpose.msra.mxu0 0.0
    %2204 = vmatprep.subr.mxu0 0.0
    %2205 = vmatpush2.xpose.msra.mxu0 0.0
    %2206 = vmatprep.subr.mxu0 0.0
    %2207 = vmatpush2.xpose.msra.mxu0 0.0
    %2208 = vmatprep.subr.mxu0 0.0
    %2209 = vmatpush2.xpose.msra.mxu0 0.0
    %2210 = vmatprep.subr.mxu0 0.0
    %2211 = vmatpush2.xpose.msra.mxu0 0.0
    %2212 = vmatprep.subr.mxu0 0.0
    %2213 = vmatpush2.xpose.msra.mxu0 0.0
    %2214 = vmatprep.subr.mxu0 0.0
    %2215 = vmatpush2.xpose.msra.mxu0 0.0
    %2216 = vmatprep.subr.mxu0 0.0
    %2217 = vmatpush2.xpose.msra.mxu0 0.0
    %2218 = vmatprep.subr.mxu0 0.0
    %2219 = vmatpush2.xpose.msra.mxu0 0.0
    %2220 = vmatprep.subr.mxu0 0.0
    %2221 = vmatpush2.xpose.msra.mxu0 0.0
    %2222 = vmatprep.subr.mxu0 0.0
    %2223 = vmatpush2.xpose.msra.mxu0 0.0
    %2224 = vmatprep.subr.mxu0 0.0
    %2225 = vmatpush2.xpose.msra.mxu0 0.0
    %2226 = vmatprep.subr.mxu0 0.0
    %2227 = vmatpush2.xpose.msra.mxu0 0.0
    %2228 = vmatprep.subr.mxu0 0.0
    %2229 = vmatpush2.xpose.msra.mxu0 0.0
    %2230 = vmatprep.subr.mxu0 0.0
    %2231 = vmatpush2.xpose.msra.mxu0 0.0
    %2232 = vmatprep.mubr.f32.mxu0 0.0
    %2233 = vmatmul.mubr.f32.gmra.mxu0 %v2163
    %v2234 = vpop.f32.mrf.mxu0
    %v2235 = vadd.f32 0.0, %v2234
    %v2236 = vpop.f32.mrf.mxu0
    %2237 = vdwg.mxu0
    %v2239 = vsel %vm363, %v2152, 0
    %v2242 = vsel %vm363, %v258, 0
    %2244 = vmatprep.subr.mxu0 0.0
    %2245 = vmatpush1.xpose.msra.mxu0 0.0
    %2246 = vmatprep.subr.mxu0 0.0
    %2247 = vmatpush1.xpose.msra.mxu0 0.0
    %2248 = vmatprep.subr.mxu0 0.0
    %2249 = vmatpush1.xpose.msra.mxu0 0.0
    %2250 = vmatprep.subr.mxu0 0.0
    %2251 = vmatpush1.xpose.msra.mxu0 0.0
    %2252 = vmatprep.subr.mxu0 0.0
    %2253 = vmatpush1.xpose.msra.mxu0 0.0
    %2254 = vmatprep.subr.mxu0 0.0
    %2255 = vmatpush1.xpose.msra.mxu0 0.0
    %2256 = vmatprep.subr.mxu0 0.0
    %2257 = vmatpush1.xpose.msra.mxu0 0.0
    %2258 = vmatprep.subr.mxu0 0.0
    %2259 = vmatpush1.xpose.msra.mxu0 0.0
    %2260 = vmatprep.subr.mxu0 0.0
    %2261 = vmatpush1.xpose.msra.mxu0 0.0
    %2262 = vmatprep.subr.mxu0 0.0
    %2263 = vmatpush1.xpose.msra.mxu0 0.0
    %2264 = vmatprep.subr.mxu0 0.0
    %2265 = vmatpush1.xpose.msra.mxu0 0.0
    %2266 = vmatprep.subr.mxu0 0.0
    %2267 = vmatpush1.xpose.msra.mxu0 0.0
    %2268 = vmatprep.subr.mxu0 0.0
    %2269 = vmatpush1.xpose.msra.mxu0 0.0
    %2270 = vmatprep.subr.mxu0 0.0
    %2271 = vmatpush1.xpose.msra.mxu0 0.0
    %2272 = vmatprep.subr.mxu0 0.0
    %2273 = vmatpush1.xpose.msra.mxu0 0.0
    %2274 = vmatprep.subr.mxu0 0.0
    %2275 = vmatpush1.xpose.msra.mxu0 %v2242
    %2276 = vmatprep.subr.mxu0 0.0
    %2277 = vmatpush2.xpose.msra.mxu0 0.0
    %2278 = vmatprep.subr.mxu0 0.0
    %2279 = vmatpush2.xpose.msra.mxu0 0.0
    %2280 = vmatprep.subr.mxu0 0.0
    %2281 = vmatpush2.xpose.msra.mxu0 0.0
    %2282 = vmatprep.subr.mxu0 0.0
    %2283 = vmatpush2.xpose.msra.mxu0 0.0
    %2284 = vmatprep.subr.mxu0 0.0
    %2285 = vmatpush2.xpose.msra.mxu0 0.0
    %2286 = vmatprep.subr.mxu0 0.0
    %2287 = vmatpush2.xpose.msra.mxu0 0.0
    %2288 = vmatprep.subr.mxu0 0.0
    %2289 = vmatpush2.xpose.msra.mxu0 0.0
    %2290 = vmatprep.subr.mxu0 0.0
    %2291 = vmatpush2.xpose.msra.mxu0 0.0
    %2292 = vmatprep.subr.mxu0 0.0
    %2293 = vmatpush2.xpose.msra.mxu0 0.0
    %2294 = vmatprep.subr.mxu0 0.0
    %2295 = vmatpush2.xpose.msra.mxu0 0.0
    %2296 = vmatprep.subr.mxu0 0.0
    %2297 = vmatpush2.xpose.msra.mxu0 0.0
    %2298 = vmatprep.subr.mxu0 0.0
    %2299 = vmatpush2.xpose.msra.mxu0 0.0
    %2300 = vmatprep.subr.mxu0 0.0
    %2301 = vmatpush2.xpose.msra.mxu0 0.0
    %2302 = vmatprep.subr.mxu0 0.0
    %2303 = vmatpush2.xpose.msra.mxu0 0.0
    %2304 = vmatprep.subr.mxu0 0.0
    %2305 = vmatpush2.xpose.msra.mxu0 0.0
    %2306 = vmatprep.subr.mxu0 0.0
    %2307 = vmatpush2.xpose.msra.mxu0 0.0
    %2308 = vmatprep.mubr.f32.mxu0 0.0
    %2309 = vmatmul.mubr.f32.gmra.mxu0 %v2239
    %v2310 = vpop.f32.mrf.mxu0
    %v2311 = vadd.f32 0.0, %v2310
    %v2312 = vpop.f32.mrf.mxu0
    %2313 = vdwg.mxu0
    %v2314 = vsel %vm363, %v2235, -inf
    %2315 = vmax.xlane.f32.xlu0 %v2314
    %v2316 = vpop.xlane.xlu0 %2315
    %v2317 = vsel %vm363, %v2311, -inf
    %2318 = vmax.xlane.f32.xlu0 %v2317
    %v2319 = vpop.xlane.xlu0 %2318
    %v2320 = vsub.f32 %v2235, %v2316
    %v2321 = vsub.f32 %v2311, %v2319
    %v2322 = vmul.f32 %v2320, 1.442695
    %v2323 = vpow.pop %v2322
    %v2324 = vmul.f32 %v2321, 1.442695
    %v2325 = vpow.pop %v2324
    %v2326 = vsel %vm363, %v2323, 0.0
    %2327 = vadd.xlane.f32.xlu0 %v2326
    %v2328 = vpop.xlane.xlu0 %2327
    %v2329 = vsel %vm363, %v2325, 0.0
    %2330 = vadd.xlane.f32.xlu0 %v2329
    %v2331 = vpop.xlane.xlu0 %2330
    %v2332 = vrcp.pop %v2328
    %v2333 = vrcp.pop %v2331
    %v2334 = vmul.f32 %v2323, %v2332
    %v2335 = vmul.f32 %v2325, %v2333
    %2336 = vrot.lane.b32.xlu0 %v253, 96
    %v2337 = vpop.permute.xlu0 %2336
    %v2340 = vsel %vm363, %v2334, 0
    %2342 = vmatprep.subr.mxu0 0.0
    %2343 = vmatpush1.msra.mxu0 0.0
    %2344 = vmatprep.subr.mxu0 0.0
    %2345 = vmatpush1.msra.mxu0 0.0
    %2346 = vmatprep.subr.mxu0 0.0
    %2347 = vmatpush1.msra.mxu0 0.0
    %2348 = vmatprep.subr.mxu0 0.0
    %2349 = vmatpush1.msra.mxu0 0.0
    %2350 = vmatprep.subr.mxu0 0.0
    %2351 = vmatpush1.msra.mxu0 0.0
    %2352 = vmatprep.subr.mxu0 0.0
    %2353 = vmatpush1.msra.mxu0 0.0
    %2354 = vmatprep.subr.mxu0 0.0
    %2355 = vmatpush1.msra.mxu0 0.0
    %2356 = vmatprep.subr.mxu0 0.0
    %2357 = vmatpush1.msra.mxu0 0.0
    %2358 = vmatprep.subr.mxu0 0.0
    %2359 = vmatpush1.msra.mxu0 0.0
    %2360 = vmatprep.subr.mxu0 0.0
    %2361 = vmatpush1.msra.mxu0 0.0
    %2362 = vmatprep.subr.mxu0 0.0
    %2363 = vmatpush1.msra.mxu0 0.0
    %2364 = vmatprep.subr.mxu0 0.0
    %2365 = vmatpush1.msra.mxu0 0.0
    %2366 = vmatprep.subr.mxu0 0.0
    %2367 = vmatpush1.msra.mxu0 0.0
    %2368 = vmatprep.subr.mxu0 0.0
    %2369 = vmatpush1.msra.mxu0 0.0
    %2370 = vmatprep.subr.mxu0 0.0
    %2371 = vmatpush1.msra.mxu0 0.0
    %2372 = vmatprep.subr.mxu0 0.0
    %2373 = vmatpush1.msra.mxu0 %v2337
    %2374 = vmatprep.subr.mxu0 0.0
    %2375 = vmatpush2.msra.mxu0 0.0
    %2376 = vmatprep.subr.mxu0 0.0
    %2377 = vmatpush2.msra.mxu0 0.0
    %2378 = vmatprep.subr.mxu0 0.0
    %2379 = vmatpush2.msra.mxu0 0.0
    %2380 = vmatprep.subr.mxu0 0.0
    %2381 = vmatpush2.msra.mxu0 0.0
    %2382 = vmatprep.subr.mxu0 0.0
    %2383 = vmatpush2.msra.mxu0 0.0
    %2384 = vmatprep.subr.mxu0 0.0
    %2385 = vmatpush2.msra.mxu0 0.0
    %2386 = vmatprep.subr.mxu0 0.0
    %2387 = vmatpush2.msra.mxu0 0.0
    %2388 = vmatprep.subr.mxu0 0.0
    %2389 = vmatpush2.msra.mxu0 0.0
    %2390 = vmatprep.subr.mxu0 0.0
    %2391 = vmatpush2.msra.mxu0 0.0
    %2392 = vmatprep.subr.mxu0 0.0
    %2393 = vmatpush2.msra.mxu0 0.0
    %2394 = vmatprep.subr.mxu0 0.0
    %2395 = vmatpush2.msra.mxu0 0.0
    %2396 = vmatprep.subr.mxu0 0.0
    %2397 = vmatpush2.msra.mxu0 0.0
    %2398 = vmatprep.subr.mxu0 0.0
    %2399 = vmatpush2.msra.mxu0 0.0
    %2400 = vmatprep.subr.mxu0 0.0
    %2401 = vmatpush2.msra.mxu0 0.0
    %2402 = vmatprep.subr.mxu0 0.0
    %2403 = vmatpush2.msra.mxu0 0.0
    %2404 = vmatprep.subr.mxu0 0.0
    %2405 = vmatpush2.msra.mxu0 0.0
    %2406 = vmatprep.mubr.f32.mxu0 0.0
    %2407 = vmatmul.mubr.f32.gmra.mxu0 %v2340
    %v2408 = vpop.f32.mrf.mxu0
    %v2409 = vadd.f32 0.0, %v2408
    %v2410 = vpop.f32.mrf.mxu0
    %2411 = vdwg.mxu0
    %2412 = vrot.lane.b32.xlu0 %v258, 96
    %v2413 = vpop.permute.xlu0 %2412
    %v2416 = vsel %vm363, %v2335, 0
    %2418 = vmatprep.subr.mxu0 0.0
    %2419 = vmatpush1.msra.mxu0 0.0
    %2420 = vmatprep.subr.mxu0 0.0
    %2421 = vmatpush1.msra.mxu0 0.0
    %2422 = vmatprep.subr.mxu0 0.0
    %2423 = vmatpush1.msra.mxu0 0.0
    %2424 = vmatprep.subr.mxu0 0.0
    %2425 = vmatpush1.msra.mxu0 0.0
    %2426 = vmatprep.subr.mxu0 0.0
    %2427 = vmatpush1.msra.mxu0 0.0
    %2428 = vmatprep.subr.mxu0 0.0
    %2429 = vmatpush1.msra.mxu0 0.0
    %2430 = vmatprep.subr.mxu0 0.0
    %2431 = vmatpush1.msra.mxu0 0.0
    %2432 = vmatprep.subr.mxu0 0.0
    %2433 = vmatpush1.msra.mxu0 0.0
    %2434 = vmatprep.subr.mxu0 0.0
    %2435 = vmatpush1.msra.mxu0 0.0
    %2436 = vmatprep.subr.mxu0 0.0
    %2437 = vmatpush1.msra.mxu0 0.0
    %2438 = vmatprep.subr.mxu0 0.0
    %2439 = vmatpush1.msra.mxu0 0.0
    %2440 = vmatprep.subr.mxu0 0.0
    %2441 = vmatpush1.msra.mxu0 0.0
    %2442 = vmatprep.subr.mxu0 0.0
    %2443 = vmatpush1.msra.mxu0 0.0
    %2444 = vmatprep.subr.mxu0 0.0
    %2445 = vmatpush1.msra.mxu0 0.0
    %2446 = vmatprep.subr.mxu0 0.0
    %2447 = vmatpush1.msra.mxu0 0.0
    %2448 = vmatprep.subr.mxu0 0.0
    %2449 = vmatpush1.msra.mxu0 %v2413
    %2450 = vmatprep.subr.mxu0 0.0
    %2451 = vmatpush2.msra.mxu0 0.0
    %2452 = vmatprep.subr.mxu0 0.0
    %2453 = vmatpush2.msra.mxu0 0.0
    %2454 = vmatprep.subr.mxu0 0.0
    %2455 = vmatpush2.msra.mxu0 0.0
    %2456 = vmatprep.subr.mxu0 0.0
    %2457 = vmatpush2.msra.mxu0 0.0
    %2458 = vmatprep.subr.mxu0 0.0
    %2459 = vmatpush2.msra.mxu0 0.0
    %2460 = vmatprep.subr.mxu0 0.0
    %2461 = vmatpush2.msra.mxu0 0.0
    %2462 = vmatprep.subr.mxu0 0.0
    %2463 = vmatpush2.msra.mxu0 0.0
    %2464 = vmatprep.subr.mxu0 0.0
    %2465 = vmatpush2.msra.mxu0 0.0
    %2466 = vmatprep.subr.mxu0 0.0
    %2467 = vmatpush2.msra.mxu0 0.0
    %2468 = vmatprep.subr.mxu0 0.0
    %2469 = vmatpush2.msra.mxu0 0.0
    %2470 = vmatprep.subr.mxu0 0.0
    %2471 = vmatpush2.msra.mxu0 0.0
    %2472 = vmatprep.subr.mxu0 0.0
    %2473 = vmatpush2.msra.mxu0 0.0
    %2474 = vmatprep.subr.mxu0 0.0
    %2475 = vmatpush2.msra.mxu0 0.0
    %2476 = vmatprep.subr.mxu0 0.0
    %2477 = vmatpush2.msra.mxu0 0.0
    %2478 = vmatprep.subr.mxu0 0.0
    %2479 = vmatpush2.msra.mxu0 0.0
    %2480 = vmatprep.subr.mxu0 0.0
    %2481 = vmatpush2.msra.mxu0 0.0
    %2482 = vmatprep.mubr.f32.mxu0 0.0
    %2483 = vmatmul.mubr.f32.gmra.mxu0 %v2416
    %v2484 = vpop.f32.mrf.mxu0
    %v2485 = vadd.f32 0.0, %v2484
    %v2486 = vpop.f32.mrf.mxu0
    %2487 = vdwg.mxu0
    %v2488 = vld [vmem:[#allocation13] sm:$0xff]
    %v2490 = vsel %vm363, %v2409, 0
    %v2493 = vsel %vm363, %v2485, 0
    %2495 = vmatprep.subr.mxu0 0.0
    %2496 = vmatpush1.msra.mxu0 0.0
    %2497 = vmatprep.subr.mxu0 0.0
    %2498 = vmatpush1.msra.mxu0 0.0
    %2499 = vmatprep.subr.mxu0 0.0
    %2500 = vmatpush1.msra.mxu0 0.0
    %2501 = vmatprep.subr.mxu0 0.0
    %2502 = vmatpush1.msra.mxu0 0.0
    %2503 = vmatprep.subr.mxu0 0.0
    %2504 = vmatpush1.msra.mxu0 0.0
    %2505 = vmatprep.subr.mxu0 0.0
    %2506 = vmatpush1.msra.mxu0 0.0
    %2507 = vmatprep.subr.mxu0 0.0
    %2508 = vmatpush1.msra.mxu0 0.0
    %2509 = vmatprep.subr.mxu0 0.0
    %2510 = vmatpush1.msra.mxu0 0.0
    %2511 = vmatprep.subr.mxu0 0.0
    %2512 = vmatpush1.msra.mxu0 0.0
    %2513 = vmatprep.subr.mxu0 0.0
    %2514 = vmatpush1.msra.mxu0 0.0
    %2515 = vmatprep.subr.mxu0 0.0
    %2516 = vmatpush1.msra.mxu0 0.0
    %2517 = vmatprep.subr.mxu0 0.0
    %2518 = vmatpush1.msra.mxu0 0.0
    %2519 = vmatprep.subr.mxu0 0.0
    %2520 = vmatpush1.msra.mxu0 0.0
    %2521 = vmatprep.subr.mxu0 0.0
    %2522 = vmatpush1.msra.mxu0 0.0
    %2523 = vmatprep.subr.mxu0 0.0
    %2524 = vmatpush1.msra.mxu0 0.0
    %2525 = vmatprep.subr.mxu0 0.0
    %2526 = vmatpush1.msra.mxu0 %v2488
    %2527 = vmatprep.subr.mxu0 0.0
    %2528 = vmatpush2.msra.mxu0 0.0
    %2529 = vmatprep.subr.mxu0 0.0
    %2530 = vmatpush2.msra.mxu0 0.0
    %2531 = vmatprep.subr.mxu0 0.0
    %2532 = vmatpush2.msra.mxu0 0.0
    %2533 = vmatprep.subr.mxu0 0.0
    %2534 = vmatpush2.msra.mxu0 0.0
    %2535 = vmatprep.subr.mxu0 0.0
    %2536 = vmatpush2.msra.mxu0 0.0
    %2537 = vmatprep.subr.mxu0 0.0
    %2538 = vmatpush2.msra.mxu0 0.0
    %2539 = vmatprep.subr.mxu0 0.0
    %2540 = vmatpush2.msra.mxu0 0.0
    %2541 = vmatprep.subr.mxu0 0.0
    %2542 = vmatpush2.msra.mxu0 0.0
    %2543 = vmatprep.subr.mxu0 0.0
    %2544 = vmatpush2.msra.mxu0 0.0
    %2545 = vmatprep.subr.mxu0 0.0
    %2546 = vmatpush2.msra.mxu0 0.0
    %2547 = vmatprep.subr.mxu0 0.0
    %2548 = vmatpush2.msra.mxu0 0.0
    %2549 = vmatprep.subr.mxu0 0.0
    %2550 = vmatpush2.msra.mxu0 0.0
    %2551 = vmatprep.subr.mxu0 0.0
    %2552 = vmatpush2.msra.mxu0 0.0
    %2553 = vmatprep.subr.mxu0 0.0
    %2554 = vmatpush2.msra.mxu0 0.0
    %2555 = vmatprep.subr.mxu0 0.0
    %2556 = vmatpush2.msra.mxu0 0.0
    %2557 = vmatprep.subr.mxu0 0.0
    %2558 = vmatpush2.msra.mxu0 0.0
    %2559 = vmatprep.mubr.f32.mxu0 0.0
    %2560 = vmatmul.mubr.f32.gmra.mxu0 %v2490
    %v2561 = vpop.f32.mrf.mxu0
    %v2562 = vadd.f32 0.0, %v2561
    %v2563 = vpop.f32.mrf.mxu0
    %2564 = vmatprep.mubr.f32.mxu0 0.0
    %2565 = vmatmul.mubr.f32.gmra.mxu0 %v2493
    %v2566 = vpop.f32.mrf.mxu0
    %v2567 = vadd.f32 0.0, %v2566
    %v2568 = vpop.f32.mrf.mxu0
    %2569 = vdwg.mxu0
    %v2570 = vadd.f32 %v2160, %v2562
    %v2571 = vadd.f32 %v2160, %v2567
    %2572 = vrot.lane.b32.xlu0 %v2147, 120
    %v2573 = vpop.permute.xlu0 %2572
    %2574 = vrot.lane.b32.xlu0 %v253, 120
    %v2575 = vpop.permute.xlu0 %2574
    %v2576 = vsel %vm363, %v2573, 0
    %v2578 = vsel %vm363, %v2575, 0
    %2580 = vmatprep.subr.mxu0 0.0
    %2581 = vmatpush1.xpose.msra.mxu0 0.0
    %2582 = vmatprep.subr.mxu0 0.0
    %2583 = vmatpush1.xpose.msra.mxu0 0.0
    %2584 = vmatprep.subr.mxu0 0.0
    %2585 = vmatpush1.xpose.msra.mxu0 0.0
    %2586 = vmatprep.subr.mxu0 0.0
    %2587 = vmatpush1.xpose.msra.mxu0 0.0
    %2588 = vmatprep.subr.mxu0 0.0
    %2589 = vmatpush1.xpose.msra.mxu0 0.0
    %2590 = vmatprep.subr.mxu0 0.0
    %2591 = vmatpush1.xpose.msra.mxu0 0.0
    %2592 = vmatprep.subr.mxu0 0.0
    %2593 = vmatpush1.xpose.msra.mxu0 0.0
    %2594 = vmatprep.subr.mxu0 0.0
    %2595 = vmatpush1.xpose.msra.mxu0 0.0
    %2596 = vmatprep.subr.mxu0 0.0
    %2597 = vmatpush1.xpose.msra.mxu0 0.0
    %2598 = vmatprep.subr.mxu0 0.0
    %2599 = vmatpush1.xpose.msra.mxu0 0.0
    %2600 = vmatprep.subr.mxu0 0.0
    %2601 = vmatpush1.xpose.msra.mxu0 0.0
    %2602 = vmatprep.subr.mxu0 0.0
    %2603 = vmatpush1.xpose.msra.mxu0 0.0
    %2604 = vmatprep.subr.mxu0 0.0
    %2605 = vmatpush1.xpose.msra.mxu0 0.0
    %2606 = vmatprep.subr.mxu0 0.0
    %2607 = vmatpush1.xpose.msra.mxu0 0.0
    %2608 = vmatprep.subr.mxu0 0.0
    %2609 = vmatpush1.xpose.msra.mxu0 0.0
    %2610 = vmatprep.subr.mxu0 0.0
    %2611 = vmatpush1.xpose.msra.mxu0 %v2578
    %2612 = vmatprep.subr.mxu0 0.0
    %2613 = vmatpush2.xpose.msra.mxu0 0.0
    %2614 = vmatprep.subr.mxu0 0.0
    %2615 = vmatpush2.xpose.msra.mxu0 0.0
    %2616 = vmatprep.subr.mxu0 0.0
    %2617 = vmatpush2.xpose.msra.mxu0 0.0
    %2618 = vmatprep.subr.mxu0 0.0
    %2619 = vmatpush2.xpose.msra.mxu0 0.0
    %2620 = vmatprep.subr.mxu0 0.0
    %2621 = vmatpush2.xpose.msra.mxu0 0.0
    %2622 = vmatprep.subr.mxu0 0.0
    %2623 = vmatpush2.xpose.msra.mxu0 0.0
    %2624 = vmatprep.subr.mxu0 0.0
    %2625 = vmatpush2.xpose.msra.mxu0 0.0
    %2626 = vmatprep.subr.mxu0 0.0
    %2627 = vmatpush2.xpose.msra.mxu0 0.0
    %2628 = vmatprep.subr.mxu0 0.0
    %2629 = vmatpush2.xpose.msra.mxu0 0.0
    %2630 = vmatprep.subr.mxu0 0.0
    %2631 = vmatpush2.xpose.msra.mxu0 0.0
    %2632 = vmatprep.subr.mxu0 0.0
    %2633 = vmatpush2.xpose.msra.mxu0 0.0
    %2634 = vmatprep.subr.mxu0 0.0
    %2635 = vmatpush2.xpose.msra.mxu0 0.0
    %2636 = vmatprep.subr.mxu0 0.0
    %2637 = vmatpush2.xpose.msra.mxu0 0.0
    %2638 = vmatprep.subr.mxu0 0.0
    %2639 = vmatpush2.xpose.msra.mxu0 0.0
    %2640 = vmatprep.subr.mxu0 0.0
    %2641 = vmatpush2.xpose.msra.mxu0 0.0
    %2642 = vmatprep.subr.mxu0 0.0
    %2643 = vmatpush2.xpose.msra.mxu0 0.0
    %2644 = vmatprep.mubr.f32.mxu0 0.0
    %2645 = vmatmul.mubr.f32.gmra.mxu0 %v2576
    %v2646 = vpop.f32.mrf.mxu0
    %v2647 = vadd.f32 0.0, %v2646
    %v2648 = vpop.f32.mrf.mxu0
    %2649 = vdwg.mxu0
    %2650 = vrot.lane.b32.xlu0 %v2152, 120
    %v2651 = vpop.permute.xlu0 %2650
    %2652 = vrot.lane.b32.xlu0 %v258, 120
    %v2653 = vpop.permute.xlu0 %2652
    %v2654 = vsel %vm363, %v2651, 0
    %v2656 = vsel %vm363, %v2653, 0
    %2658 = vmatprep.subr.mxu0 0.0
    %2659 = vmatpush1.xpose.msra.mxu0 0.0
    %2660 = vmatprep.subr.mxu0 0.0
    %2661 = vmatpush1.xpose.msra.mxu0 0.0
    %2662 = vmatprep.subr.mxu0 0.0
    %2663 = vmatpush1.xpose.msra.mxu0 0.0
    %2664 = vmatprep.subr.mxu0 0.0
    %2665 = vmatpush1.xpose.msra.mxu0 0.0
    %2666 = vmatprep.subr.mxu0 0.0
    %2667 = vmatpush1.xpose.msra.mxu0 0.0
    %2668 = vmatprep.subr.mxu0 0.0
    %2669 = vmatpush1.xpose.msra.mxu0 0.0
    %2670 = vmatprep.subr.mxu0 0.0
    %2671 = vmatpush1.xpose.msra.mxu0 0.0
    %2672 = vmatprep.subr.mxu0 0.0
    %2673 = vmatpush1.xpose.msra.mxu0 0.0
    %2674 = vmatprep.subr.mxu0 0.0
    %2675 = vmatpush1.xpose.msra.mxu0 0.0
    %2676 = vmatprep.subr.mxu0 0.0
    %2677 = vmatpush1.xpose.msra.mxu0 0.0
    %2678 = vmatprep.subr.mxu0 0.0
    %2679 = vmatpush1.xpose.msra.mxu0 0.0
    %2680 = vmatprep.subr.mxu0 0.0
    %2681 = vmatpush1.xpose.msra.mxu0 0.0
    %2682 = vmatprep.subr.mxu0 0.0
    %2683 = vmatpush1.xpose.msra.mxu0 0.0
    %2684 = vmatprep.subr.mxu0 0.0
    %2685 = vmatpush1.xpose.msra.mxu0 0.0
    %2686 = vmatprep.subr.mxu0 0.0
    %2687 = vmatpush1.xpose.msra.mxu0 0.0
    %2688 = vmatprep.subr.mxu0 0.0
    %2689 = vmatpush1.xpose.msra.mxu0 %v2656
    %2690 = vmatprep.subr.mxu0 0.0
    %2691 = vmatpush2.xpose.msra.mxu0 0.0
    %2692 = vmatprep.subr.mxu0 0.0
    %2693 = vmatpush2.xpose.msra.mxu0 0.0
    %2694 = vmatprep.subr.mxu0 0.0
    %2695 = vmatpush2.xpose.msra.mxu0 0.0
    %2696 = vmatprep.subr.mxu0 0.0
    %2697 = vmatpush2.xpose.msra.mxu0 0.0
    %2698 = vmatprep.subr.mxu0 0.0
    %2699 = vmatpush2.xpose.msra.mxu0 0.0
    %2700 = vmatprep.subr.mxu0 0.0
    %2701 = vmatpush2.xpose.msra.mxu0 0.0
    %2702 = vmatprep.subr.mxu0 0.0
    %2703 = vmatpush2.xpose.msra.mxu0 0.0
    %2704 = vmatprep.subr.mxu0 0.0
    %2705 = vmatpush2.xpose.msra.mxu0 0.0
    %2706 = vmatprep.subr.mxu0 0.0
    %2707 = vmatpush2.xpose.msra.mxu0 0.0
    %2708 = vmatprep.subr.mxu0 0.0
    %2709 = vmatpush2.xpose.msra.mxu0 0.0
    %2710 = vmatprep.subr.mxu0 0.0
    %2711 = vmatpush2.xpose.msra.mxu0 0.0
    %2712 = vmatprep.subr.mxu0 0.0
    %2713 = vmatpush2.xpose.msra.mxu0 0.0
    %2714 = vmatprep.subr.mxu0 0.0
    %2715 = vmatpush2.xpose.msra.mxu0 0.0
    %2716 = vmatprep.subr.mxu0 0.0
    %2717 = vmatpush2.xpose.msra.mxu0 0.0
    %2718 = vmatprep.subr.mxu0 0.0
    %2719 = vmatpush2.xpose.msra.mxu0 0.0
    %2720 = vmatprep.subr.mxu0 0.0
    %2721 = vmatpush2.xpose.msra.mxu0 0.0
    %2722 = vmatprep.mubr.f32.mxu0 0.0
    %2723 = vmatmul.mubr.f32.gmra.mxu0 %v2654
    %v2724 = vpop.f32.mrf.mxu0
    %v2725 = vadd.f32 0.0, %v2724
    %v2726 = vpop.f32.mrf.mxu0
    %2727 = vdwg.mxu0
    %v2728 = vsel %vm363, %v2647, -inf
    %2729 = vmax.xlane.f32.xlu0 %v2728
    %v2730 = vpop.xlane.xlu0 %2729
    %v2731 = vsel %vm363, %v2725, -inf
    %2732 = vmax.xlane.f32.xlu0 %v2731
    %v2733 = vpop.xlane.xlu0 %2732
    %v2734 = vsub.f32 %v2647, %v2730
    %v2735 = vsub.f32 %v2725, %v2733
    %v2736 = vmul.f32 %v2734, 1.442695
    %v2737 = vpow.pop %v2736
    %v2738 = vmul.f32 %v2735, 1.442695
    %v2739 = vpow.pop %v2738
    %v2740 = vsel %vm363, %v2737, 0.0
    %2741 = vadd.xlane.f32.xlu0 %v2740
    %v2742 = vpop.xlane.xlu0 %2741
    %v2743 = vsel %vm363, %v2739, 0.0
    %2744 = vadd.xlane.f32.xlu0 %v2743
    %v2745 = vpop.xlane.xlu0 %2744
    %v2746 = vrcp.pop %v2742
    %v2747 = vrcp.pop %v2745
    %v2748 = vmul.f32 %v2737, %v2746
    %v2749 = vmul.f32 %v2739, %v2747
    %2750 = vrot.lane.b32.xlu0 %v253, 88
    %v2751 = vpop.permute.xlu0 %2750
    %v2754 = vsel %vm363, %v2748, 0
    %2756 = vmatprep.subr.mxu0 0.0
    %2757 = vmatpush1.msra.mxu0 0.0
    %2758 = vmatprep.subr.mxu0 0.0
    %2759 = vmatpush1.msra.mxu0 0.0
    %2760 = vmatprep.subr.mxu0 0.0
    %2761 = vmatpush1.msra.mxu0 0.0
    %2762 = vmatprep.subr.mxu0 0.0
    %2763 = vmatpush1.msra.mxu0 0.0
    %2764 = vmatprep.subr.mxu0 0.0
    %2765 = vmatpush1.msra.mxu0 0.0
    %2766 = vmatprep.subr.mxu0 0.0
    %2767 = vmatpush1.msra.mxu0 0.0
    %2768 = vmatprep.subr.mxu0 0.0
    %2769 = vmatpush1.msra.mxu0 0.0
    %2770 = vmatprep.subr.mxu0 0.0
    %2771 = vmatpush1.msra.mxu0 0.0
    %2772 = vmatprep.subr.mxu0 0.0
    %2773 = vmatpush1.msra.mxu0 0.0
    %2774 = vmatprep.subr.mxu0 0.0
    %2775 = vmatpush1.msra.mxu0 0.0
    %2776 = vmatprep.subr.mxu0 0.0
    %2777 = vmatpush1.msra.mxu0 0.0
    %2778 = vmatprep.subr.mxu0 0.0
    %2779 = vmatpush1.msra.mxu0 0.0
    %2780 = vmatprep.subr.mxu0 0.0
    %2781 = vmatpush1.msra.mxu0 0.0
    %2782 = vmatprep.subr.mxu0 0.0
    %2783 = vmatpush1.msra.mxu0 0.0
    %2784 = vmatprep.subr.mxu0 0.0
    %2785 = vmatpush1.msra.mxu0 0.0
    %2786 = vmatprep.subr.mxu0 0.0
    %2787 = vmatpush1.msra.mxu0 %v2751
    %2788 = vmatprep.subr.mxu0 0.0
    %2789 = vmatpush2.msra.mxu0 0.0
    %2790 = vmatprep.subr.mxu0 0.0
    %2791 = vmatpush2.msra.mxu0 0.0
    %2792 = vmatprep.subr.mxu0 0.0
    %2793 = vmatpush2.msra.mxu0 0.0
    %2794 = vmatprep.subr.mxu0 0.0
    %2795 = vmatpush2.msra.mxu0 0.0
    %2796 = vmatprep.subr.mxu0 0.0
    %2797 = vmatpush2.msra.mxu0 0.0
    %2798 = vmatprep.subr.mxu0 0.0
    %2799 = vmatpush2.msra.mxu0 0.0
    %2800 = vmatprep.subr.mxu0 0.0
    %2801 = vmatpush2.msra.mxu0 0.0
    %2802 = vmatprep.subr.mxu0 0.0
    %2803 = vmatpush2.msra.mxu0 0.0
    %2804 = vmatprep.subr.mxu0 0.0
    %2805 = vmatpush2.msra.mxu0 0.0
    %2806 = vmatprep.subr.mxu0 0.0
    %2807 = vmatpush2.msra.mxu0 0.0
    %2808 = vmatprep.subr.mxu0 0.0
    %2809 = vmatpush2.msra.mxu0 0.0
    %2810 = vmatprep.subr.mxu0 0.0
    %2811 = vmatpush2.msra.mxu0 0.0
    %2812 = vmatprep.subr.mxu0 0.0
    %2813 = vmatpush2.msra.mxu0 0.0
    %2814 = vmatprep.subr.mxu0 0.0
    %2815 = vmatpush2.msra.mxu0 0.0
    %2816 = vmatprep.subr.mxu0 0.0
    %2817 = vmatpush2.msra.mxu0 0.0
    %2818 = vmatprep.subr.mxu0 0.0
    %2819 = vmatpush2.msra.mxu0 0.0
    %2820 = vmatprep.mubr.f32.mxu0 0.0
    %2821 = vmatmul.mubr.f32.gmra.mxu0 %v2754
    %v2822 = vpop.f32.mrf.mxu0
    %v2823 = vadd.f32 0.0, %v2822
    %v2824 = vpop.f32.mrf.mxu0
    %2825 = vdwg.mxu0
    %2826 = vrot.lane.b32.xlu0 %v258, 88
    %v2827 = vpop.permute.xlu0 %2826
    %v2830 = vsel %vm363, %v2749, 0
    %2832 = vmatprep.subr.mxu0 0.0
    %2833 = vmatpush1.msra.mxu0 0.0
    %2834 = vmatprep.subr.mxu0 0.0
    %2835 = vmatpush1.msra.mxu0 0.0
    %2836 = vmatprep.subr.mxu0 0.0
    %2837 = vmatpush1.msra.mxu0 0.0
    %2838 = vmatprep.subr.mxu0 0.0
    %2839 = vmatpush1.msra.mxu0 0.0
    %2840 = vmatprep.subr.mxu0 0.0
    %2841 = vmatpush1.msra.mxu0 0.0
    %2842 = vmatprep.subr.mxu0 0.0
    %2843 = vmatpush1.msra.mxu0 0.0
    %2844 = vmatprep.subr.mxu0 0.0
    %2845 = vmatpush1.msra.mxu0 0.0
    %2846 = vmatprep.subr.mxu0 0.0
    %2847 = vmatpush1.msra.mxu0 0.0
    %2848 = vmatprep.subr.mxu0 0.0
    %2849 = vmatpush1.msra.mxu0 0.0
    %2850 = vmatprep.subr.mxu0 0.0
    %2851 = vmatpush1.msra.mxu0 0.0
    %2852 = vmatprep.subr.mxu0 0.0
    %2853 = vmatpush1.msra.mxu0 0.0
    %2854 = vmatprep.subr.mxu0 0.0
    %2855 = vmatpush1.msra.mxu0 0.0
    %2856 = vmatprep.subr.mxu0 0.0
    %2857 = vmatpush1.msra.mxu0 0.0
    %2858 = vmatprep.subr.mxu0 0.0
    %2859 = vmatpush1.msra.mxu0 0.0
    %2860 = vmatprep.subr.mxu0 0.0
    %2861 = vmatpush1.msra.mxu0 0.0
    %2862 = vmatprep.subr.mxu0 0.0
    %2863 = vmatpush1.msra.mxu0 %v2827
    %2864 = vmatprep.subr.mxu0 0.0
    %2865 = vmatpush2.msra.mxu0 0.0
    %2866 = vmatprep.subr.mxu0 0.0
    %2867 = vmatpush2.msra.mxu0 0.0
    %2868 = vmatprep.subr.mxu0 0.0
    %2869 = vmatpush2.msra.mxu0 0.0
    %2870 = vmatprep.subr.mxu0 0.0
    %2871 = vmatpush2.msra.mxu0 0.0
    %2872 = vmatprep.subr.mxu0 0.0
    %2873 = vmatpush2.msra.mxu0 0.0
    %2874 = vmatprep.subr.mxu0 0.0
    %2875 = vmatpush2.msra.mxu0 0.0
    %2876 = vmatprep.subr.mxu0 0.0
    %2877 = vmatpush2.msra.mxu0 0.0
    %2878 = vmatprep.subr.mxu0 0.0
    %2879 = vmatpush2.msra.mxu0 0.0
    %2880 = vmatprep.subr.mxu0 0.0
    %2881 = vmatpush2.msra.mxu0 0.0
    %2882 = vmatprep.subr.mxu0 0.0
    %2883 = vmatpush2.msra.mxu0 0.0
    %2884 = vmatprep.subr.mxu0 0.0
    %2885 = vmatpush2.msra.mxu0 0.0
    %2886 = vmatprep.subr.mxu0 0.0
    %2887 = vmatpush2.msra.mxu0 0.0
    %2888 = vmatprep.subr.mxu0 0.0
    %2889 = vmatpush2.msra.mxu0 0.0
    %2890 = vmatprep.subr.mxu0 0.0
    %2891 = vmatpush2.msra.mxu0 0.0
    %2892 = vmatprep.subr.mxu0 0.0
    %2893 = vmatpush2.msra.mxu0 0.0
    %2894 = vmatprep.subr.mxu0 0.0
    %2895 = vmatpush2.msra.mxu0 0.0
    %2896 = vmatprep.mubr.f32.mxu0 0.0
    %2897 = vmatmul.mubr.f32.gmra.mxu0 %v2830
    %v2898 = vpop.f32.mrf.mxu0
    %v2899 = vadd.f32 0.0, %v2898
    %v2900 = vpop.f32.mrf.mxu0
    %2901 = vdwg.mxu0
    %v2902 = vld [vmem:[#allocation13 + $0x8] sm:$0xff]
    %v2904 = vsel %vm363, %v2823, 0
    %v2907 = vsel %vm363, %v2899, 0
    %2909 = vmatprep.subr.mxu0 0.0
    %2910 = vmatpush1.msra.mxu0 0.0
    %2911 = vmatprep.subr.mxu0 0.0
    %2912 = vmatpush1.msra.mxu0 0.0
    %2913 = vmatprep.subr.mxu0 0.0
    %2914 = vmatpush1.msra.mxu0 0.0
    %2915 = vmatprep.subr.mxu0 0.0
    %2916 = vmatpush1.msra.mxu0 0.0
    %2917 = vmatprep.subr.mxu0 0.0
    %2918 = vmatpush1.msra.mxu0 0.0
    %2919 = vmatprep.subr.mxu0 0.0
    %2920 = vmatpush1.msra.mxu0 0.0
    %2921 = vmatprep.subr.mxu0 0.0
    %2922 = vmatpush1.msra.mxu0 0.0
    %2923 = vmatprep.subr.mxu0 0.0
    %2924 = vmatpush1.msra.mxu0 0.0
    %2925 = vmatprep.subr.mxu0 0.0
    %2926 = vmatpush1.msra.mxu0 0.0
    %2927 = vmatprep.subr.mxu0 0.0
    %2928 = vmatpush1.msra.mxu0 0.0
    %2929 = vmatprep.subr.mxu0 0.0
    %2930 = vmatpush1.msra.mxu0 0.0
    %2931 = vmatprep.subr.mxu0 0.0
    %2932 = vmatpush1.msra.mxu0 0.0
    %2933 = vmatprep.subr.mxu0 0.0
    %2934 = vmatpush1.msra.mxu0 0.0
    %2935 = vmatprep.subr.mxu0 0.0
    %2936 = vmatpush1.msra.mxu0 0.0
    %2937 = vmatprep.subr.mxu0 0.0
    %2938 = vmatpush1.msra.mxu0 0.0
    %2939 = vmatprep.subr.mxu0 0.0
    %2940 = vmatpush1.msra.mxu0 %v2902
    %2941 = vmatprep.subr.mxu0 0.0
    %2942 = vmatpush2.msra.mxu0 0.0
    %2943 = vmatprep.subr.mxu0 0.0
    %2944 = vmatpush2.msra.mxu0 0.0
    %2945 = vmatprep.subr.mxu0 0.0
    %2946 = vmatpush2.msra.mxu0 0.0
    %2947 = vmatprep.subr.mxu0 0.0
    %2948 = vmatpush2.msra.mxu0 0.0
    %2949 = vmatprep.subr.mxu0 0.0
    %2950 = vmatpush2.msra.mxu0 0.0
    %2951 = vmatprep.subr.mxu0 0.0
    %2952 = vmatpush2.msra.mxu0 0.0
    %2953 = vmatprep.subr.mxu0 0.0
    %2954 = vmatpush2.msra.mxu0 0.0
    %2955 = vmatprep.subr.mxu0 0.0
    %2956 = vmatpush2.msra.mxu0 0.0
    %2957 = vmatprep.subr.mxu0 0.0
    %2958 = vmatpush2.msra.mxu0 0.0
    %2959 = vmatprep.subr.mxu0 0.0
    %2960 = vmatpush2.msra.mxu0 0.0
    %2961 = vmatprep.subr.mxu0 0.0
    %2962 = vmatpush2.msra.mxu0 0.0
    %2963 = vmatprep.subr.mxu0 0.0
    %2964 = vmatpush2.msra.mxu0 0.0
    %2965 = vmatprep.subr.mxu0 0.0
    %2966 = vmatpush2.msra.mxu0 0.0
    %2967 = vmatprep.subr.mxu0 0.0
    %2968 = vmatpush2.msra.mxu0 0.0
    %2969 = vmatprep.subr.mxu0 0.0
    %2970 = vmatpush2.msra.mxu0 0.0
    %2971 = vmatprep.subr.mxu0 0.0
    %2972 = vmatpush2.msra.mxu0 0.0
    %2973 = vmatprep.mubr.f32.mxu0 0.0
    %2974 = vmatmul.mubr.f32.gmra.mxu0 %v2904
    %v2975 = vpop.f32.mrf.mxu0
    %v2976 = vadd.f32 0.0, %v2975
    %v2977 = vpop.f32.mrf.mxu0
    %2978 = vmatprep.mubr.f32.mxu0 0.0
    %2979 = vmatmul.mubr.f32.gmra.mxu0 %v2907
    %v2980 = vpop.f32.mrf.mxu0
    %v2981 = vadd.f32 0.0, %v2980
    %v2982 = vpop.f32.mrf.mxu0
    %2983 = vdwg.mxu0
    %v2984 = vadd.f32 %v2570, %v2976
    %v2985 = vadd.f32 %v2571, %v2981
    %2986 = vrot.lane.b32.xlu0 %v2147, 112
    %v2987 = vpop.permute.xlu0 %2986
    %2988 = vrot.lane.b32.xlu0 %v253, 112
    %v2989 = vpop.permute.xlu0 %2988
    %v2990 = vsel %vm363, %v2987, 0
    %v2992 = vsel %vm363, %v2989, 0
    %2994 = vmatprep.subr.mxu0 0.0
    %2995 = vmatpush1.xpose.msra.mxu0 0.0
    %2996 = vmatprep.subr.mxu0 0.0
    %2997 = vmatpush1.xpose.msra.mxu0 0.0
    %2998 = vmatprep.subr.mxu0 0.0
    %2999 = vmatpush1.xpose.msra.mxu0 0.0
    %3000 = vmatprep.subr.mxu0 0.0
    %3001 = vmatpush1.xpose.msra.mxu0 0.0
    %3002 = vmatprep.subr.mxu0 0.0
    %3003 = vmatpush1.xpose.msra.mxu0 0.0
    %3004 = vmatprep.subr.mxu0 0.0
    %3005 = vmatpush1.xpose.msra.mxu0 0.0
    %3006 = vmatprep.subr.mxu0 0.0
    %3007 = vmatpush1.xpose.msra.mxu0 0.0
    %3008 = vmatprep.subr.mxu0 0.0
    %3009 = vmatpush1.xpose.msra.mxu0 0.0
    %3010 = vmatprep.subr.mxu0 0.0
    %3011 = vmatpush1.xpose.msra.mxu0 0.0
    %3012 = vmatprep.subr.mxu0 0.0
    %3013 = vmatpush1.xpose.msra.mxu0 0.0
    %3014 = vmatprep.subr.mxu0 0.0
    %3015 = vmatpush1.xpose.msra.mxu0 0.0
    %3016 = vmatprep.subr.mxu0 0.0
    %3017 = vmatpush1.xpose.msra.mxu0 0.0
    %3018 = vmatprep.subr.mxu0 0.0
    %3019 = vmatpush1.xpose.msra.mxu0 0.0
    %3020 = vmatprep.subr.mxu0 0.0
    %3021 = vmatpush1.xpose.msra.mxu0 0.0
    %3022 = vmatprep.subr.mxu0 0.0
    %3023 = vmatpush1.xpose.msra.mxu0 0.0
    %3024 = vmatprep.subr.mxu0 0.0
    %3025 = vmatpush1.xpose.msra.mxu0 %v2992
    %3026 = vmatprep.subr.mxu0 0.0
    %3027 = vmatpush2.xpose.msra.mxu0 0.0
    %3028 = vmatprep.subr.mxu0 0.0
    %3029 = vmatpush2.xpose.msra.mxu0 0.0
    %3030 = vmatprep.subr.mxu0 0.0
    %3031 = vmatpush2.xpose.msra.mxu0 0.0
    %3032 = vmatprep.subr.mxu0 0.0
    %3033 = vmatpush2.xpose.msra.mxu0 0.0
    %3034 = vmatprep.subr.mxu0 0.0
    %3035 = vmatpush2.xpose.msra.mxu0 0.0
    %3036 = vmatprep.subr.mxu0 0.0
    %3037 = vmatpush2.xpose.msra.mxu0 0.0
    %3038 = vmatprep.subr.mxu0 0.0
    %3039 = vmatpush2.xpose.msra.mxu0 0.0
    %3040 = vmatprep.subr.mxu0 0.0
    %3041 = vmatpush2.xpose.msra.mxu0 0.0
    %3042 = vmatprep.subr.mxu0 0.0
    %3043 = vmatpush2.xpose.msra.mxu0 0.0
    %3044 = vmatprep.subr.mxu0 0.0
    %3045 = vmatpush2.xpose.msra.mxu0 0.0
    %3046 = vmatprep.subr.mxu0 0.0
    %3047 = vmatpush2.xpose.msra.mxu0 0.0
    %3048 = vmatprep.subr.mxu0 0.0
    %3049 = vmatpush2.xpose.msra.mxu0 0.0
    %3050 = vmatprep.subr.mxu0 0.0
    %3051 = vmatpush2.xpose.msra.mxu0 0.0
    %3052 = vmatprep.subr.mxu0 0.0
    %3053 = vmatpush2.xpose.msra.mxu0 0.0
    %3054 = vmatprep.subr.mxu0 0.0
    %3055 = vmatpush2.xpose.msra.mxu0 0.0
    %3056 = vmatprep.subr.mxu0 0.0
    %3057 = vmatpush2.xpose.msra.mxu0 0.0
    %3058 = vmatprep.mubr.f32.mxu0 0.0
    %3059 = vmatmul.mubr.f32.gmra.mxu0 %v2990
    %v3060 = vpop.f32.mrf.mxu0
    %v3061 = vadd.f32 0.0, %v3060
    %v3062 = vpop.f32.mrf.mxu0
    %3063 = vdwg.mxu0
    %3064 = vrot.lane.b32.xlu0 %v2152, 112
    %v3065 = vpop.permute.xlu0 %3064
    %3066 = vrot.lane.b32.xlu0 %v258, 112
    %v3067 = vpop.permute.xlu0 %3066
    %v3068 = vsel %vm363, %v3065, 0
    %v3070 = vsel %vm363, %v3067, 0
    %3072 = vmatprep.subr.mxu0 0.0
    %3073 = vmatpush1.xpose.msra.mxu0 0.0
    %3074 = vmatprep.subr.mxu0 0.0
    %3075 = vmatpush1.xpose.msra.mxu0 0.0
    %3076 = vmatprep.subr.mxu0 0.0
    %3077 = vmatpush1.xpose.msra.mxu0 0.0
    %3078 = vmatprep.subr.mxu0 0.0
    %3079 = vmatpush1.xpose.msra.mxu0 0.0
    %3080 = vmatprep.subr.mxu0 0.0
    %3081 = vmatpush1.xpose.msra.mxu0 0.0
    %3082 = vmatprep.subr.mxu0 0.0
    %3083 = vmatpush1.xpose.msra.mxu0 0.0
    %3084 = vmatprep.subr.mxu0 0.0
    %3085 = vmatpush1.xpose.msra.mxu0 0.0
    %3086 = vmatprep.subr.mxu0 0.0
    %3087 = vmatpush1.xpose.msra.mxu0 0.0
    %3088 = vmatprep.subr.mxu0 0.0
    %3089 = vmatpush1.xpose.msra.mxu0 0.0
    %3090 = vmatprep.subr.mxu0 0.0
    %3091 = vmatpush1.xpose.msra.mxu0 0.0
    %3092 = vmatprep.subr.mxu0 0.0
    %3093 = vmatpush1.xpose.msra.mxu0 0.0
    %3094 = vmatprep.subr.mxu0 0.0
    %3095 = vmatpush1.xpose.msra.mxu0 0.0
    %3096 = vmatprep.subr.mxu0 0.0
    %3097 = vmatpush1.xpose.msra.mxu0 0.0
    %3098 = vmatprep.subr.mxu0 0.0
    %3099 = vmatpush1.xpose.msra.mxu0 0.0
    %3100 = vmatprep.subr.mxu0 0.0
    %3101 = vmatpush1.xpose.msra.mxu0 0.0
    %3102 = vmatprep.subr.mxu0 0.0
    %3103 = vmatpush1.xpose.msra.mxu0 %v3070
    %3104 = vmatprep.subr.mxu0 0.0
    %3105 = vmatpush2.xpose.msra.mxu0 0.0
    %3106 = vmatprep.subr.mxu0 0.0
    %3107 = vmatpush2.xpose.msra.mxu0 0.0
    %3108 = vmatprep.subr.mxu0 0.0
    %3109 = vmatpush2.xpose.msra.mxu0 0.0
    %3110 = vmatprep.subr.mxu0 0.0
    %3111 = vmatpush2.xpose.msra.mxu0 0.0
    %3112 = vmatprep.subr.mxu0 0.0
    %3113 = vmatpush2.xpose.msra.mxu0 0.0
    %3114 = vmatprep.subr.mxu0 0.0
    %3115 = vmatpush2.xpose.msra.mxu0 0.0
    %3116 = vmatprep.subr.mxu0 0.0
    %3117 = vmatpush2.xpose.msra.mxu0 0.0
    %3118 = vmatprep.subr.mxu0 0.0
    %3119 = vmatpush2.xpose.msra.mxu0 0.0
    %3120 = vmatprep.subr.mxu0 0.0
    %3121 = vmatpush2.xpose.msra.mxu0 0.0
    %3122 = vmatprep.subr.mxu0 0.0
    %3123 = vmatpush2.xpose.msra.mxu0 0.0
    %3124 = vmatprep.subr.mxu0 0.0
    %3125 = vmatpush2.xpose.msra.mxu0 0.0
    %3126 = vmatprep.subr.mxu0 0.0
    %3127 = vmatpush2.xpose.msra.mxu0 0.0
    %3128 = vmatprep.subr.mxu0 0.0
    %3129 = vmatpush2.xpose.msra.mxu0 0.0
    %3130 = vmatprep.subr.mxu0 0.0
    %3131 = vmatpush2.xpose.msra.mxu0 0.0
    %3132 = vmatprep.subr.mxu0 0.0
    %3133 = vmatpush2.xpose.msra.mxu0 0.0
    %3134 = vmatprep.subr.mxu0 0.0
    %3135 = vmatpush2.xpose.msra.mxu0 0.0
    %3136 = vmatprep.mubr.f32.mxu0 0.0
    %3137 = vmatmul.mubr.f32.gmra.mxu0 %v3068
    %v3138 = vpop.f32.mrf.mxu0
    %v3139 = vadd.f32 0.0, %v3138
    %v3140 = vpop.f32.mrf.mxu0
    %3141 = vdwg.mxu0
    %v3142 = vsel %vm363, %v3061, -inf
    %3143 = vmax.xlane.f32.xlu0 %v3142
    %v3144 = vpop.xlane.xlu0 %3143
    %v3145 = vsel %vm363, %v3139, -inf
    %3146 = vmax.xlane.f32.xlu0 %v3145
    %v3147 = vpop.xlane.xlu0 %3146
    %v3148 = vsub.f32 %v3061, %v3144
    %v3149 = vsub.f32 %v3139, %v3147
    %v3150 = vmul.f32 %v3148, 1.442695
    %v3151 = vpow.pop %v3150
    %v3152 = vmul.f32 %v3149, 1.442695
    %v3153 = vpow.pop %v3152
    %v3154 = vsel %vm363, %v3151, 0.0
    %3155 = vadd.xlane.f32.xlu0 %v3154
    %v3156 = vpop.xlane.xlu0 %3155
    %v3157 = vsel %vm363, %v3153, 0.0
    %3158 = vadd.xlane.f32.xlu0 %v3157
    %v3159 = vpop.xlane.xlu0 %3158
    %v3160 = vrcp.pop %v3156
    %v3161 = vrcp.pop %v3159
    %v3162 = vmul.f32 %v3151, %v3160
    %v3163 = vmul.f32 %v3153, %v3161
    %3164 = vrot.lane.b32.xlu0 %v253, 80
    %v3165 = vpop.permute.xlu0 %3164
    %v3168 = vsel %vm363, %v3162, 0
    %3170 = vmatprep.subr.mxu0 0.0
    %3171 = vmatpush1.msra.mxu0 0.0
    %3172 = vmatprep.subr.mxu0 0.0
    %3173 = vmatpush1.msra.mxu0 0.0
    %3174 = vmatprep.subr.mxu0 0.0
    %3175 = vmatpush1.msra.mxu0 0.0
    %3176 = vmatprep.subr.mxu0 0.0
    %3177 = vmatpush1.msra.mxu0 0.0
    %3178 = vmatprep.subr.mxu0 0.0
    %3179 = vmatpush1.msra.mxu0 0.0
    %3180 = vmatprep.subr.mxu0 0.0
    %3181 = vmatpush1.msra.mxu0 0.0
    %3182 = vmatprep.subr.mxu0 0.0
    %3183 = vmatpush1.msra.mxu0 0.0
    %3184 = vmatprep.subr.mxu0 0.0
    %3185 = vmatpush1.msra.mxu0 0.0
    %3186 = vmatprep.subr.mxu0 0.0
    %3187 = vmatpush1.msra.mxu0 0.0
    %3188 = vmatprep.subr.mxu0 0.0
    %3189 = vmatpush1.msra.mxu0 0.0
    %3190 = vmatprep.subr.mxu0 0.0
    %3191 = vmatpush1.msra.mxu0 0.0
    %3192 = vmatprep.subr.mxu0 0.0
    %3193 = vmatpush1.msra.mxu0 0.0
    %3194 = vmatprep.subr.mxu0 0.0
    %3195 = vmatpush1.msra.mxu0 0.0
    %3196 = vmatprep.subr.mxu0 0.0
    %3197 = vmatpush1.msra.mxu0 0.0
    %3198 = vmatprep.subr.mxu0 0.0
    %3199 = vmatpush1.msra.mxu0 0.0
    %3200 = vmatprep.subr.mxu0 0.0
    %3201 = vmatpush1.msra.mxu0 %v3165
    %3202 = vmatprep.subr.mxu0 0.0
    %3203 = vmatpush2.msra.mxu0 0.0
    %3204 = vmatprep.subr.mxu0 0.0
    %3205 = vmatpush2.msra.mxu0 0.0
    %3206 = vmatprep.subr.mxu0 0.0
    %3207 = vmatpush2.msra.mxu0 0.0
    %3208 = vmatprep.subr.mxu0 0.0
    %3209 = vmatpush2.msra.mxu0 0.0
    %3210 = vmatprep.subr.mxu0 0.0
    %3211 = vmatpush2.msra.mxu0 0.0
    %3212 = vmatprep.subr.mxu0 0.0
    %3213 = vmatpush2.msra.mxu0 0.0
    %3214 = vmatprep.subr.mxu0 0.0
    %3215 = vmatpush2.msra.mxu0 0.0
    %3216 = vmatprep.subr.mxu0 0.0
    %3217 = vmatpush2.msra.mxu0 0.0
    %3218 = vmatprep.subr.mxu0 0.0
    %3219 = vmatpush2.msra.mxu0 0.0
    %3220 = vmatprep.subr.mxu0 0.0
    %3221 = vmatpush2.msra.mxu0 0.0
    %3222 = vmatprep.subr.mxu0 0.0
    %3223 = vmatpush2.msra.mxu0 0.0
    %3224 = vmatprep.subr.mxu0 0.0
    %3225 = vmatpush2.msra.mxu0 0.0
    %3226 = vmatprep.subr.mxu0 0.0
    %3227 = vmatpush2.msra.mxu0 0.0
    %3228 = vmatprep.subr.mxu0 0.0
    %3229 = vmatpush2.msra.mxu0 0.0
    %3230 = vmatprep.subr.mxu0 0.0
    %3231 = vmatpush2.msra.mxu0 0.0
    %3232 = vmatprep.subr.mxu0 0.0
    %3233 = vmatpush2.msra.mxu0 0.0
    %3234 = vmatprep.mubr.f32.mxu0 0.0
    %3235 = vmatmul.mubr.f32.gmra.mxu0 %v3168
    %v3236 = vpop.f32.mrf.mxu0
    %v3237 = vadd.f32 0.0, %v3236
    %v3238 = vpop.f32.mrf.mxu0
    %3239 = vdwg.mxu0
    %3240 = vrot.lane.b32.xlu0 %v258, 80
    %v3241 = vpop.permute.xlu0 %3240
    %v3244 = vsel %vm363, %v3163, 0
    %3246 = vmatprep.subr.mxu0 0.0
    %3247 = vmatpush1.msra.mxu0 0.0
    %3248 = vmatprep.subr.mxu0 0.0
    %3249 = vmatpush1.msra.mxu0 0.0
    %3250 = vmatprep.subr.mxu0 0.0
    %3251 = vmatpush1.msra.mxu0 0.0
    %3252 = vmatprep.subr.mxu0 0.0
    %3253 = vmatpush1.msra.mxu0 0.0
    %3254 = vmatprep.subr.mxu0 0.0
    %3255 = vmatpush1.msra.mxu0 0.0
    %3256 = vmatprep.subr.mxu0 0.0
    %3257 = vmatpush1.msra.mxu0 0.0
    %3258 = vmatprep.subr.mxu0 0.0
    %3259 = vmatpush1.msra.mxu0 0.0
    %3260 = vmatprep.subr.mxu0 0.0
    %3261 = vmatpush1.msra.mxu0 0.0
    %3262 = vmatprep.subr.mxu0 0.0
    %3263 = vmatpush1.msra.mxu0 0.0
    %3264 = vmatprep.subr.mxu0 0.0
    %3265 = vmatpush1.msra.mxu0 0.0
    %3266 = vmatprep.subr.mxu0 0.0
    %3267 = vmatpush1.msra.mxu0 0.0
    %3268 = vmatprep.subr.mxu0 0.0
    %3269 = vmatpush1.msra.mxu0 0.0
    %3270 = vmatprep.subr.mxu0 0.0
    %3271 = vmatpush1.msra.mxu0 0.0
    %3272 = vmatprep.subr.mxu0 0.0
    %3273 = vmatpush1.msra.mxu0 0.0
    %3274 = vmatprep.subr.mxu0 0.0
    %3275 = vmatpush1.msra.mxu0 0.0
    %3276 = vmatprep.subr.mxu0 0.0
    %3277 = vmatpush1.msra.mxu0 %v3241
    %3278 = vmatprep.subr.mxu0 0.0
    %3279 = vmatpush2.msra.mxu0 0.0
    %3280 = vmatprep.subr.mxu0 0.0
    %3281 = vmatpush2.msra.mxu0 0.0
    %3282 = vmatprep.subr.mxu0 0.0
    %3283 = vmatpush2.msra.mxu0 0.0
    %3284 = vmatprep.subr.mxu0 0.0
    %3285 = vmatpush2.msra.mxu0 0.0
    %3286 = vmatprep.subr.mxu0 0.0
    %3287 = vmatpush2.msra.mxu0 0.0
    %3288 = vmatprep.subr.mxu0 0.0
    %3289 = vmatpush2.msra.mxu0 0.0
    %3290 = vmatprep.subr.mxu0 0.0
    %3291 = vmatpush2.msra.mxu0 0.0
    %3292 = vmatprep.subr.mxu0 0.0
    %3293 = vmatpush2.msra.mxu0 0.0
    %3294 = vmatprep.subr.mxu0 0.0
    %3295 = vmatpush2.msra.mxu0 0.0
    %3296 = vmatprep.subr.mxu0 0.0
    %3297 = vmatpush2.msra.mxu0 0.0
    %3298 = vmatprep.subr.mxu0 0.0
    %3299 = vmatpush2.msra.mxu0 0.0
    %3300 = vmatprep.subr.mxu0 0.0
    %3301 = vmatpush2.msra.mxu0 0.0
    %3302 = vmatprep.subr.mxu0 0.0
    %3303 = vmatpush2.msra.mxu0 0.0
    %3304 = vmatprep.subr.mxu0 0.0
    %3305 = vmatpush2.msra.mxu0 0.0
    %3306 = vmatprep.subr.mxu0 0.0
    %3307 = vmatpush2.msra.mxu0 0.0
    %3308 = vmatprep.subr.mxu0 0.0
    %3309 = vmatpush2.msra.mxu0 0.0
    %3310 = vmatprep.mubr.f32.mxu0 0.0
    %3311 = vmatmul.mubr.f32.gmra.mxu0 %v3244
    %v3312 = vpop.f32.mrf.mxu0
    %v3313 = vadd.f32 0.0, %v3312
    %v3314 = vpop.f32.mrf.mxu0
    %3315 = vdwg.mxu0
    %v3316 = vld [vmem:[#allocation13 + $0x10] sm:$0xff]
    %v3318 = vsel %vm363, %v3237, 0
    %v3321 = vsel %vm363, %v3313, 0
    %3323 = vmatprep.subr.mxu0 0.0
    %3324 = vmatpush1.msra.mxu0 0.0
    %3325 = vmatprep.subr.mxu0 0.0
    %3326 = vmatpush1.msra.mxu0 0.0
    %3327 = vmatprep.subr.mxu0 0.0
    %3328 = vmatpush1.msra.mxu0 0.0
    %3329 = vmatprep.subr.mxu0 0.0
    %3330 = vmatpush1.msra.mxu0 0.0
    %3331 = vmatprep.subr.mxu0 0.0
    %3332 = vmatpush1.msra.mxu0 0.0
    %3333 = vmatprep.subr.mxu0 0.0
    %3334 = vmatpush1.msra.mxu0 0.0
    %3335 = vmatprep.subr.mxu0 0.0
    %3336 = vmatpush1.msra.mxu0 0.0
    %3337 = vmatprep.subr.mxu0 0.0
    %3338 = vmatpush1.msra.mxu0 0.0
    %3339 = vmatprep.subr.mxu0 0.0
    %3340 = vmatpush1.msra.mxu0 0.0
    %3341 = vmatprep.subr.mxu0 0.0
    %3342 = vmatpush1.msra.mxu0 0.0
    %3343 = vmatprep.subr.mxu0 0.0
    %3344 = vmatpush1.msra.mxu0 0.0
    %3345 = vmatprep.subr.mxu0 0.0
    %3346 = vmatpush1.msra.mxu0 0.0
    %3347 = vmatprep.subr.mxu0 0.0
    %3348 = vmatpush1.msra.mxu0 0.0
    %3349 = vmatprep.subr.mxu0 0.0
    %3350 = vmatpush1.msra.mxu0 0.0
    %3351 = vmatprep.subr.mxu0 0.0
    %3352 = vmatpush1.msra.mxu0 0.0
    %3353 = vmatprep.subr.mxu0 0.0
    %3354 = vmatpush1.msra.mxu0 %v3316
    %3355 = vmatprep.subr.mxu0 0.0
    %3356 = vmatpush2.msra.mxu0 0.0
    %3357 = vmatprep.subr.mxu0 0.0
    %3358 = vmatpush2.msra.mxu0 0.0
    %3359 = vmatprep.subr.mxu0 0.0
    %3360 = vmatpush2.msra.mxu0 0.0
    %3361 = vmatprep.subr.mxu0 0.0
    %3362 = vmatpush2.msra.mxu0 0.0
    %3363 = vmatprep.subr.mxu0 0.0
    %3364 = vmatpush2.msra.mxu0 0.0
    %3365 = vmatprep.subr.mxu0 0.0
    %3366 = vmatpush2.msra.mxu0 0.0
    %3367 = vmatprep.subr.mxu0 0.0
    %3368 = vmatpush2.msra.mxu0 0.0
    %3369 = vmatprep.subr.mxu0 0.0
    %3370 = vmatpush2.msra.mxu0 0.0
    %3371 = vmatprep.subr.mxu0 0.0
    %3372 = vmatpush2.msra.mxu0 0.0
    %3373 = vmatprep.subr.mxu0 0.0
    %3374 = vmatpush2.msra.mxu0 0.0
    %3375 = vmatprep.subr.mxu0 0.0
    %3376 = vmatpush2.msra.mxu0 0.0
    %3377 = vmatprep.subr.mxu0 0.0
    %3378 = vmatpush2.msra.mxu0 0.0
    %3379 = vmatprep.subr.mxu0 0.0
    %3380 = vmatpush2.msra.mxu0 0.0
    %3381 = vmatprep.subr.mxu0 0.0
    %3382 = vmatpush2.msra.mxu0 0.0
    %3383 = vmatprep.subr.mxu0 0.0
    %3384 = vmatpush2.msra.mxu0 0.0
    %3385 = vmatprep.subr.mxu0 0.0
    %3386 = vmatpush2.msra.mxu0 0.0
    %3387 = vmatprep.mubr.f32.mxu0 0.0
    %3388 = vmatmul.mubr.f32.gmra.mxu0 %v3318
    %v3389 = vpop.f32.mrf.mxu0
    %v3390 = vadd.f32 0.0, %v3389
    %v3391 = vpop.f32.mrf.mxu0
    %3392 = vmatprep.mubr.f32.mxu0 0.0
    %3393 = vmatmul.mubr.f32.gmra.mxu0 %v3321
    %v3394 = vpop.f32.mrf.mxu0
    %v3395 = vadd.f32 0.0, %v3394
    %v3396 = vpop.f32.mrf.mxu0
    %3397 = vdwg.mxu0
    %v3398 = vadd.f32 %v2984, %v3390
    %v3399 = vadd.f32 %v2985, %v3395
    %3400 = vrot.lane.b32.xlu0 %v2147, 104
    %v3401 = vpop.permute.xlu0 %3400
    %3402 = vrot.lane.b32.xlu0 %v253, 104
    %v3403 = vpop.permute.xlu0 %3402
    %v3404 = vsel %vm363, %v3401, 0
    %v3406 = vsel %vm363, %v3403, 0
    %3408 = vmatprep.subr.mxu0 0.0
    %3409 = vmatpush1.xpose.msra.mxu0 0.0
    %3410 = vmatprep.subr.mxu0 0.0
    %3411 = vmatpush1.xpose.msra.mxu0 0.0
    %3412 = vmatprep.subr.mxu0 0.0
    %3413 = vmatpush1.xpose.msra.mxu0 0.0
    %3414 = vmatprep.subr.mxu0 0.0
    %3415 = vmatpush1.xpose.msra.mxu0 0.0
    %3416 = vmatprep.subr.mxu0 0.0
    %3417 = vmatpush1.xpose.msra.mxu0 0.0
    %3418 = vmatprep.subr.mxu0 0.0
    %3419 = vmatpush1.xpose.msra.mxu0 0.0
    %3420 = vmatprep.subr.mxu0 0.0
    %3421 = vmatpush1.xpose.msra.mxu0 0.0
    %3422 = vmatprep.subr.mxu0 0.0
    %3423 = vmatpush1.xpose.msra.mxu0 0.0
    %3424 = vmatprep.subr.mxu0 0.0
    %3425 = vmatpush1.xpose.msra.mxu0 0.0
    %3426 = vmatprep.subr.mxu0 0.0
    %3427 = vmatpush1.xpose.msra.mxu0 0.0
    %3428 = vmatprep.subr.mxu0 0.0
    %3429 = vmatpush1.xpose.msra.mxu0 0.0
    %3430 = vmatprep.subr.mxu0 0.0
    %3431 = vmatpush1.xpose.msra.mxu0 0.0
    %3432 = vmatprep.subr.mxu0 0.0
    %3433 = vmatpush1.xpose.msra.mxu0 0.0
    %3434 = vmatprep.subr.mxu0 0.0
    %3435 = vmatpush1.xpose.msra.mxu0 0.0
    %3436 = vmatprep.subr.mxu0 0.0
    %3437 = vmatpush1.xpose.msra.mxu0 0.0
    %3438 = vmatprep.subr.mxu0 0.0
    %3439 = vmatpush1.xpose.msra.mxu0 %v3406
    %3440 = vmatprep.subr.mxu0 0.0
    %3441 = vmatpush2.xpose.msra.mxu0 0.0
    %3442 = vmatprep.subr.mxu0 0.0
    %3443 = vmatpush2.xpose.msra.mxu0 0.0
    %3444 = vmatprep.subr.mxu0 0.0
    %3445 = vmatpush2.xpose.msra.mxu0 0.0
    %3446 = vmatprep.subr.mxu0 0.0
    %3447 = vmatpush2.xpose.msra.mxu0 0.0
    %3448 = vmatprep.subr.mxu0 0.0
    %3449 = vmatpush2.xpose.msra.mxu0 0.0
    %3450 = vmatprep.subr.mxu0 0.0
    %3451 = vmatpush2.xpose.msra.mxu0 0.0
    %3452 = vmatprep.subr.mxu0 0.0
    %3453 = vmatpush2.xpose.msra.mxu0 0.0
    %3454 = vmatprep.subr.mxu0 0.0
    %3455 = vmatpush2.xpose.msra.mxu0 0.0
    %3456 = vmatprep.subr.mxu0 0.0
    %3457 = vmatpush2.xpose.msra.mxu0 0.0
    %3458 = vmatprep.subr.mxu0 0.0
    %3459 = vmatpush2.xpose.msra.mxu0 0.0
    %3460 = vmatprep.subr.mxu0 0.0
    %3461 = vmatpush2.xpose.msra.mxu0 0.0
    %3462 = vmatprep.subr.mxu0 0.0
    %3463 = vmatpush2.xpose.msra.mxu0 0.0
    %3464 = vmatprep.subr.mxu0 0.0
    %3465 = vmatpush2.xpose.msra.mxu0 0.0
    %3466 = vmatprep.subr.mxu0 0.0
    %3467 = vmatpush2.xpose.msra.mxu0 0.0
    %3468 = vmatprep.subr.mxu0 0.0
    %3469 = vmatpush2.xpose.msra.mxu0 0.0
    %3470 = vmatprep.subr.mxu0 0.0
    %3471 = vmatpush2.xpose.msra.mxu0 0.0
    %3472 = vmatprep.mubr.f32.mxu0 0.0
    %3473 = vmatmul.mubr.f32.gmra.mxu0 %v3404
    %v3474 = vpop.f32.mrf.mxu0
    %v3475 = vadd.f32 0.0, %v3474
    %v3476 = vpop.f32.mrf.mxu0
    %3477 = vdwg.mxu0
    %3478 = vrot.lane.b32.xlu0 %v2152, 104
    %v3479 = vpop.permute.xlu0 %3478
    %3480 = vrot.lane.b32.xlu0 %v258, 104
    %v3481 = vpop.permute.xlu0 %3480
    %v3482 = vsel %vm363, %v3479, 0
    %v3484 = vsel %vm363, %v3481, 0
    %3486 = vmatprep.subr.mxu0 0.0
    %3487 = vmatpush1.xpose.msra.mxu0 0.0
    %3488 = vmatprep.subr.mxu0 0.0
    %3489 = vmatpush1.xpose.msra.mxu0 0.0
    %3490 = vmatprep.subr.mxu0 0.0
    %3491 = vmatpush1.xpose.msra.mxu0 0.0
    %3492 = vmatprep.subr.mxu0 0.0
    %3493 = vmatpush1.xpose.msra.mxu0 0.0
    %3494 = vmatprep.subr.mxu0 0.0
    %3495 = vmatpush1.xpose.msra.mxu0 0.0
    %3496 = vmatprep.subr.mxu0 0.0
    %3497 = vmatpush1.xpose.msra.mxu0 0.0
    %3498 = vmatprep.subr.mxu0 0.0
    %3499 = vmatpush1.xpose.msra.mxu0 0.0
    %3500 = vmatprep.subr.mxu0 0.0
    %3501 = vmatpush1.xpose.msra.mxu0 0.0
    %3502 = vmatprep.subr.mxu0 0.0
    %3503 = vmatpush1.xpose.msra.mxu0 0.0
    %3504 = vmatprep.subr.mxu0 0.0
    %3505 = vmatpush1.xpose.msra.mxu0 0.0
    %3506 = vmatprep.subr.mxu0 0.0
    %3507 = vmatpush1.xpose.msra.mxu0 0.0
    %3508 = vmatprep.subr.mxu0 0.0
    %3509 = vmatpush1.xpose.msra.mxu0 0.0
    %3510 = vmatprep.subr.mxu0 0.0
    %3511 = vmatpush1.xpose.msra.mxu0 0.0
    %3512 = vmatprep.subr.mxu0 0.0
    %3513 = vmatpush1.xpose.msra.mxu0 0.0
    %3514 = vmatprep.subr.mxu0 0.0
    %3515 = vmatpush1.xpose.msra.mxu0 0.0
    %3516 = vmatprep.subr.mxu0 0.0
    %3517 = vmatpush1.xpose.msra.mxu0 %v3484
    %3518 = vmatprep.subr.mxu0 0.0
    %3519 = vmatpush2.xpose.msra.mxu0 0.0
    %3520 = vmatprep.subr.mxu0 0.0
    %3521 = vmatpush2.xpose.msra.mxu0 0.0
    %3522 = vmatprep.subr.mxu0 0.0
    %3523 = vmatpush2.xpose.msra.mxu0 0.0
    %3524 = vmatprep.subr.mxu0 0.0
    %3525 = vmatpush2.xpose.msra.mxu0 0.0
    %3526 = vmatprep.subr.mxu0 0.0
    %3527 = vmatpush2.xpose.msra.mxu0 0.0
    %3528 = vmatprep.subr.mxu0 0.0
    %3529 = vmatpush2.xpose.msra.mxu0 0.0
    %3530 = vmatprep.subr.mxu0 0.0
    %3531 = vmatpush2.xpose.msra.mxu0 0.0
    %3532 = vmatprep.subr.mxu0 0.0
    %3533 = vmatpush2.xpose.msra.mxu0 0.0
    %3534 = vmatprep.subr.mxu0 0.0
    %3535 = vmatpush2.xpose.msra.mxu0 0.0
    %3536 = vmatprep.subr.mxu0 0.0
    %3537 = vmatpush2.xpose.msra.mxu0 0.0
    %3538 = vmatprep.subr.mxu0 0.0
    %3539 = vmatpush2.xpose.msra.mxu0 0.0
    %3540 = vmatprep.subr.mxu0 0.0
    %3541 = vmatpush2.xpose.msra.mxu0 0.0
    %3542 = vmatprep.subr.mxu0 0.0
    %3543 = vmatpush2.xpose.msra.mxu0 0.0
    %3544 = vmatprep.subr.mxu0 0.0
    %3545 = vmatpush2.xpose.msra.mxu0 0.0
    %3546 = vmatprep.subr.mxu0 0.0
    %3547 = vmatpush2.xpose.msra.mxu0 0.0
    %3548 = vmatprep.subr.mxu0 0.0
    %3549 = vmatpush2.xpose.msra.mxu0 0.0
    %3550 = vmatprep.mubr.f32.mxu0 0.0
    %3551 = vmatmul.mubr.f32.gmra.mxu0 %v3482
    %v3552 = vpop.f32.mrf.mxu0
    %v3553 = vadd.f32 0.0, %v3552
    %v3554 = vpop.f32.mrf.mxu0
    %3555 = vdwg.mxu0
    %v3556 = vsel %vm363, %v3475, -inf
    %3557 = vmax.xlane.f32.xlu0 %v3556
    %v3558 = vpop.xlane.xlu0 %3557
    %v3559 = vsel %vm363, %v3553, -inf
    %3560 = vmax.xlane.f32.xlu0 %v3559
    %v3561 = vpop.xlane.xlu0 %3560
    %v3562 = vsub.f32 %v3475, %v3558
    %v3563 = vsub.f32 %v3553, %v3561
    %v3564 = vmul.f32 %v3562, 1.442695
    %v3565 = vpow.pop %v3564
    %v3566 = vmul.f32 %v3563, 1.442695
    %v3567 = vpow.pop %v3566
    %v3568 = vsel %vm363, %v3565, 0.0
    %3569 = vadd.xlane.f32.xlu0 %v3568
    %v3570 = vpop.xlane.xlu0 %3569
    %v3571 = vsel %vm363, %v3567, 0.0
    %3572 = vadd.xlane.f32.xlu0 %v3571
    %v3573 = vpop.xlane.xlu0 %3572
    %v3574 = vrcp.pop %v3570
    %v3575 = vrcp.pop %v3573
    %v3576 = vmul.f32 %v3565, %v3574
    %v3577 = vmul.f32 %v3567, %v3575
    %3578 = vrot.lane.b32.xlu0 %v253, 72
    %v3579 = vpop.permute.xlu0 %3578
    %v3582 = vsel %vm363, %v3576, 0
    %3584 = vmatprep.subr.mxu0 0.0
    %3585 = vmatpush1.msra.mxu0 0.0
    %3586 = vmatprep.subr.mxu0 0.0
    %3587 = vmatpush1.msra.mxu0 0.0
    %3588 = vmatprep.subr.mxu0 0.0
    %3589 = vmatpush1.msra.mxu0 0.0
    %3590 = vmatprep.subr.mxu0 0.0
    %3591 = vmatpush1.msra.mxu0 0.0
    %3592 = vmatprep.subr.mxu0 0.0
    %3593 = vmatpush1.msra.mxu0 0.0
    %3594 = vmatprep.subr.mxu0 0.0
    %3595 = vmatpush1.msra.mxu0 0.0
    %3596 = vmatprep.subr.mxu0 0.0
    %3597 = vmatpush1.msra.mxu0 0.0
    %3598 = vmatprep.subr.mxu0 0.0
    %3599 = vmatpush1.msra.mxu0 0.0
    %3600 = vmatprep.subr.mxu0 0.0
    %3601 = vmatpush1.msra.mxu0 0.0
    %3602 = vmatprep.subr.mxu0 0.0
    %3603 = vmatpush1.msra.mxu0 0.0
    %3604 = vmatprep.subr.mxu0 0.0
    %3605 = vmatpush1.msra.mxu0 0.0
    %3606 = vmatprep.subr.mxu0 0.0
    %3607 = vmatpush1.msra.mxu0 0.0
    %3608 = vmatprep.subr.mxu0 0.0
    %3609 = vmatpush1.msra.mxu0 0.0
    %3610 = vmatprep.subr.mxu0 0.0
    %3611 = vmatpush1.msra.mxu0 0.0
    %3612 = vmatprep.subr.mxu0 0.0
    %3613 = vmatpush1.msra.mxu0 0.0
    %3614 = vmatprep.subr.mxu0 0.0
    %3615 = vmatpush1.msra.mxu0 %v3579
    %3616 = vmatprep.subr.mxu0 0.0
    %3617 = vmatpush2.msra.mxu0 0.0
    %3618 = vmatprep.subr.mxu0 0.0
    %3619 = vmatpush2.msra.mxu0 0.0
    %3620 = vmatprep.subr.mxu0 0.0
    %3621 = vmatpush2.msra.mxu0 0.0
    %3622 = vmatprep.subr.mxu0 0.0
    %3623 = vmatpush2.msra.mxu0 0.0
    %3624 = vmatprep.subr.mxu0 0.0
    %3625 = vmatpush2.msra.mxu0 0.0
    %3626 = vmatprep.subr.mxu0 0.0
    %3627 = vmatpush2.msra.mxu0 0.0
    %3628 = vmatprep.subr.mxu0 0.0
    %3629 = vmatpush2.msra.mxu0 0.0
    %3630 = vmatprep.subr.mxu0 0.0
    %3631 = vmatpush2.msra.mxu0 0.0
    %3632 = vmatprep.subr.mxu0 0.0
    %3633 = vmatpush2.msra.mxu0 0.0
    %3634 = vmatprep.subr.mxu0 0.0
    %3635 = vmatpush2.msra.mxu0 0.0
    %3636 = vmatprep.subr.mxu0 0.0
    %3637 = vmatpush2.msra.mxu0 0.0
    %3638 = vmatprep.subr.mxu0 0.0
    %3639 = vmatpush2.msra.mxu0 0.0
    %3640 = vmatprep.subr.mxu0 0.0
    %3641 = vmatpush2.msra.mxu0 0.0
    %3642 = vmatprep.subr.mxu0 0.0
    %3643 = vmatpush2.msra.mxu0 0.0
    %3644 = vmatprep.subr.mxu0 0.0
    %3645 = vmatpush2.msra.mxu0 0.0
    %3646 = vmatprep.subr.mxu0 0.0
    %3647 = vmatpush2.msra.mxu0 0.0
    %3648 = vmatprep.mubr.f32.mxu0 0.0
    %3649 = vmatmul.mubr.f32.gmra.mxu0 %v3582
    %v3650 = vpop.f32.mrf.mxu0
    %v3651 = vadd.f32 0.0, %v3650
    %v3652 = vpop.f32.mrf.mxu0
    %3653 = vdwg.mxu0
    %3654 = vrot.lane.b32.xlu0 %v258, 72
    %v3655 = vpop.permute.xlu0 %3654
    %v3658 = vsel %vm363, %v3577, 0
    %3660 = vmatprep.subr.mxu0 0.0
    %3661 = vmatpush1.msra.mxu0 0.0
    %3662 = vmatprep.subr.mxu0 0.0
    %3663 = vmatpush1.msra.mxu0 0.0
    %3664 = vmatprep.subr.mxu0 0.0
    %3665 = vmatpush1.msra.mxu0 0.0
    %3666 = vmatprep.subr.mxu0 0.0
    %3667 = vmatpush1.msra.mxu0 0.0
    %3668 = vmatprep.subr.mxu0 0.0
    %3669 = vmatpush1.msra.mxu0 0.0
    %3670 = vmatprep.subr.mxu0 0.0
    %3671 = vmatpush1.msra.mxu0 0.0
    %3672 = vmatprep.subr.mxu0 0.0
    %3673 = vmatpush1.msra.mxu0 0.0
    %3674 = vmatprep.subr.mxu0 0.0
    %3675 = vmatpush1.msra.mxu0 0.0
    %3676 = vmatprep.subr.mxu0 0.0
    %3677 = vmatpush1.msra.mxu0 0.0
    %3678 = vmatprep.subr.mxu0 0.0
    %3679 = vmatpush1.msra.mxu0 0.0
    %3680 = vmatprep.subr.mxu0 0.0
    %3681 = vmatpush1.msra.mxu0 0.0
    %3682 = vmatprep.subr.mxu0 0.0
    %3683 = vmatpush1.msra.mxu0 0.0
    %3684 = vmatprep.subr.mxu0 0.0
    %3685 = vmatpush1.msra.mxu0 0.0
    %3686 = vmatprep.subr.mxu0 0.0
    %3687 = vmatpush1.msra.mxu0 0.0
    %3688 = vmatprep.subr.mxu0 0.0
    %3689 = vmatpush1.msra.mxu0 0.0
    %3690 = vmatprep.subr.mxu0 0.0
    %3691 = vmatpush1.msra.mxu0 %v3655
    %3692 = vmatprep.subr.mxu0 0.0
    %3693 = vmatpush2.msra.mxu0 0.0
    %3694 = vmatprep.subr.mxu0 0.0
    %3695 = vmatpush2.msra.mxu0 0.0
    %3696 = vmatprep.subr.mxu0 0.0
    %3697 = vmatpush2.msra.mxu0 0.0
    %3698 = vmatprep.subr.mxu0 0.0
    %3699 = vmatpush2.msra.mxu0 0.0
    %3700 = vmatprep.subr.mxu0 0.0
    %3701 = vmatpush2.msra.mxu0 0.0
    %3702 = vmatprep.subr.mxu0 0.0
    %3703 = vmatpush2.msra.mxu0 0.0
    %3704 = vmatprep.subr.mxu0 0.0
    %3705 = vmatpush2.msra.mxu0 0.0
    %3706 = vmatprep.subr.mxu0 0.0
    %3707 = vmatpush2.msra.mxu0 0.0
    %3708 = vmatprep.subr.mxu0 0.0
    %3709 = vmatpush2.msra.mxu0 0.0
    %3710 = vmatprep.subr.mxu0 0.0
    %3711 = vmatpush2.msra.mxu0 0.0
    %3712 = vmatprep.subr.mxu0 0.0
    %3713 = vmatpush2.msra.mxu0 0.0
    %3714 = vmatprep.subr.mxu0 0.0
    %3715 = vmatpush2.msra.mxu0 0.0
    %3716 = vmatprep.subr.mxu0 0.0
    %3717 = vmatpush2.msra.mxu0 0.0
    %3718 = vmatprep.subr.mxu0 0.0
    %3719 = vmatpush2.msra.mxu0 0.0
    %3720 = vmatprep.subr.mxu0 0.0
    %3721 = vmatpush2.msra.mxu0 0.0
    %3722 = vmatprep.subr.mxu0 0.0
    %3723 = vmatpush2.msra.mxu0 0.0
    %3724 = vmatprep.mubr.f32.mxu0 0.0
    %3725 = vmatmul.mubr.f32.gmra.mxu0 %v3658
    %v3726 = vpop.f32.mrf.mxu0
    %v3727 = vadd.f32 0.0, %v3726
    %v3728 = vpop.f32.mrf.mxu0
    %3729 = vdwg.mxu0
    %v3730 = vld [vmem:[#allocation13 + $0x18] sm:$0xff]
    %v3732 = vsel %vm363, %v3651, 0
    %v3735 = vsel %vm363, %v3727, 0
    %3737 = vmatprep.subr.mxu0 0.0
    %3738 = vmatpush1.msra.mxu0 0.0
    %3739 = vmatprep.subr.mxu0 0.0
    %3740 = vmatpush1.msra.mxu0 0.0
    %3741 = vmatprep.subr.mxu0 0.0
    %3742 = vmatpush1.msra.mxu0 0.0
    %3743 = vmatprep.subr.mxu0 0.0
    %3744 = vmatpush1.msra.mxu0 0.0
    %3745 = vmatprep.subr.mxu0 0.0
    %3746 = vmatpush1.msra.mxu0 0.0
    %3747 = vmatprep.subr.mxu0 0.0
    %3748 = vmatpush1.msra.mxu0 0.0
    %3749 = vmatprep.subr.mxu0 0.0
    %3750 = vmatpush1.msra.mxu0 0.0
    %3751 = vmatprep.subr.mxu0 0.0
    %3752 = vmatpush1.msra.mxu0 0.0
    %3753 = vmatprep.subr.mxu0 0.0
    %3754 = vmatpush1.msra.mxu0 0.0
    %3755 = vmatprep.subr.mxu0 0.0
    %3756 = vmatpush1.msra.mxu0 0.0
    %3757 = vmatprep.subr.mxu0 0.0
    %3758 = vmatpush1.msra.mxu0 0.0
    %3759 = vmatprep.subr.mxu0 0.0
    %3760 = vmatpush1.msra.mxu0 0.0
    %3761 = vmatprep.subr.mxu0 0.0
    %3762 = vmatpush1.msra.mxu0 0.0
    %3763 = vmatprep.subr.mxu0 0.0
    %3764 = vmatpush1.msra.mxu0 0.0
    %3765 = vmatprep.subr.mxu0 0.0
    %3766 = vmatpush1.msra.mxu0 0.0
    %3767 = vmatprep.subr.mxu0 0.0
    %3768 = vmatpush1.msra.mxu0 %v3730
    %3769 = vmatprep.subr.mxu0 0.0
    %3770 = vmatpush2.msra.mxu0 0.0
    %3771 = vmatprep.subr.mxu0 0.0
    %3772 = vmatpush2.msra.mxu0 0.0
    %3773 = vmatprep.subr.mxu0 0.0
    %3774 = vmatpush2.msra.mxu0 0.0
    %3775 = vmatprep.subr.mxu0 0.0
    %3776 = vmatpush2.msra.mxu0 0.0
    %3777 = vmatprep.subr.mxu0 0.0
    %3778 = vmatpush2.msra.mxu0 0.0
    %3779 = vmatprep.subr.mxu0 0.0
    %3780 = vmatpush2.msra.mxu0 0.0
    %3781 = vmatprep.subr.mxu0 0.0
    %3782 = vmatpush2.msra.mxu0 0.0
    %3783 = vmatprep.subr.mxu0 0.0
    %3784 = vmatpush2.msra.mxu0 0.0
    %3785 = vmatprep.subr.mxu0 0.0
    %3786 = vmatpush2.msra.mxu0 0.0
    %3787 = vmatprep.subr.mxu0 0.0
    %3788 = vmatpush2.msra.mxu0 0.0
    %3789 = vmatprep.subr.mxu0 0.0
    %3790 = vmatpush2.msra.mxu0 0.0
    %3791 = vmatprep.subr.mxu0 0.0
    %3792 = vmatpush2.msra.mxu0 0.0
    %3793 = vmatprep.subr.mxu0 0.0
    %3794 = vmatpush2.msra.mxu0 0.0
    %3795 = vmatprep.subr.mxu0 0.0
    %3796 = vmatpush2.msra.mxu0 0.0
    %3797 = vmatprep.subr.mxu0 0.0
    %3798 = vmatpush2.msra.mxu0 0.0
    %3799 = vmatprep.subr.mxu0 0.0
    %3800 = vmatpush2.msra.mxu0 0.0
    %3801 = vmatprep.mubr.f32.mxu0 0.0
    %3802 = vmatmul.mubr.f32.gmra.mxu0 %v3732
    %v3803 = vpop.f32.mrf.mxu0
    %v3804 = vadd.f32 0.0, %v3803
    %v3805 = vpop.f32.mrf.mxu0
    %3806 = vmatprep.mubr.f32.mxu0 0.0
    %3807 = vmatmul.mubr.f32.gmra.mxu0 %v3735
    %v3808 = vpop.f32.mrf.mxu0
    %v3809 = vadd.f32 0.0, %v3808
    %v3810 = vpop.f32.mrf.mxu0
    %3811 = vdwg.mxu0
    %v3812 = vadd.f32 %v3398, %v3804
    %v3813 = vadd.f32 %v3399, %v3809
    %v3814 = vadd.f32 %v2061, %v3812
    %v3815 = vadd.f32 %v2062, %v3813
    %s3816 = scalar_lea.vmem %s16, 2
    %v3817 = vld [vmem:[%s3816] sm:$0x1]
    %s3818 = scalar_lea.vmem %s16, 3
    %v3819 = vld [vmem:[%s3818] sm:$0x1]
    %v3820 = vsel %vm179, %v3814, 0.0
    %3821 = vadd.xlane.f32.xlu0 %v3820
    %v3822 = vpop.xlane.xlu0 %3821
    %v3823 = vsel %vm179, %v3815, 0.0
    %3824 = vadd.xlane.f32.xlu0 %v3823
    %v3825 = vpop.xlane.xlu0 %3824
    %v3826 = vmul.f32 %v3822, %v2026
    %v3827 = vmul.f32 %v3825, %v2026
    %v3828 = vsub.f32 %v3814, %v3826
    %v3829 = vsub.f32 %v3815, %v3827
    %v3830 = vmul.f32 %v3828, %v3828
    %v3831 = vmul.f32 %v3829, %v3829
    %v3832 = vsel %vm179, %v3830, 0.0
    %3833 = vadd.xlane.f32.xlu0 %v3832
    %v3834 = vpop.xlane.xlu0 %3833
    %v3835 = vsel %vm179, %v3831, 0.0
    %3836 = vadd.xlane.f32.xlu0 %v3835
    %v3837 = vpop.xlane.xlu0 %3836
    %v3838 = vmul.f32 %v3834, %v2026
    %v3839 = vmul.f32 %v3837, %v2026
    %v3840 = vadd.f32 %v3838, 1e-05
    %v3841 = vadd.f32 %v3839, 1e-05
    %v3842 = vrsqrt.pop %v3840
    %v3843 = vrsqrt.pop %v3841
    %v3844 = vmul.f32 %v3828, %v3842
    %v3845 = vmul.f32 %v3829, %v3843
    %v3847 = vlaneseq
    %v3848 = vshrl.u32 %v3847, 7
    %v3849 = vsub.s32 0, %v3848
    %v3850 = vrot.slane %v3817, %v3849
    %v3852 = vmul.f32 %v3844, %v3850
    %v3853 = vmul.f32 %v3845, %v3850
    %v3855 = vlaneseq
    %v3856 = vshrl.u32 %v3855, 7
    %v3857 = vsub.s32 0, %v3856
    %v3858 = vrot.slane %v3819, %v3857
    %v3860 = vadd.f32 %v3852, %v3858
    %v3861 = vadd.f32 %v3853, %v3858
    %v3862 = vld [vmem:[#allocation14] sm:$0xff]
    %v3863 = vld [vmem:[#allocation14 + $0x8] sm:$0xff]
    %v3864 = vld [vmem:[#allocation14 + $0x10] sm:$0xff]
    %v3865 = vld [vmem:[#allocation14 + $0x18] sm:$0xff]
    %v3866 = vld [vmem:[%s13] sm:$0x1]
    %v3868 = vlaneseq
    %v3869 = vshrl.u32 %v3868, 7
    %v3870 = vsub.s32 0, %v3869
    %v3871 = vrot.slane %v3866, %v3870
    %v3874 = vsel %vm179, %v3860, 0
    %v3877 = vsel %vm179, %v3861, 0
    %3879 = vmatprep.subr.mxu0 0.0
    %3880 = vmatpush1.msra.mxu0 0.0
    %3881 = vmatprep.subr.mxu0 0.0
    %3882 = vmatpush1.msra.mxu0 0.0
    %3883 = vmatprep.subr.mxu0 0.0
    %3884 = vmatpush1.msra.mxu0 0.0
    %3885 = vmatprep.subr.mxu0 0.0
    %3886 = vmatpush1.msra.mxu0 0.0
    %3887 = vmatprep.subr.mxu0 0.0
    %3888 = vmatpush1.msra.mxu0 0.0
    %3889 = vmatprep.subr.mxu0 0.0
    %3890 = vmatpush1.msra.mxu0 0.0
    %3891 = vmatprep.subr.mxu0 0.0
    %3892 = vmatpush1.msra.mxu0 0.0
    %3893 = vmatprep.subr.mxu0 0.0
    %3894 = vmatpush1.msra.mxu0 0.0
    %3895 = vmatprep.subr.mxu0 0.0
    %3896 = vmatpush1.msra.mxu0 0.0
    %3897 = vmatprep.subr.mxu0 0.0
    %3898 = vmatpush1.msra.mxu0 0.0
    %3899 = vmatprep.subr.mxu0 0.0
    %3900 = vmatpush1.msra.mxu0 0.0
    %3901 = vmatprep.subr.mxu0 0.0
    %3902 = vmatpush1.msra.mxu0 0.0
    %3903 = vmatprep.subr.mxu0 0.0
    %3904 = vmatpush1.msra.mxu0 %v3865
    %3905 = vmatprep.subr.mxu0 0.0
    %3906 = vmatpush1.msra.mxu0 %v3864
    %3907 = vmatprep.subr.mxu0 0.0
    %3908 = vmatpush1.msra.mxu0 %v3863
    %3909 = vmatprep.subr.mxu0 0.0
    %3910 = vmatpush1.msra.mxu0 %v3862
    %3911 = vmatprep.subr.mxu0 0.0
    %3912 = vmatpush2.msra.mxu0 0.0
    %3913 = vmatprep.subr.mxu0 0.0
    %3914 = vmatpush2.msra.mxu0 0.0
    %3915 = vmatprep.subr.mxu0 0.0
    %3916 = vmatpush2.msra.mxu0 0.0
    %3917 = vmatprep.subr.mxu0 0.0
    %3918 = vmatpush2.msra.mxu0 0.0
    %3919 = vmatprep.subr.mxu0 0.0
    %3920 = vmatpush2.msra.mxu0 0.0
    %3921 = vmatprep.subr.mxu0 0.0
    %3922 = vmatpush2.msra.mxu0 0.0
    %3923 = vmatprep.subr.mxu0 0.0
    %3924 = vmatpush2.msra.mxu0 0.0
    %3925 = vmatprep.subr.mxu0 0.0
    %3926 = vmatpush2.msra.mxu0 0.0
    %3927 = vmatprep.subr.mxu0 0.0
    %3928 = vmatpush2.msra.mxu0 0.0
    %3929 = vmatprep.subr.mxu0 0.0
    %3930 = vmatpush2.msra.mxu0 0.0
    %3931 = vmatprep.subr.mxu0 0.0
    %3932 = vmatpush2.msra.mxu0 0.0
    %3933 = vmatprep.subr.mxu0 0.0
    %3934 = vmatpush2.msra.mxu0 0.0
    %3935 = vmatprep.subr.mxu0 0.0
    %3936 = vmatpush2.msra.mxu0 0.0
    %3937 = vmatprep.subr.mxu0 0.0
    %3938 = vmatpush2.msra.mxu0 0.0
    %3939 = vmatprep.subr.mxu0 0.0
    %3940 = vmatpush2.msra.mxu0 0.0
    %3941 = vmatprep.subr.mxu0 0.0
    %3942 = vmatpush2.msra.mxu0 0.0
    %3943 = vmatprep.mubr.f32.mxu0 0.0
    %3944 = vmatmul.mubr.f32.gmra.mxu0 %v3874
    %v3945 = vpop.f32.mrf.mxu0
    %v3946 = vadd.f32 %v3871, %v3945
    %v3947 = vpop.f32.mrf.mxu0
    %3948 = vmatprep.mubr.f32.mxu0 0.0
    %3949 = vmatmul.mubr.f32.gmra.mxu0 %v3877
    %v3950 = vpop.f32.mrf.mxu0
    %v3951 = vadd.f32 %v3871, %v3950
    %v3952 = vpop.f32.mrf.mxu0
    %3953 = vdwg.mxu0
    %v3954 = vmax.f32 %v3946, 0.0
    %v3955 = vmax.f32 %v3951, 0.0
    %v3956 = vld [vmem:[%s14] sm:$0xff]
    %v3957 = vld [vmem:[%s14 + $0x8] sm:$0xff]
    %v3958 = vld [vmem:[%s14 + $0x10] sm:$0xff]
    %v3959 = vld [vmem:[%s14 + $0x18] sm:$0xff]
    %v3960 = vld [vmem:[%s14 + $0x20] sm:$0xff]
    %v3961 = vld [vmem:[%s14 + $0x28] sm:$0xff]
    %v3962 = vld [vmem:[%s14 + $0x30] sm:$0xff]
    %v3963 = vld [vmem:[%s14 + $0x38] sm:$0xff]
    %v3964 = vld [vmem:[%s15] sm:$0x1]
    %v3966 = vlaneseq
    %v3967 = vshrl.u32 %v3966, 7
    %v3968 = vsub.s32 0, %v3967
    %v3969 = vrot.slane %v3964, %v3968
    %vm3971 = vcmask 523264
    %v3973 = vsel %vm3971, %v3954, 0
    %v3976 = vsel %vm3971, %v3955, 0
    %3978 = vmatprep.subr.mxu0 0.0
    %3979 = vmatpush1.msra.mxu0 0.0
    %3980 = vmatprep.subr.mxu0 0.0
    %3981 = vmatpush1.msra.mxu0 0.0
    %3982 = vmatprep.subr.mxu0 0.0
    %3983 = vmatpush1.msra.mxu0 0.0
    %3984 = vmatprep.subr.mxu0 0.0
    %3985 = vmatpush1.msra.mxu0 0.0
    %3986 = vmatprep.subr.mxu0 0.0
    %3987 = vmatpush1.msra.mxu0 0.0
    %3988 = vmatprep.subr.mxu0 0.0
    %3989 = vmatpush1.msra.mxu0 0.0
    %3990 = vmatprep.subr.mxu0 0.0
    %3991 = vmatpush1.msra.mxu0 0.0
    %3992 = vmatprep.subr.mxu0 0.0
    %3993 = vmatpush1.msra.mxu0 0.0
    %3994 = vmatprep.subr.mxu0 0.0
    %3995 = vmatpush1.msra.mxu0 %v3963
    %3996 = vmatprep.subr.mxu0 0.0
    %3997 = vmatpush1.msra.mxu0 %v3962
    %3998 = vmatprep.subr.mxu0 0.0
    %3999 = vmatpush1.msra.mxu0 %v3961
    %4000 = vmatprep.subr.mxu0 0.0
    %4001 = vmatpush1.msra.mxu0 %v3960
    %4002 = vmatprep.subr.mxu0 0.0
    %4003 = vmatpush1.msra.mxu0 %v3959
    %4004 = vmatprep.subr.mxu0 0.0
    %4005 = vmatpush1.msra.mxu0 %v3958
    %4006 = vmatprep.subr.mxu0 0.0
    %4007 = vmatpush1.msra.mxu0 %v3957
    %4008 = vmatprep.subr.mxu0 0.0
    %4009 = vmatpush1.msra.mxu0 %v3956
    %4010 = vmatprep.subr.mxu0 0.0
    %4011 = vmatpush2.msra.mxu0 0.0
    %4012 = vmatprep.subr.mxu0 0.0
    %4013 = vmatpush2.msra.mxu0 0.0
    %4014 = vmatprep.subr.mxu0 0.0
    %4015 = vmatpush2.msra.mxu0 0.0
    %4016 = vmatprep.subr.mxu0 0.0
    %4017 = vmatpush2.msra.mxu0 0.0
    %4018 = vmatprep.subr.mxu0 0.0
    %4019 = vmatpush2.msra.mxu0 0.0
    %4020 = vmatprep.subr.mxu0 0.0
    %4021 = vmatpush2.msra.mxu0 0.0
    %4022 = vmatprep.subr.mxu0 0.0
    %4023 = vmatpush2.msra.mxu0 0.0
    %4024 = vmatprep.subr.mxu0 0.0
    %4025 = vmatpush2.msra.mxu0 0.0
    %4026 = vmatprep.subr.mxu0 0.0
    %4027 = vmatpush2.msra.mxu0 0.0
    %4028 = vmatprep.subr.mxu0 0.0
    %4029 = vmatpush2.msra.mxu0 0.0
    %4030 = vmatprep.subr.mxu0 0.0
    %4031 = vmatpush2.msra.mxu0 0.0
    %4032 = vmatprep.subr.mxu0 0.0
    %4033 = vmatpush2.msra.mxu0 0.0
    %4034 = vmatprep.subr.mxu0 0.0
    %4035 = vmatpush2.msra.mxu0 0.0
    %4036 = vmatprep.subr.mxu0 0.0
    %4037 = vmatpush2.msra.mxu0 0.0
    %4038 = vmatprep.subr.mxu0 0.0
    %4039 = vmatpush2.msra.mxu0 0.0
    %4040 = vmatprep.subr.mxu0 0.0
    %4041 = vmatpush2.msra.mxu0 0.0
    %4042 = vmatprep.mubr.f32.mxu0 0.0
    %4043 = vmatmul.mubr.f32.gmra.mxu0 %v3973
    %v4044 = vpop.f32.mrf.mxu0
    %v4045 = vadd.f32 %v3969, %v4044
    %v4046 = vpop.f32.mrf.mxu0
    %4047 = vmatprep.mubr.f32.mxu0 0.0
    %4048 = vmatmul.mubr.f32.gmra.mxu0 %v3976
    %v4049 = vpop.f32.mrf.mxu0
    %v4050 = vadd.f32 %v3969, %v4049
    %v4051 = vpop.f32.mrf.mxu0
    %4052 = vdwg.mxu0
    %v4053 = vadd.f32 %v3860, %v4045
    %v4054 = vadd.f32 %v3861, %v4050
    %s4055 = scalar_lea.vmem %s16, 4
    %v4056 = vld [vmem:[%s4055] sm:$0x1]
    %s4057 = scalar_lea.vmem %s16, 5
    %v4058 = vld [vmem:[%s4057] sm:$0x1]
    %v4059 = vsel %vm179, %v4053, 0.0
    %4060 = vadd.xlane.f32.xlu0 %v4059
    %v4061 = vpop.xlane.xlu0 %4060
    %v4062 = vsel %vm179, %v4054, 0.0
    %4063 = vadd.xlane.f32.xlu0 %v4062
    %v4064 = vpop.xlane.xlu0 %4063
    %v4065 = vmul.f32 %v4061, %v2026
    %v4066 = vmul.f32 %v4064, %v2026
    %v4067 = vsub.f32 %v4053, %v4065
    %v4068 = vsub.f32 %v4054, %v4066
    %v4069 = vmul.f32 %v4067, %v4067
    %v4070 = vmul.f32 %v4068, %v4068
    %v4071 = vsel %vm179, %v4069, 0.0
    %4072 = vadd.xlane.f32.xlu0 %v4071
    %v4073 = vpop.xlane.xlu0 %4072
    %v4074 = vsel %vm179, %v4070, 0.0
    %4075 = vadd.xlane.f32.xlu0 %v4074
    %v4076 = vpop.xlane.xlu0 %4075
    %v4077 = vmul.f32 %v4073, %v2026
    %v4078 = vmul.f32 %v4076, %v2026
    %v4079 = vadd.f32 %v4077, 1e-05
    %v4080 = vadd.f32 %v4078, 1e-05
    %v4081 = vrsqrt.pop %v4079
    %v4082 = vrsqrt.pop %v4080
    %v4083 = vmul.f32 %v4067, %v4081
    %v4084 = vmul.f32 %v4068, %v4082
    %v4086 = vlaneseq
    %v4087 = vshrl.u32 %v4086, 7
    %v4088 = vsub.s32 0, %v4087
    %v4089 = vrot.slane %v4056, %v4088
    %v4091 = vmul.f32 %v4083, %v4089
    %v4092 = vmul.f32 %v4084, %v4089
    %v4094 = vlaneseq
    %v4095 = vshrl.u32 %v4094, 7
    %v4096 = vsub.s32 0, %v4095
    %v4097 = vrot.slane %v4058, %v4096
    %v4099 = vadd.f32 %v4091, %v4097
    %v4100 = vadd.f32 %v4092, %v4097
    %s4101 = scalar_lea.vmem %s2, 32
    %v4102 = vld [vmem:[%s4101] sm:$0xff]
    %v4103 = vld [vmem:[%s4101 + $0x8] sm:$0xff]
    %v4104 = vld [vmem:[%s4101 + $0x10] sm:$0xff]
    %v4105 = vld [vmem:[%s4101 + $0x18] sm:$0xff]
    %s4106 = scalar_lea.vmem %s3, 1
    %v4107 = vld [vmem:[%s4106] sm:$0x1]
    %v4109 = vlaneseq
    %v4110 = vshrl.u32 %v4109, 7
    %v4111 = vsub.s32 0, %v4110
    %v4112 = vrot.slane %v4107, %v4111
    %v4115 = vsel %vm179, %v4099, 0
    %v4118 = vsel %vm179, %v4100, 0
    %4120 = vmatprep.subr.mxu0 0.0
    %4121 = vmatpush1.msra.mxu0 0.0
    %4122 = vmatprep.subr.mxu0 0.0
    %4123 = vmatpush1.msra.mxu0 0.0
    %4124 = vmatprep.subr.mxu0 0.0
    %4125 = vmatpush1.msra.mxu0 0.0
    %4126 = vmatprep.subr.mxu0 0.0
    %4127 = vmatpush1.msra.mxu0 0.0
    %4128 = vmatprep.subr.mxu0 0.0
    %4129 = vmatpush1.msra.mxu0 0.0
    %4130 = vmatprep.subr.mxu0 0.0
    %4131 = vmatpush1.msra.mxu0 0.0
    %4132 = vmatprep.subr.mxu0 0.0
    %4133 = vmatpush1.msra.mxu0 0.0
    %4134 = vmatprep.subr.mxu0 0.0
    %4135 = vmatpush1.msra.mxu0 0.0
    %4136 = vmatprep.subr.mxu0 0.0
    %4137 = vmatpush1.msra.mxu0 0.0
    %4138 = vmatprep.subr.mxu0 0.0
    %4139 = vmatpush1.msra.mxu0 0.0
    %4140 = vmatprep.subr.mxu0 0.0
    %4141 = vmatpush1.msra.mxu0 0.0
    %4142 = vmatprep.subr.mxu0 0.0
    %4143 = vmatpush1.msra.mxu0 0.0
    %4144 = vmatprep.subr.mxu0 0.0
    %4145 = vmatpush1.msra.mxu0 %v4105
    %4146 = vmatprep.subr.mxu0 0.0
    %4147 = vmatpush1.msra.mxu0 %v4104
    %4148 = vmatprep.subr.mxu0 0.0
    %4149 = vmatpush1.msra.mxu0 %v4103
    %4150 = vmatprep.subr.mxu0 0.0
    %4151 = vmatpush1.msra.mxu0 %v4102
    %4152 = vmatprep.subr.mxu0 0.0
    %4153 = vmatpush2.msra.mxu0 0.0
    %4154 = vmatprep.subr.mxu0 0.0
    %4155 = vmatpush2.msra.mxu0 0.0
    %4156 = vmatprep.subr.mxu0 0.0
    %4157 = vmatpush2.msra.mxu0 0.0
    %4158 = vmatprep.subr.mxu0 0.0
    %4159 = vmatpush2.msra.mxu0 0.0
    %4160 = vmatprep.subr.mxu0 0.0
    %4161 = vmatpush2.msra.mxu0 0.0
    %4162 = vmatprep.subr.mxu0 0.0
    %4163 = vmatpush2.msra.mxu0 0.0
    %4164 = vmatprep.subr.mxu0 0.0
    %4165 = vmatpush2.msra.mxu0 0.0
    %4166 = vmatprep.subr.mxu0 0.0
    %4167 = vmatpush2.msra.mxu0 0.0
    %4168 = vmatprep.subr.mxu0 0.0
    %4169 = vmatpush2.msra.mxu0 0.0
    %4170 = vmatprep.subr.mxu0 0.0
    %4171 = vmatpush2.msra.mxu0 0.0
    %4172 = vmatprep.subr.mxu0 0.0
    %4173 = vmatpush2.msra.mxu0 0.0
    %4174 = vmatprep.subr.mxu0 0.0
    %4175 = vmatpush2.msra.mxu0 0.0
    %4176 = vmatprep.subr.mxu0 0.0
    %4177 = vmatpush2.msra.mxu0 0.0
    %4178 = vmatprep.subr.mxu0 0.0
    %4179 = vmatpush2.msra.mxu0 0.0
    %4180 = vmatprep.subr.mxu0 0.0
    %4181 = vmatpush2.msra.mxu0 0.0
    %4182 = vmatprep.subr.mxu0 0.0
    %4183 = vmatpush2.msra.mxu0 0.0
    %4184 = vmatprep.mubr.f32.mxu0 0.0
    %4185 = vmatmul.mubr.f32.gmra.mxu0 %v4115
    %v4186 = vpop.f32.mrf.mxu0
    %v4187 = vadd.f32 %v4112, %v4186
    %v4188 = vpop.f32.mrf.mxu0
    %4189 = vmatprep.mubr.f32.mxu0 0.0
    %4190 = vmatmul.mubr.f32.gmra.mxu0 %v4118
    %v4191 = vpop.f32.mrf.mxu0
    %v4192 = vadd.f32 %v4112, %v4191
    %v4193 = vpop.f32.mrf.mxu0
    %4194 = vdwg.mxu0
    %s4195 = scalar_lea.vmem [#allocation7], 1
    %v4196 = vld [vmem:[%s4195] sm:$0x1]
    %v4198 = vlaneseq
    %v4199 = vshrl.u32 %v4198, 7
    %v4200 = vsub.s32 0, %v4199
    %v4201 = vrot.slane %v4196, %v4200
    %4204 = vrot.lane.b32.xlu0 %v4187, 96
    %v4205 = vpop.permute.xlu0 %4204
    %v4206 = vsel %vm363, %v4187, 0
    %v4208 = vsel %vm363, %v4205, 0
    %4210 = vmatprep.subr.mxu0 0.0
    %4211 = vmatpush1.xpose.msra.mxu0 0.0
    %4212 = vmatprep.subr.mxu0 0.0
    %4213 = vmatpush1.xpose.msra.mxu0 0.0
    %4214 = vmatprep.subr.mxu0 0.0
    %4215 = vmatpush1.xpose.msra.mxu0 0.0
    %4216 = vmatprep.subr.mxu0 0.0
    %4217 = vmatpush1.xpose.msra.mxu0 0.0
    %4218 = vmatprep.subr.mxu0 0.0
    %4219 = vmatpush1.xpose.msra.mxu0 0.0
    %4220 = vmatprep.subr.mxu0 0.0
    %4221 = vmatpush1.xpose.msra.mxu0 0.0
    %4222 = vmatprep.subr.mxu0 0.0
    %4223 = vmatpush1.xpose.msra.mxu0 0.0
    %4224 = vmatprep.subr.mxu0 0.0
    %4225 = vmatpush1.xpose.msra.mxu0 0.0
    %4226 = vmatprep.subr.mxu0 0.0
    %4227 = vmatpush1.xpose.msra.mxu0 0.0
    %4228 = vmatprep.subr.mxu0 0.0
    %4229 = vmatpush1.xpose.msra.mxu0 0.0
    %4230 = vmatprep.subr.mxu0 0.0
    %4231 = vmatpush1.xpose.msra.mxu0 0.0
    %4232 = vmatprep.subr.mxu0 0.0
    %4233 = vmatpush1.xpose.msra.mxu0 0.0
    %4234 = vmatprep.subr.mxu0 0.0
    %4235 = vmatpush1.xpose.msra.mxu0 0.0
    %4236 = vmatprep.subr.mxu0 0.0
    %4237 = vmatpush1.xpose.msra.mxu0 0.0
    %4238 = vmatprep.subr.mxu0 0.0
    %4239 = vmatpush1.xpose.msra.mxu0 0.0
    %4240 = vmatprep.subr.mxu0 0.0
    %4241 = vmatpush1.xpose.msra.mxu0 %v4208
    %4242 = vmatprep.subr.mxu0 0.0
    %4243 = vmatpush2.xpose.msra.mxu0 0.0
    %4244 = vmatprep.subr.mxu0 0.0
    %4245 = vmatpush2.xpose.msra.mxu0 0.0
    %4246 = vmatprep.subr.mxu0 0.0
    %4247 = vmatpush2.xpose.msra.mxu0 0.0
    %4248 = vmatprep.subr.mxu0 0.0
    %4249 = vmatpush2.xpose.msra.mxu0 0.0
    %4250 = vmatprep.subr.mxu0 0.0
    %4251 = vmatpush2.xpose.msra.mxu0 0.0
    %4252 = vmatprep.subr.mxu0 0.0
    %4253 = vmatpush2.xpose.msra.mxu0 0.0
    %4254 = vmatprep.subr.mxu0 0.0
    %4255 = vmatpush2.xpose.msra.mxu0 0.0
    %4256 = vmatprep.subr.mxu0 0.0
    %4257 = vmatpush2.xpose.msra.mxu0 0.0
    %4258 = vmatprep.subr.mxu0 0.0
    %4259 = vmatpush2.xpose.msra.mxu0 0.0
    %4260 = vmatprep.subr.mxu0 0.0
    %4261 = vmatpush2.xpose.msra.mxu0 0.0
    %4262 = vmatprep.subr.mxu0 0.0
    %4263 = vmatpush2.xpose.msra.mxu0 0.0
    %4264 = vmatprep.subr.mxu0 0.0
    %4265 = vmatpush2.xpose.msra.mxu0 0.0
    %4266 = vmatprep.subr.mxu0 0.0
    %4267 = vmatpush2.xpose.msra.mxu0 0.0
    %4268 = vmatprep.subr.mxu0 0.0
    %4269 = vmatpush2.xpose.msra.mxu0 0.0
    %4270 = vmatprep.subr.mxu0 0.0
    %4271 = vmatpush2.xpose.msra.mxu0 0.0
    %4272 = vmatprep.subr.mxu0 0.0
    %4273 = vmatpush2.xpose.msra.mxu0 0.0
    %4274 = vmatprep.mubr.f32.mxu0 0.0
    %4275 = vmatmul.mubr.f32.gmra.mxu0 %v4206
    %v4276 = vpop.f32.mrf.mxu0
    %v4277 = vadd.f32 0.0, %v4276
    %v4278 = vpop.f32.mrf.mxu0
    %4279 = vdwg.mxu0
    %4281 = vrot.lane.b32.xlu0 %v4192, 96
    %v4282 = vpop.permute.xlu0 %4281
    %v4283 = vsel %vm363, %v4192, 0
    %v4285 = vsel %vm363, %v4282, 0
    %4287 = vmatprep.subr.mxu0 0.0
    %4288 = vmatpush1.xpose.msra.mxu0 0.0
    %4289 = vmatprep.subr.mxu0 0.0
    %4290 = vmatpush1.xpose.msra.mxu0 0.0
    %4291 = vmatprep.subr.mxu0 0.0
    %4292 = vmatpush1.xpose.msra.mxu0 0.0
    %4293 = vmatprep.subr.mxu0 0.0
    %4294 = vmatpush1.xpose.msra.mxu0 0.0
    %4295 = vmatprep.subr.mxu0 0.0
    %4296 = vmatpush1.xpose.msra.mxu0 0.0
    %4297 = vmatprep.subr.mxu0 0.0
    %4298 = vmatpush1.xpose.msra.mxu0 0.0
    %4299 = vmatprep.subr.mxu0 0.0
    %4300 = vmatpush1.xpose.msra.mxu0 0.0
    %4301 = vmatprep.subr.mxu0 0.0
    %4302 = vmatpush1.xpose.msra.mxu0 0.0
    %4303 = vmatprep.subr.mxu0 0.0
    %4304 = vmatpush1.xpose.msra.mxu0 0.0
    %4305 = vmatprep.subr.mxu0 0.0
    %4306 = vmatpush1.xpose.msra.mxu0 0.0
    %4307 = vmatprep.subr.mxu0 0.0
    %4308 = vmatpush1.xpose.msra.mxu0 0.0
    %4309 = vmatprep.subr.mxu0 0.0
    %4310 = vmatpush1.xpose.msra.mxu0 0.0
    %4311 = vmatprep.subr.mxu0 0.0
    %4312 = vmatpush1.xpose.msra.mxu0 0.0
    %4313 = vmatprep.subr.mxu0 0.0
    %4314 = vmatpush1.xpose.msra.mxu0 0.0
    %4315 = vmatprep.subr.mxu0 0.0
    %4316 = vmatpush1.xpose.msra.mxu0 0.0
    %4317 = vmatprep.subr.mxu0 0.0
    %4318 = vmatpush1.xpose.msra.mxu0 %v4285
    %4319 = vmatprep.subr.mxu0 0.0
    %4320 = vmatpush2.xpose.msra.mxu0 0.0
    %4321 = vmatprep.subr.mxu0 0.0
    %4322 = vmatpush2.xpose.msra.mxu0 0.0
    %4323 = vmatprep.subr.mxu0 0.0
    %4324 = vmatpush2.xpose.msra.mxu0 0.0
    %4325 = vmatprep.subr.mxu0 0.0
    %4326 = vmatpush2.xpose.msra.mxu0 0.0
    %4327 = vmatprep.subr.mxu0 0.0
    %4328 = vmatpush2.xpose.msra.mxu0 0.0
    %4329 = vmatprep.subr.mxu0 0.0
    %4330 = vmatpush2.xpose.msra.mxu0 0.0
    %4331 = vmatprep.subr.mxu0 0.0
    %4332 = vmatpush2.xpose.msra.mxu0 0.0
    %4333 = vmatprep.subr.mxu0 0.0
    %4334 = vmatpush2.xpose.msra.mxu0 0.0
    %4335 = vmatprep.subr.mxu0 0.0
    %4336 = vmatpush2.xpose.msra.mxu0 0.0
    %4337 = vmatprep.subr.mxu0 0.0
    %4338 = vmatpush2.xpose.msra.mxu0 0.0
    %4339 = vmatprep.subr.mxu0 0.0
    %4340 = vmatpush2.xpose.msra.mxu0 0.0
    %4341 = vmatprep.subr.mxu0 0.0
    %4342 = vmatpush2.xpose.msra.mxu0 0.0
    %4343 = vmatprep.subr.mxu0 0.0
    %4344 = vmatpush2.xpose.msra.mxu0 0.0
    %4345 = vmatprep.subr.mxu0 0.0
    %4346 = vmatpush2.xpose.msra.mxu0 0.0
    %4347 = vmatprep.subr.mxu0 0.0
    %4348 = vmatpush2.xpose.msra.mxu0 0.0
    %4349 = vmatprep.subr.mxu0 0.0
    %4350 = vmatpush2.xpose.msra.mxu0 0.0
    %4351 = vmatprep.mubr.f32.mxu0 0.0
    %4352 = vmatmul.mubr.f32.gmra.mxu0 %v4283
    %v4353 = vpop.f32.mrf.mxu0
    %v4354 = vadd.f32 0.0, %v4353
    %v4355 = vpop.f32.mrf.mxu0
    %4356 = vdwg.mxu0
    %v4357 = vsel %vm363, %v4277, -inf
    %4358 = vmax.xlane.f32.xlu0 %v4357
    %v4359 = vpop.xlane.xlu0 %4358
    %v4360 = vsel %vm363, %v4354, -inf
    %4361 = vmax.xlane.f32.xlu0 %v4360
    %v4362 = vpop.xlane.xlu0 %4361
    %v4363 = vsub.f32 %v4277, %v4359
    %v4364 = vsub.f32 %v4354, %v4362
    %v4365 = vmul.f32 %v4363, 1.442695
    %v4366 = vpow.pop %v4365
    %v4367 = vmul.f32 %v4364, 1.442695
    %v4368 = vpow.pop %v4367
    %v4369 = vsel %vm363, %v4366, 0.0
    %4370 = vadd.xlane.f32.xlu0 %v4369
    %v4371 = vpop.xlane.xlu0 %4370
    %v4372 = vsel %vm363, %v4368, 0.0
    %4373 = vadd.xlane.f32.xlu0 %v4372
    %v4374 = vpop.xlane.xlu0 %4373
    %v4375 = vrcp.pop %v4371
    %v4376 = vrcp.pop %v4374
    %v4377 = vmul.f32 %v4366, %v4375
    %v4378 = vmul.f32 %v4368, %v4376
    %4379 = vrot.lane.b32.xlu0 %v4187, 64
    %v4380 = vpop.permute.xlu0 %4379
    %v4383 = vsel %vm363, %v4377, 0
    %4385 = vmatprep.subr.mxu0 0.0
    %4386 = vmatpush1.msra.mxu0 0.0
    %4387 = vmatprep.subr.mxu0 0.0
    %4388 = vmatpush1.msra.mxu0 0.0
    %4389 = vmatprep.subr.mxu0 0.0
    %4390 = vmatpush1.msra.mxu0 0.0
    %4391 = vmatprep.subr.mxu0 0.0
    %4392 = vmatpush1.msra.mxu0 0.0
    %4393 = vmatprep.subr.mxu0 0.0
    %4394 = vmatpush1.msra.mxu0 0.0
    %4395 = vmatprep.subr.mxu0 0.0
    %4396 = vmatpush1.msra.mxu0 0.0
    %4397 = vmatprep.subr.mxu0 0.0
    %4398 = vmatpush1.msra.mxu0 0.0
    %4399 = vmatprep.subr.mxu0 0.0
    %4400 = vmatpush1.msra.mxu0 0.0
    %4401 = vmatprep.subr.mxu0 0.0
    %4402 = vmatpush1.msra.mxu0 0.0
    %4403 = vmatprep.subr.mxu0 0.0
    %4404 = vmatpush1.msra.mxu0 0.0
    %4405 = vmatprep.subr.mxu0 0.0
    %4406 = vmatpush1.msra.mxu0 0.0
    %4407 = vmatprep.subr.mxu0 0.0
    %4408 = vmatpush1.msra.mxu0 0.0
    %4409 = vmatprep.subr.mxu0 0.0
    %4410 = vmatpush1.msra.mxu0 0.0
    %4411 = vmatprep.subr.mxu0 0.0
    %4412 = vmatpush1.msra.mxu0 0.0
    %4413 = vmatprep.subr.mxu0 0.0
    %4414 = vmatpush1.msra.mxu0 0.0
    %4415 = vmatprep.subr.mxu0 0.0
    %4416 = vmatpush1.msra.mxu0 %v4380
    %4417 = vmatprep.subr.mxu0 0.0
    %4418 = vmatpush2.msra.mxu0 0.0
    %4419 = vmatprep.subr.mxu0 0.0
    %4420 = vmatpush2.msra.mxu0 0.0
    %4421 = vmatprep.subr.mxu0 0.0
    %4422 = vmatpush2.msra.mxu0 0.0
    %4423 = vmatprep.subr.mxu0 0.0
    %4424 = vmatpush2.msra.mxu0 0.0
    %4425 = vmatprep.subr.mxu0 0.0
    %4426 = vmatpush2.msra.mxu0 0.0
    %4427 = vmatprep.subr.mxu0 0.0
    %4428 = vmatpush2.msra.mxu0 0.0
    %4429 = vmatprep.subr.mxu0 0.0
    %4430 = vmatpush2.msra.mxu0 0.0
    %4431 = vmatprep.subr.mxu0 0.0
    %4432 = vmatpush2.msra.mxu0 0.0
    %4433 = vmatprep.subr.mxu0 0.0
    %4434 = vmatpush2.msra.mxu0 0.0
    %4435 = vmatprep.subr.mxu0 0.0
    %4436 = vmatpush2.msra.mxu0 0.0
    %4437 = vmatprep.subr.mxu0 0.0
    %4438 = vmatpush2.msra.mxu0 0.0
    %4439 = vmatprep.subr.mxu0 0.0
    %4440 = vmatpush2.msra.mxu0 0.0
    %4441 = vmatprep.subr.mxu0 0.0
    %4442 = vmatpush2.msra.mxu0 0.0
    %4443 = vmatprep.subr.mxu0 0.0
    %4444 = vmatpush2.msra.mxu0 0.0
    %4445 = vmatprep.subr.mxu0 0.0
    %4446 = vmatpush2.msra.mxu0 0.0
    %4447 = vmatprep.subr.mxu0 0.0
    %4448 = vmatpush2.msra.mxu0 0.0
    %4449 = vmatprep.mubr.f32.mxu0 0.0
    %4450 = vmatmul.mubr.f32.gmra.mxu0 %v4383
    %v4451 = vpop.f32.mrf.mxu0
    %v4452 = vadd.f32 0.0, %v4451
    %v4453 = vpop.f32.mrf.mxu0
    %4454 = vdwg.mxu0
    %4455 = vrot.lane.b32.xlu0 %v4192, 64
    %v4456 = vpop.permute.xlu0 %4455
    %v4459 = vsel %vm363, %v4378, 0
    %4461 = vmatprep.subr.mxu0 0.0
    %4462 = vmatpush1.msra.mxu0 0.0
    %4463 = vmatprep.subr.mxu0 0.0
    %4464 = vmatpush1.msra.mxu0 0.0
    %4465 = vmatprep.subr.mxu0 0.0
    %4466 = vmatpush1.msra.mxu0 0.0
    %4467 = vmatprep.subr.mxu0 0.0
    %4468 = vmatpush1.msra.mxu0 0.0
    %4469 = vmatprep.subr.mxu0 0.0
    %4470 = vmatpush1.msra.mxu0 0.0
    %4471 = vmatprep.subr.mxu0 0.0
    %4472 = vmatpush1.msra.mxu0 0.0
    %4473 = vmatprep.subr.mxu0 0.0
    %4474 = vmatpush1.msra.mxu0 0.0
    %4475 = vmatprep.subr.mxu0 0.0
    %4476 = vmatpush1.msra.mxu0 0.0
    %4477 = vmatprep.subr.mxu0 0.0
    %4478 = vmatpush1.msra.mxu0 0.0
    %4479 = vmatprep.subr.mxu0 0.0
    %4480 = vmatpush1.msra.mxu0 0.0
    %4481 = vmatprep.subr.mxu0 0.0
    %4482 = vmatpush1.msra.mxu0 0.0
    %4483 = vmatprep.subr.mxu0 0.0
    %4484 = vmatpush1.msra.mxu0 0.0
    %4485 = vmatprep.subr.mxu0 0.0
    %4486 = vmatpush1.msra.mxu0 0.0
    %4487 = vmatprep.subr.mxu0 0.0
    %4488 = vmatpush1.msra.mxu0 0.0
    %4489 = vmatprep.subr.mxu0 0.0
    %4490 = vmatpush1.msra.mxu0 0.0
    %4491 = vmatprep.subr.mxu0 0.0
    %4492 = vmatpush1.msra.mxu0 %v4456
    %4493 = vmatprep.subr.mxu0 0.0
    %4494 = vmatpush2.msra.mxu0 0.0
    %4495 = vmatprep.subr.mxu0 0.0
    %4496 = vmatpush2.msra.mxu0 0.0
    %4497 = vmatprep.subr.mxu0 0.0
    %4498 = vmatpush2.msra.mxu0 0.0
    %4499 = vmatprep.subr.mxu0 0.0
    %4500 = vmatpush2.msra.mxu0 0.0
    %4501 = vmatprep.subr.mxu0 0.0
    %4502 = vmatpush2.msra.mxu0 0.0
    %4503 = vmatprep.subr.mxu0 0.0
    %4504 = vmatpush2.msra.mxu0 0.0
    %4505 = vmatprep.subr.mxu0 0.0
    %4506 = vmatpush2.msra.mxu0 0.0
    %4507 = vmatprep.subr.mxu0 0.0
    %4508 = vmatpush2.msra.mxu0 0.0
    %4509 = vmatprep.subr.mxu0 0.0
    %4510 = vmatpush2.msra.mxu0 0.0
    %4511 = vmatprep.subr.mxu0 0.0
    %4512 = vmatpush2.msra.mxu0 0.0
    %4513 = vmatprep.subr.mxu0 0.0
    %4514 = vmatpush2.msra.mxu0 0.0
    %4515 = vmatprep.subr.mxu0 0.0
    %4516 = vmatpush2.msra.mxu0 0.0
    %4517 = vmatprep.subr.mxu0 0.0
    %4518 = vmatpush2.msra.mxu0 0.0
    %4519 = vmatprep.subr.mxu0 0.0
    %4520 = vmatpush2.msra.mxu0 0.0
    %4521 = vmatprep.subr.mxu0 0.0
    %4522 = vmatpush2.msra.mxu0 0.0
    %4523 = vmatprep.subr.mxu0 0.0
    %4524 = vmatpush2.msra.mxu0 0.0
    %4525 = vmatprep.mubr.f32.mxu0 0.0
    %4526 = vmatmul.mubr.f32.gmra.mxu0 %v4459
    %v4527 = vpop.f32.mrf.mxu0
    %v4528 = vadd.f32 0.0, %v4527
    %v4529 = vpop.f32.mrf.mxu0
    %4530 = vdwg.mxu0
    %s4531 = scalar_lea.vmem %s4, 32
    %v4532 = vld [vmem:[%s4531] sm:$0xff]
    %v4534 = vsel %vm363, %v4452, 0
    %v4537 = vsel %vm363, %v4528, 0
    %4539 = vmatprep.subr.mxu0 0.0
    %4540 = vmatpush1.msra.mxu0 0.0
    %4541 = vmatprep.subr.mxu0 0.0
    %4542 = vmatpush1.msra.mxu0 0.0
    %4543 = vmatprep.subr.mxu0 0.0
    %4544 = vmatpush1.msra.mxu0 0.0
    %4545 = vmatprep.subr.mxu0 0.0
    %4546 = vmatpush1.msra.mxu0 0.0
    %4547 = vmatprep.subr.mxu0 0.0
    %4548 = vmatpush1.msra.mxu0 0.0
    %4549 = vmatprep.subr.mxu0 0.0
    %4550 = vmatpush1.msra.mxu0 0.0
    %4551 = vmatprep.subr.mxu0 0.0
    %4552 = vmatpush1.msra.mxu0 0.0
    %4553 = vmatprep.subr.mxu0 0.0
    %4554 = vmatpush1.msra.mxu0 0.0
    %4555 = vmatprep.subr.mxu0 0.0
    %4556 = vmatpush1.msra.mxu0 0.0
    %4557 = vmatprep.subr.mxu0 0.0
    %4558 = vmatpush1.msra.mxu0 0.0
    %4559 = vmatprep.subr.mxu0 0.0
    %4560 = vmatpush1.msra.mxu0 0.0
    %4561 = vmatprep.subr.mxu0 0.0
    %4562 = vmatpush1.msra.mxu0 0.0
    %4563 = vmatprep.subr.mxu0 0.0
    %4564 = vmatpush1.msra.mxu0 0.0
    %4565 = vmatprep.subr.mxu0 0.0
    %4566 = vmatpush1.msra.mxu0 0.0
    %4567 = vmatprep.subr.mxu0 0.0
    %4568 = vmatpush1.msra.mxu0 0.0
    %4569 = vmatprep.subr.mxu0 0.0
    %4570 = vmatpush1.msra.mxu0 %v4532
    %4571 = vmatprep.subr.mxu0 0.0
    %4572 = vmatpush2.msra.mxu0 0.0
    %4573 = vmatprep.subr.mxu0 0.0
    %4574 = vmatpush2.msra.mxu0 0.0
    %4575 = vmatprep.subr.mxu0 0.0
    %4576 = vmatpush2.msra.mxu0 0.0
    %4577 = vmatprep.subr.mxu0 0.0
    %4578 = vmatpush2.msra.mxu0 0.0
    %4579 = vmatprep.subr.mxu0 0.0
    %4580 = vmatpush2.msra.mxu0 0.0
    %4581 = vmatprep.subr.mxu0 0.0
    %4582 = vmatpush2.msra.mxu0 0.0
    %4583 = vmatprep.subr.mxu0 0.0
    %4584 = vmatpush2.msra.mxu0 0.0
    %4585 = vmatprep.subr.mxu0 0.0
    %4586 = vmatpush2.msra.mxu0 0.0
    %4587 = vmatprep.subr.mxu0 0.0
    %4588 = vmatpush2.msra.mxu0 0.0
    %4589 = vmatprep.subr.mxu0 0.0
    %4590 = vmatpush2.msra.mxu0 0.0
    %4591 = vmatprep.subr.mxu0 0.0
    %4592 = vmatpush2.msra.mxu0 0.0
    %4593 = vmatprep.subr.mxu0 0.0
    %4594 = vmatpush2.msra.mxu0 0.0
    %4595 = vmatprep.subr.mxu0 0.0
    %4596 = vmatpush2.msra.mxu0 0.0
    %4597 = vmatprep.subr.mxu0 0.0
    %4598 = vmatpush2.msra.mxu0 0.0
    %4599 = vmatprep.subr.mxu0 0.0
    %4600 = vmatpush2.msra.mxu0 0.0
    %4601 = vmatprep.subr.mxu0 0.0
    %4602 = vmatpush2.msra.mxu0 0.0
    %4603 = vmatprep.mubr.f32.mxu0 0.0
    %4604 = vmatmul.mubr.f32.gmra.mxu0 %v4534
    %v4605 = vpop.f32.mrf.mxu0
    %v4606 = vadd.f32 0.0, %v4605
    %v4607 = vpop.f32.mrf.mxu0
    %4608 = vmatprep.mubr.f32.mxu0 0.0
    %4609 = vmatmul.mubr.f32.gmra.mxu0 %v4537
    %v4610 = vpop.f32.mrf.mxu0
    %v4611 = vadd.f32 0.0, %v4610
    %v4612 = vpop.f32.mrf.mxu0
    %4613 = vdwg.mxu0
    %v4614 = vadd.f32 %v4201, %v4606
    %v4615 = vadd.f32 %v4201, %v4611
    %4616 = vrot.lane.b32.xlu0 %v4187, 120
    %v4617 = vpop.permute.xlu0 %4616
    %4618 = vrot.lane.b32.xlu0 %v4187, 88
    %v4619 = vpop.permute.xlu0 %4618
    %v4620 = vsel %vm363, %v4617, 0
    %v4622 = vsel %vm363, %v4619, 0
    %4624 = vmatprep.subr.mxu0 0.0
    %4625 = vmatpush1.xpose.msra.mxu0 0.0
    %4626 = vmatprep.subr.mxu0 0.0
    %4627 = vmatpush1.xpose.msra.mxu0 0.0
    %4628 = vmatprep.subr.mxu0 0.0
    %4629 = vmatpush1.xpose.msra.mxu0 0.0
    %4630 = vmatprep.subr.mxu0 0.0
    %4631 = vmatpush1.xpose.msra.mxu0 0.0
    %4632 = vmatprep.subr.mxu0 0.0
    %4633 = vmatpush1.xpose.msra.mxu0 0.0
    %4634 = vmatprep.subr.mxu0 0.0
    %4635 = vmatpush1.xpose.msra.mxu0 0.0
    %4636 = vmatprep.subr.mxu0 0.0
    %4637 = vmatpush1.xpose.msra.mxu0 0.0
    %4638 = vmatprep.subr.mxu0 0.0
    %4639 = vmatpush1.xpose.msra.mxu0 0.0
    %4640 = vmatprep.subr.mxu0 0.0
    %4641 = vmatpush1.xpose.msra.mxu0 0.0
    %4642 = vmatprep.subr.mxu0 0.0
    %4643 = vmatpush1.xpose.msra.mxu0 0.0
    %4644 = vmatprep.subr.mxu0 0.0
    %4645 = vmatpush1.xpose.msra.mxu0 0.0
    %4646 = vmatprep.subr.mxu0 0.0
    %4647 = vmatpush1.xpose.msra.mxu0 0.0
    %4648 = vmatprep.subr.mxu0 0.0
    %4649 = vmatpush1.xpose.msra.mxu0 0.0
    %4650 = vmatprep.subr.mxu0 0.0
    %4651 = vmatpush1.xpose.msra.mxu0 0.0
    %4652 = vmatprep.subr.mxu0 0.0
    %4653 = vmatpush1.xpose.msra.mxu0 0.0
    %4654 = vmatprep.subr.mxu0 0.0
    %4655 = vmatpush1.xpose.msra.mxu0 %v4622
    %4656 = vmatprep.subr.mxu0 0.0
    %4657 = vmatpush2.xpose.msra.mxu0 0.0
    %4658 = vmatprep.subr.mxu0 0.0
    %4659 = vmatpush2.xpose.msra.mxu0 0.0
    %4660 = vmatprep.subr.mxu0 0.0
    %4661 = vmatpush2.xpose.msra.mxu0 0.0
    %4662 = vmatprep.subr.mxu0 0.0
    %4663 = vmatpush2.xpose.msra.mxu0 0.0
    %4664 = vmatprep.subr.mxu0 0.0
    %4665 = vmatpush2.xpose.msra.mxu0 0.0
    %4666 = vmatprep.subr.mxu0 0.0
    %4667 = vmatpush2.xpose.msra.mxu0 0.0
    %4668 = vmatprep.subr.mxu0 0.0
    %4669 = vmatpush2.xpose.msra.mxu0 0.0
    %4670 = vmatprep.subr.mxu0 0.0
    %4671 = vmatpush2.xpose.msra.mxu0 0.0
    %4672 = vmatprep.subr.mxu0 0.0
    %4673 = vmatpush2.xpose.msra.mxu0 0.0
    %4674 = vmatprep.subr.mxu0 0.0
    %4675 = vmatpush2.xpose.msra.mxu0 0.0
    %4676 = vmatprep.subr.mxu0 0.0
    %4677 = vmatpush2.xpose.msra.mxu0 0.0
    %4678 = vmatprep.subr.mxu0 0.0
    %4679 = vmatpush2.xpose.msra.mxu0 0.0
    %4680 = vmatprep.subr.mxu0 0.0
    %4681 = vmatpush2.xpose.msra.mxu0 0.0
    %4682 = vmatprep.subr.mxu0 0.0
    %4683 = vmatpush2.xpose.msra.mxu0 0.0
    %4684 = vmatprep.subr.mxu0 0.0
    %4685 = vmatpush2.xpose.msra.mxu0 0.0
    %4686 = vmatprep.subr.mxu0 0.0
    %4687 = vmatpush2.xpose.msra.mxu0 0.0
    %4688 = vmatprep.mubr.f32.mxu0 0.0
    %4689 = vmatmul.mubr.f32.gmra.mxu0 %v4620
    %v4690 = vpop.f32.mrf.mxu0
    %v4691 = vadd.f32 0.0, %v4690
    %v4692 = vpop.f32.mrf.mxu0
    %4693 = vdwg.mxu0
    %4694 = vrot.lane.b32.xlu0 %v4192, 120
    %v4695 = vpop.permute.xlu0 %4694
    %4696 = vrot.lane.b32.xlu0 %v4192, 88
    %v4697 = vpop.permute.xlu0 %4696
    %v4698 = vsel %vm363, %v4695, 0
    %v4700 = vsel %vm363, %v4697, 0
    %4702 = vmatprep.subr.mxu0 0.0
    %4703 = vmatpush1.xpose.msra.mxu0 0.0
    %4704 = vmatprep.subr.mxu0 0.0
    %4705 = vmatpush1.xpose.msra.mxu0 0.0
    %4706 = vmatprep.subr.mxu0 0.0
    %4707 = vmatpush1.xpose.msra.mxu0 0.0
    %4708 = vmatprep.subr.mxu0 0.0
    %4709 = vmatpush1.xpose.msra.mxu0 0.0
    %4710 = vmatprep.subr.mxu0 0.0
    %4711 = vmatpush1.xpose.msra.mxu0 0.0
    %4712 = vmatprep.subr.mxu0 0.0
    %4713 = vmatpush1.xpose.msra.mxu0 0.0
    %4714 = vmatprep.subr.mxu0 0.0
    %4715 = vmatpush1.xpose.msra.mxu0 0.0
    %4716 = vmatprep.subr.mxu0 0.0
    %4717 = vmatpush1.xpose.msra.mxu0 0.0
    %4718 = vmatprep.subr.mxu0 0.0
    %4719 = vmatpush1.xpose.msra.mxu0 0.0
    %4720 = vmatprep.subr.mxu0 0.0
    %4721 = vmatpush1.xpose.msra.mxu0 0.0
    %4722 = vmatprep.subr.mxu0 0.0
    %4723 = vmatpush1.xpose.msra.mxu0 0.0
    %4724 = vmatprep.subr.mxu0 0.0
    %4725 = vmatpush1.xpose.msra.mxu0 0.0
    %4726 = vmatprep.subr.mxu0 0.0
    %4727 = vmatpush1.xpose.msra.mxu0 0.0
    %4728 = vmatprep.subr.mxu0 0.0
    %4729 = vmatpush1.xpose.msra.mxu0 0.0
    %4730 = vmatprep.subr.mxu0 0.0
    %4731 = vmatpush1.xpose.msra.mxu0 0.0
    %4732 = vmatprep.subr.mxu0 0.0
    %4733 = vmatpush1.xpose.msra.mxu0 %v4700
    %4734 = vmatprep.subr.mxu0 0.0
    %4735 = vmatpush2.xpose.msra.mxu0 0.0
    %4736 = vmatprep.subr.mxu0 0.0
    %4737 = vmatpush2.xpose.msra.mxu0 0.0
    %4738 = vmatprep.subr.mxu0 0.0
    %4739 = vmatpush2.xpose.msra.mxu0 0.0
    %4740 = vmatprep.subr.mxu0 0.0
    %4741 = vmatpush2.xpose.msra.mxu0 0.0
    %4742 = vmatprep.subr.mxu0 0.0
    %4743 = vmatpush2.xpose.msra.mxu0 0.0
    %4744 = vmatprep.subr.mxu0 0.0
    %4745 = vmatpush2.xpose.msra.mxu0 0.0
    %4746 = vmatprep.subr.mxu0 0.0
    %4747 = vmatpush2.xpose.msra.mxu0 0.0
    %4748 = vmatprep.subr.mxu0 0.0
    %4749 = vmatpush2.xpose.msra.mxu0 0.0
    %4750 = vmatprep.subr.mxu0 0.0
    %4751 = vmatpush2.xpose.msra.mxu0 0.0
    %4752 = vmatprep.subr.mxu0 0.0
    %4753 = vmatpush2.xpose.msra.mxu0 0.0
    %4754 = vmatprep.subr.mxu0 0.0
    %4755 = vmatpush2.xpose.msra.mxu0 0.0
    %4756 = vmatprep.subr.mxu0 0.0
    %4757 = vmatpush2.xpose.msra.mxu0 0.0
    %4758 = vmatprep.subr.mxu0 0.0
    %4759 = vmatpush2.xpose.msra.mxu0 0.0
    %4760 = vmatprep.subr.mxu0 0.0
    %4761 = vmatpush2.xpose.msra.mxu0 0.0
    %4762 = vmatprep.subr.mxu0 0.0
    %4763 = vmatpush2.xpose.msra.mxu0 0.0
    %4764 = vmatprep.subr.mxu0 0.0
    %4765 = vmatpush2.xpose.msra.mxu0 0.0
    %4766 = vmatprep.mubr.f32.mxu0 0.0
    %4767 = vmatmul.mubr.f32.gmra.mxu0 %v4698
    %v4768 = vpop.f32.mrf.mxu0
    %v4769 = vadd.f32 0.0, %v4768
    %v4770 = vpop.f32.mrf.mxu0
    %4771 = vdwg.mxu0
    %v4772 = vsel %vm363, %v4691, -inf
    %4773 = vmax.xlane.f32.xlu0 %v4772
    %v4774 = vpop.xlane.xlu0 %4773
    %v4775 = vsel %vm363, %v4769, -inf
    %4776 = vmax.xlane.f32.xlu0 %v4775
    %v4777 = vpop.xlane.xlu0 %4776
    %v4778 = vsub.f32 %v4691, %v4774
    %v4779 = vsub.f32 %v4769, %v4777
    %v4780 = vmul.f32 %v4778, 1.442695
    %v4781 = vpow.pop %v4780
    %v4782 = vmul.f32 %v4779, 1.442695
    %v4783 = vpow.pop %v4782
    %v4784 = vsel %vm363, %v4781, 0.0
    %4785 = vadd.xlane.f32.xlu0 %v4784
    %v4786 = vpop.xlane.xlu0 %4785
    %v4787 = vsel %vm363, %v4783, 0.0
    %4788 = vadd.xlane.f32.xlu0 %v4787
    %v4789 = vpop.xlane.xlu0 %4788
    %v4790 = vrcp.pop %v4786
    %v4791 = vrcp.pop %v4789
    %v4792 = vmul.f32 %v4781, %v4790
    %v4793 = vmul.f32 %v4783, %v4791
    %4794 = vrot.lane.b32.xlu0 %v4187, 56
    %v4795 = vpop.permute.xlu0 %4794
    %v4798 = vsel %vm363, %v4792, 0
    %4800 = vmatprep.subr.mxu0 0.0
    %4801 = vmatpush1.msra.mxu0 0.0
    %4802 = vmatprep.subr.mxu0 0.0
    %4803 = vmatpush1.msra.mxu0 0.0
    %4804 = vmatprep.subr.mxu0 0.0
    %4805 = vmatpush1.msra.mxu0 0.0
    %4806 = vmatprep.subr.mxu0 0.0
    %4807 = vmatpush1.msra.mxu0 0.0
    %4808 = vmatprep.subr.mxu0 0.0
    %4809 = vmatpush1.msra.mxu0 0.0
    %4810 = vmatprep.subr.mxu0 0.0
    %4811 = vmatpush1.msra.mxu0 0.0
    %4812 = vmatprep.subr.mxu0 0.0
    %4813 = vmatpush1.msra.mxu0 0.0
    %4814 = vmatprep.subr.mxu0 0.0
    %4815 = vmatpush1.msra.mxu0 0.0
    %4816 = vmatprep.subr.mxu0 0.0
    %4817 = vmatpush1.msra.mxu0 0.0
    %4818 = vmatprep.subr.mxu0 0.0
    %4819 = vmatpush1.msra.mxu0 0.0
    %4820 = vmatprep.subr.mxu0 0.0
    %4821 = vmatpush1.msra.mxu0 0.0
    %4822 = vmatprep.subr.mxu0 0.0
    %4823 = vmatpush1.msra.mxu0 0.0
    %4824 = vmatprep.subr.mxu0 0.0
    %4825 = vmatpush1.msra.mxu0 0.0
    %4826 = vmatprep.subr.mxu0 0.0
    %4827 = vmatpush1.msra.mxu0 0.0
    %4828 = vmatprep.subr.mxu0 0.0
    %4829 = vmatpush1.msra.mxu0 0.0
    %4830 = vmatprep.subr.mxu0 0.0
    %4831 = vmatpush1.msra.mxu0 %v4795
    %4832 = vmatprep.subr.mxu0 0.0
    %4833 = vmatpush2.msra.mxu0 0.0
    %4834 = vmatprep.subr.mxu0 0.0
    %4835 = vmatpush2.msra.mxu0 0.0
    %4836 = vmatprep.subr.mxu0 0.0
    %4837 = vmatpush2.msra.mxu0 0.0
    %4838 = vmatprep.subr.mxu0 0.0
    %4839 = vmatpush2.msra.mxu0 0.0
    %4840 = vmatprep.subr.mxu0 0.0
    %4841 = vmatpush2.msra.mxu0 0.0
    %4842 = vmatprep.subr.mxu0 0.0
    %4843 = vmatpush2.msra.mxu0 0.0
    %4844 = vmatprep.subr.mxu0 0.0
    %4845 = vmatpush2.msra.mxu0 0.0
    %4846 = vmatprep.subr.mxu0 0.0
    %4847 = vmatpush2.msra.mxu0 0.0
    %4848 = vmatprep.subr.mxu0 0.0
    %4849 = vmatpush2.msra.mxu0 0.0
    %4850 = vmatprep.subr.mxu0 0.0
    %4851 = vmatpush2.msra.mxu0 0.0
    %4852 = vmatprep.subr.mxu0 0.0
    %4853 = vmatpush2.msra.mxu0 0.0
    %4854 = vmatprep.subr.mxu0 0.0
    %4855 = vmatpush2.msra.mxu0 0.0
    %4856 = vmatprep.subr.mxu0 0.0
    %4857 = vmatpush2.msra.mxu0 0.0
    %4858 = vmatprep.subr.mxu0 0.0
    %4859 = vmatpush2.msra.mxu0 0.0
    %4860 = vmatprep.subr.mxu0 0.0
    %4861 = vmatpush2.msra.mxu0 0.0
    %4862 = vmatprep.subr.mxu0 0.0
    %4863 = vmatpush2.msra.mxu0 0.0
    %4864 = vmatprep.mubr.f32.mxu0 0.0
    %4865 = vmatmul.mubr.f32.gmra.mxu0 %v4798
    %v4866 = vpop.f32.mrf.mxu0
    %v4867 = vadd.f32 0.0, %v4866
    %v4868 = vpop.f32.mrf.mxu0
    %4869 = vdwg.mxu0
    %4870 = vrot.lane.b32.xlu0 %v4192, 56
    %v4871 = vpop.permute.xlu0 %4870
    %v4874 = vsel %vm363, %v4793, 0
    %4876 = vmatprep.subr.mxu0 0.0
    %4877 = vmatpush1.msra.mxu0 0.0
    %4878 = vmatprep.subr.mxu0 0.0
    %4879 = vmatpush1.msra.mxu0 0.0
    %4880 = vmatprep.subr.mxu0 0.0
    %4881 = vmatpush1.msra.mxu0 0.0
    %4882 = vmatprep.subr.mxu0 0.0
    %4883 = vmatpush1.msra.mxu0 0.0
    %4884 = vmatprep.subr.mxu0 0.0
    %4885 = vmatpush1.msra.mxu0 0.0
    %4886 = vmatprep.subr.mxu0 0.0
    %4887 = vmatpush1.msra.mxu0 0.0
    %4888 = vmatprep.subr.mxu0 0.0
    %4889 = vmatpush1.msra.mxu0 0.0
    %4890 = vmatprep.subr.mxu0 0.0
    %4891 = vmatpush1.msra.mxu0 0.0
    %4892 = vmatprep.subr.mxu0 0.0
    %4893 = vmatpush1.msra.mxu0 0.0
    %4894 = vmatprep.subr.mxu0 0.0
    %4895 = vmatpush1.msra.mxu0 0.0
    %4896 = vmatprep.subr.mxu0 0.0
    %4897 = vmatpush1.msra.mxu0 0.0
    %4898 = vmatprep.subr.mxu0 0.0
    %4899 = vmatpush1.msra.mxu0 0.0
    %4900 = vmatprep.subr.mxu0 0.0
    %4901 = vmatpush1.msra.mxu0 0.0
    %4902 = vmatprep.subr.mxu0 0.0
    %4903 = vmatpush1.msra.mxu0 0.0
    %4904 = vmatprep.subr.mxu0 0.0
    %4905 = vmatpush1.msra.mxu0 0.0
    %4906 = vmatprep.subr.mxu0 0.0
    %4907 = vmatpush1.msra.mxu0 %v4871
    %4908 = vmatprep.subr.mxu0 0.0
    %4909 = vmatpush2.msra.mxu0 0.0
    %4910 = vmatprep.subr.mxu0 0.0
    %4911 = vmatpush2.msra.mxu0 0.0
    %4912 = vmatprep.subr.mxu0 0.0
    %4913 = vmatpush2.msra.mxu0 0.0
    %4914 = vmatprep.subr.mxu0 0.0
    %4915 = vmatpush2.msra.mxu0 0.0
    %4916 = vmatprep.subr.mxu0 0.0
    %4917 = vmatpush2.msra.mxu0 0.0
    %4918 = vmatprep.subr.mxu0 0.0
    %4919 = vmatpush2.msra.mxu0 0.0
    %4920 = vmatprep.subr.mxu0 0.0
    %4921 = vmatpush2.msra.mxu0 0.0
    %4922 = vmatprep.subr.mxu0 0.0
    %4923 = vmatpush2.msra.mxu0 0.0
    %4924 = vmatprep.subr.mxu0 0.0
    %4925 = vmatpush2.msra.mxu0 0.0
    %4926 = vmatprep.subr.mxu0 0.0
    %4927 = vmatpush2.msra.mxu0 0.0
    %4928 = vmatprep.subr.mxu0 0.0
    %4929 = vmatpush2.msra.mxu0 0.0
    %4930 = vmatprep.subr.mxu0 0.0
    %4931 = vmatpush2.msra.mxu0 0.0
    %4932 = vmatprep.subr.mxu0 0.0
    %4933 = vmatpush2.msra.mxu0 0.0
    %4934 = vmatprep.subr.mxu0 0.0
    %4935 = vmatpush2.msra.mxu0 0.0
    %4936 = vmatprep.subr.mxu0 0.0
    %4937 = vmatpush2.msra.mxu0 0.0
    %4938 = vmatprep.subr.mxu0 0.0
    %4939 = vmatpush2.msra.mxu0 0.0
    %4940 = vmatprep.mubr.f32.mxu0 0.0
    %4941 = vmatmul.mubr.f32.gmra.mxu0 %v4874
    %v4942 = vpop.f32.mrf.mxu0
    %v4943 = vadd.f32 0.0, %v4942
    %v4944 = vpop.f32.mrf.mxu0
    %4945 = vdwg.mxu0
    %v4946 = vld [vmem:[%s4531 + $0x8] sm:$0xff]
    %v4948 = vsel %vm363, %v4867, 0
    %v4951 = vsel %vm363, %v4943, 0
    %4953 = vmatprep.subr.mxu0 0.0
    %4954 = vmatpush1.msra.mxu0 0.0
    %4955 = vmatprep.subr.mxu0 0.0
    %4956 = vmatpush1.msra.mxu0 0.0
    %4957 = vmatprep.subr.mxu0 0.0
    %4958 = vmatpush1.msra.mxu0 0.0
    %4959 = vmatprep.subr.mxu0 0.0
    %4960 = vmatpush1.msra.mxu0 0.0
    %4961 = vmatprep.subr.mxu0 0.0
    %4962 = vmatpush1.msra.mxu0 0.0
    %4963 = vmatprep.subr.mxu0 0.0
    %4964 = vmatpush1.msra.mxu0 0.0
    %4965 = vmatprep.subr.mxu0 0.0
    %4966 = vmatpush1.msra.mxu0 0.0
    %4967 = vmatprep.subr.mxu0 0.0
    %4968 = vmatpush1.msra.mxu0 0.0
    %4969 = vmatprep.subr.mxu0 0.0
    %4970 = vmatpush1.msra.mxu0 0.0
    %4971 = vmatprep.subr.mxu0 0.0
    %4972 = vmatpush1.msra.mxu0 0.0
    %4973 = vmatprep.subr.mxu0 0.0
    %4974 = vmatpush1.msra.mxu0 0.0
    %4975 = vmatprep.subr.mxu0 0.0
    %4976 = vmatpush1.msra.mxu0 0.0
    %4977 = vmatprep.subr.mxu0 0.0
    %4978 = vmatpush1.msra.mxu0 0.0
    %4979 = vmatprep.subr.mxu0 0.0
    %4980 = vmatpush1.msra.mxu0 0.0
    %4981 = vmatprep.subr.mxu0 0.0
    %4982 = vmatpush1.msra.mxu0 0.0
    %4983 = vmatprep.subr.mxu0 0.0
    %4984 = vmatpush1.msra.mxu0 %v4946
    %4985 = vmatprep.subr.mxu0 0.0
    %4986 = vmatpush2.msra.mxu0 0.0
    %4987 = vmatprep.subr.mxu0 0.0
    %4988 = vmatpush2.msra.mxu0 0.0
    %4989 = vmatprep.subr.mxu0 0.0
    %4990 = vmatpush2.msra.mxu0 0.0
    %4991 = vmatprep.subr.mxu0 0.0
    %4992 = vmatpush2.msra.mxu0 0.0
    %4993 = vmatprep.subr.mxu0 0.0
    %4994 = vmatpush2.msra.mxu0 0.0
    %4995 = vmatprep.subr.mxu0 0.0
    %4996 = vmatpush2.msra.mxu0 0.0
    %4997 = vmatprep.subr.mxu0 0.0
    %4998 = vmatpush2.msra.mxu0 0.0
    %4999 = vmatprep.subr.mxu0 0.0
    %5000 = vmatpush2.msra.mxu0 0.0
    %5001 = vmatprep.subr.mxu0 0.0
    %5002 = vmatpush2.msra.mxu0 0.0
    %5003 = vmatprep.subr.mxu0 0.0
    %5004 = vmatpush2.msra.mxu0 0.0
    %5005 = vmatprep.subr.mxu0 0.0
    %5006 = vmatpush2.msra.mxu0 0.0
    %5007 = vmatprep.subr.mxu0 0.0
    %5008 = vmatpush2.msra.mxu0 0.0
    %5009 = vmatprep.subr.mxu0 0.0
    %5010 = vmatpush2.msra.mxu0 0.0
    %5011 = vmatprep.subr.mxu0 0.0
    %5012 = vmatpush2.msra.mxu0 0.0
    %5013 = vmatprep.subr.mxu0 0.0
    %5014 = vmatpush2.msra.mxu0 0.0
    %5015 = vmatprep.subr.mxu0 0.0
    %5016 = vmatpush2.msra.mxu0 0.0
    %5017 = vmatprep.mubr.f32.mxu0 0.0
    %5018 = vmatmul.mubr.f32.gmra.mxu0 %v4948
    %v5019 = vpop.f32.mrf.mxu0
    %v5020 = vadd.f32 0.0, %v5019
    %v5021 = vpop.f32.mrf.mxu0
    %5022 = vmatprep.mubr.f32.mxu0 0.0
    %5023 = vmatmul.mubr.f32.gmra.mxu0 %v4951
    %v5024 = vpop.f32.mrf.mxu0
    %v5025 = vadd.f32 0.0, %v5024
    %v5026 = vpop.f32.mrf.mxu0
    %5027 = vdwg.mxu0
    %v5028 = vadd.f32 %v4614, %v5020
    %v5029 = vadd.f32 %v4615, %v5025
    %5030 = vrot.lane.b32.xlu0 %v4187, 112
    %v5031 = vpop.permute.xlu0 %5030
    %5032 = vrot.lane.b32.xlu0 %v4187, 80
    %v5033 = vpop.permute.xlu0 %5032
    %v5034 = vsel %vm363, %v5031, 0
    %v5036 = vsel %vm363, %v5033, 0
    %5038 = vmatprep.subr.mxu0 0.0
    %5039 = vmatpush1.xpose.msra.mxu0 0.0
    %5040 = vmatprep.subr.mxu0 0.0
    %5041 = vmatpush1.xpose.msra.mxu0 0.0
    %5042 = vmatprep.subr.mxu0 0.0
    %5043 = vmatpush1.xpose.msra.mxu0 0.0
    %5044 = vmatprep.subr.mxu0 0.0
    %5045 = vmatpush1.xpose.msra.mxu0 0.0
    %5046 = vmatprep.subr.mxu0 0.0
    %5047 = vmatpush1.xpose.msra.mxu0 0.0
    %5048 = vmatprep.subr.mxu0 0.0
    %5049 = vmatpush1.xpose.msra.mxu0 0.0
    %5050 = vmatprep.subr.mxu0 0.0
    %5051 = vmatpush1.xpose.msra.mxu0 0.0
    %5052 = vmatprep.subr.mxu0 0.0
    %5053 = vmatpush1.xpose.msra.mxu0 0.0
    %5054 = vmatprep.subr.mxu0 0.0
    %5055 = vmatpush1.xpose.msra.mxu0 0.0
    %5056 = vmatprep.subr.mxu0 0.0
    %5057 = vmatpush1.xpose.msra.mxu0 0.0
    %5058 = vmatprep.subr.mxu0 0.0
    %5059 = vmatpush1.xpose.msra.mxu0 0.0
    %5060 = vmatprep.subr.mxu0 0.0
    %5061 = vmatpush1.xpose.msra.mxu0 0.0
    %5062 = vmatprep.subr.mxu0 0.0
    %5063 = vmatpush1.xpose.msra.mxu0 0.0
    %5064 = vmatprep.subr.mxu0 0.0
    %5065 = vmatpush1.xpose.msra.mxu0 0.0
    %5066 = vmatprep.subr.mxu0 0.0
    %5067 = vmatpush1.xpose.msra.mxu0 0.0
    %5068 = vmatprep.subr.mxu0 0.0
    %5069 = vmatpush1.xpose.msra.mxu0 %v5036
    %5070 = vmatprep.subr.mxu0 0.0
    %5071 = vmatpush2.xpose.msra.mxu0 0.0
    %5072 = vmatprep.subr.mxu0 0.0
    %5073 = vmatpush2.xpose.msra.mxu0 0.0
    %5074 = vmatprep.subr.mxu0 0.0
    %5075 = vmatpush2.xpose.msra.mxu0 0.0
    %5076 = vmatprep.subr.mxu0 0.0
    %5077 = vmatpush2.xpose.msra.mxu0 0.0
    %5078 = vmatprep.subr.mxu0 0.0
    %5079 = vmatpush2.xpose.msra.mxu0 0.0
    %5080 = vmatprep.subr.mxu0 0.0
    %5081 = vmatpush2.xpose.msra.mxu0 0.0
    %5082 = vmatprep.subr.mxu0 0.0
    %5083 = vmatpush2.xpose.msra.mxu0 0.0
    %5084 = vmatprep.subr.mxu0 0.0
    %5085 = vmatpush2.xpose.msra.mxu0 0.0
    %5086 = vmatprep.subr.mxu0 0.0
    %5087 = vmatpush2.xpose.msra.mxu0 0.0
    %5088 = vmatprep.subr.mxu0 0.0
    %5089 = vmatpush2.xpose.msra.mxu0 0.0
    %5090 = vmatprep.subr.mxu0 0.0
    %5091 = vmatpush2.xpose.msra.mxu0 0.0
    %5092 = vmatprep.subr.mxu0 0.0
    %5093 = vmatpush2.xpose.msra.mxu0 0.0
    %5094 = vmatprep.subr.mxu0 0.0
    %5095 = vmatpush2.xpose.msra.mxu0 0.0
    %5096 = vmatprep.subr.mxu0 0.0
    %5097 = vmatpush2.xpose.msra.mxu0 0.0
    %5098 = vmatprep.subr.mxu0 0.0
    %5099 = vmatpush2.xpose.msra.mxu0 0.0
    %5100 = vmatprep.subr.mxu0 0.0
    %5101 = vmatpush2.xpose.msra.mxu0 0.0
    %5102 = vmatprep.mubr.f32.mxu0 0.0
    %5103 = vmatmul.mubr.f32.gmra.mxu0 %v5034
    %v5104 = vpop.f32.mrf.mxu0
    %v5105 = vadd.f32 0.0, %v5104
    %v5106 = vpop.f32.mrf.mxu0
    %5107 = vdwg.mxu0
    %5108 = vrot.lane.b32.xlu0 %v4192, 112
    %v5109 = vpop.permute.xlu0 %5108
    %5110 = vrot.lane.b32.xlu0 %v4192, 80
    %v5111 = vpop.permute.xlu0 %5110
    %v5112 = vsel %vm363, %v5109, 0
    %v5114 = vsel %vm363, %v5111, 0
    %5116 = vmatprep.subr.mxu0 0.0
    %5117 = vmatpush1.xpose.msra.mxu0 0.0
    %5118 = vmatprep.subr.mxu0 0.0
    %5119 = vmatpush1.xpose.msra.mxu0 0.0
    %5120 = vmatprep.subr.mxu0 0.0
    %5121 = vmatpush1.xpose.msra.mxu0 0.0
    %5122 = vmatprep.subr.mxu0 0.0
    %5123 = vmatpush1.xpose.msra.mxu0 0.0
    %5124 = vmatprep.subr.mxu0 0.0
    %5125 = vmatpush1.xpose.msra.mxu0 0.0
    %5126 = vmatprep.subr.mxu0 0.0
    %5127 = vmatpush1.xpose.msra.mxu0 0.0
    %5128 = vmatprep.subr.mxu0 0.0
    %5129 = vmatpush1.xpose.msra.mxu0 0.0
    %5130 = vmatprep.subr.mxu0 0.0
    %5131 = vmatpush1.xpose.msra.mxu0 0.0
    %5132 = vmatprep.subr.mxu0 0.0
    %5133 = vmatpush1.xpose.msra.mxu0 0.0
    %5134 = vmatprep.subr.mxu0 0.0
    %5135 = vmatpush1.xpose.msra.mxu0 0.0
    %5136 = vmatprep.subr.mxu0 0.0
    %5137 = vmatpush1.xpose.msra.mxu0 0.0
    %5138 = vmatprep.subr.mxu0 0.0
    %5139 = vmatpush1.xpose.msra.mxu0 0.0
    %5140 = vmatprep.subr.mxu0 0.0
    %5141 = vmatpush1.xpose.msra.mxu0 0.0
    %5142 = vmatprep.subr.mxu0 0.0
    %5143 = vmatpush1.xpose.msra.mxu0 0.0
    %5144 = vmatprep.subr.mxu0 0.0
    %5145 = vmatpush1.xpose.msra.mxu0 0.0
    %5146 = vmatprep.subr.mxu0 0.0
    %5147 = vmatpush1.xpose.msra.mxu0 %v5114
    %5148 = vmatprep.subr.mxu0 0.0
    %5149 = vmatpush2.xpose.msra.mxu0 0.0
    %5150 = vmatprep.subr.mxu0 0.0
    %5151 = vmatpush2.xpose.msra.mxu0 0.0
    %5152 = vmatprep.subr.mxu0 0.0
    %5153 = vmatpush2.xpose.msra.mxu0 0.0
    %5154 = vmatprep.subr.mxu0 0.0
    %5155 = vmatpush2.xpose.msra.mxu0 0.0
    %5156 = vmatprep.subr.mxu0 0.0
    %5157 = vmatpush2.xpose.msra.mxu0 0.0
    %5158 = vmatprep.subr.mxu0 0.0
    %5159 = vmatpush2.xpose.msra.mxu0 0.0
    %5160 = vmatprep.subr.mxu0 0.0
    %5161 = vmatpush2.xpose.msra.mxu0 0.0
    %5162 = vmatprep.subr.mxu0 0.0
    %5163 = vmatpush2.xpose.msra.mxu0 0.0
    %5164 = vmatprep.subr.mxu0 0.0
    %5165 = vmatpush2.xpose.msra.mxu0 0.0
    %5166 = vmatprep.subr.mxu0 0.0
    %5167 = vmatpush2.xpose.msra.mxu0 0.0
    %5168 = vmatprep.subr.mxu0 0.0
    %5169 = vmatpush2.xpose.msra.mxu0 0.0
    %5170 = vmatprep.subr.mxu0 0.0
    %5171 = vmatpush2.xpose.msra.mxu0 0.0
    %5172 = vmatprep.subr.mxu0 0.0
    %5173 = vmatpush2.xpose.msra.mxu0 0.0
    %5174 = vmatprep.subr.mxu0 0.0
    %5175 = vmatpush2.xpose.msra.mxu0 0.0
    %5176 = vmatprep.subr.mxu0 0.0
    %5177 = vmatpush2.xpose.msra.mxu0 0.0
    %5178 = vmatprep.subr.mxu0 0.0
    %5179 = vmatpush2.xpose.msra.mxu0 0.0
    %5180 = vmatprep.mubr.f32.mxu0 0.0
    %5181 = vmatmul.mubr.f32.gmra.mxu0 %v5112
    %v5182 = vpop.f32.mrf.mxu0
    %v5183 = vadd.f32 0.0, %v5182
    %v5184 = vpop.f32.mrf.mxu0
    %5185 = vdwg.mxu0
    %v5186 = vsel %vm363, %v5105, -inf
    %5187 = vmax.xlane.f32.xlu0 %v5186
    %v5188 = vpop.xlane.xlu0 %5187
    %v5189 = vsel %vm363, %v5183, -inf
    %5190 = vmax.xlane.f32.xlu0 %v5189
    %v5191 = vpop.xlane.xlu0 %5190
    %v5192 = vsub.f32 %v5105, %v5188
    %v5193 = vsub.f32 %v5183, %v5191
    %v5194 = vmul.f32 %v5192, 1.442695
    %v5195 = vpow.pop %v5194
    %v5196 = vmul.f32 %v5193, 1.442695
    %v5197 = vpow.pop %v5196
    %v5198 = vsel %vm363, %v5195, 0.0
    %5199 = vadd.xlane.f32.xlu0 %v5198
    %v5200 = vpop.xlane.xlu0 %5199
    %v5201 = vsel %vm363, %v5197, 0.0
    %5202 = vadd.xlane.f32.xlu0 %v5201
    %v5203 = vpop.xlane.xlu0 %5202
    %v5204 = vrcp.pop %v5200
    %v5205 = vrcp.pop %v5203
    %v5206 = vmul.f32 %v5195, %v5204
    %v5207 = vmul.f32 %v5197, %v5205
    %5208 = vrot.lane.b32.xlu0 %v4187, 48
    %v5209 = vpop.permute.xlu0 %5208
    %v5212 = vsel %vm363, %v5206, 0
    %5214 = vmatprep.subr.mxu0 0.0
    %5215 = vmatpush1.msra.mxu0 0.0
    %5216 = vmatprep.subr.mxu0 0.0
    %5217 = vmatpush1.msra.mxu0 0.0
    %5218 = vmatprep.subr.mxu0 0.0
    %5219 = vmatpush1.msra.mxu0 0.0
    %5220 = vmatprep.subr.mxu0 0.0
    %5221 = vmatpush1.msra.mxu0 0.0
    %5222 = vmatprep.subr.mxu0 0.0
    %5223 = vmatpush1.msra.mxu0 0.0
    %5224 = vmatprep.subr.mxu0 0.0
    %5225 = vmatpush1.msra.mxu0 0.0
    %5226 = vmatprep.subr.mxu0 0.0
    %5227 = vmatpush1.msra.mxu0 0.0
    %5228 = vmatprep.subr.mxu0 0.0
    %5229 = vmatpush1.msra.mxu0 0.0
    %5230 = vmatprep.subr.mxu0 0.0
    %5231 = vmatpush1.msra.mxu0 0.0
    %5232 = vmatprep.subr.mxu0 0.0
    %5233 = vmatpush1.msra.mxu0 0.0
    %5234 = vmatprep.subr.mxu0 0.0
    %5235 = vmatpush1.msra.mxu0 0.0
    %5236 = vmatprep.subr.mxu0 0.0
    %5237 = vmatpush1.msra.mxu0 0.0
    %5238 = vmatprep.subr.mxu0 0.0
    %5239 = vmatpush1.msra.mxu0 0.0
    %5240 = vmatprep.subr.mxu0 0.0
    %5241 = vmatpush1.msra.mxu0 0.0
    %5242 = vmatprep.subr.mxu0 0.0
    %5243 = vmatpush1.msra.mxu0 0.0
    %5244 = vmatprep.subr.mxu0 0.0
    %5245 = vmatpush1.msra.mxu0 %v5209
    %5246 = vmatprep.subr.mxu0 0.0
    %5247 = vmatpush2.msra.mxu0 0.0
    %5248 = vmatprep.subr.mxu0 0.0
    %5249 = vmatpush2.msra.mxu0 0.0
    %5250 = vmatprep.subr.mxu0 0.0
    %5251 = vmatpush2.msra.mxu0 0.0
    %5252 = vmatprep.subr.mxu0 0.0
    %5253 = vmatpush2.msra.mxu0 0.0
    %5254 = vmatprep.subr.mxu0 0.0
    %5255 = vmatpush2.msra.mxu0 0.0
    %5256 = vmatprep.subr.mxu0 0.0
    %5257 = vmatpush2.msra.mxu0 0.0
    %5258 = vmatprep.subr.mxu0 0.0
    %5259 = vmatpush2.msra.mxu0 0.0
    %5260 = vmatprep.subr.mxu0 0.0
    %5261 = vmatpush2.msra.mxu0 0.0
    %5262 = vmatprep.subr.mxu0 0.0
    %5263 = vmatpush2.msra.mxu0 0.0
    %5264 = vmatprep.subr.mxu0 0.0
    %5265 = vmatpush2.msra.mxu0 0.0
    %5266 = vmatprep.subr.mxu0 0.0
    %5267 = vmatpush2.msra.mxu0 0.0
    %5268 = vmatprep.subr.mxu0 0.0
    %5269 = vmatpush2.msra.mxu0 0.0
    %5270 = vmatprep.subr.mxu0 0.0
    %5271 = vmatpush2.msra.mxu0 0.0
    %5272 = vmatprep.subr.mxu0 0.0
    %5273 = vmatpush2.msra.mxu0 0.0
    %5274 = vmatprep.subr.mxu0 0.0
    %5275 = vmatpush2.msra.mxu0 0.0
    %5276 = vmatprep.subr.mxu0 0.0
    %5277 = vmatpush2.msra.mxu0 0.0
    %5278 = vmatprep.mubr.f32.mxu0 0.0
    %5279 = vmatmul.mubr.f32.gmra.mxu0 %v5212
    %v5280 = vpop.f32.mrf.mxu0
    %v5281 = vadd.f32 0.0, %v5280
    %v5282 = vpop.f32.mrf.mxu0
    %5283 = vdwg.mxu0
    %5284 = vrot.lane.b32.xlu0 %v4192, 48
    %v5285 = vpop.permute.xlu0 %5284
    %v5288 = vsel %vm363, %v5207, 0
    %5290 = vmatprep.subr.mxu0 0.0
    %5291 = vmatpush1.msra.mxu0 0.0
    %5292 = vmatprep.subr.mxu0 0.0
    %5293 = vmatpush1.msra.mxu0 0.0
    %5294 = vmatprep.subr.mxu0 0.0
    %5295 = vmatpush1.msra.mxu0 0.0
    %5296 = vmatprep.subr.mxu0 0.0
    %5297 = vmatpush1.msra.mxu0 0.0
    %5298 = vmatprep.subr.mxu0 0.0
    %5299 = vmatpush1.msra.mxu0 0.0
    %5300 = vmatprep.subr.mxu0 0.0
    %5301 = vmatpush1.msra.mxu0 0.0
    %5302 = vmatprep.subr.mxu0 0.0
    %5303 = vmatpush1.msra.mxu0 0.0
    %5304 = vmatprep.subr.mxu0 0.0
    %5305 = vmatpush1.msra.mxu0 0.0
    %5306 = vmatprep.subr.mxu0 0.0
    %5307 = vmatpush1.msra.mxu0 0.0
    %5308 = vmatprep.subr.mxu0 0.0
    %5309 = vmatpush1.msra.mxu0 0.0
    %5310 = vmatprep.subr.mxu0 0.0
    %5311 = vmatpush1.msra.mxu0 0.0
    %5312 = vmatprep.subr.mxu0 0.0
    %5313 = vmatpush1.msra.mxu0 0.0
    %5314 = vmatprep.subr.mxu0 0.0
    %5315 = vmatpush1.msra.mxu0 0.0
    %5316 = vmatprep.subr.mxu0 0.0
    %5317 = vmatpush1.msra.mxu0 0.0
    %5318 = vmatprep.subr.mxu0 0.0
    %5319 = vmatpush1.msra.mxu0 0.0
    %5320 = vmatprep.subr.mxu0 0.0
    %5321 = vmatpush1.msra.mxu0 %v5285
    %5322 = vmatprep.subr.mxu0 0.0
    %5323 = vmatpush2.msra.mxu0 0.0
    %5324 = vmatprep.subr.mxu0 0.0
    %5325 = vmatpush2.msra.mxu0 0.0
    %5326 = vmatprep.subr.mxu0 0.0
    %5327 = vmatpush2.msra.mxu0 0.0
    %5328 = vmatprep.subr.mxu0 0.0
    %5329 = vmatpush2.msra.mxu0 0.0
    %5330 = vmatprep.subr.mxu0 0.0
    %5331 = vmatpush2.msra.mxu0 0.0
    %5332 = vmatprep.subr.mxu0 0.0
    %5333 = vmatpush2.msra.mxu0 0.0
    %5334 = vmatprep.subr.mxu0 0.0
    %5335 = vmatpush2.msra.mxu0 0.0
    %5336 = vmatprep.subr.mxu0 0.0
    %5337 = vmatpush2.msra.mxu0 0.0
    %5338 = vmatprep.subr.mxu0 0.0
    %5339 = vmatpush2.msra.mxu0 0.0
    %5340 = vmatprep.subr.mxu0 0.0
    %5341 = vmatpush2.msra.mxu0 0.0
    %5342 = vmatprep.subr.mxu0 0.0
    %5343 = vmatpush2.msra.mxu0 0.0
    %5344 = vmatprep.subr.mxu0 0.0
    %5345 = vmatpush2.msra.mxu0 0.0
    %5346 = vmatprep.subr.mxu0 0.0
    %5347 = vmatpush2.msra.mxu0 0.0
    %5348 = vmatprep.subr.mxu0 0.0
    %5349 = vmatpush2.msra.mxu0 0.0
    %5350 = vmatprep.subr.mxu0 0.0
    %5351 = vmatpush2.msra.mxu0 0.0
    %5352 = vmatprep.subr.mxu0 0.0
    %5353 = vmatpush2.msra.mxu0 0.0
    %5354 = vmatprep.mubr.f32.mxu0 0.0
    %5355 = vmatmul.mubr.f32.gmra.mxu0 %v5288
    %v5356 = vpop.f32.mrf.mxu0
    %v5357 = vadd.f32 0.0, %v5356
    %v5358 = vpop.f32.mrf.mxu0
    %5359 = vdwg.mxu0
    %v5360 = vld [vmem:[%s4531 + $0x10] sm:$0xff]
    %v5362 = vsel %vm363, %v5281, 0
    %v5365 = vsel %vm363, %v5357, 0
    %5367 = vmatprep.subr.mxu0 0.0
    %5368 = vmatpush1.msra.mxu0 0.0
    %5369 = vmatprep.subr.mxu0 0.0
    %5370 = vmatpush1.msra.mxu0 0.0
    %5371 = vmatprep.subr.mxu0 0.0
    %5372 = vmatpush1.msra.mxu0 0.0
    %5373 = vmatprep.subr.mxu0 0.0
    %5374 = vmatpush1.msra.mxu0 0.0
    %5375 = vmatprep.subr.mxu0 0.0
    %5376 = vmatpush1.msra.mxu0 0.0
    %5377 = vmatprep.subr.mxu0 0.0
    %5378 = vmatpush1.msra.mxu0 0.0
    %5379 = vmatprep.subr.mxu0 0.0
    %5380 = vmatpush1.msra.mxu0 0.0
    %5381 = vmatprep.subr.mxu0 0.0
    %5382 = vmatpush1.msra.mxu0 0.0
    %5383 = vmatprep.subr.mxu0 0.0
    %5384 = vmatpush1.msra.mxu0 0.0
    %5385 = vmatprep.subr.mxu0 0.0
    %5386 = vmatpush1.msra.mxu0 0.0
    %5387 = vmatprep.subr.mxu0 0.0
    %5388 = vmatpush1.msra.mxu0 0.0
    %5389 = vmatprep.subr.mxu0 0.0
    %5390 = vmatpush1.msra.mxu0 0.0
    %5391 = vmatprep.subr.mxu0 0.0
    %5392 = vmatpush1.msra.mxu0 0.0
    %5393 = vmatprep.subr.mxu0 0.0
    %5394 = vmatpush1.msra.mxu0 0.0
    %5395 = vmatprep.subr.mxu0 0.0
    %5396 = vmatpush1.msra.mxu0 0.0
    %5397 = vmatprep.subr.mxu0 0.0
    %5398 = vmatpush1.msra.mxu0 %v5360
    %5399 = vmatprep.subr.mxu0 0.0
    %5400 = vmatpush2.msra.mxu0 0.0
    %5401 = vmatprep.subr.mxu0 0.0
    %5402 = vmatpush2.msra.mxu0 0.0
    %5403 = vmatprep.subr.mxu0 0.0
    %5404 = vmatpush2.msra.mxu0 0.0
    %5405 = vmatprep.subr.mxu0 0.0
    %5406 = vmatpush2.msra.mxu0 0.0
    %5407 = vmatprep.subr.mxu0 0.0
    %5408 = vmatpush2.msra.mxu0 0.0
    %5409 = vmatprep.subr.mxu0 0.0
    %5410 = vmatpush2.msra.mxu0 0.0
    %5411 = vmatprep.subr.mxu0 0.0
    %5412 = vmatpush2.msra.mxu0 0.0
    %5413 = vmatprep.subr.mxu0 0.0
    %5414 = vmatpush2.msra.mxu0 0.0
    %5415 = vmatprep.subr.mxu0 0.0
    %5416 = vmatpush2.msra.mxu0 0.0
    %5417 = vmatprep.subr.mxu0 0.0
    %5418 = vmatpush2.msra.mxu0 0.0
    %5419 = vmatprep.subr.mxu0 0.0
    %5420 = vmatpush2.msra.mxu0 0.0
    %5421 = vmatprep.subr.mxu0 0.0
    %5422 = vmatpush2.msra.mxu0 0.0
    %5423 = vmatprep.subr.mxu0 0.0
    %5424 = vmatpush2.msra.mxu0 0.0
    %5425 = vmatprep.subr.mxu0 0.0
    %5426 = vmatpush2.msra.mxu0 0.0
    %5427 = vmatprep.subr.mxu0 0.0
    %5428 = vmatpush2.msra.mxu0 0.0
    %5429 = vmatprep.subr.mxu0 0.0
    %5430 = vmatpush2.msra.mxu0 0.0
    %5431 = vmatprep.mubr.f32.mxu0 0.0
    %5432 = vmatmul.mubr.f32.gmra.mxu0 %v5362
    %v5433 = vpop.f32.mrf.mxu0
    %v5434 = vadd.f32 0.0, %v5433
    %v5435 = vpop.f32.mrf.mxu0
    %5436 = vmatprep.mubr.f32.mxu0 0.0
    %5437 = vmatmul.mubr.f32.gmra.mxu0 %v5365
    %v5438 = vpop.f32.mrf.mxu0
    %v5439 = vadd.f32 0.0, %v5438
    %v5440 = vpop.f32.mrf.mxu0
    %5441 = vdwg.mxu0
    %v5442 = vadd.f32 %v5028, %v5434
    %v5443 = vadd.f32 %v5029, %v5439
    %5444 = vrot.lane.b32.xlu0 %v4187, 104
    %v5445 = vpop.permute.xlu0 %5444
    %5446 = vrot.lane.b32.xlu0 %v4187, 72
    %v5447 = vpop.permute.xlu0 %5446
    %v5448 = vsel %vm363, %v5445, 0
    %v5450 = vsel %vm363, %v5447, 0
    %5452 = vmatprep.subr.mxu0 0.0
    %5453 = vmatpush1.xpose.msra.mxu0 0.0
    %5454 = vmatprep.subr.mxu0 0.0
    %5455 = vmatpush1.xpose.msra.mxu0 0.0
    %5456 = vmatprep.subr.mxu0 0.0
    %5457 = vmatpush1.xpose.msra.mxu0 0.0
    %5458 = vmatprep.subr.mxu0 0.0
    %5459 = vmatpush1.xpose.msra.mxu0 0.0
    %5460 = vmatprep.subr.mxu0 0.0
    %5461 = vmatpush1.xpose.msra.mxu0 0.0
    %5462 = vmatprep.subr.mxu0 0.0
    %5463 = vmatpush1.xpose.msra.mxu0 0.0
    %5464 = vmatprep.subr.mxu0 0.0
    %5465 = vmatpush1.xpose.msra.mxu0 0.0
    %5466 = vmatprep.subr.mxu0 0.0
    %5467 = vmatpush1.xpose.msra.mxu0 0.0
    %5468 = vmatprep.subr.mxu0 0.0
    %5469 = vmatpush1.xpose.msra.mxu0 0.0
    %5470 = vmatprep.subr.mxu0 0.0
    %5471 = vmatpush1.xpose.msra.mxu0 0.0
    %5472 = vmatprep.subr.mxu0 0.0
    %5473 = vmatpush1.xpose.msra.mxu0 0.0
    %5474 = vmatprep.subr.mxu0 0.0
    %5475 = vmatpush1.xpose.msra.mxu0 0.0
    %5476 = vmatprep.subr.mxu0 0.0
    %5477 = vmatpush1.xpose.msra.mxu0 0.0
    %5478 = vmatprep.subr.mxu0 0.0
    %5479 = vmatpush1.xpose.msra.mxu0 0.0
    %5480 = vmatprep.subr.mxu0 0.0
    %5481 = vmatpush1.xpose.msra.mxu0 0.0
    %5482 = vmatprep.subr.mxu0 0.0
    %5483 = vmatpush1.xpose.msra.mxu0 %v5450
    %5484 = vmatprep.subr.mxu0 0.0
    %5485 = vmatpush2.xpose.msra.mxu0 0.0
    %5486 = vmatprep.subr.mxu0 0.0
    %5487 = vmatpush2.xpose.msra.mxu0 0.0
    %5488 = vmatprep.subr.mxu0 0.0
    %5489 = vmatpush2.xpose.msra.mxu0 0.0
    %5490 = vmatprep.subr.mxu0 0.0
    %5491 = vmatpush2.xpose.msra.mxu0 0.0
    %5492 = vmatprep.subr.mxu0 0.0
    %5493 = vmatpush2.xpose.msra.mxu0 0.0
    %5494 = vmatprep.subr.mxu0 0.0
    %5495 = vmatpush2.xpose.msra.mxu0 0.0
    %5496 = vmatprep.subr.mxu0 0.0
    %5497 = vmatpush2.xpose.msra.mxu0 0.0
    %5498 = vmatprep.subr.mxu0 0.0
    %5499 = vmatpush2.xpose.msra.mxu0 0.0
    %5500 = vmatprep.subr.mxu0 0.0
    %5501 = vmatpush2.xpose.msra.mxu0 0.0
    %5502 = vmatprep.subr.mxu0 0.0
    %5503 = vmatpush2.xpose.msra.mxu0 0.0
    %5504 = vmatprep.subr.mxu0 0.0
    %5505 = vmatpush2.xpose.msra.mxu0 0.0
    %5506 = vmatprep.subr.mxu0 0.0
    %5507 = vmatpush2.xpose.msra.mxu0 0.0
    %5508 = vmatprep.subr.mxu0 0.0
    %5509 = vmatpush2.xpose.msra.mxu0 0.0
    %5510 = vmatprep.subr.mxu0 0.0
    %5511 = vmatpush2.xpose.msra.mxu0 0.0
    %5512 = vmatprep.subr.mxu0 0.0
    %5513 = vmatpush2.xpose.msra.mxu0 0.0
    %5514 = vmatprep.subr.mxu0 0.0
    %5515 = vmatpush2.xpose.msra.mxu0 0.0
    %5516 = vmatprep.mubr.f32.mxu0 0.0
    %5517 = vmatmul.mubr.f32.gmra.mxu0 %v5448
    %v5518 = vpop.f32.mrf.mxu0
    %v5519 = vadd.f32 0.0, %v5518
    %v5520 = vpop.f32.mrf.mxu0
    %5521 = vdwg.mxu0
    %5522 = vrot.lane.b32.xlu0 %v4192, 104
    %v5523 = vpop.permute.xlu0 %5522
    %5524 = vrot.lane.b32.xlu0 %v4192, 72
    %v5525 = vpop.permute.xlu0 %5524
    %v5526 = vsel %vm363, %v5523, 0
    %v5528 = vsel %vm363, %v5525, 0
    %5530 = vmatprep.subr.mxu0 0.0
    %5531 = vmatpush1.xpose.msra.mxu0 0.0
    %5532 = vmatprep.subr.mxu0 0.0
    %5533 = vmatpush1.xpose.msra.mxu0 0.0
    %5534 = vmatprep.subr.mxu0 0.0
    %5535 = vmatpush1.xpose.msra.mxu0 0.0
    %5536 = vmatprep.subr.mxu0 0.0
    %5537 = vmatpush1.xpose.msra.mxu0 0.0
    %5538 = vmatprep.subr.mxu0 0.0
    %5539 = vmatpush1.xpose.msra.mxu0 0.0
    %5540 = vmatprep.subr.mxu0 0.0
    %5541 = vmatpush1.xpose.msra.mxu0 0.0
    %5542 = vmatprep.subr.mxu0 0.0
    %5543 = vmatpush1.xpose.msra.mxu0 0.0
    %5544 = vmatprep.subr.mxu0 0.0
    %5545 = vmatpush1.xpose.msra.mxu0 0.0
    %5546 = vmatprep.subr.mxu0 0.0
    %5547 = vmatpush1.xpose.msra.mxu0 0.0
    %5548 = vmatprep.subr.mxu0 0.0
    %5549 = vmatpush1.xpose.msra.mxu0 0.0
    %5550 = vmatprep.subr.mxu0 0.0
    %5551 = vmatpush1.xpose.msra.mxu0 0.0
    %5552 = vmatprep.subr.mxu0 0.0
    %5553 = vmatpush1.xpose.msra.mxu0 0.0
    %5554 = vmatprep.subr.mxu0 0.0
    %5555 = vmatpush1.xpose.msra.mxu0 0.0
    %5556 = vmatprep.subr.mxu0 0.0
    %5557 = vmatpush1.xpose.msra.mxu0 0.0
    %5558 = vmatprep.subr.mxu0 0.0
    %5559 = vmatpush1.xpose.msra.mxu0 0.0
    %5560 = vmatprep.subr.mxu0 0.0
    %5561 = vmatpush1.xpose.msra.mxu0 %v5528
    %5562 = vmatprep.subr.mxu0 0.0
    %5563 = vmatpush2.xpose.msra.mxu0 0.0
    %5564 = vmatprep.subr.mxu0 0.0
    %5565 = vmatpush2.xpose.msra.mxu0 0.0
    %5566 = vmatprep.subr.mxu0 0.0
    %5567 = vmatpush2.xpose.msra.mxu0 0.0
    %5568 = vmatprep.subr.mxu0 0.0
    %5569 = vmatpush2.xpose.msra.mxu0 0.0
    %5570 = vmatprep.subr.mxu0 0.0
    %5571 = vmatpush2.xpose.msra.mxu0 0.0
    %5572 = vmatprep.subr.mxu0 0.0
    %5573 = vmatpush2.xpose.msra.mxu0 0.0
    %5574 = vmatprep.subr.mxu0 0.0
    %5575 = vmatpush2.xpose.msra.mxu0 0.0
    %5576 = vmatprep.subr.mxu0 0.0
    %5577 = vmatpush2.xpose.msra.mxu0 0.0
    %5578 = vmatprep.subr.mxu0 0.0
    %5579 = vmatpush2.xpose.msra.mxu0 0.0
    %5580 = vmatprep.subr.mxu0 0.0
    %5581 = vmatpush2.xpose.msra.mxu0 0.0
    %5582 = vmatprep.subr.mxu0 0.0
    %5583 = vmatpush2.xpose.msra.mxu0 0.0
    %5584 = vmatprep.subr.mxu0 0.0
    %5585 = vmatpush2.xpose.msra.mxu0 0.0
    %5586 = vmatprep.subr.mxu0 0.0
    %5587 = vmatpush2.xpose.msra.mxu0 0.0
    %5588 = vmatprep.subr.mxu0 0.0
    %5589 = vmatpush2.xpose.msra.mxu0 0.0
    %5590 = vmatprep.subr.mxu0 0.0
    %5591 = vmatpush2.xpose.msra.mxu0 0.0
    %5592 = vmatprep.subr.mxu0 0.0
    %5593 = vmatpush2.xpose.msra.mxu0 0.0
    %5594 = vmatprep.mubr.f32.mxu0 0.0
    %5595 = vmatmul.mubr.f32.gmra.mxu0 %v5526
    %v5596 = vpop.f32.mrf.mxu0
    %v5597 = vadd.f32 0.0, %v5596
    %v5598 = vpop.f32.mrf.mxu0
    %5599 = vdwg.mxu0
    %v5600 = vsel %vm363, %v5519, -inf
    %5601 = vmax.xlane.f32.xlu0 %v5600
    %v5602 = vpop.xlane.xlu0 %5601
    %v5603 = vsel %vm363, %v5597, -inf
    %5604 = vmax.xlane.f32.xlu0 %v5603
    %v5605 = vpop.xlane.xlu0 %5604
    %v5606 = vsub.f32 %v5519, %v5602
    %v5607 = vsub.f32 %v5597, %v5605
    %v5608 = vmul.f32 %v5606, 1.442695
    %v5609 = vpow.pop %v5608
    %v5610 = vmul.f32 %v5607, 1.442695
    %v5611 = vpow.pop %v5610
    %v5612 = vsel %vm363, %v5609, 0.0
    %5613 = vadd.xlane.f32.xlu0 %v5612
    %v5614 = vpop.xlane.xlu0 %5613
    %v5615 = vsel %vm363, %v5611, 0.0
    %5616 = vadd.xlane.f32.xlu0 %v5615
    %v5617 = vpop.xlane.xlu0 %5616
    %v5618 = vrcp.pop %v5614
    %v5619 = vrcp.pop %v5617
    %v5620 = vmul.f32 %v5609, %v5618
    %v5621 = vmul.f32 %v5611, %v5619
    %5622 = vrot.lane.b32.xlu0 %v4187, 40
    %v5623 = vpop.permute.xlu0 %5622
    %v5626 = vsel %vm363, %v5620, 0
    %5628 = vmatprep.subr.mxu0 0.0
    %5629 = vmatpush1.msra.mxu0 0.0
    %5630 = vmatprep.subr.mxu0 0.0
    %5631 = vmatpush1.msra.mxu0 0.0
    %5632 = vmatprep.subr.mxu0 0.0
    %5633 = vmatpush1.msra.mxu0 0.0
    %5634 = vmatprep.subr.mxu0 0.0
    %5635 = vmatpush1.msra.mxu0 0.0
    %5636 = vmatprep.subr.mxu0 0.0
    %5637 = vmatpush1.msra.mxu0 0.0
    %5638 = vmatprep.subr.mxu0 0.0
    %5639 = vmatpush1.msra.mxu0 0.0
    %5640 = vmatprep.subr.mxu0 0.0
    %5641 = vmatpush1.msra.mxu0 0.0
    %5642 = vmatprep.subr.mxu0 0.0
    %5643 = vmatpush1.msra.mxu0 0.0
    %5644 = vmatprep.subr.mxu0 0.0
    %5645 = vmatpush1.msra.mxu0 0.0
    %5646 = vmatprep.subr.mxu0 0.0
    %5647 = vmatpush1.msra.mxu0 0.0
    %5648 = vmatprep.subr.mxu0 0.0
    %5649 = vmatpush1.msra.mxu0 0.0
    %5650 = vmatprep.subr.mxu0 0.0
    %5651 = vmatpush1.msra.mxu0 0.0
    %5652 = vmatprep.subr.mxu0 0.0
    %5653 = vmatpush1.msra.mxu0 0.0
    %5654 = vmatprep.subr.mxu0 0.0
    %5655 = vmatpush1.msra.mxu0 0.0
    %5656 = vmatprep.subr.mxu0 0.0
    %5657 = vmatpush1.msra.mxu0 0.0
    %5658 = vmatprep.subr.mxu0 0.0
    %5659 = vmatpush1.msra.mxu0 %v5623
    %5660 = vmatprep.subr.mxu0 0.0
    %5661 = vmatpush2.msra.mxu0 0.0
    %5662 = vmatprep.subr.mxu0 0.0
    %5663 = vmatpush2.msra.mxu0 0.0
    %5664 = vmatprep.subr.mxu0 0.0
    %5665 = vmatpush2.msra.mxu0 0.0
    %5666 = vmatprep.subr.mxu0 0.0
    %5667 = vmatpush2.msra.mxu0 0.0
    %5668 = vmatprep.subr.mxu0 0.0
    %5669 = vmatpush2.msra.mxu0 0.0
    %5670 = vmatprep.subr.mxu0 0.0
    %5671 = vmatpush2.msra.mxu0 0.0
    %5672 = vmatprep.subr.mxu0 0.0
    %5673 = vmatpush2.msra.mxu0 0.0
    %5674 = vmatprep.subr.mxu0 0.0
    %5675 = vmatpush2.msra.mxu0 0.0
    %5676 = vmatprep.subr.mxu0 0.0
    %5677 = vmatpush2.msra.mxu0 0.0
    %5678 = vmatprep.subr.mxu0 0.0
    %5679 = vmatpush2.msra.mxu0 0.0
    %5680 = vmatprep.subr.mxu0 0.0
    %5681 = vmatpush2.msra.mxu0 0.0
    %5682 = vmatprep.subr.mxu0 0.0
    %5683 = vmatpush2.msra.mxu0 0.0
    %5684 = vmatprep.subr.mxu0 0.0
    %5685 = vmatpush2.msra.mxu0 0.0
    %5686 = vmatprep.subr.mxu0 0.0
    %5687 = vmatpush2.msra.mxu0 0.0
    %5688 = vmatprep.subr.mxu0 0.0
    %5689 = vmatpush2.msra.mxu0 0.0
    %5690 = vmatprep.subr.mxu0 0.0
    %5691 = vmatpush2.msra.mxu0 0.0
    %5692 = vmatprep.mubr.f32.mxu0 0.0
    %5693 = vmatmul.mubr.f32.gmra.mxu0 %v5626
    %v5694 = vpop.f32.mrf.mxu0
    %v5695 = vadd.f32 0.0, %v5694
    %v5696 = vpop.f32.mrf.mxu0
    %5697 = vdwg.mxu0
    %5698 = vrot.lane.b32.xlu0 %v4192, 40
    %v5699 = vpop.permute.xlu0 %5698
    %v5702 = vsel %vm363, %v5621, 0
    %5704 = vmatprep.subr.mxu0 0.0
    %5705 = vmatpush1.msra.mxu0 0.0
    %5706 = vmatprep.subr.mxu0 0.0
    %5707 = vmatpush1.msra.mxu0 0.0
    %5708 = vmatprep.subr.mxu0 0.0
    %5709 = vmatpush1.msra.mxu0 0.0
    %5710 = vmatprep.subr.mxu0 0.0
    %5711 = vmatpush1.msra.mxu0 0.0
    %5712 = vmatprep.subr.mxu0 0.0
    %5713 = vmatpush1.msra.mxu0 0.0
    %5714 = vmatprep.subr.mxu0 0.0
    %5715 = vmatpush1.msra.mxu0 0.0
    %5716 = vmatprep.subr.mxu0 0.0
    %5717 = vmatpush1.msra.mxu0 0.0
    %5718 = vmatprep.subr.mxu0 0.0
    %5719 = vmatpush1.msra.mxu0 0.0
    %5720 = vmatprep.subr.mxu0 0.0
    %5721 = vmatpush1.msra.mxu0 0.0
    %5722 = vmatprep.subr.mxu0 0.0
    %5723 = vmatpush1.msra.mxu0 0.0
    %5724 = vmatprep.subr.mxu0 0.0
    %5725 = vmatpush1.msra.mxu0 0.0
    %5726 = vmatprep.subr.mxu0 0.0
    %5727 = vmatpush1.msra.mxu0 0.0
    %5728 = vmatprep.subr.mxu0 0.0
    %5729 = vmatpush1.msra.mxu0 0.0
    %5730 = vmatprep.subr.mxu0 0.0
    %5731 = vmatpush1.msra.mxu0 0.0
    %5732 = vmatprep.subr.mxu0 0.0
    %5733 = vmatpush1.msra.mxu0 0.0
    %5734 = vmatprep.subr.mxu0 0.0
    %5735 = vmatpush1.msra.mxu0 %v5699
    %5736 = vmatprep.subr.mxu0 0.0
    %5737 = vmatpush2.msra.mxu0 0.0
    %5738 = vmatprep.subr.mxu0 0.0
    %5739 = vmatpush2.msra.mxu0 0.0
    %5740 = vmatprep.subr.mxu0 0.0
    %5741 = vmatpush2.msra.mxu0 0.0
    %5742 = vmatprep.subr.mxu0 0.0
    %5743 = vmatpush2.msra.mxu0 0.0
    %5744 = vmatprep.subr.mxu0 0.0
    %5745 = vmatpush2.msra.mxu0 0.0
    %5746 = vmatprep.subr.mxu0 0.0
    %5747 = vmatpush2.msra.mxu0 0.0
    %5748 = vmatprep.subr.mxu0 0.0
    %5749 = vmatpush2.msra.mxu0 0.0
    %5750 = vmatprep.subr.mxu0 0.0
    %5751 = vmatpush2.msra.mxu0 0.0
    %5752 = vmatprep.subr.mxu0 0.0
    %5753 = vmatpush2.msra.mxu0 0.0
    %5754 = vmatprep.subr.mxu0 0.0
    %5755 = vmatpush2.msra.mxu0 0.0
    %5756 = vmatprep.subr.mxu0 0.0
    %5757 = vmatpush2.msra.mxu0 0.0
    %5758 = vmatprep.subr.mxu0 0.0
    %5759 = vmatpush2.msra.mxu0 0.0
    %5760 = vmatprep.subr.mxu0 0.0
    %5761 = vmatpush2.msra.mxu0 0.0
    %5762 = vmatprep.subr.mxu0 0.0
    %5763 = vmatpush2.msra.mxu0 0.0
    %5764 = vmatprep.subr.mxu0 0.0
    %5765 = vmatpush2.msra.mxu0 0.0
    %5766 = vmatprep.subr.mxu0 0.0
    %5767 = vmatpush2.msra.mxu0 0.0
    %5768 = vmatprep.mubr.f32.mxu0 0.0
    %5769 = vmatmul.mubr.f32.gmra.mxu0 %v5702
    %v5770 = vpop.f32.mrf.mxu0
    %v5771 = vadd.f32 0.0, %v5770
    %v5772 = vpop.f32.mrf.mxu0
    %5773 = vdwg.mxu0
    %v5774 = vld [vmem:[%s4531 + $0x18] sm:$0xff]
    %v5776 = vsel %vm363, %v5695, 0
    %v5779 = vsel %vm363, %v5771, 0
    %5781 = vmatprep.subr.mxu0 0.0
    %5782 = vmatpush1.msra.mxu0 0.0
    %5783 = vmatprep.subr.mxu0 0.0
    %5784 = vmatpush1.msra.mxu0 0.0
    %5785 = vmatprep.subr.mxu0 0.0
    %5786 = vmatpush1.msra.mxu0 0.0
    %5787 = vmatprep.subr.mxu0 0.0
    %5788 = vmatpush1.msra.mxu0 0.0
    %5789 = vmatprep.subr.mxu0 0.0
    %5790 = vmatpush1.msra.mxu0 0.0
    %5791 = vmatprep.subr.mxu0 0.0
    %5792 = vmatpush1.msra.mxu0 0.0
    %5793 = vmatprep.subr.mxu0 0.0
    %5794 = vmatpush1.msra.mxu0 0.0
    %5795 = vmatprep.subr.mxu0 0.0
    %5796 = vmatpush1.msra.mxu0 0.0
    %5797 = vmatprep.subr.mxu0 0.0
    %5798 = vmatpush1.msra.mxu0 0.0
    %5799 = vmatprep.subr.mxu0 0.0
    %5800 = vmatpush1.msra.mxu0 0.0
    %5801 = vmatprep.subr.mxu0 0.0
    %5802 = vmatpush1.msra.mxu0 0.0
    %5803 = vmatprep.subr.mxu0 0.0
    %5804 = vmatpush1.msra.mxu0 0.0
    %5805 = vmatprep.subr.mxu0 0.0
    %5806 = vmatpush1.msra.mxu0 0.0
    %5807 = vmatprep.subr.mxu0 0.0
    %5808 = vmatpush1.msra.mxu0 0.0
    %5809 = vmatprep.subr.mxu0 0.0
    %5810 = vmatpush1.msra.mxu0 0.0
    %5811 = vmatprep.subr.mxu0 0.0
    %5812 = vmatpush1.msra.mxu0 %v5774
    %5813 = vmatprep.subr.mxu0 0.0
    %5814 = vmatpush2.msra.mxu0 0.0
    %5815 = vmatprep.subr.mxu0 0.0
    %5816 = vmatpush2.msra.mxu0 0.0
    %5817 = vmatprep.subr.mxu0 0.0
    %5818 = vmatpush2.msra.mxu0 0.0
    %5819 = vmatprep.subr.mxu0 0.0
    %5820 = vmatpush2.msra.mxu0 0.0
    %5821 = vmatprep.subr.mxu0 0.0
    %5822 = vmatpush2.msra.mxu0 0.0
    %5823 = vmatprep.subr.mxu0 0.0
    %5824 = vmatpush2.msra.mxu0 0.0
    %5825 = vmatprep.subr.mxu0 0.0
    %5826 = vmatpush2.msra.mxu0 0.0
    %5827 = vmatprep.subr.mxu0 0.0
    %5828 = vmatpush2.msra.mxu0 0.0
    %5829 = vmatprep.subr.mxu0 0.0
    %5830 = vmatpush2.msra.mxu0 0.0
    %5831 = vmatprep.subr.mxu0 0.0
    %5832 = vmatpush2.msra.mxu0 0.0
    %5833 = vmatprep.subr.mxu0 0.0
    %5834 = vmatpush2.msra.mxu0 0.0
    %5835 = vmatprep.subr.mxu0 0.0
    %5836 = vmatpush2.msra.mxu0 0.0
    %5837 = vmatprep.subr.mxu0 0.0
    %5838 = vmatpush2.msra.mxu0 0.0
    %5839 = vmatprep.subr.mxu0 0.0
    %5840 = vmatpush2.msra.mxu0 0.0
    %5841 = vmatprep.subr.mxu0 0.0
    %5842 = vmatpush2.msra.mxu0 0.0
    %5843 = vmatprep.subr.mxu0 0.0
    %5844 = vmatpush2.msra.mxu0 0.0
    %5845 = vmatprep.mubr.f32.mxu0 0.0
    %5846 = vmatmul.mubr.f32.gmra.mxu0 %v5776
    %v5847 = vpop.f32.mrf.mxu0
    %v5848 = vadd.f32 0.0, %v5847
    %v5849 = vpop.f32.mrf.mxu0
    %5850 = vmatprep.mubr.f32.mxu0 0.0
    %5851 = vmatmul.mubr.f32.gmra.mxu0 %v5779
    %v5852 = vpop.f32.mrf.mxu0
    %v5853 = vadd.f32 0.0, %v5852
    %v5854 = vpop.f32.mrf.mxu0
    %5855 = vdwg.mxu0
    %v5856 = vadd.f32 %v5442, %v5848
    %v5857 = vadd.f32 %v5443, %v5853
    %v5858 = vadd.f32 %v4099, %v5856
    %v5859 = vadd.f32 %v4100, %v5857
    %s5860 = scalar_lea.vmem %s16, 6
    %v5861 = vld [vmem:[%s5860] sm:$0x1]
    %s5862 = scalar_lea.vmem %s16, 7
    %v5863 = vld [vmem:[%s5862] sm:$0x1]
    %v5864 = vsel %vm179, %v5858, 0.0
    %5865 = vadd.xlane.f32.xlu0 %v5864
    %v5866 = vpop.xlane.xlu0 %5865
    %v5867 = vsel %vm179, %v5859, 0.0
    %5868 = vadd.xlane.f32.xlu0 %v5867
    %v5869 = vpop.xlane.xlu0 %5868
    %v5870 = vmul.f32 %v5866, %v2026
    %v5871 = vmul.f32 %v5869, %v2026
    %v5872 = vsub.f32 %v5858, %v5870
    %v5873 = vsub.f32 %v5859, %v5871
    %v5874 = vmul.f32 %v5872, %v5872
    %v5875 = vmul.f32 %v5873, %v5873
    %v5876 = vsel %vm179, %v5874, 0.0
    %5877 = vadd.xlane.f32.xlu0 %v5876
    %v5878 = vpop.xlane.xlu0 %5877
    %v5879 = vsel %vm179, %v5875, 0.0
    %5880 = vadd.xlane.f32.xlu0 %v5879
    %v5881 = vpop.xlane.xlu0 %5880
    %v5882 = vmul.f32 %v5878, %v2026
    %v5883 = vmul.f32 %v5881, %v2026
    %v5884 = vadd.f32 %v5882, 1e-05
    %v5885 = vadd.f32 %v5883, 1e-05
    %v5886 = vrsqrt.pop %v5884
    %v5887 = vrsqrt.pop %v5885
    %v5888 = vmul.f32 %v5872, %v5886
    %v5889 = vmul.f32 %v5873, %v5887
    %v5891 = vlaneseq
    %v5892 = vshrl.u32 %v5891, 7
    %v5893 = vsub.s32 0, %v5892
    %v5894 = vrot.slane %v5861, %v5893
    %v5896 = vmul.f32 %v5888, %v5894
    %v5897 = vmul.f32 %v5889, %v5894
    %v5899 = vlaneseq
    %v5900 = vshrl.u32 %v5899, 7
    %v5901 = vsub.s32 0, %v5900
    %v5902 = vrot.slane %v5863, %v5901
    %v5904 = vadd.f32 %v5896, %v5902
    %v5905 = vadd.f32 %v5897, %v5902
    %s5906 = scalar_lea.vmem %s6, 32
    %v5907 = vld [vmem:[%s5906] sm:$0xff]
    %v5908 = vld [vmem:[%s5906 + $0x8] sm:$0xff]
    %v5909 = vld [vmem:[%s5906 + $0x10] sm:$0xff]
    %v5910 = vld [vmem:[%s5906 + $0x18] sm:$0xff]
    %s5911 = scalar_lea.vmem [#allocation8], 1
    %v5912 = vld [vmem:[%s5911] sm:$0x1]
    %v5914 = vlaneseq
    %v5915 = vshrl.u32 %v5914, 7
    %v5916 = vsub.s32 0, %v5915
    %v5917 = vrot.slane %v5912, %v5916
    %v5920 = vsel %vm179, %v5904, 0
    %v5923 = vsel %vm179, %v5905, 0
    %5925 = vmatprep.subr.mxu0 0.0
    %5926 = vmatpush1.msra.mxu0 0.0
    %5927 = vmatprep.subr.mxu0 0.0
    %5928 = vmatpush1.msra.mxu0 0.0
    %5929 = vmatprep.subr.mxu0 0.0
    %5930 = vmatpush1.msra.mxu0 0.0
    %5931 = vmatprep.subr.mxu0 0.0
    %5932 = vmatpush1.msra.mxu0 0.0
    %5933 = vmatprep.subr.mxu0 0.0
    %5934 = vmatpush1.msra.mxu0 0.0
    %5935 = vmatprep.subr.mxu0 0.0
    %5936 = vmatpush1.msra.mxu0 0.0
    %5937 = vmatprep.subr.mxu0 0.0
    %5938 = vmatpush1.msra.mxu0 0.0
    %5939 = vmatprep.subr.mxu0 0.0
    %5940 = vmatpush1.msra.mxu0 0.0
    %5941 = vmatprep.subr.mxu0 0.0
    %5942 = vmatpush1.msra.mxu0 0.0
    %5943 = vmatprep.subr.mxu0 0.0
    %5944 = vmatpush1.msra.mxu0 0.0
    %5945 = vmatprep.subr.mxu0 0.0
    %5946 = vmatpush1.msra.mxu0 0.0
    %5947 = vmatprep.subr.mxu0 0.0
    %5948 = vmatpush1.msra.mxu0 0.0
    %5949 = vmatprep.subr.mxu0 0.0
    %5950 = vmatpush1.msra.mxu0 %v5910
    %5951 = vmatprep.subr.mxu0 0.0
    %5952 = vmatpush1.msra.mxu0 %v5909
    %5953 = vmatprep.subr.mxu0 0.0
    %5954 = vmatpush1.msra.mxu0 %v5908
    %5955 = vmatprep.subr.mxu0 0.0
    %5956 = vmatpush1.msra.mxu0 %v5907
    %5957 = vmatprep.subr.mxu0 0.0
    %5958 = vmatpush2.msra.mxu0 0.0
    %5959 = vmatprep.subr.mxu0 0.0
    %5960 = vmatpush2.msra.mxu0 0.0
    %5961 = vmatprep.subr.mxu0 0.0
    %5962 = vmatpush2.msra.mxu0 0.0
    %5963 = vmatprep.subr.mxu0 0.0
    %5964 = vmatpush2.msra.mxu0 0.0
    %5965 = vmatprep.subr.mxu0 0.0
    %5966 = vmatpush2.msra.mxu0 0.0
    %5967 = vmatprep.subr.mxu0 0.0
    %5968 = vmatpush2.msra.mxu0 0.0
    %5969 = vmatprep.subr.mxu0 0.0
    %5970 = vmatpush2.msra.mxu0 0.0
    %5971 = vmatprep.subr.mxu0 0.0
    %5972 = vmatpush2.msra.mxu0 0.0
    %5973 = vmatprep.subr.mxu0 0.0
    %5974 = vmatpush2.msra.mxu0 0.0
    %5975 = vmatprep.subr.mxu0 0.0
    %5976 = vmatpush2.msra.mxu0 0.0
    %5977 = vmatprep.subr.mxu0 0.0
    %5978 = vmatpush2.msra.mxu0 0.0
    %5979 = vmatprep.subr.mxu0 0.0
    %5980 = vmatpush2.msra.mxu0 0.0
    %5981 = vmatprep.subr.mxu0 0.0
    %5982 = vmatpush2.msra.mxu0 0.0
    %5983 = vmatprep.subr.mxu0 0.0
    %5984 = vmatpush2.msra.mxu0 0.0
    %5985 = vmatprep.subr.mxu0 0.0
    %5986 = vmatpush2.msra.mxu0 0.0
    %5987 = vmatprep.subr.mxu0 0.0
    %5988 = vmatpush2.msra.mxu0 0.0
    %5989 = vmatprep.mubr.f32.mxu0 0.0
    %5990 = vmatmul.mubr.f32.gmra.mxu0 %v5920
    %v5991 = vpop.f32.mrf.mxu0
    %v5992 = vadd.f32 %v5917, %v5991
    %v5993 = vpop.f32.mrf.mxu0
    %5994 = vmatprep.mubr.f32.mxu0 0.0
    %5995 = vmatmul.mubr.f32.gmra.mxu0 %v5923
    %v5996 = vpop.f32.mrf.mxu0
    %v5997 = vadd.f32 %v5917, %v5996
    %v5998 = vpop.f32.mrf.mxu0
    %5999 = vdwg.mxu0
    %s6000 = scalar_lea.vmem %s11, 1
    %v6001 = vld [vmem:[%s6000] sm:$0x1]
    %v6003 = vlaneseq
    %v6004 = vshrl.u32 %v6003, 7
    %v6005 = vsub.s32 0, %v6004
    %v6006 = vrot.slane %v6001, %v6005
    %6008 = vrot.lane.b32.xlu0 %v253, 64
    %v6009 = vpop.permute.xlu0 %6008
    %v6011 = vsel %vm363, %v5992, 0
    %v6013 = vsel %vm363, %v6009, 0
    %6015 = vmatprep.subr.mxu0 0.0
    %6016 = vmatpush1.xpose.msra.mxu0 0.0
    %6017 = vmatprep.subr.mxu0 0.0
    %6018 = vmatpush1.xpose.msra.mxu0 0.0
    %6019 = vmatprep.subr.mxu0 0.0
    %6020 = vmatpush1.xpose.msra.mxu0 0.0
    %6021 = vmatprep.subr.mxu0 0.0
    %6022 = vmatpush1.xpose.msra.mxu0 0.0
    %6023 = vmatprep.subr.mxu0 0.0
    %6024 = vmatpush1.xpose.msra.mxu0 0.0
    %6025 = vmatprep.subr.mxu0 0.0
    %6026 = vmatpush1.xpose.msra.mxu0 0.0
    %6027 = vmatprep.subr.mxu0 0.0
    %6028 = vmatpush1.xpose.msra.mxu0 0.0
    %6029 = vmatprep.subr.mxu0 0.0
    %6030 = vmatpush1.xpose.msra.mxu0 0.0
    %6031 = vmatprep.subr.mxu0 0.0
    %6032 = vmatpush1.xpose.msra.mxu0 0.0
    %6033 = vmatprep.subr.mxu0 0.0
    %6034 = vmatpush1.xpose.msra.mxu0 0.0
    %6035 = vmatprep.subr.mxu0 0.0
    %6036 = vmatpush1.xpose.msra.mxu0 0.0
    %6037 = vmatprep.subr.mxu0 0.0
    %6038 = vmatpush1.xpose.msra.mxu0 0.0
    %6039 = vmatprep.subr.mxu0 0.0
    %6040 = vmatpush1.xpose.msra.mxu0 0.0
    %6041 = vmatprep.subr.mxu0 0.0
    %6042 = vmatpush1.xpose.msra.mxu0 0.0
    %6043 = vmatprep.subr.mxu0 0.0
    %6044 = vmatpush1.xpose.msra.mxu0 0.0
    %6045 = vmatprep.subr.mxu0 0.0
    %6046 = vmatpush1.xpose.msra.mxu0 %v6013
    %6047 = vmatprep.subr.mxu0 0.0
    %6048 = vmatpush2.xpose.msra.mxu0 0.0
    %6049 = vmatprep.subr.mxu0 0.0
    %6050 = vmatpush2.xpose.msra.mxu0 0.0
    %6051 = vmatprep.subr.mxu0 0.0
    %6052 = vmatpush2.xpose.msra.mxu0 0.0
    %6053 = vmatprep.subr.mxu0 0.0
    %6054 = vmatpush2.xpose.msra.mxu0 0.0
    %6055 = vmatprep.subr.mxu0 0.0
    %6056 = vmatpush2.xpose.msra.mxu0 0.0
    %6057 = vmatprep.subr.mxu0 0.0
    %6058 = vmatpush2.xpose.msra.mxu0 0.0
    %6059 = vmatprep.subr.mxu0 0.0
    %6060 = vmatpush2.xpose.msra.mxu0 0.0
    %6061 = vmatprep.subr.mxu0 0.0
    %6062 = vmatpush2.xpose.msra.mxu0 0.0
    %6063 = vmatprep.subr.mxu0 0.0
    %6064 = vmatpush2.xpose.msra.mxu0 0.0
    %6065 = vmatprep.subr.mxu0 0.0
    %6066 = vmatpush2.xpose.msra.mxu0 0.0
    %6067 = vmatprep.subr.mxu0 0.0
    %6068 = vmatpush2.xpose.msra.mxu0 0.0
    %6069 = vmatprep.subr.mxu0 0.0
    %6070 = vmatpush2.xpose.msra.mxu0 0.0
    %6071 = vmatprep.subr.mxu0 0.0
    %6072 = vmatpush2.xpose.msra.mxu0 0.0
    %6073 = vmatprep.subr.mxu0 0.0
    %6074 = vmatpush2.xpose.msra.mxu0 0.0
    %6075 = vmatprep.subr.mxu0 0.0
    %6076 = vmatpush2.xpose.msra.mxu0 0.0
    %6077 = vmatprep.subr.mxu0 0.0
    %6078 = vmatpush2.xpose.msra.mxu0 0.0
    %6079 = vmatprep.mubr.f32.mxu0 0.0
    %6080 = vmatmul.mubr.f32.gmra.mxu0 %v6011
    %v6081 = vpop.f32.mrf.mxu0
    %v6082 = vadd.f32 0.0, %v6081
    %v6083 = vpop.f32.mrf.mxu0
    %6084 = vdwg.mxu0
    %6085 = vrot.lane.b32.xlu0 %v258, 64
    %v6086 = vpop.permute.xlu0 %6085
    %v6088 = vsel %vm363, %v5997, 0
    %v6090 = vsel %vm363, %v6086, 0
    %6092 = vmatprep.subr.mxu0 0.0
    %6093 = vmatpush1.xpose.msra.mxu0 0.0
    %6094 = vmatprep.subr.mxu0 0.0
    %6095 = vmatpush1.xpose.msra.mxu0 0.0
    %6096 = vmatprep.subr.mxu0 0.0
    %6097 = vmatpush1.xpose.msra.mxu0 0.0
    %6098 = vmatprep.subr.mxu0 0.0
    %6099 = vmatpush1.xpose.msra.mxu0 0.0
    %6100 = vmatprep.subr.mxu0 0.0
    %6101 = vmatpush1.xpose.msra.mxu0 0.0
    %6102 = vmatprep.subr.mxu0 0.0
    %6103 = vmatpush1.xpose.msra.mxu0 0.0
    %6104 = vmatprep.subr.mxu0 0.0
    %6105 = vmatpush1.xpose.msra.mxu0 0.0
    %6106 = vmatprep.subr.mxu0 0.0
    %6107 = vmatpush1.xpose.msra.mxu0 0.0
    %6108 = vmatprep.subr.mxu0 0.0
    %6109 = vmatpush1.xpose.msra.mxu0 0.0
    %6110 = vmatprep.subr.mxu0 0.0
    %6111 = vmatpush1.xpose.msra.mxu0 0.0
    %6112 = vmatprep.subr.mxu0 0.0
    %6113 = vmatpush1.xpose.msra.mxu0 0.0
    %6114 = vmatprep.subr.mxu0 0.0
    %6115 = vmatpush1.xpose.msra.mxu0 0.0
    %6116 = vmatprep.subr.mxu0 0.0
    %6117 = vmatpush1.xpose.msra.mxu0 0.0
    %6118 = vmatprep.subr.mxu0 0.0
    %6119 = vmatpush1.xpose.msra.mxu0 0.0
    %6120 = vmatprep.subr.mxu0 0.0
    %6121 = vmatpush1.xpose.msra.mxu0 0.0
    %6122 = vmatprep.subr.mxu0 0.0
    %6123 = vmatpush1.xpose.msra.mxu0 %v6090
    %6124 = vmatprep.subr.mxu0 0.0
    %6125 = vmatpush2.xpose.msra.mxu0 0.0
    %6126 = vmatprep.subr.mxu0 0.0
    %6127 = vmatpush2.xpose.msra.mxu0 0.0
    %6128 = vmatprep.subr.mxu0 0.0
    %6129 = vmatpush2.xpose.msra.mxu0 0.0
    %6130 = vmatprep.subr.mxu0 0.0
    %6131 = vmatpush2.xpose.msra.mxu0 0.0
    %6132 = vmatprep.subr.mxu0 0.0
    %6133 = vmatpush2.xpose.msra.mxu0 0.0
    %6134 = vmatprep.subr.mxu0 0.0
    %6135 = vmatpush2.xpose.msra.mxu0 0.0
    %6136 = vmatprep.subr.mxu0 0.0
    %6137 = vmatpush2.xpose.msra.mxu0 0.0
    %6138 = vmatprep.subr.mxu0 0.0
    %6139 = vmatpush2.xpose.msra.mxu0 0.0
    %6140 = vmatprep.subr.mxu0 0.0
    %6141 = vmatpush2.xpose.msra.mxu0 0.0
    %6142 = vmatprep.subr.mxu0 0.0
    %6143 = vmatpush2.xpose.msra.mxu0 0.0
    %6144 = vmatprep.subr.mxu0 0.0
    %6145 = vmatpush2.xpose.msra.mxu0 0.0
    %6146 = vmatprep.subr.mxu0 0.0
    %6147 = vmatpush2.xpose.msra.mxu0 0.0
    %6148 = vmatprep.subr.mxu0 0.0
    %6149 = vmatpush2.xpose.msra.mxu0 0.0
    %6150 = vmatprep.subr.mxu0 0.0
    %6151 = vmatpush2.xpose.msra.mxu0 0.0
    %6152 = vmatprep.subr.mxu0 0.0
    %6153 = vmatpush2.xpose.msra.mxu0 0.0
    %6154 = vmatprep.subr.mxu0 0.0
    %6155 = vmatpush2.xpose.msra.mxu0 0.0
    %6156 = vmatprep.mubr.f32.mxu0 0.0
    %6157 = vmatmul.mubr.f32.gmra.mxu0 %v6088
    %v6158 = vpop.f32.mrf.mxu0
    %v6159 = vadd.f32 0.0, %v6158
    %v6160 = vpop.f32.mrf.mxu0
    %6161 = vdwg.mxu0
    %v6162 = vsel %vm363, %v6082, -inf
    %6163 = vmax.xlane.f32.xlu0 %v6162
    %v6164 = vpop.xlane.xlu0 %6163
    %v6165 = vsel %vm363, %v6159, -inf
    %6166 = vmax.xlane.f32.xlu0 %v6165
    %v6167 = vpop.xlane.xlu0 %6166
    %v6168 = vsub.f32 %v6082, %v6164
    %v6169 = vsub.f32 %v6159, %v6167
    %v6170 = vmul.f32 %v6168, 1.442695
    %v6171 = vpow.pop %v6170
    %v6172 = vmul.f32 %v6169, 1.442695
    %v6173 = vpow.pop %v6172
    %v6174 = vsel %vm363, %v6171, 0.0
    %6175 = vadd.xlane.f32.xlu0 %v6174
    %v6176 = vpop.xlane.xlu0 %6175
    %v6177 = vsel %vm363, %v6173, 0.0
    %6178 = vadd.xlane.f32.xlu0 %v6177
    %v6179 = vpop.xlane.xlu0 %6178
    %v6180 = vrcp.pop %v6176
    %v6181 = vrcp.pop %v6179
    %v6182 = vmul.f32 %v6171, %v6180
    %v6183 = vmul.f32 %v6173, %v6181
    %6184 = vrot.lane.b32.xlu0 %v253, 32
    %v6185 = vpop.permute.xlu0 %6184
    %v6188 = vsel %vm363, %v6182, 0
    %6190 = vmatprep.subr.mxu0 0.0
    %6191 = vmatpush1.msra.mxu0 0.0
    %6192 = vmatprep.subr.mxu0 0.0
    %6193 = vmatpush1.msra.mxu0 0.0
    %6194 = vmatprep.subr.mxu0 0.0
    %6195 = vmatpush1.msra.mxu0 0.0
    %6196 = vmatprep.subr.mxu0 0.0
    %6197 = vmatpush1.msra.mxu0 0.0
    %6198 = vmatprep.subr.mxu0 0.0
    %6199 = vmatpush1.msra.mxu0 0.0
    %6200 = vmatprep.subr.mxu0 0.0
    %6201 = vmatpush1.msra.mxu0 0.0
    %6202 = vmatprep.subr.mxu0 0.0
    %6203 = vmatpush1.msra.mxu0 0.0
    %6204 = vmatprep.subr.mxu0 0.0
    %6205 = vmatpush1.msra.mxu0 0.0
    %6206 = vmatprep.subr.mxu0 0.0
    %6207 = vmatpush1.msra.mxu0 0.0
    %6208 = vmatprep.subr.mxu0 0.0
    %6209 = vmatpush1.msra.mxu0 0.0
    %6210 = vmatprep.subr.mxu0 0.0
    %6211 = vmatpush1.msra.mxu0 0.0
    %6212 = vmatprep.subr.mxu0 0.0
    %6213 = vmatpush1.msra.mxu0 0.0
    %6214 = vmatprep.subr.mxu0 0.0
    %6215 = vmatpush1.msra.mxu0 0.0
    %6216 = vmatprep.subr.mxu0 0.0
    %6217 = vmatpush1.msra.mxu0 0.0
    %6218 = vmatprep.subr.mxu0 0.0
    %6219 = vmatpush1.msra.mxu0 0.0
    %6220 = vmatprep.subr.mxu0 0.0
    %6221 = vmatpush1.msra.mxu0 %v6185
    %6222 = vmatprep.subr.mxu0 0.0
    %6223 = vmatpush2.msra.mxu0 0.0
    %6224 = vmatprep.subr.mxu0 0.0
    %6225 = vmatpush2.msra.mxu0 0.0
    %6226 = vmatprep.subr.mxu0 0.0
    %6227 = vmatpush2.msra.mxu0 0.0
    %6228 = vmatprep.subr.mxu0 0.0
    %6229 = vmatpush2.msra.mxu0 0.0
    %6230 = vmatprep.subr.mxu0 0.0
    %6231 = vmatpush2.msra.mxu0 0.0
    %6232 = vmatprep.subr.mxu0 0.0
    %6233 = vmatpush2.msra.mxu0 0.0
    %6234 = vmatprep.subr.mxu0 0.0
    %6235 = vmatpush2.msra.mxu0 0.0
    %6236 = vmatprep.subr.mxu0 0.0
    %6237 = vmatpush2.msra.mxu0 0.0
    %6238 = vmatprep.subr.mxu0 0.0
    %6239 = vmatpush2.msra.mxu0 0.0
    %6240 = vmatprep.subr.mxu0 0.0
    %6241 = vmatpush2.msra.mxu0 0.0
    %6242 = vmatprep.subr.mxu0 0.0
    %6243 = vmatpush2.msra.mxu0 0.0
    %6244 = vmatprep.subr.mxu0 0.0
    %6245 = vmatpush2.msra.mxu0 0.0
    %6246 = vmatprep.subr.mxu0 0.0
    %6247 = vmatpush2.msra.mxu0 0.0
    %6248 = vmatprep.subr.mxu0 0.0
    %6249 = vmatpush2.msra.mxu0 0.0
    %6250 = vmatprep.subr.mxu0 0.0
    %6251 = vmatpush2.msra.mxu0 0.0
    %6252 = vmatprep.subr.mxu0 0.0
    %6253 = vmatpush2.msra.mxu0 0.0
    %6254 = vmatprep.mubr.f32.mxu0 0.0
    %6255 = vmatmul.mubr.f32.gmra.mxu0 %v6188
    %v6256 = vpop.f32.mrf.mxu0
    %v6257 = vadd.f32 0.0, %v6256
    %v6258 = vpop.f32.mrf.mxu0
    %6259 = vdwg.mxu0
    %6260 = vrot.lane.b32.xlu0 %v258, 32
    %v6261 = vpop.permute.xlu0 %6260
    %v6264 = vsel %vm363, %v6183, 0
    %6266 = vmatprep.subr.mxu0 0.0
    %6267 = vmatpush1.msra.mxu0 0.0
    %6268 = vmatprep.subr.mxu0 0.0
    %6269 = vmatpush1.msra.mxu0 0.0
    %6270 = vmatprep.subr.mxu0 0.0
    %6271 = vmatpush1.msra.mxu0 0.0
    %6272 = vmatprep.subr.mxu0 0.0
    %6273 = vmatpush1.msra.mxu0 0.0
    %6274 = vmatprep.subr.mxu0 0.0
    %6275 = vmatpush1.msra.mxu0 0.0
    %6276 = vmatprep.subr.mxu0 0.0
    %6277 = vmatpush1.msra.mxu0 0.0
    %6278 = vmatprep.subr.mxu0 0.0
    %6279 = vmatpush1.msra.mxu0 0.0
    %6280 = vmatprep.subr.mxu0 0.0
    %6281 = vmatpush1.msra.mxu0 0.0
    %6282 = vmatprep.subr.mxu0 0.0
    %6283 = vmatpush1.msra.mxu0 0.0
    %6284 = vmatprep.subr.mxu0 0.0
    %6285 = vmatpush1.msra.mxu0 0.0
    %6286 = vmatprep.subr.mxu0 0.0
    %6287 = vmatpush1.msra.mxu0 0.0
    %6288 = vmatprep.subr.mxu0 0.0
    %6289 = vmatpush1.msra.mxu0 0.0
    %6290 = vmatprep.subr.mxu0 0.0
    %6291 = vmatpush1.msra.mxu0 0.0
    %6292 = vmatprep.subr.mxu0 0.0
    %6293 = vmatpush1.msra.mxu0 0.0
    %6294 = vmatprep.subr.mxu0 0.0
    %6295 = vmatpush1.msra.mxu0 0.0
    %6296 = vmatprep.subr.mxu0 0.0
    %6297 = vmatpush1.msra.mxu0 %v6261
    %6298 = vmatprep.subr.mxu0 0.0
    %6299 = vmatpush2.msra.mxu0 0.0
    %6300 = vmatprep.subr.mxu0 0.0
    %6301 = vmatpush2.msra.mxu0 0.0
    %6302 = vmatprep.subr.mxu0 0.0
    %6303 = vmatpush2.msra.mxu0 0.0
    %6304 = vmatprep.subr.mxu0 0.0
    %6305 = vmatpush2.msra.mxu0 0.0
    %6306 = vmatprep.subr.mxu0 0.0
    %6307 = vmatpush2.msra.mxu0 0.0
    %6308 = vmatprep.subr.mxu0 0.0
    %6309 = vmatpush2.msra.mxu0 0.0
    %6310 = vmatprep.subr.mxu0 0.0
    %6311 = vmatpush2.msra.mxu0 0.0
    %6312 = vmatprep.subr.mxu0 0.0
    %6313 = vmatpush2.msra.mxu0 0.0
    %6314 = vmatprep.subr.mxu0 0.0
    %6315 = vmatpush2.msra.mxu0 0.0
    %6316 = vmatprep.subr.mxu0 0.0
    %6317 = vmatpush2.msra.mxu0 0.0
    %6318 = vmatprep.subr.mxu0 0.0
    %6319 = vmatpush2.msra.mxu0 0.0
    %6320 = vmatprep.subr.mxu0 0.0
    %6321 = vmatpush2.msra.mxu0 0.0
    %6322 = vmatprep.subr.mxu0 0.0
    %6323 = vmatpush2.msra.mxu0 0.0
    %6324 = vmatprep.subr.mxu0 0.0
    %6325 = vmatpush2.msra.mxu0 0.0
    %6326 = vmatprep.subr.mxu0 0.0
    %6327 = vmatpush2.msra.mxu0 0.0
    %6328 = vmatprep.subr.mxu0 0.0
    %6329 = vmatpush2.msra.mxu0 0.0
    %6330 = vmatprep.mubr.f32.mxu0 0.0
    %6331 = vmatmul.mubr.f32.gmra.mxu0 %v6264
    %v6332 = vpop.f32.mrf.mxu0
    %v6333 = vadd.f32 0.0, %v6332
    %v6334 = vpop.f32.mrf.mxu0
    %6335 = vdwg.mxu0
    %s6336 = scalar_lea.vmem [#allocation13], 32
    %v6337 = vld [vmem:[%s6336] sm:$0xff]
    %v6339 = vsel %vm363, %v6257, 0
    %v6342 = vsel %vm363, %v6333, 0
    %6344 = vmatprep.subr.mxu0 0.0
    %6345 = vmatpush1.msra.mxu0 0.0
    %6346 = vmatprep.subr.mxu0 0.0
    %6347 = vmatpush1.msra.mxu0 0.0
    %6348 = vmatprep.subr.mxu0 0.0
    %6349 = vmatpush1.msra.mxu0 0.0
    %6350 = vmatprep.subr.mxu0 0.0
    %6351 = vmatpush1.msra.mxu0 0.0
    %6352 = vmatprep.subr.mxu0 0.0
    %6353 = vmatpush1.msra.mxu0 0.0
    %6354 = vmatprep.subr.mxu0 0.0
    %6355 = vmatpush1.msra.mxu0 0.0
    %6356 = vmatprep.subr.mxu0 0.0
    %6357 = vmatpush1.msra.mxu0 0.0
    %6358 = vmatprep.subr.mxu0 0.0
    %6359 = vmatpush1.msra.mxu0 0.0
    %6360 = vmatprep.subr.mxu0 0.0
    %6361 = vmatpush1.msra.mxu0 0.0
    %6362 = vmatprep.subr.mxu0 0.0
    %6363 = vmatpush1.msra.mxu0 0.0
    %6364 = vmatprep.subr.mxu0 0.0
    %6365 = vmatpush1.msra.mxu0 0.0
    %6366 = vmatprep.subr.mxu0 0.0
    %6367 = vmatpush1.msra.mxu0 0.0
    %6368 = vmatprep.subr.mxu0 0.0
    %6369 = vmatpush1.msra.mxu0 0.0
    %6370 = vmatprep.subr.mxu0 0.0
    %6371 = vmatpush1.msra.mxu0 0.0
    %6372 = vmatprep.subr.mxu0 0.0
    %6373 = vmatpush1.msra.mxu0 0.0
    %6374 = vmatprep.subr.mxu0 0.0
    %6375 = vmatpush1.msra.mxu0 %v6337
    %6376 = vmatprep.subr.mxu0 0.0
    %6377 = vmatpush2.msra.mxu0 0.0
    %6378 = vmatprep.subr.mxu0 0.0
    %6379 = vmatpush2.msra.mxu0 0.0
    %6380 = vmatprep.subr.mxu0 0.0
    %6381 = vmatpush2.msra.mxu0 0.0
    %6382 = vmatprep.subr.mxu0 0.0
    %6383 = vmatpush2.msra.mxu0 0.0
    %6384 = vmatprep.subr.mxu0 0.0
    %6385 = vmatpush2.msra.mxu0 0.0
    %6386 = vmatprep.subr.mxu0 0.0
    %6387 = vmatpush2.msra.mxu0 0.0
    %6388 = vmatprep.subr.mxu0 0.0
    %6389 = vmatpush2.msra.mxu0 0.0
    %6390 = vmatprep.subr.mxu0 0.0
    %6391 = vmatpush2.msra.mxu0 0.0
    %6392 = vmatprep.subr.mxu0 0.0
    %6393 = vmatpush2.msra.mxu0 0.0
    %6394 = vmatprep.subr.mxu0 0.0
    %6395 = vmatpush2.msra.mxu0 0.0
    %6396 = vmatprep.subr.mxu0 0.0
    %6397 = vmatpush2.msra.mxu0 0.0
    %6398 = vmatprep.subr.mxu0 0.0
    %6399 = vmatpush2.msra.mxu0 0.0
    %6400 = vmatprep.subr.mxu0 0.0
    %6401 = vmatpush2.msra.mxu0 0.0
    %6402 = vmatprep.subr.mxu0 0.0
    %6403 = vmatpush2.msra.mxu0 0.0
    %6404 = vmatprep.subr.mxu0 0.0
    %6405 = vmatpush2.msra.mxu0 0.0
    %6406 = vmatprep.subr.mxu0 0.0
    %6407 = vmatpush2.msra.mxu0 0.0
    %6408 = vmatprep.mubr.f32.mxu0 0.0
    %6409 = vmatmul.mubr.f32.gmra.mxu0 %v6339
    %v6410 = vpop.f32.mrf.mxu0
    %v6411 = vadd.f32 0.0, %v6410
    %v6412 = vpop.f32.mrf.mxu0
    %6413 = vmatprep.mubr.f32.mxu0 0.0
    %6414 = vmatmul.mubr.f32.gmra.mxu0 %v6342
    %v6415 = vpop.f32.mrf.mxu0
    %v6416 = vadd.f32 0.0, %v6415
    %v6417 = vpop.f32.mrf.mxu0
    %6418 = vdwg.mxu0
    %v6419 = vadd.f32 %v6006, %v6411
    %v6420 = vadd.f32 %v6006, %v6416
    %6421 = vrot.lane.b32.xlu0 %v5992, 120
    %v6422 = vpop.permute.xlu0 %6421
    %6423 = vrot.lane.b32.xlu0 %v253, 56
    %v6424 = vpop.permute.xlu0 %6423
    %v6425 = vsel %vm363, %v6422, 0
    %v6427 = vsel %vm363, %v6424, 0
    %6429 = vmatprep.subr.mxu0 0.0
    %6430 = vmatpush1.xpose.msra.mxu0 0.0
    %6431 = vmatprep.subr.mxu0 0.0
    %6432 = vmatpush1.xpose.msra.mxu0 0.0
    %6433 = vmatprep.subr.mxu0 0.0
    %6434 = vmatpush1.xpose.msra.mxu0 0.0
    %6435 = vmatprep.subr.mxu0 0.0
    %6436 = vmatpush1.xpose.msra.mxu0 0.0
    %6437 = vmatprep.subr.mxu0 0.0
    %6438 = vmatpush1.xpose.msra.mxu0 0.0
    %6439 = vmatprep.subr.mxu0 0.0
    %6440 = vmatpush1.xpose.msra.mxu0 0.0
    %6441 = vmatprep.subr.mxu0 0.0
    %6442 = vmatpush1.xpose.msra.mxu0 0.0
    %6443 = vmatprep.subr.mxu0 0.0
    %6444 = vmatpush1.xpose.msra.mxu0 0.0
    %6445 = vmatprep.subr.mxu0 0.0
    %6446 = vmatpush1.xpose.msra.mxu0 0.0
    %6447 = vmatprep.subr.mxu0 0.0
    %6448 = vmatpush1.xpose.msra.mxu0 0.0
    %6449 = vmatprep.subr.mxu0 0.0
    %6450 = vmatpush1.xpose.msra.mxu0 0.0
    %6451 = vmatprep.subr.mxu0 0.0
    %6452 = vmatpush1.xpose.msra.mxu0 0.0
    %6453 = vmatprep.subr.mxu0 0.0
    %6454 = vmatpush1.xpose.msra.mxu0 0.0
    %6455 = vmatprep.subr.mxu0 0.0
    %6456 = vmatpush1.xpose.msra.mxu0 0.0
    %6457 = vmatprep.subr.mxu0 0.0
    %6458 = vmatpush1.xpose.msra.mxu0 0.0
    %6459 = vmatprep.subr.mxu0 0.0
    %6460 = vmatpush1.xpose.msra.mxu0 %v6427
    %6461 = vmatprep.subr.mxu0 0.0
    %6462 = vmatpush2.xpose.msra.mxu0 0.0
    %6463 = vmatprep.subr.mxu0 0.0
    %6464 = vmatpush2.xpose.msra.mxu0 0.0
    %6465 = vmatprep.subr.mxu0 0.0
    %6466 = vmatpush2.xpose.msra.mxu0 0.0
    %6467 = vmatprep.subr.mxu0 0.0
    %6468 = vmatpush2.xpose.msra.mxu0 0.0
    %6469 = vmatprep.subr.mxu0 0.0
    %6470 = vmatpush2.xpose.msra.mxu0 0.0
    %6471 = vmatprep.subr.mxu0 0.0
    %6472 = vmatpush2.xpose.msra.mxu0 0.0
    %6473 = vmatprep.subr.mxu0 0.0
    %6474 = vmatpush2.xpose.msra.mxu0 0.0
    %6475 = vmatprep.subr.mxu0 0.0
    %6476 = vmatpush2.xpose.msra.mxu0 0.0
    %6477 = vmatprep.subr.mxu0 0.0
    %6478 = vmatpush2.xpose.msra.mxu0 0.0
    %6479 = vmatprep.subr.mxu0 0.0
    %6480 = vmatpush2.xpose.msra.mxu0 0.0
    %6481 = vmatprep.subr.mxu0 0.0
    %6482 = vmatpush2.xpose.msra.mxu0 0.0
    %6483 = vmatprep.subr.mxu0 0.0
    %6484 = vmatpush2.xpose.msra.mxu0 0.0
    %6485 = vmatprep.subr.mxu0 0.0
    %6486 = vmatpush2.xpose.msra.mxu0 0.0
    %6487 = vmatprep.subr.mxu0 0.0
    %6488 = vmatpush2.xpose.msra.mxu0 0.0
    %6489 = vmatprep.subr.mxu0 0.0
    %6490 = vmatpush2.xpose.msra.mxu0 0.0
    %6491 = vmatprep.subr.mxu0 0.0
    %6492 = vmatpush2.xpose.msra.mxu0 0.0
    %6493 = vmatprep.mubr.f32.mxu0 0.0
    %6494 = vmatmul.mubr.f32.gmra.mxu0 %v6425
    %v6495 = vpop.f32.mrf.mxu0
    %v6496 = vadd.f32 0.0, %v6495
    %v6497 = vpop.f32.mrf.mxu0
    %6498 = vdwg.mxu0
    %6499 = vrot.lane.b32.xlu0 %v5997, 120
    %v6500 = vpop.permute.xlu0 %6499
    %6501 = vrot.lane.b32.xlu0 %v258, 56
    %v6502 = vpop.permute.xlu0 %6501
    %v6503 = vsel %vm363, %v6500, 0
    %v6505 = vsel %vm363, %v6502, 0
    %6507 = vmatprep.subr.mxu0 0.0
    %6508 = vmatpush1.xpose.msra.mxu0 0.0
    %6509 = vmatprep.subr.mxu0 0.0
    %6510 = vmatpush1.xpose.msra.mxu0 0.0
    %6511 = vmatprep.subr.mxu0 0.0
    %6512 = vmatpush1.xpose.msra.mxu0 0.0
    %6513 = vmatprep.subr.mxu0 0.0
    %6514 = vmatpush1.xpose.msra.mxu0 0.0
    %6515 = vmatprep.subr.mxu0 0.0
    %6516 = vmatpush1.xpose.msra.mxu0 0.0
    %6517 = vmatprep.subr.mxu0 0.0
    %6518 = vmatpush1.xpose.msra.mxu0 0.0
    %6519 = vmatprep.subr.mxu0 0.0
    %6520 = vmatpush1.xpose.msra.mxu0 0.0
    %6521 = vmatprep.subr.mxu0 0.0
    %6522 = vmatpush1.xpose.msra.mxu0 0.0
    %6523 = vmatprep.subr.mxu0 0.0
    %6524 = vmatpush1.xpose.msra.mxu0 0.0
    %6525 = vmatprep.subr.mxu0 0.0
    %6526 = vmatpush1.xpose.msra.mxu0 0.0
    %6527 = vmatprep.subr.mxu0 0.0
    %6528 = vmatpush1.xpose.msra.mxu0 0.0
    %6529 = vmatprep.subr.mxu0 0.0
    %6530 = vmatpush1.xpose.msra.mxu0 0.0
    %6531 = vmatprep.subr.mxu0 0.0
    %6532 = vmatpush1.xpose.msra.mxu0 0.0
    %6533 = vmatprep.subr.mxu0 0.0
    %6534 = vmatpush1.xpose.msra.mxu0 0.0
    %6535 = vmatprep.subr.mxu0 0.0
    %6536 = vmatpush1.xpose.msra.mxu0 0.0
    %6537 = vmatprep.subr.mxu0 0.0
    %6538 = vmatpush1.xpose.msra.mxu0 %v6505
    %6539 = vmatprep.subr.mxu0 0.0
    %6540 = vmatpush2.xpose.msra.mxu0 0.0
    %6541 = vmatprep.subr.mxu0 0.0
    %6542 = vmatpush2.xpose.msra.mxu0 0.0
    %6543 = vmatprep.subr.mxu0 0.0
    %6544 = vmatpush2.xpose.msra.mxu0 0.0
    %6545 = vmatprep.subr.mxu0 0.0
    %6546 = vmatpush2.xpose.msra.mxu0 0.0
    %6547 = vmatprep.subr.mxu0 0.0
    %6548 = vmatpush2.xpose.msra.mxu0 0.0
    %6549 = vmatprep.subr.mxu0 0.0
    %6550 = vmatpush2.xpose.msra.mxu0 0.0
    %6551 = vmatprep.subr.mxu0 0.0
    %6552 = vmatpush2.xpose.msra.mxu0 0.0
    %6553 = vmatprep.subr.mxu0 0.0
    %6554 = vmatpush2.xpose.msra.mxu0 0.0
    %6555 = vmatprep.subr.mxu0 0.0
    %6556 = vmatpush2.xpose.msra.mxu0 0.0
    %6557 = vmatprep.subr.mxu0 0.0
    %6558 = vmatpush2.xpose.msra.mxu0 0.0
    %6559 = vmatprep.subr.mxu0 0.0
    %6560 = vmatpush2.xpose.msra.mxu0 0.0
    %6561 = vmatprep.subr.mxu0 0.0
    %6562 = vmatpush2.xpose.msra.mxu0 0.0
    %6563 = vmatprep.subr.mxu0 0.0
    %6564 = vmatpush2.xpose.msra.mxu0 0.0
    %6565 = vmatprep.subr.mxu0 0.0
    %6566 = vmatpush2.xpose.msra.mxu0 0.0
    %6567 = vmatprep.subr.mxu0 0.0
    %6568 = vmatpush2.xpose.msra.mxu0 0.0
    %6569 = vmatprep.subr.mxu0 0.0
    %6570 = vmatpush2.xpose.msra.mxu0 0.0
    %6571 = vmatprep.mubr.f32.mxu0 0.0
    %6572 = vmatmul.mubr.f32.gmra.mxu0 %v6503
    %v6573 = vpop.f32.mrf.mxu0
    %v6574 = vadd.f32 0.0, %v6573
    %v6575 = vpop.f32.mrf.mxu0
    %6576 = vdwg.mxu0
    %v6577 = vsel %vm363, %v6496, -inf
    %6578 = vmax.xlane.f32.xlu0 %v6577
    %v6579 = vpop.xlane.xlu0 %6578
    %v6580 = vsel %vm363, %v6574, -inf
    %6581 = vmax.xlane.f32.xlu0 %v6580
    %v6582 = vpop.xlane.xlu0 %6581
    %v6583 = vsub.f32 %v6496, %v6579
    %v6584 = vsub.f32 %v6574, %v6582
    %v6585 = vmul.f32 %v6583, 1.442695
    %v6586 = vpow.pop %v6585
    %v6587 = vmul.f32 %v6584, 1.442695
    %v6588 = vpow.pop %v6587
    %v6589 = vsel %vm363, %v6586, 0.0
    %6590 = vadd.xlane.f32.xlu0 %v6589
    %v6591 = vpop.xlane.xlu0 %6590
    %v6592 = vsel %vm363, %v6588, 0.0
    %6593 = vadd.xlane.f32.xlu0 %v6592
    %v6594 = vpop.xlane.xlu0 %6593
    %v6595 = vrcp.pop %v6591
    %v6596 = vrcp.pop %v6594
    %v6597 = vmul.f32 %v6586, %v6595
    %v6598 = vmul.f32 %v6588, %v6596
    %6599 = vrot.lane.b32.xlu0 %v253, 24
    %v6600 = vpop.permute.xlu0 %6599
    %v6603 = vsel %vm363, %v6597, 0
    %6605 = vmatprep.subr.mxu0 0.0
    %6606 = vmatpush1.msra.mxu0 0.0
    %6607 = vmatprep.subr.mxu0 0.0
    %6608 = vmatpush1.msra.mxu0 0.0
    %6609 = vmatprep.subr.mxu0 0.0
    %6610 = vmatpush1.msra.mxu0 0.0
    %6611 = vmatprep.subr.mxu0 0.0
    %6612 = vmatpush1.msra.mxu0 0.0
    %6613 = vmatprep.subr.mxu0 0.0
    %6614 = vmatpush1.msra.mxu0 0.0
    %6615 = vmatprep.subr.mxu0 0.0
    %6616 = vmatpush1.msra.mxu0 0.0
    %6617 = vmatprep.subr.mxu0 0.0
    %6618 = vmatpush1.msra.mxu0 0.0
    %6619 = vmatprep.subr.mxu0 0.0
    %6620 = vmatpush1.msra.mxu0 0.0
    %6621 = vmatprep.subr.mxu0 0.0
    %6622 = vmatpush1.msra.mxu0 0.0
    %6623 = vmatprep.subr.mxu0 0.0
    %6624 = vmatpush1.msra.mxu0 0.0
    %6625 = vmatprep.subr.mxu0 0.0
    %6626 = vmatpush1.msra.mxu0 0.0
    %6627 = vmatprep.subr.mxu0 0.0
    %6628 = vmatpush1.msra.mxu0 0.0
    %6629 = vmatprep.subr.mxu0 0.0
    %6630 = vmatpush1.msra.mxu0 0.0
    %6631 = vmatprep.subr.mxu0 0.0
    %6632 = vmatpush1.msra.mxu0 0.0
    %6633 = vmatprep.subr.mxu0 0.0
    %6634 = vmatpush1.msra.mxu0 0.0
    %6635 = vmatprep.subr.mxu0 0.0
    %6636 = vmatpush1.msra.mxu0 %v6600
    %6637 = vmatprep.subr.mxu0 0.0
    %6638 = vmatpush2.msra.mxu0 0.0
    %6639 = vmatprep.subr.mxu0 0.0
    %6640 = vmatpush2.msra.mxu0 0.0
    %6641 = vmatprep.subr.mxu0 0.0
    %6642 = vmatpush2.msra.mxu0 0.0
    %6643 = vmatprep.subr.mxu0 0.0
    %6644 = vmatpush2.msra.mxu0 0.0
    %6645 = vmatprep.subr.mxu0 0.0
    %6646 = vmatpush2.msra.mxu0 0.0
    %6647 = vmatprep.subr.mxu0 0.0
    %6648 = vmatpush2.msra.mxu0 0.0
    %6649 = vmatprep.subr.mxu0 0.0
    %6650 = vmatpush2.msra.mxu0 0.0
    %6651 = vmatprep.subr.mxu0 0.0
    %6652 = vmatpush2.msra.mxu0 0.0
    %6653 = vmatprep.subr.mxu0 0.0
    %6654 = vmatpush2.msra.mxu0 0.0
    %6655 = vmatprep.subr.mxu0 0.0
    %6656 = vmatpush2.msra.mxu0 0.0
    %6657 = vmatprep.subr.mxu0 0.0
    %6658 = vmatpush2.msra.mxu0 0.0
    %6659 = vmatprep.subr.mxu0 0.0
    %6660 = vmatpush2.msra.mxu0 0.0
    %6661 = vmatprep.subr.mxu0 0.0
    %6662 = vmatpush2.msra.mxu0 0.0
    %6663 = vmatprep.subr.mxu0 0.0
    %6664 = vmatpush2.msra.mxu0 0.0
    %6665 = vmatprep.subr.mxu0 0.0
    %6666 = vmatpush2.msra.mxu0 0.0
    %6667 = vmatprep.subr.mxu0 0.0
    %6668 = vmatpush2.msra.mxu0 0.0
    %6669 = vmatprep.mubr.f32.mxu0 0.0
    %6670 = vmatmul.mubr.f32.gmra.mxu0 %v6603
    %v6671 = vpop.f32.mrf.mxu0
    %v6672 = vadd.f32 0.0, %v6671
    %v6673 = vpop.f32.mrf.mxu0
    %6674 = vdwg.mxu0
    %6675 = vrot.lane.b32.xlu0 %v258, 24
    %v6676 = vpop.permute.xlu0 %6675
    %v6679 = vsel %vm363, %v6598, 0
    %6681 = vmatprep.subr.mxu0 0.0
    %6682 = vmatpush1.msra.mxu0 0.0
    %6683 = vmatprep.subr.mxu0 0.0
    %6684 = vmatpush1.msra.mxu0 0.0
    %6685 = vmatprep.subr.mxu0 0.0
    %6686 = vmatpush1.msra.mxu0 0.0
    %6687 = vmatprep.subr.mxu0 0.0
    %6688 = vmatpush1.msra.mxu0 0.0
    %6689 = vmatprep.subr.mxu0 0.0
    %6690 = vmatpush1.msra.mxu0 0.0
    %6691 = vmatprep.subr.mxu0 0.0
    %6692 = vmatpush1.msra.mxu0 0.0
    %6693 = vmatprep.subr.mxu0 0.0
    %6694 = vmatpush1.msra.mxu0 0.0
    %6695 = vmatprep.subr.mxu0 0.0
    %6696 = vmatpush1.msra.mxu0 0.0
    %6697 = vmatprep.subr.mxu0 0.0
    %6698 = vmatpush1.msra.mxu0 0.0
    %6699 = vmatprep.subr.mxu0 0.0
    %6700 = vmatpush1.msra.mxu0 0.0
    %6701 = vmatprep.subr.mxu0 0.0
    %6702 = vmatpush1.msra.mxu0 0.0
    %6703 = vmatprep.subr.mxu0 0.0
    %6704 = vmatpush1.msra.mxu0 0.0
    %6705 = vmatprep.subr.mxu0 0.0
    %6706 = vmatpush1.msra.mxu0 0.0
    %6707 = vmatprep.subr.mxu0 0.0
    %6708 = vmatpush1.msra.mxu0 0.0
    %6709 = vmatprep.subr.mxu0 0.0
    %6710 = vmatpush1.msra.mxu0 0.0
    %6711 = vmatprep.subr.mxu0 0.0
    %6712 = vmatpush1.msra.mxu0 %v6676
    %6713 = vmatprep.subr.mxu0 0.0
    %6714 = vmatpush2.msra.mxu0 0.0
    %6715 = vmatprep.subr.mxu0 0.0
    %6716 = vmatpush2.msra.mxu0 0.0
    %6717 = vmatprep.subr.mxu0 0.0
    %6718 = vmatpush2.msra.mxu0 0.0
    %6719 = vmatprep.subr.mxu0 0.0
    %6720 = vmatpush2.msra.mxu0 0.0
    %6721 = vmatprep.subr.mxu0 0.0
    %6722 = vmatpush2.msra.mxu0 0.0
    %6723 = vmatprep.subr.mxu0 0.0
    %6724 = vmatpush2.msra.mxu0 0.0
    %6725 = vmatprep.subr.mxu0 0.0
    %6726 = vmatpush2.msra.mxu0 0.0
    %6727 = vmatprep.subr.mxu0 0.0
    %6728 = vmatpush2.msra.mxu0 0.0
    %6729 = vmatprep.subr.mxu0 0.0
    %6730 = vmatpush2.msra.mxu0 0.0
    %6731 = vmatprep.subr.mxu0 0.0
    %6732 = vmatpush2.msra.mxu0 0.0
    %6733 = vmatprep.subr.mxu0 0.0
    %6734 = vmatpush2.msra.mxu0 0.0
    %6735 = vmatprep.subr.mxu0 0.0
    %6736 = vmatpush2.msra.mxu0 0.0
    %6737 = vmatprep.subr.mxu0 0.0
    %6738 = vmatpush2.msra.mxu0 0.0
    %6739 = vmatprep.subr.mxu0 0.0
    %6740 = vmatpush2.msra.mxu0 0.0
    %6741 = vmatprep.subr.mxu0 0.0
    %6742 = vmatpush2.msra.mxu0 0.0
    %6743 = vmatprep.subr.mxu0 0.0
    %6744 = vmatpush2.msra.mxu0 0.0
    %6745 = vmatprep.mubr.f32.mxu0 0.0
    %6746 = vmatmul.mubr.f32.gmra.mxu0 %v6679
    %v6747 = vpop.f32.mrf.mxu0
    %v6748 = vadd.f32 0.0, %v6747
    %v6749 = vpop.f32.mrf.mxu0
    %6750 = vdwg.mxu0
    %v6751 = vld [vmem:[%s6336 + $0x8] sm:$0xff]
    %v6753 = vsel %vm363, %v6672, 0
    %v6756 = vsel %vm363, %v6748, 0
    %6758 = vmatprep.subr.mxu0 0.0
    %6759 = vmatpush1.msra.mxu0 0.0
    %6760 = vmatprep.subr.mxu0 0.0
    %6761 = vmatpush1.msra.mxu0 0.0
    %6762 = vmatprep.subr.mxu0 0.0
    %6763 = vmatpush1.msra.mxu0 0.0
    %6764 = vmatprep.subr.mxu0 0.0
    %6765 = vmatpush1.msra.mxu0 0.0
    %6766 = vmatprep.subr.mxu0 0.0
    %6767 = vmatpush1.msra.mxu0 0.0
    %6768 = vmatprep.subr.mxu0 0.0
    %6769 = vmatpush1.msra.mxu0 0.0
    %6770 = vmatprep.subr.mxu0 0.0
    %6771 = vmatpush1.msra.mxu0 0.0
    %6772 = vmatprep.subr.mxu0 0.0
    %6773 = vmatpush1.msra.mxu0 0.0
    %6774 = vmatprep.subr.mxu0 0.0
    %6775 = vmatpush1.msra.mxu0 0.0
    %6776 = vmatprep.subr.mxu0 0.0
    %6777 = vmatpush1.msra.mxu0 0.0
    %6778 = vmatprep.subr.mxu0 0.0
    %6779 = vmatpush1.msra.mxu0 0.0
    %6780 = vmatprep.subr.mxu0 0.0
    %6781 = vmatpush1.msra.mxu0 0.0
    %6782 = vmatprep.subr.mxu0 0.0
    %6783 = vmatpush1.msra.mxu0 0.0
    %6784 = vmatprep.subr.mxu0 0.0
    %6785 = vmatpush1.msra.mxu0 0.0
    %6786 = vmatprep.subr.mxu0 0.0
    %6787 = vmatpush1.msra.mxu0 0.0
    %6788 = vmatprep.subr.mxu0 0.0
    %6789 = vmatpush1.msra.mxu0 %v6751
    %6790 = vmatprep.subr.mxu0 0.0
    %6791 = vmatpush2.msra.mxu0 0.0
    %6792 = vmatprep.subr.mxu0 0.0
    %6793 = vmatpush2.msra.mxu0 0.0
    %6794 = vmatprep.subr.mxu0 0.0
    %6795 = vmatpush2.msra.mxu0 0.0
    %6796 = vmatprep.subr.mxu0 0.0
    %6797 = vmatpush2.msra.mxu0 0.0
    %6798 = vmatprep.subr.mxu0 0.0
    %6799 = vmatpush2.msra.mxu0 0.0
    %6800 = vmatprep.subr.mxu0 0.0
    %6801 = vmatpush2.msra.mxu0 0.0
    %6802 = vmatprep.subr.mxu0 0.0
    %6803 = vmatpush2.msra.mxu0 0.0
    %6804 = vmatprep.subr.mxu0 0.0
    %6805 = vmatpush2.msra.mxu0 0.0
    %6806 = vmatprep.subr.mxu0 0.0
    %6807 = vmatpush2.msra.mxu0 0.0
    %6808 = vmatprep.subr.mxu0 0.0
    %6809 = vmatpush2.msra.mxu0 0.0
    %6810 = vmatprep.subr.mxu0 0.0
    %6811 = vmatpush2.msra.mxu0 0.0
    %6812 = vmatprep.subr.mxu0 0.0
    %6813 = vmatpush2.msra.mxu0 0.0
    %6814 = vmatprep.subr.mxu0 0.0
    %6815 = vmatpush2.msra.mxu0 0.0
    %6816 = vmatprep.subr.mxu0 0.0
    %6817 = vmatpush2.msra.mxu0 0.0
    %6818 = vmatprep.subr.mxu0 0.0
    %6819 = vmatpush2.msra.mxu0 0.0
    %6820 = vmatprep.subr.mxu0 0.0
    %6821 = vmatpush2.msra.mxu0 0.0
    %6822 = vmatprep.mubr.f32.mxu0 0.0
    %6823 = vmatmul.mubr.f32.gmra.mxu0 %v6753
    %v6824 = vpop.f32.mrf.mxu0
    %v6825 = vadd.f32 0.0, %v6824
    %v6826 = vpop.f32.mrf.mxu0
    %6827 = vmatprep.mubr.f32.mxu0 0.0
    %6828 = vmatmul.mubr.f32.gmra.mxu0 %v6756
    %v6829 = vpop.f32.mrf.mxu0
    %v6830 = vadd.f32 0.0, %v6829
    %v6831 = vpop.f32.mrf.mxu0
    %6832 = vdwg.mxu0
    %v6833 = vadd.f32 %v6419, %v6825
    %v6834 = vadd.f32 %v6420, %v6830
    %6835 = vrot.lane.b32.xlu0 %v5992, 112
    %v6836 = vpop.permute.xlu0 %6835
    %6837 = vrot.lane.b32.xlu0 %v253, 48
    %v6838 = vpop.permute.xlu0 %6837
    %v6839 = vsel %vm363, %v6836, 0
    %v6841 = vsel %vm363, %v6838, 0
    %6843 = vmatprep.subr.mxu0 0.0
    %6844 = vmatpush1.xpose.msra.mxu0 0.0
    %6845 = vmatprep.subr.mxu0 0.0
    %6846 = vmatpush1.xpose.msra.mxu0 0.0
    %6847 = vmatprep.subr.mxu0 0.0
    %6848 = vmatpush1.xpose.msra.mxu0 0.0
    %6849 = vmatprep.subr.mxu0 0.0
    %6850 = vmatpush1.xpose.msra.mxu0 0.0
    %6851 = vmatprep.subr.mxu0 0.0
    %6852 = vmatpush1.xpose.msra.mxu0 0.0
    %6853 = vmatprep.subr.mxu0 0.0
    %6854 = vmatpush1.xpose.msra.mxu0 0.0
    %6855 = vmatprep.subr.mxu0 0.0
    %6856 = vmatpush1.xpose.msra.mxu0 0.0
    %6857 = vmatprep.subr.mxu0 0.0
    %6858 = vmatpush1.xpose.msra.mxu0 0.0
    %6859 = vmatprep.subr.mxu0 0.0
    %6860 = vmatpush1.xpose.msra.mxu0 0.0
    %6861 = vmatprep.subr.mxu0 0.0
    %6862 = vmatpush1.xpose.msra.mxu0 0.0
    %6863 = vmatprep.subr.mxu0 0.0
    %6864 = vmatpush1.xpose.msra.mxu0 0.0
    %6865 = vmatprep.subr.mxu0 0.0
    %6866 = vmatpush1.xpose.msra.mxu0 0.0
    %6867 = vmatprep.subr.mxu0 0.0
    %6868 = vmatpush1.xpose.msra.mxu0 0.0
    %6869 = vmatprep.subr.mxu0 0.0
    %6870 = vmatpush1.xpose.msra.mxu0 0.0
    %6871 = vmatprep.subr.mxu0 0.0
    %6872 = vmatpush1.xpose.msra.mxu0 0.0
    %6873 = vmatprep.subr.mxu0 0.0
    %6874 = vmatpush1.xpose.msra.mxu0 %v6841
    %6875 = vmatprep.subr.mxu0 0.0
    %6876 = vmatpush2.xpose.msra.mxu0 0.0
    %6877 = vmatprep.subr.mxu0 0.0
    %6878 = vmatpush2.xpose.msra.mxu0 0.0
    %6879 = vmatprep.subr.mxu0 0.0
    %6880 = vmatpush2.xpose.msra.mxu0 0.0
    %6881 = vmatprep.subr.mxu0 0.0
    %6882 = vmatpush2.xpose.msra.mxu0 0.0
    %6883 = vmatprep.subr.mxu0 0.0
    %6884 = vmatpush2.xpose.msra.mxu0 0.0
    %6885 = vmatprep.subr.mxu0 0.0
    %6886 = vmatpush2.xpose.msra.mxu0 0.0
    %6887 = vmatprep.subr.mxu0 0.0
    %6888 = vmatpush2.xpose.msra.mxu0 0.0
    %6889 = vmatprep.subr.mxu0 0.0
    %6890 = vmatpush2.xpose.msra.mxu0 0.0
    %6891 = vmatprep.subr.mxu0 0.0
    %6892 = vmatpush2.xpose.msra.mxu0 0.0
    %6893 = vmatprep.subr.mxu0 0.0
    %6894 = vmatpush2.xpose.msra.mxu0 0.0
    %6895 = vmatprep.subr.mxu0 0.0
    %6896 = vmatpush2.xpose.msra.mxu0 0.0
    %6897 = vmatprep.subr.mxu0 0.0
    %6898 = vmatpush2.xpose.msra.mxu0 0.0
    %6899 = vmatprep.subr.mxu0 0.0
    %6900 = vmatpush2.xpose.msra.mxu0 0.0
    %6901 = vmatprep.subr.mxu0 0.0
    %6902 = vmatpush2.xpose.msra.mxu0 0.0
    %6903 = vmatprep.subr.mxu0 0.0
    %6904 = vmatpush2.xpose.msra.mxu0 0.0
    %6905 = vmatprep.subr.mxu0 0.0
    %6906 = vmatpush2.xpose.msra.mxu0 0.0
    %6907 = vmatprep.mubr.f32.mxu0 0.0
    %6908 = vmatmul.mubr.f32.gmra.mxu0 %v6839
    %v6909 = vpop.f32.mrf.mxu0
    %v6910 = vadd.f32 0.0, %v6909
    %v6911 = vpop.f32.mrf.mxu0
    %6912 = vdwg.mxu0
    %6913 = vrot.lane.b32.xlu0 %v5997, 112
    %v6914 = vpop.permute.xlu0 %6913
    %6915 = vrot.lane.b32.xlu0 %v258, 48
    %v6916 = vpop.permute.xlu0 %6915
    %v6917 = vsel %vm363, %v6914, 0
    %v6919 = vsel %vm363, %v6916, 0
    %6921 = vmatprep.subr.mxu0 0.0
    %6922 = vmatpush1.xpose.msra.mxu0 0.0
    %6923 = vmatprep.subr.mxu0 0.0
    %6924 = vmatpush1.xpose.msra.mxu0 0.0
    %6925 = vmatprep.subr.mxu0 0.0
    %6926 = vmatpush1.xpose.msra.mxu0 0.0
    %6927 = vmatprep.subr.mxu0 0.0
    %6928 = vmatpush1.xpose.msra.mxu0 0.0
    %6929 = vmatprep.subr.mxu0 0.0
    %6930 = vmatpush1.xpose.msra.mxu0 0.0
    %6931 = vmatprep.subr.mxu0 0.0
    %6932 = vmatpush1.xpose.msra.mxu0 0.0
    %6933 = vmatprep.subr.mxu0 0.0
    %6934 = vmatpush1.xpose.msra.mxu0 0.0
    %6935 = vmatprep.subr.mxu0 0.0
    %6936 = vmatpush1.xpose.msra.mxu0 0.0
    %6937 = vmatprep.subr.mxu0 0.0
    %6938 = vmatpush1.xpose.msra.mxu0 0.0
    %6939 = vmatprep.subr.mxu0 0.0
    %6940 = vmatpush1.xpose.msra.mxu0 0.0
    %6941 = vmatprep.subr.mxu0 0.0
    %6942 = vmatpush1.xpose.msra.mxu0 0.0
    %6943 = vmatprep.subr.mxu0 0.0
    %6944 = vmatpush1.xpose.msra.mxu0 0.0
    %6945 = vmatprep.subr.mxu0 0.0
    %6946 = vmatpush1.xpose.msra.mxu0 0.0
    %6947 = vmatprep.subr.mxu0 0.0
    %6948 = vmatpush1.xpose.msra.mxu0 0.0
    %6949 = vmatprep.subr.mxu0 0.0
    %6950 = vmatpush1.xpose.msra.mxu0 0.0
    %6951 = vmatprep.subr.mxu0 0.0
    %6952 = vmatpush1.xpose.msra.mxu0 %v6919
    %6953 = vmatprep.subr.mxu0 0.0
    %6954 = vmatpush2.xpose.msra.mxu0 0.0
    %6955 = vmatprep.subr.mxu0 0.0
    %6956 = vmatpush2.xpose.msra.mxu0 0.0
    %6957 = vmatprep.subr.mxu0 0.0
    %6958 = vmatpush2.xpose.msra.mxu0 0.0
    %6959 = vmatprep.subr.mxu0 0.0
    %6960 = vmatpush2.xpose.msra.mxu0 0.0
    %6961 = vmatprep.subr.mxu0 0.0
    %6962 = vmatpush2.xpose.msra.mxu0 0.0
    %6963 = vmatprep.subr.mxu0 0.0
    %6964 = vmatpush2.xpose.msra.mxu0 0.0
    %6965 = vmatprep.subr.mxu0 0.0
    %6966 = vmatpush2.xpose.msra.mxu0 0.0
    %6967 = vmatprep.subr.mxu0 0.0
    %6968 = vmatpush2.xpose.msra.mxu0 0.0
    %6969 = vmatprep.subr.mxu0 0.0
    %6970 = vmatpush2.xpose.msra.mxu0 0.0
    %6971 = vmatprep.subr.mxu0 0.0
    %6972 = vmatpush2.xpose.msra.mxu0 0.0
    %6973 = vmatprep.subr.mxu0 0.0
    %6974 = vmatpush2.xpose.msra.mxu0 0.0
    %6975 = vmatprep.subr.mxu0 0.0
    %6976 = vmatpush2.xpose.msra.mxu0 0.0
    %6977 = vmatprep.subr.mxu0 0.0
    %6978 = vmatpush2.xpose.msra.mxu0 0.0
    %6979 = vmatprep.subr.mxu0 0.0
    %6980 = vmatpush2.xpose.msra.mxu0 0.0
    %6981 = vmatprep.subr.mxu0 0.0
    %6982 = vmatpush2.xpose.msra.mxu0 0.0
    %6983 = vmatprep.subr.mxu0 0.0
    %6984 = vmatpush2.xpose.msra.mxu0 0.0
    %6985 = vmatprep.mubr.f32.mxu0 0.0
    %6986 = vmatmul.mubr.f32.gmra.mxu0 %v6917
    %v6987 = vpop.f32.mrf.mxu0
    %v6988 = vadd.f32 0.0, %v6987
    %v6989 = vpop.f32.mrf.mxu0
    %6990 = vdwg.mxu0
    %v6991 = vsel %vm363, %v6910, -inf
    %6992 = vmax.xlane.f32.xlu0 %v6991
    %v6993 = vpop.xlane.xlu0 %6992
    %v6994 = vsel %vm363, %v6988, -inf
    %6995 = vmax.xlane.f32.xlu0 %v6994
    %v6996 = vpop.xlane.xlu0 %6995
    %v6997 = vsub.f32 %v6910, %v6993
    %v6998 = vsub.f32 %v6988, %v6996
    %v6999 = vmul.f32 %v6997, 1.442695
    %v7000 = vpow.pop %v6999
    %v7001 = vmul.f32 %v6998, 1.442695
    %v7002 = vpow.pop %v7001
    %v7003 = vsel %vm363, %v7000, 0.0
    %7004 = vadd.xlane.f32.xlu0 %v7003
    %v7005 = vpop.xlane.xlu0 %7004
    %v7006 = vsel %vm363, %v7002, 0.0
    %7007 = vadd.xlane.f32.xlu0 %v7006
    %v7008 = vpop.xlane.xlu0 %7007
    %v7009 = vrcp.pop %v7005
    %v7010 = vrcp.pop %v7008
    %v7011 = vmul.f32 %v7000, %v7009
    %v7012 = vmul.f32 %v7002, %v7010
    %7013 = vrot.lane.b32.xlu0 %v253, 16
    %v7014 = vpop.permute.xlu0 %7013
    %v7017 = vsel %vm363, %v7011, 0
    %7019 = vmatprep.subr.mxu0 0.0
    %7020 = vmatpush1.msra.mxu0 0.0
    %7021 = vmatprep.subr.mxu0 0.0
    %7022 = vmatpush1.msra.mxu0 0.0
    %7023 = vmatprep.subr.mxu0 0.0
    %7024 = vmatpush1.msra.mxu0 0.0
    %7025 = vmatprep.subr.mxu0 0.0
    %7026 = vmatpush1.msra.mxu0 0.0
    %7027 = vmatprep.subr.mxu0 0.0
    %7028 = vmatpush1.msra.mxu0 0.0
    %7029 = vmatprep.subr.mxu0 0.0
    %7030 = vmatpush1.msra.mxu0 0.0
    %7031 = vmatprep.subr.mxu0 0.0
    %7032 = vmatpush1.msra.mxu0 0.0
    %7033 = vmatprep.subr.mxu0 0.0
    %7034 = vmatpush1.msra.mxu0 0.0
    %7035 = vmatprep.subr.mxu0 0.0
    %7036 = vmatpush1.msra.mxu0 0.0
    %7037 = vmatprep.subr.mxu0 0.0
    %7038 = vmatpush1.msra.mxu0 0.0
    %7039 = vmatprep.subr.mxu0 0.0
    %7040 = vmatpush1.msra.mxu0 0.0
    %7041 = vmatprep.subr.mxu0 0.0
    %7042 = vmatpush1.msra.mxu0 0.0
    %7043 = vmatprep.subr.mxu0 0.0
    %7044 = vmatpush1.msra.mxu0 0.0
    %7045 = vmatprep.subr.mxu0 0.0
    %7046 = vmatpush1.msra.mxu0 0.0
    %7047 = vmatprep.subr.mxu0 0.0
    %7048 = vmatpush1.msra.mxu0 0.0
    %7049 = vmatprep.subr.mxu0 0.0
    %7050 = vmatpush1.msra.mxu0 %v7014
    %7051 = vmatprep.subr.mxu0 0.0
    %7052 = vmatpush2.msra.mxu0 0.0
    %7053 = vmatprep.subr.mxu0 0.0
    %7054 = vmatpush2.msra.mxu0 0.0
    %7055 = vmatprep.subr.mxu0 0.0
    %7056 = vmatpush2.msra.mxu0 0.0
    %7057 = vmatprep.subr.mxu0 0.0
    %7058 = vmatpush2.msra.mxu0 0.0
    %7059 = vmatprep.subr.mxu0 0.0
    %7060 = vmatpush2.msra.mxu0 0.0
    %7061 = vmatprep.subr.mxu0 0.0
    %7062 = vmatpush2.msra.mxu0 0.0
    %7063 = vmatprep.subr.mxu0 0.0
    %7064 = vmatpush2.msra.mxu0 0.0
    %7065 = vmatprep.subr.mxu0 0.0
    %7066 = vmatpush2.msra.mxu0 0.0
    %7067 = vmatprep.subr.mxu0 0.0
    %7068 = vmatpush2.msra.mxu0 0.0
    %7069 = vmatprep.subr.mxu0 0.0
    %7070 = vmatpush2.msra.mxu0 0.0
    %7071 = vmatprep.subr.mxu0 0.0
    %7072 = vmatpush2.msra.mxu0 0.0
    %7073 = vmatprep.subr.mxu0 0.0
    %7074 = vmatpush2.msra.mxu0 0.0
    %7075 = vmatprep.subr.mxu0 0.0
    %7076 = vmatpush2.msra.mxu0 0.0
    %7077 = vmatprep.subr.mxu0 0.0
    %7078 = vmatpush2.msra.mxu0 0.0
    %7079 = vmatprep.subr.mxu0 0.0
    %7080 = vmatpush2.msra.mxu0 0.0
    %7081 = vmatprep.subr.mxu0 0.0
    %7082 = vmatpush2.msra.mxu0 0.0
    %7083 = vmatprep.mubr.f32.mxu0 0.0
    %7084 = vmatmul.mubr.f32.gmra.mxu0 %v7017
    %v7085 = vpop.f32.mrf.mxu0
    %v7086 = vadd.f32 0.0, %v7085
    %v7087 = vpop.f32.mrf.mxu0
    %7088 = vdwg.mxu0
    %7089 = vrot.lane.b32.xlu0 %v258, 16
    %v7090 = vpop.permute.xlu0 %7089
    %v7093 = vsel %vm363, %v7012, 0
    %7095 = vmatprep.subr.mxu0 0.0
    %7096 = vmatpush1.msra.mxu0 0.0
    %7097 = vmatprep.subr.mxu0 0.0
    %7098 = vmatpush1.msra.mxu0 0.0
    %7099 = vmatprep.subr.mxu0 0.0
    %7100 = vmatpush1.msra.mxu0 0.0
    %7101 = vmatprep.subr.mxu0 0.0
    %7102 = vmatpush1.msra.mxu0 0.0
    %7103 = vmatprep.subr.mxu0 0.0
    %7104 = vmatpush1.msra.mxu0 0.0
    %7105 = vmatprep.subr.mxu0 0.0
    %7106 = vmatpush1.msra.mxu0 0.0
    %7107 = vmatprep.subr.mxu0 0.0
    %7108 = vmatpush1.msra.mxu0 0.0
    %7109 = vmatprep.subr.mxu0 0.0
    %7110 = vmatpush1.msra.mxu0 0.0
    %7111 = vmatprep.subr.mxu0 0.0
    %7112 = vmatpush1.msra.mxu0 0.0
    %7113 = vmatprep.subr.mxu0 0.0
    %7114 = vmatpush1.msra.mxu0 0.0
    %7115 = vmatprep.subr.mxu0 0.0
    %7116 = vmatpush1.msra.mxu0 0.0
    %7117 = vmatprep.subr.mxu0 0.0
    %7118 = vmatpush1.msra.mxu0 0.0
    %7119 = vmatprep.subr.mxu0 0.0
    %7120 = vmatpush1.msra.mxu0 0.0
    %7121 = vmatprep.subr.mxu0 0.0
    %7122 = vmatpush1.msra.mxu0 0.0
    %7123 = vmatprep.subr.mxu0 0.0
    %7124 = vmatpush1.msra.mxu0 0.0
    %7125 = vmatprep.subr.mxu0 0.0
    %7126 = vmatpush1.msra.mxu0 %v7090
    %7127 = vmatprep.subr.mxu0 0.0
    %7128 = vmatpush2.msra.mxu0 0.0
    %7129 = vmatprep.subr.mxu0 0.0
    %7130 = vmatpush2.msra.mxu0 0.0
    %7131 = vmatprep.subr.mxu0 0.0
    %7132 = vmatpush2.msra.mxu0 0.0
    %7133 = vmatprep.subr.mxu0 0.0
    %7134 = vmatpush2.msra.mxu0 0.0
    %7135 = vmatprep.subr.mxu0 0.0
    %7136 = vmatpush2.msra.mxu0 0.0
    %7137 = vmatprep.subr.mxu0 0.0
    %7138 = vmatpush2.msra.mxu0 0.0
    %7139 = vmatprep.subr.mxu0 0.0
    %7140 = vmatpush2.msra.mxu0 0.0
    %7141 = vmatprep.subr.mxu0 0.0
    %7142 = vmatpush2.msra.mxu0 0.0
    %7143 = vmatprep.subr.mxu0 0.0
    %7144 = vmatpush2.msra.mxu0 0.0
    %7145 = vmatprep.subr.mxu0 0.0
    %7146 = vmatpush2.msra.mxu0 0.0
    %7147 = vmatprep.subr.mxu0 0.0
    %7148 = vmatpush2.msra.mxu0 0.0
    %7149 = vmatprep.subr.mxu0 0.0
    %7150 = vmatpush2.msra.mxu0 0.0
    %7151 = vmatprep.subr.mxu0 0.0
    %7152 = vmatpush2.msra.mxu0 0.0
    %7153 = vmatprep.subr.mxu0 0.0
    %7154 = vmatpush2.msra.mxu0 0.0
    %7155 = vmatprep.subr.mxu0 0.0
    %7156 = vmatpush2.msra.mxu0 0.0
    %7157 = vmatprep.subr.mxu0 0.0
    %7158 = vmatpush2.msra.mxu0 0.0
    %7159 = vmatprep.mubr.f32.mxu0 0.0
    %7160 = vmatmul.mubr.f32.gmra.mxu0 %v7093
    %v7161 = vpop.f32.mrf.mxu0
    %v7162 = vadd.f32 0.0, %v7161
    %v7163 = vpop.f32.mrf.mxu0
    %7164 = vdwg.mxu0
    %v7165 = vld [vmem:[%s6336 + $0x10] sm:$0xff]
    %v7167 = vsel %vm363, %v7086, 0
    %v7170 = vsel %vm363, %v7162, 0
    %7172 = vmatprep.subr.mxu0 0.0
    %7173 = vmatpush1.msra.mxu0 0.0
    %7174 = vmatprep.subr.mxu0 0.0
    %7175 = vmatpush1.msra.mxu0 0.0
    %7176 = vmatprep.subr.mxu0 0.0
    %7177 = vmatpush1.msra.mxu0 0.0
    %7178 = vmatprep.subr.mxu0 0.0
    %7179 = vmatpush1.msra.mxu0 0.0
    %7180 = vmatprep.subr.mxu0 0.0
    %7181 = vmatpush1.msra.mxu0 0.0
    %7182 = vmatprep.subr.mxu0 0.0
    %7183 = vmatpush1.msra.mxu0 0.0
    %7184 = vmatprep.subr.mxu0 0.0
    %7185 = vmatpush1.msra.mxu0 0.0
    %7186 = vmatprep.subr.mxu0 0.0
    %7187 = vmatpush1.msra.mxu0 0.0
    %7188 = vmatprep.subr.mxu0 0.0
    %7189 = vmatpush1.msra.mxu0 0.0
    %7190 = vmatprep.subr.mxu0 0.0
    %7191 = vmatpush1.msra.mxu0 0.0
    %7192 = vmatprep.subr.mxu0 0.0
    %7193 = vmatpush1.msra.mxu0 0.0
    %7194 = vmatprep.subr.mxu0 0.0
    %7195 = vmatpush1.msra.mxu0 0.0
    %7196 = vmatprep.subr.mxu0 0.0
    %7197 = vmatpush1.msra.mxu0 0.0
    %7198 = vmatprep.subr.mxu0 0.0
    %7199 = vmatpush1.msra.mxu0 0.0
    %7200 = vmatprep.subr.mxu0 0.0
    %7201 = vmatpush1.msra.mxu0 0.0
    %7202 = vmatprep.subr.mxu0 0.0
    %7203 = vmatpush1.msra.mxu0 %v7165
    %7204 = vmatprep.subr.mxu0 0.0
    %7205 = vmatpush2.msra.mxu0 0.0
    %7206 = vmatprep.subr.mxu0 0.0
    %7207 = vmatpush2.msra.mxu0 0.0
    %7208 = vmatprep.subr.mxu0 0.0
    %7209 = vmatpush2.msra.mxu0 0.0
    %7210 = vmatprep.subr.mxu0 0.0
    %7211 = vmatpush2.msra.mxu0 0.0
    %7212 = vmatprep.subr.mxu0 0.0
    %7213 = vmatpush2.msra.mxu0 0.0
    %7214 = vmatprep.subr.mxu0 0.0
    %7215 = vmatpush2.msra.mxu0 0.0
    %7216 = vmatprep.subr.mxu0 0.0
    %7217 = vmatpush2.msra.mxu0 0.0
    %7218 = vmatprep.subr.mxu0 0.0
    %7219 = vmatpush2.msra.mxu0 0.0
    %7220 = vmatprep.subr.mxu0 0.0
    %7221 = vmatpush2.msra.mxu0 0.0
    %7222 = vmatprep.subr.mxu0 0.0
    %7223 = vmatpush2.msra.mxu0 0.0
    %7224 = vmatprep.subr.mxu0 0.0
    %7225 = vmatpush2.msra.mxu0 0.0
    %7226 = vmatprep.subr.mxu0 0.0
    %7227 = vmatpush2.msra.mxu0 0.0
    %7228 = vmatprep.subr.mxu0 0.0
    %7229 = vmatpush2.msra.mxu0 0.0
    %7230 = vmatprep.subr.mxu0 0.0
    %7231 = vmatpush2.msra.mxu0 0.0
    %7232 = vmatprep.subr.mxu0 0.0
    %7233 = vmatpush2.msra.mxu0 0.0
    %7234 = vmatprep.subr.mxu0 0.0
    %7235 = vmatpush2.msra.mxu0 0.0
    %7236 = vmatprep.mubr.f32.mxu0 0.0
    %7237 = vmatmul.mubr.f32.gmra.mxu0 %v7167
    %v7238 = vpop.f32.mrf.mxu0
    %v7239 = vadd.f32 0.0, %v7238
    %v7240 = vpop.f32.mrf.mxu0
    %7241 = vmatprep.mubr.f32.mxu0 0.0
    %7242 = vmatmul.mubr.f32.gmra.mxu0 %v7170
    %v7243 = vpop.f32.mrf.mxu0
    %v7244 = vadd.f32 0.0, %v7243
    %v7245 = vpop.f32.mrf.mxu0
    %7246 = vdwg.mxu0
    %v7247 = vadd.f32 %v6833, %v7239
    %v7248 = vadd.f32 %v6834, %v7244
    %7249 = vrot.lane.b32.xlu0 %v5992, 104
    %v7250 = vpop.permute.xlu0 %7249
    %7251 = vrot.lane.b32.xlu0 %v253, 40
    %v7252 = vpop.permute.xlu0 %7251
    %v7253 = vsel %vm363, %v7250, 0
    %v7255 = vsel %vm363, %v7252, 0
    %7257 = vmatprep.subr.mxu0 0.0
    %7258 = vmatpush1.xpose.msra.mxu0 0.0
    %7259 = vmatprep.subr.mxu0 0.0
    %7260 = vmatpush1.xpose.msra.mxu0 0.0
    %7261 = vmatprep.subr.mxu0 0.0
    %7262 = vmatpush1.xpose.msra.mxu0 0.0
    %7263 = vmatprep.subr.mxu0 0.0
    %7264 = vmatpush1.xpose.msra.mxu0 0.0
    %7265 = vmatprep.subr.mxu0 0.0
    %7266 = vmatpush1.xpose.msra.mxu0 0.0
    %7267 = vmatprep.subr.mxu0 0.0
    %7268 = vmatpush1.xpose.msra.mxu0 0.0
    %7269 = vmatprep.subr.mxu0 0.0
    %7270 = vmatpush1.xpose.msra.mxu0 0.0
    %7271 = vmatprep.subr.mxu0 0.0
    %7272 = vmatpush1.xpose.msra.mxu0 0.0
    %7273 = vmatprep.subr.mxu0 0.0
    %7274 = vmatpush1.xpose.msra.mxu0 0.0
    %7275 = vmatprep.subr.mxu0 0.0
    %7276 = vmatpush1.xpose.msra.mxu0 0.0
    %7277 = vmatprep.subr.mxu0 0.0
    %7278 = vmatpush1.xpose.msra.mxu0 0.0
    %7279 = vmatprep.subr.mxu0 0.0
    %7280 = vmatpush1.xpose.msra.mxu0 0.0
    %7281 = vmatprep.subr.mxu0 0.0
    %7282 = vmatpush1.xpose.msra.mxu0 0.0
    %7283 = vmatprep.subr.mxu0 0.0
    %7284 = vmatpush1.xpose.msra.mxu0 0.0
    %7285 = vmatprep.subr.mxu0 0.0
    %7286 = vmatpush1.xpose.msra.mxu0 0.0
    %7287 = vmatprep.subr.mxu0 0.0
    %7288 = vmatpush1.xpose.msra.mxu0 %v7255
    %7289 = vmatprep.subr.mxu0 0.0
    %7290 = vmatpush2.xpose.msra.mxu0 0.0
    %7291 = vmatprep.subr.mxu0 0.0
    %7292 = vmatpush2.xpose.msra.mxu0 0.0
    %7293 = vmatprep.subr.mxu0 0.0
    %7294 = vmatpush2.xpose.msra.mxu0 0.0
    %7295 = vmatprep.subr.mxu0 0.0
    %7296 = vmatpush2.xpose.msra.mxu0 0.0
    %7297 = vmatprep.subr.mxu0 0.0
    %7298 = vmatpush2.xpose.msra.mxu0 0.0
    %7299 = vmatprep.subr.mxu0 0.0
    %7300 = vmatpush2.xpose.msra.mxu0 0.0
    %7301 = vmatprep.subr.mxu0 0.0
    %7302 = vmatpush2.xpose.msra.mxu0 0.0
    %7303 = vmatprep.subr.mxu0 0.0
    %7304 = vmatpush2.xpose.msra.mxu0 0.0
    %7305 = vmatprep.subr.mxu0 0.0
    %7306 = vmatpush2.xpose.msra.mxu0 0.0
    %7307 = vmatprep.subr.mxu0 0.0
    %7308 = vmatpush2.xpose.msra.mxu0 0.0
    %7309 = vmatprep.subr.mxu0 0.0
    %7310 = vmatpush2.xpose.msra.mxu0 0.0
    %7311 = vmatprep.subr.mxu0 0.0
    %7312 = vmatpush2.xpose.msra.mxu0 0.0
    %7313 = vmatprep.subr.mxu0 0.0
    %7314 = vmatpush2.xpose.msra.mxu0 0.0
    %7315 = vmatprep.subr.mxu0 0.0
    %7316 = vmatpush2.xpose.msra.mxu0 0.0
    %7317 = vmatprep.subr.mxu0 0.0
    %7318 = vmatpush2.xpose.msra.mxu0 0.0
    %7319 = vmatprep.subr.mxu0 0.0
    %7320 = vmatpush2.xpose.msra.mxu0 0.0
    %7321 = vmatprep.mubr.f32.mxu0 0.0
    %7322 = vmatmul.mubr.f32.gmra.mxu0 %v7253
    %v7323 = vpop.f32.mrf.mxu0
    %v7324 = vadd.f32 0.0, %v7323
    %v7325 = vpop.f32.mrf.mxu0
    %7326 = vdwg.mxu0
    %7327 = vrot.lane.b32.xlu0 %v5997, 104
    %v7328 = vpop.permute.xlu0 %7327
    %7329 = vrot.lane.b32.xlu0 %v258, 40
    %v7330 = vpop.permute.xlu0 %7329
    %v7331 = vsel %vm363, %v7328, 0
    %v7333 = vsel %vm363, %v7330, 0
    %7335 = vmatprep.subr.mxu0 0.0
    %7336 = vmatpush1.xpose.msra.mxu0 0.0
    %7337 = vmatprep.subr.mxu0 0.0
    %7338 = vmatpush1.xpose.msra.mxu0 0.0
    %7339 = vmatprep.subr.mxu0 0.0
    %7340 = vmatpush1.xpose.msra.mxu0 0.0
    %7341 = vmatprep.subr.mxu0 0.0
    %7342 = vmatpush1.xpose.msra.mxu0 0.0
    %7343 = vmatprep.subr.mxu0 0.0
    %7344 = vmatpush1.xpose.msra.mxu0 0.0
    %7345 = vmatprep.subr.mxu0 0.0
    %7346 = vmatpush1.xpose.msra.mxu0 0.0
    %7347 = vmatprep.subr.mxu0 0.0
    %7348 = vmatpush1.xpose.msra.mxu0 0.0
    %7349 = vmatprep.subr.mxu0 0.0
    %7350 = vmatpush1.xpose.msra.mxu0 0.0
    %7351 = vmatprep.subr.mxu0 0.0
    %7352 = vmatpush1.xpose.msra.mxu0 0.0
    %7353 = vmatprep.subr.mxu0 0.0
    %7354 = vmatpush1.xpose.msra.mxu0 0.0
    %7355 = vmatprep.subr.mxu0 0.0
    %7356 = vmatpush1.xpose.msra.mxu0 0.0
    %7357 = vmatprep.subr.mxu0 0.0
    %7358 = vmatpush1.xpose.msra.mxu0 0.0
    %7359 = vmatprep.subr.mxu0 0.0
    %7360 = vmatpush1.xpose.msra.mxu0 0.0
    %7361 = vmatprep.subr.mxu0 0.0
    %7362 = vmatpush1.xpose.msra.mxu0 0.0
    %7363 = vmatprep.subr.mxu0 0.0
    %7364 = vmatpush1.xpose.msra.mxu0 0.0
    %7365 = vmatprep.subr.mxu0 0.0
    %7366 = vmatpush1.xpose.msra.mxu0 %v7333
    %7367 = vmatprep.subr.mxu0 0.0
    %7368 = vmatpush2.xpose.msra.mxu0 0.0
    %7369 = vmatprep.subr.mxu0 0.0
    %7370 = vmatpush2.xpose.msra.mxu0 0.0
    %7371 = vmatprep.subr.mxu0 0.0
    %7372 = vmatpush2.xpose.msra.mxu0 0.0
    %7373 = vmatprep.subr.mxu0 0.0
    %7374 = vmatpush2.xpose.msra.mxu0 0.0
    %7375 = vmatprep.subr.mxu0 0.0
    %7376 = vmatpush2.xpose.msra.mxu0 0.0
    %7377 = vmatprep.subr.mxu0 0.0
    %7378 = vmatpush2.xpose.msra.mxu0 0.0
    %7379 = vmatprep.subr.mxu0 0.0
    %7380 = vmatpush2.xpose.msra.mxu0 0.0
    %7381 = vmatprep.subr.mxu0 0.0
    %7382 = vmatpush2.xpose.msra.mxu0 0.0
    %7383 = vmatprep.subr.mxu0 0.0
    %7384 = vmatpush2.xpose.msra.mxu0 0.0
    %7385 = vmatprep.subr.mxu0 0.0
    %7386 = vmatpush2.xpose.msra.mxu0 0.0
    %7387 = vmatprep.subr.mxu0 0.0
    %7388 = vmatpush2.xpose.msra.mxu0 0.0
    %7389 = vmatprep.subr.mxu0 0.0
    %7390 = vmatpush2.xpose.msra.mxu0 0.0
    %7391 = vmatprep.subr.mxu0 0.0
    %7392 = vmatpush2.xpose.msra.mxu0 0.0
    %7393 = vmatprep.subr.mxu0 0.0
    %7394 = vmatpush2.xpose.msra.mxu0 0.0
    %7395 = vmatprep.subr.mxu0 0.0
    %7396 = vmatpush2.xpose.msra.mxu0 0.0
    %7397 = vmatprep.subr.mxu0 0.0
    %7398 = vmatpush2.xpose.msra.mxu0 0.0
    %7399 = vmatprep.mubr.f32.mxu0 0.0
    %7400 = vmatmul.mubr.f32.gmra.mxu0 %v7331
    %v7401 = vpop.f32.mrf.mxu0
    %v7402 = vadd.f32 0.0, %v7401
    %v7403 = vpop.f32.mrf.mxu0
    %7404 = vdwg.mxu0
    %v7405 = vsel %vm363, %v7324, -inf
    %7406 = vmax.xlane.f32.xlu0 %v7405
    %v7407 = vpop.xlane.xlu0 %7406
    %v7408 = vsel %vm363, %v7402, -inf
    %7409 = vmax.xlane.f32.xlu0 %v7408
    %v7410 = vpop.xlane.xlu0 %7409
    %v7411 = vsub.f32 %v7324, %v7407
    %v7412 = vsub.f32 %v7402, %v7410
    %v7413 = vmul.f32 %v7411, 1.442695
    %v7414 = vpow.pop %v7413
    %v7415 = vmul.f32 %v7412, 1.442695
    %v7416 = vpow.pop %v7415
    %v7417 = vsel %vm363, %v7414, 0.0
    %7418 = vadd.xlane.f32.xlu0 %v7417
    %v7419 = vpop.xlane.xlu0 %7418
    %v7420 = vsel %vm363, %v7416, 0.0
    %7421 = vadd.xlane.f32.xlu0 %v7420
    %v7422 = vpop.xlane.xlu0 %7421
    %v7423 = vrcp.pop %v7419
    %v7424 = vrcp.pop %v7422
    %v7425 = vmul.f32 %v7414, %v7423
    %v7426 = vmul.f32 %v7416, %v7424
    %7427 = vrot.lane.b32.xlu0 %v253, 8
    %v7428 = vpop.permute.xlu0 %7427
    %v7431 = vsel %vm363, %v7425, 0
    %7433 = vmatprep.subr.mxu0 0.0
    %7434 = vmatpush1.msra.mxu0 0.0
    %7435 = vmatprep.subr.mxu0 0.0
    %7436 = vmatpush1.msra.mxu0 0.0
    %7437 = vmatprep.subr.mxu0 0.0
    %7438 = vmatpush1.msra.mxu0 0.0
    %7439 = vmatprep.subr.mxu0 0.0
    %7440 = vmatpush1.msra.mxu0 0.0
    %7441 = vmatprep.subr.mxu0 0.0
    %7442 = vmatpush1.msra.mxu0 0.0
    %7443 = vmatprep.subr.mxu0 0.0
    %7444 = vmatpush1.msra.mxu0 0.0
    %7445 = vmatprep.subr.mxu0 0.0
    %7446 = vmatpush1.msra.mxu0 0.0
    %7447 = vmatprep.subr.mxu0 0.0
    %7448 = vmatpush1.msra.mxu0 0.0
    %7449 = vmatprep.subr.mxu0 0.0
    %7450 = vmatpush1.msra.mxu0 0.0
    %7451 = vmatprep.subr.mxu0 0.0
    %7452 = vmatpush1.msra.mxu0 0.0
    %7453 = vmatprep.subr.mxu0 0.0
    %7454 = vmatpush1.msra.mxu0 0.0
    %7455 = vmatprep.subr.mxu0 0.0
    %7456 = vmatpush1.msra.mxu0 0.0
    %7457 = vmatprep.subr.mxu0 0.0
    %7458 = vmatpush1.msra.mxu0 0.0
    %7459 = vmatprep.subr.mxu0 0.0
    %7460 = vmatpush1.msra.mxu0 0.0
    %7461 = vmatprep.subr.mxu0 0.0
    %7462 = vmatpush1.msra.mxu0 0.0
    %7463 = vmatprep.subr.mxu0 0.0
    %7464 = vmatpush1.msra.mxu0 %v7428
    %7465 = vmatprep.subr.mxu0 0.0
    %7466 = vmatpush2.msra.mxu0 0.0
    %7467 = vmatprep.subr.mxu0 0.0
    %7468 = vmatpush2.msra.mxu0 0.0
    %7469 = vmatprep.subr.mxu0 0.0
    %7470 = vmatpush2.msra.mxu0 0.0
    %7471 = vmatprep.subr.mxu0 0.0
    %7472 = vmatpush2.msra.mxu0 0.0
    %7473 = vmatprep.subr.mxu0 0.0
    %7474 = vmatpush2.msra.mxu0 0.0
    %7475 = vmatprep.subr.mxu0 0.0
    %7476 = vmatpush2.msra.mxu0 0.0
    %7477 = vmatprep.subr.mxu0 0.0
    %7478 = vmatpush2.msra.mxu0 0.0
    %7479 = vmatprep.subr.mxu0 0.0
    %7480 = vmatpush2.msra.mxu0 0.0
    %7481 = vmatprep.subr.mxu0 0.0
    %7482 = vmatpush2.msra.mxu0 0.0
    %7483 = vmatprep.subr.mxu0 0.0
    %7484 = vmatpush2.msra.mxu0 0.0
    %7485 = vmatprep.subr.mxu0 0.0
    %7486 = vmatpush2.msra.mxu0 0.0
    %7487 = vmatprep.subr.mxu0 0.0
    %7488 = vmatpush2.msra.mxu0 0.0
    %7489 = vmatprep.subr.mxu0 0.0
    %7490 = vmatpush2.msra.mxu0 0.0
    %7491 = vmatprep.subr.mxu0 0.0
    %7492 = vmatpush2.msra.mxu0 0.0
    %7493 = vmatprep.subr.mxu0 0.0
    %7494 = vmatpush2.msra.mxu0 0.0
    %7495 = vmatprep.subr.mxu0 0.0
    %7496 = vmatpush2.msra.mxu0 0.0
    %7497 = vmatprep.mubr.f32.mxu0 0.0
    %7498 = vmatmul.mubr.f32.gmra.mxu0 %v7431
    %v7499 = vpop.f32.mrf.mxu0
    %v7500 = vadd.f32 0.0, %v7499
    %v7501 = vpop.f32.mrf.mxu0
    %7502 = vdwg.mxu0
    %7503 = vrot.lane.b32.xlu0 %v258, 8
    %v7504 = vpop.permute.xlu0 %7503
    %v7507 = vsel %vm363, %v7426, 0
    %7509 = vmatprep.subr.mxu0 0.0
    %7510 = vmatpush1.msra.mxu0 0.0
    %7511 = vmatprep.subr.mxu0 0.0
    %7512 = vmatpush1.msra.mxu0 0.0
    %7513 = vmatprep.subr.mxu0 0.0
    %7514 = vmatpush1.msra.mxu0 0.0
    %7515 = vmatprep.subr.mxu0 0.0
    %7516 = vmatpush1.msra.mxu0 0.0
    %7517 = vmatprep.subr.mxu0 0.0
    %7518 = vmatpush1.msra.mxu0 0.0
    %7519 = vmatprep.subr.mxu0 0.0
    %7520 = vmatpush1.msra.mxu0 0.0
    %7521 = vmatprep.subr.mxu0 0.0
    %7522 = vmatpush1.msra.mxu0 0.0
    %7523 = vmatprep.subr.mxu0 0.0
    %7524 = vmatpush1.msra.mxu0 0.0
    %7525 = vmatprep.subr.mxu0 0.0
    %7526 = vmatpush1.msra.mxu0 0.0
    %7527 = vmatprep.subr.mxu0 0.0
    %7528 = vmatpush1.msra.mxu0 0.0
    %7529 = vmatprep.subr.mxu0 0.0
    %7530 = vmatpush1.msra.mxu0 0.0
    %7531 = vmatprep.subr.mxu0 0.0
    %7532 = vmatpush1.msra.mxu0 0.0
    %7533 = vmatprep.subr.mxu0 0.0
    %7534 = vmatpush1.msra.mxu0 0.0
    %7535 = vmatprep.subr.mxu0 0.0
    %7536 = vmatpush1.msra.mxu0 0.0
    %7537 = vmatprep.subr.mxu0 0.0
    %7538 = vmatpush1.msra.mxu0 0.0
    %7539 = vmatprep.subr.mxu0 0.0
    %7540 = vmatpush1.msra.mxu0 %v7504
    %7541 = vmatprep.subr.mxu0 0.0
    %7542 = vmatpush2.msra.mxu0 0.0
    %7543 = vmatprep.subr.mxu0 0.0
    %7544 = vmatpush2.msra.mxu0 0.0
    %7545 = vmatprep.subr.mxu0 0.0
    %7546 = vmatpush2.msra.mxu0 0.0
    %7547 = vmatprep.subr.mxu0 0.0
    %7548 = vmatpush2.msra.mxu0 0.0
    %7549 = vmatprep.subr.mxu0 0.0
    %7550 = vmatpush2.msra.mxu0 0.0
    %7551 = vmatprep.subr.mxu0 0.0
    %7552 = vmatpush2.msra.mxu0 0.0
    %7553 = vmatprep.subr.mxu0 0.0
    %7554 = vmatpush2.msra.mxu0 0.0
    %7555 = vmatprep.subr.mxu0 0.0
    %7556 = vmatpush2.msra.mxu0 0.0
    %7557 = vmatprep.subr.mxu0 0.0
    %7558 = vmatpush2.msra.mxu0 0.0
    %7559 = vmatprep.subr.mxu0 0.0
    %7560 = vmatpush2.msra.mxu0 0.0
    %7561 = vmatprep.subr.mxu0 0.0
    %7562 = vmatpush2.msra.mxu0 0.0
    %7563 = vmatprep.subr.mxu0 0.0
    %7564 = vmatpush2.msra.mxu0 0.0
    %7565 = vmatprep.subr.mxu0 0.0
    %7566 = vmatpush2.msra.mxu0 0.0
    %7567 = vmatprep.subr.mxu0 0.0
    %7568 = vmatpush2.msra.mxu0 0.0
    %7569 = vmatprep.subr.mxu0 0.0
    %7570 = vmatpush2.msra.mxu0 0.0
    %7571 = vmatprep.subr.mxu0 0.0
    %7572 = vmatpush2.msra.mxu0 0.0
    %7573 = vmatprep.mubr.f32.mxu0 0.0
    %7574 = vmatmul.mubr.f32.gmra.mxu0 %v7507
    %v7575 = vpop.f32.mrf.mxu0
    %v7576 = vadd.f32 0.0, %v7575
    %v7577 = vpop.f32.mrf.mxu0
    %7578 = vdwg.mxu0
    %v7579 = vld [vmem:[%s6336 + $0x18] sm:$0xff]
    %v7581 = vsel %vm363, %v7500, 0
    %v7584 = vsel %vm363, %v7576, 0
    %7586 = vmatprep.subr.mxu0 0.0
    %7587 = vmatpush1.msra.mxu0 0.0
    %7588 = vmatprep.subr.mxu0 0.0
    %7589 = vmatpush1.msra.mxu0 0.0
    %7590 = vmatprep.subr.mxu0 0.0
    %7591 = vmatpush1.msra.mxu0 0.0
    %7592 = vmatprep.subr.mxu0 0.0
    %7593 = vmatpush1.msra.mxu0 0.0
    %7594 = vmatprep.subr.mxu0 0.0
    %7595 = vmatpush1.msra.mxu0 0.0
    %7596 = vmatprep.subr.mxu0 0.0
    %7597 = vmatpush1.msra.mxu0 0.0
    %7598 = vmatprep.subr.mxu0 0.0
    %7599 = vmatpush1.msra.mxu0 0.0
    %7600 = vmatprep.subr.mxu0 0.0
    %7601 = vmatpush1.msra.mxu0 0.0
    %7602 = vmatprep.subr.mxu0 0.0
    %7603 = vmatpush1.msra.mxu0 0.0
    %7604 = vmatprep.subr.mxu0 0.0
    %7605 = vmatpush1.msra.mxu0 0.0
    %7606 = vmatprep.subr.mxu0 0.0
    %7607 = vmatpush1.msra.mxu0 0.0
    %7608 = vmatprep.subr.mxu0 0.0
    %7609 = vmatpush1.msra.mxu0 0.0
    %7610 = vmatprep.subr.mxu0 0.0
    %7611 = vmatpush1.msra.mxu0 0.0
    %7612 = vmatprep.subr.mxu0 0.0
    %7613 = vmatpush1.msra.mxu0 0.0
    %7614 = vmatprep.subr.mxu0 0.0
    %7615 = vmatpush1.msra.mxu0 0.0
    %7616 = vmatprep.subr.mxu0 0.0
    %7617 = vmatpush1.msra.mxu0 %v7579
    %7618 = vmatprep.subr.mxu0 0.0
    %7619 = vmatpush2.msra.mxu0 0.0
    %7620 = vmatprep.subr.mxu0 0.0
    %7621 = vmatpush2.msra.mxu0 0.0
    %7622 = vmatprep.subr.mxu0 0.0
    %7623 = vmatpush2.msra.mxu0 0.0
    %7624 = vmatprep.subr.mxu0 0.0
    %7625 = vmatpush2.msra.mxu0 0.0
    %7626 = vmatprep.subr.mxu0 0.0
    %7627 = vmatpush2.msra.mxu0 0.0
    %7628 = vmatprep.subr.mxu0 0.0
    %7629 = vmatpush2.msra.mxu0 0.0
    %7630 = vmatprep.subr.mxu0 0.0
    %7631 = vmatpush2.msra.mxu0 0.0
    %7632 = vmatprep.subr.mxu0 0.0
    %7633 = vmatpush2.msra.mxu0 0.0
    %7634 = vmatprep.subr.mxu0 0.0
    %7635 = vmatpush2.msra.mxu0 0.0
    %7636 = vmatprep.subr.mxu0 0.0
    %7637 = vmatpush2.msra.mxu0 0.0
    %7638 = vmatprep.subr.mxu0 0.0
    %7639 = vmatpush2.msra.mxu0 0.0
    %7640 = vmatprep.subr.mxu0 0.0
    %7641 = vmatpush2.msra.mxu0 0.0
    %7642 = vmatprep.subr.mxu0 0.0
    %7643 = vmatpush2.msra.mxu0 0.0
    %7644 = vmatprep.subr.mxu0 0.0
    %7645 = vmatpush2.msra.mxu0 0.0
    %7646 = vmatprep.subr.mxu0 0.0
    %7647 = vmatpush2.msra.mxu0 0.0
    %7648 = vmatprep.subr.mxu0 0.0
    %7649 = vmatpush2.msra.mxu0 0.0
    %7650 = vmatprep.mubr.f32.mxu0 0.0
    %7651 = vmatmul.mubr.f32.gmra.mxu0 %v7581
    %v7652 = vpop.f32.mrf.mxu0
    %v7653 = vadd.f32 0.0, %v7652
    %v7654 = vpop.f32.mrf.mxu0
    %7655 = vmatprep.mubr.f32.mxu0 0.0
    %7656 = vmatmul.mubr.f32.gmra.mxu0 %v7584
    %v7657 = vpop.f32.mrf.mxu0
    %v7658 = vadd.f32 0.0, %v7657
    %v7659 = vpop.f32.mrf.mxu0
    %7660 = vdwg.mxu0
    %v7661 = vadd.f32 %v7247, %v7653
    %v7662 = vadd.f32 %v7248, %v7658
    %v7663 = vadd.f32 %v5904, %v7661
    %v7664 = vadd.f32 %v5905, %v7662
    %s7665 = scalar_lea.vmem %s16, 8
    %v7666 = vld [vmem:[%s7665] sm:$0x1]
    %s7667 = scalar_lea.vmem %s16, 9
    %v7668 = vld [vmem:[%s7667] sm:$0x1]
    %v7669 = vsel %vm179, %v7663, 0.0
    %7670 = vadd.xlane.f32.xlu0 %v7669
    %v7671 = vpop.xlane.xlu0 %7670
    %v7672 = vsel %vm179, %v7664, 0.0
    %7673 = vadd.xlane.f32.xlu0 %v7672
    %v7674 = vpop.xlane.xlu0 %7673
    %v7675 = vmul.f32 %v7671, %v2026
    %v7676 = vmul.f32 %v7674, %v2026
    %v7677 = vsub.f32 %v7663, %v7675
    %v7678 = vsub.f32 %v7664, %v7676
    %v7679 = vmul.f32 %v7677, %v7677
    %v7680 = vmul.f32 %v7678, %v7678
    %v7681 = vsel %vm179, %v7679, 0.0
    %7682 = vadd.xlane.f32.xlu0 %v7681
    %v7683 = vpop.xlane.xlu0 %7682
    %v7684 = vsel %vm179, %v7680, 0.0
    %7685 = vadd.xlane.f32.xlu0 %v7684
    %v7686 = vpop.xlane.xlu0 %7685
    %v7687 = vmul.f32 %v7683, %v2026
    %v7688 = vmul.f32 %v7686, %v2026
    %v7689 = vadd.f32 %v7687, 1e-05
    %v7690 = vadd.f32 %v7688, 1e-05
    %v7691 = vrsqrt.pop %v7689
    %v7692 = vrsqrt.pop %v7690
    %v7693 = vmul.f32 %v7677, %v7691
    %v7694 = vmul.f32 %v7678, %v7692
    %v7696 = vlaneseq
    %v7697 = vshrl.u32 %v7696, 7
    %v7698 = vsub.s32 0, %v7697
    %v7699 = vrot.slane %v7666, %v7698
    %v7701 = vmul.f32 %v7693, %v7699
    %v7702 = vmul.f32 %v7694, %v7699
    %v7704 = vlaneseq
    %v7705 = vshrl.u32 %v7704, 7
    %v7706 = vsub.s32 0, %v7705
    %v7707 = vrot.slane %v7668, %v7706
    %v7709 = vadd.f32 %v7701, %v7707
    %v7710 = vadd.f32 %v7702, %v7707
    %s7711 = scalar_lea.vmem [#allocation14], 32
    %v7712 = vld [vmem:[%s7711] sm:$0xff]
    %v7713 = vld [vmem:[%s7711 + $0x8] sm:$0xff]
    %v7714 = vld [vmem:[%s7711 + $0x10] sm:$0xff]
    %v7715 = vld [vmem:[%s7711 + $0x18] sm:$0xff]
    %s7716 = scalar_lea.vmem %s13, 1
    %v7717 = vld [vmem:[%s7716] sm:$0x1]
    %v7719 = vlaneseq
    %v7720 = vshrl.u32 %v7719, 7
    %v7721 = vsub.s32 0, %v7720
    %v7722 = vrot.slane %v7717, %v7721
    %v7725 = vsel %vm179, %v7709, 0
    %v7728 = vsel %vm179, %v7710, 0
    %7730 = vmatprep.subr.mxu0 0.0
    %7731 = vmatpush1.msra.mxu0 0.0
    %7732 = vmatprep.subr.mxu0 0.0
    %7733 = vmatpush1.msra.mxu0 0.0
    %7734 = vmatprep.subr.mxu0 0.0
    %7735 = vmatpush1.msra.mxu0 0.0
    %7736 = vmatprep.subr.mxu0 0.0
    %7737 = vmatpush1.msra.mxu0 0.0
    %7738 = vmatprep.subr.mxu0 0.0
    %7739 = vmatpush1.msra.mxu0 0.0
    %7740 = vmatprep.subr.mxu0 0.0
    %7741 = vmatpush1.msra.mxu0 0.0
    %7742 = vmatprep.subr.mxu0 0.0
    %7743 = vmatpush1.msra.mxu0 0.0
    %7744 = vmatprep.subr.mxu0 0.0
    %7745 = vmatpush1.msra.mxu0 0.0
    %7746 = vmatprep.subr.mxu0 0.0
    %7747 = vmatpush1.msra.mxu0 0.0
    %7748 = vmatprep.subr.mxu0 0.0
    %7749 = vmatpush1.msra.mxu0 0.0
    %7750 = vmatprep.subr.mxu0 0.0
    %7751 = vmatpush1.msra.mxu0 0.0
    %7752 = vmatprep.subr.mxu0 0.0
    %7753 = vmatpush1.msra.mxu0 0.0
    %7754 = vmatprep.subr.mxu0 0.0
    %7755 = vmatpush1.msra.mxu0 %v7715
    %7756 = vmatprep.subr.mxu0 0.0
    %7757 = vmatpush1.msra.mxu0 %v7714
    %7758 = vmatprep.subr.mxu0 0.0
    %7759 = vmatpush1.msra.mxu0 %v7713
    %7760 = vmatprep.subr.mxu0 0.0
    %7761 = vmatpush1.msra.mxu0 %v7712
    %7762 = vmatprep.subr.mxu0 0.0
    %7763 = vmatpush2.msra.mxu0 0.0
    %7764 = vmatprep.subr.mxu0 0.0
    %7765 = vmatpush2.msra.mxu0 0.0
    %7766 = vmatprep.subr.mxu0 0.0
    %7767 = vmatpush2.msra.mxu0 0.0
    %7768 = vmatprep.subr.mxu0 0.0
    %7769 = vmatpush2.msra.mxu0 0.0
    %7770 = vmatprep.subr.mxu0 0.0
    %7771 = vmatpush2.msra.mxu0 0.0
    %7772 = vmatprep.subr.mxu0 0.0
    %7773 = vmatpush2.msra.mxu0 0.0
    %7774 = vmatprep.subr.mxu0 0.0
    %7775 = vmatpush2.msra.mxu0 0.0
    %7776 = vmatprep.subr.mxu0 0.0
    %7777 = vmatpush2.msra.mxu0 0.0
    %7778 = vmatprep.subr.mxu0 0.0
    %7779 = vmatpush2.msra.mxu0 0.0
    %7780 = vmatprep.subr.mxu0 0.0
    %7781 = vmatpush2.msra.mxu0 0.0
    %7782 = vmatprep.subr.mxu0 0.0
    %7783 = vmatpush2.msra.mxu0 0.0
    %7784 = vmatprep.subr.mxu0 0.0
    %7785 = vmatpush2.msra.mxu0 0.0
    %7786 = vmatprep.subr.mxu0 0.0
    %7787 = vmatpush2.msra.mxu0 0.0
    %7788 = vmatprep.subr.mxu0 0.0
    %7789 = vmatpush2.msra.mxu0 0.0
    %7790 = vmatprep.subr.mxu0 0.0
    %7791 = vmatpush2.msra.mxu0 0.0
    %7792 = vmatprep.subr.mxu0 0.0
    %7793 = vmatpush2.msra.mxu0 0.0
    %7794 = vmatprep.mubr.f32.mxu0 0.0
    %7795 = vmatmul.mubr.f32.gmra.mxu0 %v7725
    %v7796 = vpop.f32.mrf.mxu0
    %v7797 = vadd.f32 %v7722, %v7796
    %v7798 = vpop.f32.mrf.mxu0
    %7799 = vmatprep.mubr.f32.mxu0 0.0
    %7800 = vmatmul.mubr.f32.gmra.mxu0 %v7728
    %v7801 = vpop.f32.mrf.mxu0
    %v7802 = vadd.f32 %v7722, %v7801
    %v7803 = vpop.f32.mrf.mxu0
    %7804 = vdwg.mxu0
    %v7805 = vmax.f32 %v7797, 0.0
    %v7806 = vmax.f32 %v7802, 0.0
    %s7807 = scalar_lea.vmem %s14, 64
    %v7808 = vld [vmem:[%s7807] sm:$0xff]
    %v7809 = vld [vmem:[%s7807 + $0x8] sm:$0xff]
    %v7810 = vld [vmem:[%s7807 + $0x10] sm:$0xff]
    %v7811 = vld [vmem:[%s7807 + $0x18] sm:$0xff]
    %v7812 = vld [vmem:[%s7807 + $0x20] sm:$0xff]
    %v7813 = vld [vmem:[%s7807 + $0x28] sm:$0xff]
    %v7814 = vld [vmem:[%s7807 + $0x30] sm:$0xff]
    %v7815 = vld [vmem:[%s7807 + $0x38] sm:$0xff]
    %s7816 = scalar_lea.vmem %s15, 1
    %v7817 = vld [vmem:[%s7816] sm:$0x1]
    %v7819 = vlaneseq
    %v7820 = vshrl.u32 %v7819, 7
    %v7821 = vsub.s32 0, %v7820
    %v7822 = vrot.slane %v7817, %v7821
    %v7825 = vsel %vm3971, %v7805, 0
    %v7828 = vsel %vm3971, %v7806, 0
    %7830 = vmatprep.subr.mxu0 0.0
    %7831 = vmatpush1.msra.mxu0 0.0
    %7832 = vmatprep.subr.mxu0 0.0
    %7833 = vmatpush1.msra.mxu0 0.0
    %7834 = vmatprep.subr.mxu0 0.0
    %7835 = vmatpush1.msra.mxu0 0.0
    %7836 = vmatprep.subr.mxu0 0.0
    %7837 = vmatpush1.msra.mxu0 0.0
    %7838 = vmatprep.subr.mxu0 0.0
    %7839 = vmatpush1.msra.mxu0 0.0
    %7840 = vmatprep.subr.mxu0 0.0
    %7841 = vmatpush1.msra.mxu0 0.0
    %7842 = vmatprep.subr.mxu0 0.0
    %7843 = vmatpush1.msra.mxu0 0.0
    %7844 = vmatprep.subr.mxu0 0.0
    %7845 = vmatpush1.msra.mxu0 0.0
    %7846 = vmatprep.subr.mxu0 0.0
    %7847 = vmatpush1.msra.mxu0 %v7815
    %7848 = vmatprep.subr.mxu0 0.0
    %7849 = vmatpush1.msra.mxu0 %v7814
    %7850 = vmatprep.subr.mxu0 0.0
    %7851 = vmatpush1.msra.mxu0 %v7813
    %7852 = vmatprep.subr.mxu0 0.0
    %7853 = vmatpush1.msra.mxu0 %v7812
    %7854 = vmatprep.subr.mxu0 0.0
    %7855 = vmatpush1.msra.mxu0 %v7811
    %7856 = vmatprep.subr.mxu0 0.0
    %7857 = vmatpush1.msra.mxu0 %v7810
    %7858 = vmatprep.subr.mxu0 0.0
    %7859 = vmatpush1.msra.mxu0 %v7809
    %7860 = vmatprep.subr.mxu0 0.0
    %7861 = vmatpush1.msra.mxu0 %v7808
    %7862 = vmatprep.subr.mxu0 0.0
    %7863 = vmatpush2.msra.mxu0 0.0
    %7864 = vmatprep.subr.mxu0 0.0
    %7865 = vmatpush2.msra.mxu0 0.0
    %7866 = vmatprep.subr.mxu0 0.0
    %7867 = vmatpush2.msra.mxu0 0.0
    %7868 = vmatprep.subr.mxu0 0.0
    %7869 = vmatpush2.msra.mxu0 0.0
    %7870 = vmatprep.subr.mxu0 0.0
    %7871 = vmatpush2.msra.mxu0 0.0
    %7872 = vmatprep.subr.mxu0 0.0
    %7873 = vmatpush2.msra.mxu0 0.0
    %7874 = vmatprep.subr.mxu0 0.0
    %7875 = vmatpush2.msra.mxu0 0.0
    %7876 = vmatprep.subr.mxu0 0.0
    %7877 = vmatpush2.msra.mxu0 0.0
    %7878 = vmatprep.subr.mxu0 0.0
    %7879 = vmatpush2.msra.mxu0 0.0
    %7880 = vmatprep.subr.mxu0 0.0
    %7881 = vmatpush2.msra.mxu0 0.0
    %7882 = vmatprep.subr.mxu0 0.0
    %7883 = vmatpush2.msra.mxu0 0.0
    %7884 = vmatprep.subr.mxu0 0.0
    %7885 = vmatpush2.msra.mxu0 0.0
    %7886 = vmatprep.subr.mxu0 0.0
    %7887 = vmatpush2.msra.mxu0 0.0
    %7888 = vmatprep.subr.mxu0 0.0
    %7889 = vmatpush2.msra.mxu0 0.0
    %7890 = vmatprep.subr.mxu0 0.0
    %7891 = vmatpush2.msra.mxu0 0.0
    %7892 = vmatprep.subr.mxu0 0.0
    %7893 = vmatpush2.msra.mxu0 0.0
    %7894 = vmatprep.mubr.f32.mxu0 0.0
    %7895 = vmatmul.mubr.f32.gmra.mxu0 %v7825
    %v7896 = vpop.f32.mrf.mxu0
    %v7897 = vadd.f32 %v7822, %v7896
    %v7898 = vpop.f32.mrf.mxu0
    %7899 = vmatprep.mubr.f32.mxu0 0.0
    %7900 = vmatmul.mubr.f32.gmra.mxu0 %v7828
    %v7901 = vpop.f32.mrf.mxu0
    %v7902 = vadd.f32 %v7822, %v7901
    %v7903 = vpop.f32.mrf.mxu0
    %7904 = vdwg.mxu0
    %v7905 = vadd.f32 %v7709, %v7897
    %v7906 = vadd.f32 %v7710, %v7902
    %s7907 = scalar_lea.vmem %s16, 10
    %v7908 = vld [vmem:[%s7907] sm:$0x1]
    %s7909 = scalar_lea.vmem %s16, 11
    %v7910 = vld [vmem:[%s7909] sm:$0x1]
    %v7911 = vsel %vm179, %v7905, 0.0
    %7912 = vadd.xlane.f32.xlu0 %v7911
    %v7913 = vpop.xlane.xlu0 %7912
    %v7914 = vsel %vm179, %v7906, 0.0
    %7915 = vadd.xlane.f32.xlu0 %v7914
    %v7916 = vpop.xlane.xlu0 %7915
    %v7917 = vmul.f32 %v7913, %v2026
    %v7918 = vmul.f32 %v7916, %v2026
    %v7919 = vsub.f32 %v7905, %v7917
    %v7920 = vsub.f32 %v7906, %v7918
    %v7921 = vmul.f32 %v7919, %v7919
    %v7922 = vmul.f32 %v7920, %v7920
    %v7923 = vsel %vm179, %v7921, 0.0
    %7924 = vadd.xlane.f32.xlu0 %v7923
    %v7925 = vpop.xlane.xlu0 %7924
    %v7926 = vsel %vm179, %v7922, 0.0
    %7927 = vadd.xlane.f32.xlu0 %v7926
    %v7928 = vpop.xlane.xlu0 %7927
    %v7929 = vmul.f32 %v7925, %v2026
    %v7930 = vmul.f32 %v7928, %v2026
    %v7931 = vadd.f32 %v7929, 1e-05
    %v7932 = vadd.f32 %v7930, 1e-05
    %v7933 = vrsqrt.pop %v7931
    %v7934 = vrsqrt.pop %v7932
    %v7935 = vmul.f32 %v7919, %v7933
    %v7936 = vmul.f32 %v7920, %v7934
    %v7938 = vlaneseq
    %v7939 = vshrl.u32 %v7938, 7
    %v7940 = vsub.s32 0, %v7939
    %v7941 = vrot.slane %v7908, %v7940
    %v7943 = vmul.f32 %v7935, %v7941
    %v7944 = vmul.f32 %v7936, %v7941
    %v7946 = vlaneseq
    %v7947 = vshrl.u32 %v7946, 7
    %v7948 = vsub.s32 0, %v7947
    %v7949 = vrot.slane %v7910, %v7948
    %v7951 = vadd.f32 %v7943, %v7949
    %v7952 = vadd.f32 %v7944, %v7949
    %7953 = vst.msk [vmem:[#allocation16] sm:$0xff] %vm179, %v7951
    %7954 = vst.msk [vmem:[#allocation16 + $0x8] sm:$0xff] %vm179, %v7952
    // Predicated region
    $region102: #{tpu_custom_call.1} parent=1 // pred_check
      _
    $region103: #{tpu_custom_call.1} parent=1 // pred_check_branch
      %7956 = sbr.rel (0) target = $region105
    $region104: #{tpu_custom_call.1} parent=1 // pred_region
      %s7958 = ssub.s32 256, 256
      %7959 = vsyncadd [#allocation4], %s7958
      %s7960 = sshll.u32 [#allocation16], 4
      %s7961 = int_to_ptr.vmem [resolvable:$true] %s7960
      %7966 = dma.vmem_to_hbm [thread:$0]  %s7961, 256, %s17, [#allocation4], 128, 128, 8
    $region105: #{tpu_custom_call.1} parent=1 // pred_fallthru
      _
    // Predicated region
    $region106: #{tpu_custom_call.1} parent=1 // pred_check
      _
    $region107: #{tpu_custom_call.1} parent=1 // pred_check_branch
      %7968 = sbr.rel (0) target = $region109
    $region108: #{tpu_custom_call.1} parent=1 // pred_region
      %7969 = dma.done [#allocation4], 256
    $region109: #{tpu_custom_call.1} parent=1 // pred_fallthru
      _
    %7970 = vsyncpa [#allocation3], 1
    %7971 = vsyncpa [#allocation6], 1
    %7972 = vsyncpa [#allocation9], 1
    %7973 = vsyncpa [#allocation12], 1
    %7974 = vsyncpa [#allocation15], 1
    %7975 = vsyncpa [#allocation4], 1

</llo_original>
